<compile_context>
chip_gen: v7x
topology: tpu7x:2x2x1
jax: 0.10.0
libtpu: 0.0.40
codegen_flags: <defaults>
</compile_context>

<pallas_src>
import jax
import jax.numpy as jnp
from jax.experimental import pallas as pl

# ----------------------- small, module-consistent sizes -----------------------
EMB = 64            # embedding_dim (divisible by 8; PyTorch default was 1024)
HID = EMB // 4      # LSTM hidden_size
PROJ = EMB // 8     # LSTM proj_size
NLAYERS = 2         # num_layers (scaled down from 4)
CHANNELS = 4        # image channels
BATCH = 2
BATCH_PAD = 8       # pad batch to a full sublane tile
IMG_HW = 16         # image spatial -> conv(stride 2) -> 8x8 -> T_img = C*8*8/EMB = 4
T_AUDIO = 6

assert NLAYERS == 2          # kernel body is written for the 2-layer configuration
assert BATCH <= BATCH_PAD


# ============================ in-kernel helpers ===============================

def _dir_fuse(gx, T, Bp, bwd_mask):
    """Merge fwd/bwd time indexing of a hoisted gate slab: row block s keeps the
    fwd columns from time s and the bwd columns from time T-1-s, so each serial
    step consumes ONE contiguous, tile-aligned (Bp, G) row block."""
    rev = jnp.concatenate([gx[(T - 1 - t) * Bp:(T - t) * Bp, :] for t in range(T)],
                          axis=0)
    return jnp.where(bwd_mask, rev, gx)


def _run_bi_steps(gx_streams, Ts, w_fused, c0, g0_extra, H):
    """Serial recurrence of one (possibly multi-stream lane-merged) bidirectional
    projected-LSTM layer.  The output projection is folded into w_fused, so the
    per-step critical path is: one bf16 (Bp,S*2H)@(S*2H,S*8H) matmul, whole-vreg
    sigmoid/tanh, and the cell update on contiguous lane slices."""
    S = len(Ts)
    Wst = S * 2 * H                       # merged state width ([f|b] per stream)
    Tmax = max(Ts)
    Bp = c0.shape[0]
    lane = jax.lax.broadcasted_iota(jnp.int32, (1, Wst), 1)
    c = c0
    h_full = None
    h_steps = []
    for s in range(Tmax):
        g = g0_extra if (s == 0 and g0_extra is not None) else None
        for k, T in enumerate(Ts):        # per-stream hoisted input contribution
            if s < T:
                piece = gx_streams[k][s * Bp:(s + 1) * Bp, :]
                g = piece if g is None else g + piece
        if s > 0:                         # recurrent term (projection pre-folded)
            g = g + jnp.dot(h_full.astype(jnp.bfloat16), w_fused,
                            preferred_element_type=jnp.float32)
        sg = jax.nn.sigmoid(g)            # whole-vreg: all 4 gate types at once
        tg = jnp.tanh(g)
        c_new = sg[:, Wst:2 * Wst] * c + sg[:, :Wst] * tg[:, 2 * Wst:3 * Wst]
        h_new = sg[:, 3 * Wst:] * jnp.tanh(c_new)
        if all(s < T for T in Ts):
            c, h_full = c_new, h_new
        else:                             # shorter stream done: freeze its lanes
            preds = [((lane >= k * 2 * H) & (lane < (k + 1) * 2 * H))
                     for k, T in enumerate(Ts) if s < T]
            upd = preds[0]
            for p in preds[1:]:
                upd = upd | p
            c = jnp.where(upd, c_new, c)
            h_full = jnp.where(upd, h_new, h_full)
        h_steps.append(h_full)
    return h_steps, c


def _stream_outputs(h_steps, k, T, whr_k, H, P, Bp):
    """Off-critical-path projection + fwd/bwd time reassembly for stream k.
    Returns the time-major (T*Bp, 2P) layer output and the projected final
    state h_n (Bp, 2P) = [h_fwd(T-1) | h_bwd(0)]."""
    hs = jnp.concatenate([h_steps[s][:, k * 2 * H:(k + 1) * 2 * H]
                          for s in range(T)], axis=0)          # (T*Bp, 2H) step-major
    pr = jnp.dot(hs, whr_k, preferred_element_type=jnp.float32)  # (T*Bp, 2P)
    y = jnp.concatenate(
        [jnp.concatenate([pr[t * Bp:(t + 1) * Bp, :P],
                          pr[(T - 1 - t) * Bp:(T - t) * Bp, P:]], axis=1)
         for t in range(T)], axis=0)                           # time-major (T*Bp, 2P)
    return y, pr[(T - 1) * Bp:T * Bp, :]


# ================================ fused kernel ================================

def _lstm_classifier_kernel(
        patches_ref, convw_ref, convb_ref, scale_ref, shift_ref, audio_ref,
        iw0_ref, iw1_ref, aw0_ref, aw1_ref, bimg_ref, baud_ref,
        wfia_ref, whri_ref, whra_ref,
        fwih_ref, fbias_ref, ffused_ref, fwhh_ref, fwhr_ref,
        fc1w_ref, fc1b_ref, fc2w_ref, fc2b_ref,
        out_ref):
    """Entire LSTMClassifier forward in one kernel invocation (no grid)."""
    Bp = out_ref.shape[0]
    H = whri_ref.shape[1] // 2
    P = whri_ref.shape[2] // 2
    T_img = convw_ref.shape[0] // Bp
    T_aud = audio_ref.shape[0] // Bp
    T_tot = T_img + T_aud
    Gm = wfia_ref.shape[2]                # merged img+aud gate width (= 16H)
    Gf = ffused_ref.shape[2]              # final-encoder gate width   (=  8H)

    # backward-direction lane masks (per-2H period: [fwd H | bwd H])
    bwd_m = (jax.lax.broadcasted_iota(jnp.int32, (1, Gm), 1) % (2 * H)) >= H
    bwd_f = (jax.lax.broadcasted_iota(jnp.int32, (1, Gf), 1) % (2 * H)) >= H

    # ---- ImageEncoder.patch_conv: Conv2d(4x4,s2,p1) -> ReLU -> BatchNorm (eval) ----
    # batch-block-diagonal conv weight -> result lands directly as (T_img*Bp, E)
    # time-major rows (lane-dense, no transposes afterwards).
    x_img = (jnp.dot(convw_ref[...], patches_ref[...],
                     preferred_element_type=jnp.float32) + convb_ref[...])
    x_img = jnp.maximum(x_img, 0.0) * scale_ref[...] + shift_ref[...]
    x_aud = audio_ref[...]                                       # (T_aud*Bp, E)

    c0_zero = jnp.zeros((Bp, 4 * H), jnp.float32)
    Ts = (T_img, T_aud)

    # ---- lane-merged image+audio bidirectional LSTM encoders, layer 0 ----
    gxi = _dir_fuse(jnp.dot(x_img, iw0_ref[...], preferred_element_type=jnp.float32)
                    + bimg_ref[0], T_img, Bp, bwd_m)
    gxa = _dir_fuse(jnp.dot(x_aud, aw0_ref[...], preferred_element_type=jnp.float32)
                    + baud_ref[0], T_aud, Bp, bwd_m)
    h_steps, c_last = _run_bi_steps([gxi, gxa], Ts, wfia_ref[0], c0_zero, None, H)
    y0_img, hn0_img = _stream_outputs(h_steps, 0, T_img, whri_ref[0], H, P, Bp)
    y0_aud, hn0_aud = _stream_outputs(h_steps, 1, T_aud, whra_ref[0], H, P, Bp)
    cn0_img, cn0_aud = c_last[:, :2 * H], c_last[:, 2 * H:]

    # ---- layer 1 (inter-layer Dropout(0.1) is identity in eval mode) ----
    gxi = _dir_fuse(jnp.dot(y0_img, iw1_ref[...], preferred_element_type=jnp.float32)
                    + bimg_ref[1], T_img, Bp, bwd_m)
    gxa = _dir_fuse(jnp.dot(y0_aud, aw1_ref[...], preferred_element_type=jnp.float32)
                    + baud_ref[1], T_aud, Bp, bwd_m)
    h_steps, c_last = _run_bi_steps([gxi, gxa], Ts, wfia_ref[1], c0_zero, None, H)
    y1_img, hn1_img = _stream_outputs(h_steps, 0, T_img, whri_ref[1], H, P, Bp)
    y1_aud, hn1_aud = _stream_outputs(h_steps, 1, T_aud, whra_ref[1], H, P, Bp)
    cn1_img, cn1_aud = c_last[:, :2 * H], c_last[:, 2 * H:]

    # ---- fusion: torch.cat along time; summed (h_n, c_n) seed the final encoder ----
    x_fin = jnp.concatenate([y1_img, y1_aud], axis=0)            # (T_tot*Bp, 2P)
    h0 = (hn0_img + hn0_aud, hn1_img + hn1_aud)                  # per layer (Bp, 2P)
    c0 = (cn0_img + cn0_aud, cn1_img + cn1_aud)                  # per layer (Bp, 2H)

    # ---- final encoder, layer 0 ----
    gxf = _dir_fuse(jnp.dot(x_fin, fwih_ref[0], preferred_element_type=jnp.float32)
                    + fbias_ref[0], T_tot, Bp, bwd_f)
    g0 = jnp.dot(h0[0], fwhh_ref[0], preferred_element_type=jnp.float32)
    h_steps, _ = _run_bi_steps([gxf], (T_tot,), ffused_ref[0], c0[0], g0, H)
    y_f0, _ = _stream_outputs(h_steps, 0, T_tot, fwhr_ref[0], H, P, Bp)

    # ---- final encoder, layer 1: only the time-mean of y is consumed downstream ----
    gxf = _dir_fuse(jnp.dot(y_f0, fwih_ref[1], preferred_element_type=jnp.float32)
                    + fbias_ref[1], T_tot, Bp, bwd_f)
    g0 = jnp.dot(h0[1], fwhh_ref[1], preferred_element_type=jnp.float32)
    h_steps, _ = _run_bi_steps([gxf], (T_tot,), ffused_ref[1], c0[1], g0, H)
    h_sum = h_steps[0]
    for s in range(1, T_tot):
        h_sum = h_sum + h_steps[s]
    y_mean = jnp.dot(h_sum, fwhr_ref[1],
                     preferred_element_type=jnp.float32) * (1.0 / T_tot)

    # ---- head: Linear(2P,256) -> ReLU -> Linear(256,1) ----
    h1 = jnp.maximum(jnp.dot(y_mean, fc1w_ref[...],
                             preferred_element_type=jnp.float32) + fc1b_ref[...], 0.0)
    out_ref[...] = (jnp.dot(h1, fc2w_ref[...],
                            preferred_element_type=jnp.float32) + fc2b_ref[...])


# ================================ forward pass ================================

def forward(packed, image, audio):
    """JAX wrapper: batch padding + patch extraction + layout prep, then one
    fused grid-less Pallas call (whole model fits in VMEM with huge margin)."""
    B, C, Hi, Wi = image.shape
    K, S, PAD = 4, 2, 1
    Ho = (Hi + 2 * PAD - K) // S + 1
    Wo = (Wi + 2 * PAD - K) // S + 1
    E = audio.shape[-1]
    assert Ho * Wo == E, "conv spatial map must equal embedding_dim for .view()"
    Bp = BATCH_PAD
    T_aud = audio.shape[1]

    # pad batch 2 -> 8 so every per-step row slice inside the kernel is an
    # (8,128)-tile aligned full-sublane block (pad rows never mix with real ones).
    image_p = jnp.pad(image, ((0, Bp - B), (0, 0), (0, 0), (0, 0)))
    audio_p = jnp.pad(audio, ((0, Bp - B), (0, 0), (0, 0)))

    # im2col as one fused XLA op; feature order (ci, kh, kw) matches the PyTorch
    # Conv2d weight reshape used in pack_params.
    patches = jax.lax.conv_general_dilated_patches(
        image_p, filter_shape=(K, K), window_strides=(S, S),
        padding=((PAD, PAD), (PAD, PAD)))                        # (Bp, C*K*K, Ho, Wo)
    patches = patches.transpose(1, 0, 2, 3).reshape(C * K * K * Bp, Ho * Wo)
    # audio: batch-first (Bp, T, E) -> time-major rows (t*Bp + b, E)
    audio_tm = audio_p.transpose(1, 0, 2).reshape(T_aud * Bp, E)

    out = pl.pallas_call(
        _lstm_classifier_kernel,
        out_shape=jax.ShapeDtypeStruct((Bp, 1), jnp.float32),
    )(patches, packed['conv_w'], packed['conv_b'], packed['bn_scale'],
      packed['bn_shift'], audio_tm,
      packed['iw0'], packed['iw1'], packed['aw0'], packed['aw1'],
      packed['b_img'], packed['b_aud'], packed['wf_ia'],
      packed['whr_img'], packed['whr_aud'],
      packed['f_wih'], packed['f_bias'], packed['f_fused'],
      packed['f_whh'], packed['f_whr'],
      packed['fc1_w'], packed['fc1_b'], packed['fc2_w'], packed['fc2_b'])
    return out[:B]


# ============================ deterministic params ============================

def init_lstm(key, input_size, H, P, L):
    layers = []
    bound = 1.0 / (H ** 0.5)
    for l in range(L):
        din = input_size if l == 0 else 2 * P
        layer = {}
        for d in ('fwd', 'bwd'):
            key, k1, k2, k3, k4, k5 = jax.random.split(key, 6)
            wih = jax.random.uniform(k1, (din, 4 * H), jnp.float32, -bound, bound)
            whh = jax.random.uniform(k2, (P, 4 * H), jnp.float32, -bound, bound)
            whr = jax.random.uniform(k3, (H, P), jnp.float32, -bound, bound)
            bih = jax.random.uniform(k4, (4 * H,), jnp.float32, -bound, bound)
            bhh = jax.random.uniform(k5, (4 * H,), jnp.float32, -bound, bound)
            layer[d] = (wih, whh, whr, (bih + bhh).reshape(1, 4 * H))
        layers.append(layer)
    return key, layers


def init_params(key):
    E, H, P, L, C = EMB, HID, PROJ, NLAYERS, CHANNELS
    params = {}
    kc = 1.0 / ((C * 4 * 4) ** 0.5)
    key, k1, k2 = jax.random.split(key, 3)
    params['conv_w'] = jax.random.uniform(k1, (C, C, 4, 4), jnp.float32, -kc, kc)
    params['conv_b'] = jax.random.uniform(k2, (C,), jnp.float32, -kc, kc)
    params['bn_gamma'] = jnp.ones((C,), jnp.float32)
    params['bn_beta'] = jnp.zeros((C,), jnp.float32)
    params['bn_mean'] = jnp.zeros((C,), jnp.float32)
    params['bn_var'] = jnp.ones((C,), jnp.float32)
    key, params['img_lstm'] = init_lstm(key, E, H, P, L)
    key, params['aud_lstm'] = init_lstm(key, E, H, P, L)
    key, params['fin_lstm'] = init_lstm(key, 2 * P, H, P, L)
    kf1 = 1.0 / ((2 * P) ** 0.5)
    kf2 = 1.0 / (256.0 ** 0.5)
    key, ka, kb, kc2, kd = jax.random.split(key, 5)
    params['fc1_w'] = jax.random.uniform(ka, (2 * P, 256), jnp.float32, -kf1, kf1)
    params['fc1_b'] = jax.random.uniform(kb, (1, 256), jnp.float32, -kf1, kf1)
    params['fc2_w'] = jax.random.uniform(kc2, (256, 1), jnp.float32, -kf2, kf2)
    params['fc2_b'] = jax.random.uniform(kd, (1, 1), jnp.float32, -kf2, kf2)
    return params


# ---------------- host-side packing into the fused-kernel layout ----------------
# Merged gate column layout (per gate type block of width S*2H, 4 blocks i,f,g,o):
#   [stream0_fwd(H) | stream0_bwd(H) | stream1_fwd(H) | stream1_bwd(H) | ...]
# Merged state layout: [stream0: h_f|h_b | stream1: h_f|h_b | ...].

def _pack_wih_bias(layers, l, H, k, G):
    """Input projection weight / bias of (stream k, layer l), gate-interleaved
    and zero-padded to the merged gate width G."""
    wih_f, _, _, b_f = layers[l]['fwd']
    wih_b, _, _, b_b = layers[l]['bwd']
    blk = G // 4
    wih = jnp.zeros((wih_f.shape[0], G), jnp.float32)
    bias = jnp.zeros((1, G), jnp.float32)
    for q in range(4):
        c0 = q * blk + k * 2 * H
        wih = wih.at[:, c0:c0 + H].set(wih_f[:, q * H:(q + 1) * H])
        wih = wih.at[:, c0 + H:c0 + 2 * H].set(wih_b[:, q * H:(q + 1) * H])
        bias = bias.at[:, c0:c0 + H].set(b_f[:, q * H:(q + 1) * H])
        bias = bias.at[:, c0 + H:c0 + 2 * H].set(b_b[:, q * H:(q + 1) * H])
    return wih, bias


def _pack_fused(stream_layers, l, H):
    """(S*2H, S*8H) recurrent weight with the output projection folded in:
    per (stream, direction) block = whr @ whh, gate-interleaved columns."""
    S = len(stream_layers)
    G = S * 8 * H
    blk = G // 4
    wf = jnp.zeros((S * 2 * H, G), jnp.float32)
    for k, layers in enumerate(stream_layers):
        for d, name in enumerate(('fwd', 'bwd')):
            _, whh, whr, _ = layers[l][name]
            fused = jnp.dot(whr, whh)                          # (H, 4H)
            r0 = k * 2 * H + d * H
            for q in range(4):
                c0 = q * blk + k * 2 * H + d * H
                wf = wf.at[r0:r0 + H, c0:c0 + H].set(fused[:, q * H:(q + 1) * H])
    return wf


def _pack_whh(layers, l, H, P):
    """(2P, 8H) recurrent weight acting on the *projected* initial hidden state
    (only needed for step 0 of the final encoder, which gets a nonzero h0)."""
    G = 8 * H
    blk = G // 4
    wp = jnp.zeros((2 * P, G), jnp.float32)
    for d, name in enumerate(('fwd', 'bwd')):
        _, whh, _, _ = layers[l][name]
        r0 = d * P
        for q in range(4):
            c0 = q * blk + d * H
            wp = wp.at[r0:r0 + P, c0:c0 + H].set(whh[:, q * H:(q + 1) * H])
    return wp


def _pack_whr(layers, l, H, P):
    """(2H, 2P) block-diagonal output projection (off the recurrence chain)."""
    _, _, whr_f, _ = layers[l]['fwd']
    _, _, whr_b, _ = layers[l]['bwd']
    wr = jnp.zeros((2 * H, 2 * P), jnp.float32)
    return wr.at[:H, :P].set(whr_f).at[H:, P:].set(whr_b)


def pack_params(params, bp):
    """One-time host-side packing into the fused-kernel layout (batch = bp)."""
    eps = 1e-5
    Cout = params['conv_w'].shape[0]
    w2d = params['conv_w'].reshape(Cout, -1)                 # (Cout, Cin*K*K)
    F = w2d.shape[1]
    eyeb = jnp.eye(bp, dtype=jnp.float32)
    # batch-block-diagonal conv weight: rows (c,b), cols (f,b')
    conv_w = jnp.einsum('cf,bd->cbfd', w2d, eyeb).reshape(Cout * bp, F * bp)
    scale = params['bn_gamma'] / jnp.sqrt(params['bn_var'] + eps)
    shift = params['bn_beta'] - params['bn_mean'] * scale

    H, P, L = HID, PROJ, NLAYERS
    img, aud, fin = params['img_lstm'], params['aud_lstm'], params['fin_lstm']
    Gm = 16 * H                                              # merged img+aud gates
    packed = {
        'conv_w': conv_w,
        'conv_b': jnp.repeat(params['conv_b'], bp).reshape(-1, 1),
        'bn_scale': jnp.repeat(scale, bp).reshape(-1, 1),
        'bn_shift': jnp.repeat(shift, bp).reshape(-1, 1),
        'fc1_w': params['fc1_w'], 'fc1_b': params['fc1_b'],
        'fc2_w': params['fc2_w'], 'fc2_b': params['fc2_b'],
    }

    iw, ib, aw, ab, wfia, ri, ra = [], [], [], [], [], [], []
    for l in range(L):
        w, b = _pack_wih_bias(img, l, H, 0, Gm); iw.append(w); ib.append(b)
        w, b = _pack_wih_bias(aud, l, H, 1, Gm); aw.append(w); ab.append(b)
        wfia.append(_pack_fused([img, aud], l, H))
        ri.append(_pack_whr(img, l, H, P))
        ra.append(_pack_whr(aud, l, H, P))
    packed.update(iw0=iw[0], iw1=iw[1], aw0=aw[0], aw1=aw[1],
                  b_img=jnp.stack(ib), b_aud=jnp.stack(ab),
                  wf_ia=jnp.stack(wfia).astype(jnp.bfloat16),
                  whr_img=jnp.stack(ri), whr_aud=jnp.stack(ra))

    fw, fb, ff, fhh, fr = [], [], [], [], []
    for l in range(L):
        w, b = _pack_wih_bias(fin, l, H, 0, 8 * H); fw.append(w); fb.append(b)
        ff.append(_pack_fused([fin], l, H))
        fhh.append(_pack_whh(fin, l, H, P))
        fr.append(_pack_whr(fin, l, H, P))
    packed.update(f_wih=jnp.stack(fw), f_bias=jnp.stack(fb),
                  f_fused=jnp.stack(ff).astype(jnp.bfloat16),
                  f_whh=jnp.stack(fhh), f_whr=jnp.stack(fr))
    return packed


if __name__ == "__main__":
    root = jax.random.PRNGKey(0)
    kp, ki, ka = jax.random.split(root, 3)
    params = init_params(kp)
    packed = pack_params(params, BATCH_PAD)
    image = jax.random.normal(ki, (BATCH, CHANNELS, IMG_HW, IMG_HW), jnp.float32)
    audio = jax.random.normal(ka, (BATCH, T_AUDIO, EMB), jnp.float32)

    out = jax.jit(forward)(packed, image, audio)
    out = jax.block_until_ready(out)
    assert out.shape == (BATCH, 1) and out.dtype == jnp.float32
    print("KERNEL_OK")
</pallas_src>

<mosaic_0001>
module attributes {stable_mosaic.version = 11 : i64} {
  func.func @_lstm_classifier_kernel(%arg0: memref<512x64xf32, #tpu.memory_space<vmem>>, %arg1: memref<32x512xf32, #tpu.memory_space<vmem>>, %arg2: memref<32x1xf32, #tpu.memory_space<vmem>>, %arg3: memref<32x1xf32, #tpu.memory_space<vmem>>, %arg4: memref<32x1xf32, #tpu.memory_space<vmem>>, %arg5: memref<48x64xf32, #tpu.memory_space<vmem>>, %arg6: memref<64x256xf32, #tpu.memory_space<vmem>>, %arg7: memref<16x256xf32, #tpu.memory_space<vmem>>, %arg8: memref<64x256xf32, #tpu.memory_space<vmem>>, %arg9: memref<16x256xf32, #tpu.memory_space<vmem>>, %arg10: memref<2x1x256xf32, #tpu.memory_space<vmem>>, %arg11: memref<2x1x256xf32, #tpu.memory_space<vmem>>, %arg12: memref<2x64x256xbf16, #tpu.memory_space<vmem>>, %arg13: memref<2x32x16xf32, #tpu.memory_space<vmem>>, %arg14: memref<2x32x16xf32, #tpu.memory_space<vmem>>, %arg15: memref<2x16x128xf32, #tpu.memory_space<vmem>>, %arg16: memref<2x1x128xf32, #tpu.memory_space<vmem>>, %arg17: memref<2x32x128xbf16, #tpu.memory_space<vmem>>, %arg18: memref<2x16x128xf32, #tpu.memory_space<vmem>>, %arg19: memref<2x32x16xf32, #tpu.memory_space<vmem>>, %arg20: memref<16x256xf32, #tpu.memory_space<vmem>>, %arg21: memref<1x256xf32, #tpu.memory_space<vmem>>, %arg22: memref<256x1xf32, #tpu.memory_space<vmem>>, %arg23: memref<1x1xf32, #tpu.memory_space<vmem>>, %arg24: memref<8x1xf32, #tpu.memory_space<vmem>>) attributes {dimension_semantics = [], scalar_prefetch = 0 : i64, scratch_operands = 0 : i64, tpu.core_type = #tpu.core_type<tc>} {
    %0 = tpu.iota {dimensions = array<i32: 1>} : vector<1x256xi32>
    %c32_i32 = arith.constant 32 : i32
    %c0_i32 = arith.constant 0 : i32
    %1 = arith.cmpi eq, %c32_i32, %c0_i32 : i32
    %c1_i32 = arith.constant 1 : i32
    %2 = arith.select %1, %c1_i32, %c32_i32 : i32
    %3 = vector.broadcast %2 : i32 to vector<1x256xi32>
    %4 = arith.remsi %0, %3 : vector<1x256xi32>
    %c0_i32_0 = arith.constant 0 : i32
    %5 = vector.broadcast %c0_i32_0 : i32 to vector<1x256xi32>
    %6 = arith.cmpi ne, %4, %5 : vector<1x256xi32>
    %c0_i32_1 = arith.constant 0 : i32
    %7 = vector.broadcast %c0_i32_1 : i32 to vector<1x256xi32>
    %8 = arith.cmpi slt, %4, %7 : vector<1x256xi32>
    %c0_i32_2 = arith.constant 0 : i32
    %9 = arith.cmpi slt, %2, %c0_i32_2 : i32
    %10 = vector.broadcast %9 : i1 to vector<1x256xi1>
    %11 = vector.broadcast %10 : vector<1x256xi1> to vector<1x256xi1>
    %12 = arith.xori %8, %11 : vector<1x256xi1>
    %13 = arith.andi %12, %6 : vector<1x256xi1>
    %14 = vector.broadcast %2 : i32 to vector<1x256xi32>
    %15 = arith.addi %4, %14 : vector<1x256xi32>
    %16 = arith.select %13, %15, %4 : vector<1x256xi1>, vector<1x256xi32>
    %c16_i32 = arith.constant 16 : i32
    %17 = vector.broadcast %c16_i32 : i32 to vector<1x256xi32>
    %18 = arith.cmpi sge, %16, %17 : vector<1x256xi32>
    %19 = tpu.iota {dimensions = array<i32: 1>} : vector<1x128xi32>
    %c32_i32_3 = arith.constant 32 : i32
    %c0_i32_4 = arith.constant 0 : i32
    %20 = arith.cmpi eq, %c32_i32_3, %c0_i32_4 : i32
    %c1_i32_5 = arith.constant 1 : i32
    %21 = arith.select %20, %c1_i32_5, %c32_i32_3 : i32
    %22 = vector.broadcast %21 : i32 to vector<1x128xi32>
    %23 = arith.remsi %19, %22 : vector<1x128xi32>
    %c0_i32_6 = arith.constant 0 : i32
    %24 = vector.broadcast %c0_i32_6 : i32 to vector<1x128xi32>
    %25 = arith.cmpi ne, %23, %24 : vector<1x128xi32>
    %c0_i32_7 = arith.constant 0 : i32
    %26 = vector.broadcast %c0_i32_7 : i32 to vector<1x128xi32>
    %27 = arith.cmpi slt, %23, %26 : vector<1x128xi32>
    %c0_i32_8 = arith.constant 0 : i32
    %28 = arith.cmpi slt, %21, %c0_i32_8 : i32
    %29 = vector.broadcast %28 : i1 to vector<1x128xi1>
    %30 = vector.broadcast %29 : vector<1x128xi1> to vector<1x128xi1>
    %31 = arith.xori %27, %30 : vector<1x128xi1>
    %32 = arith.andi %31, %25 : vector<1x128xi1>
    %33 = vector.broadcast %21 : i32 to vector<1x128xi32>
    %34 = arith.addi %23, %33 : vector<1x128xi32>
    %35 = arith.select %32, %34, %23 : vector<1x128xi1>, vector<1x128xi32>
    %c16_i32_9 = arith.constant 16 : i32
    %36 = vector.broadcast %c16_i32_9 : i32 to vector<1x128xi32>
    %37 = arith.cmpi sge, %35, %36 : vector<1x128xi32>
    %c0 = arith.constant 0 : index
    %c0_10 = arith.constant 0 : index
    %38 = vector.load %arg1[%c0, %c0_10] : memref<32x512xf32, #tpu.memory_space<vmem>>, vector<32x512xf32>
    %c0_11 = arith.constant 0 : index
    %c0_12 = arith.constant 0 : index
    %39 = vector.load %arg0[%c0_11, %c0_12] : memref<512x64xf32, #tpu.memory_space<vmem>>, vector<512x64xf32>
    %cst = arith.constant dense<0.000000e+00> : vector<32x64xf32>
    %40 = tpu.matmul %38, %39, %cst {dimension_numbers = #tpu.dot_dimension_numbers<[1], [0], [0], [1], [0, 0, 1, 1], [], []>} : vector<32x512xf32>, vector<512x64xf32>, vector<32x64xf32> -> vector<32x64xf32>
    %c0_13 = arith.constant 0 : index
    %c0_14 = arith.constant 0 : index
    %41 = vector.load %arg2[%c0_13, %c0_14] : memref<32x1xf32, #tpu.memory_space<vmem>>, vector<32x1xf32>
    %42 = vector.broadcast %41 : vector<32x1xf32> to vector<32x64xf32>
    %43 = arith.addf %40, %42 : vector<32x64xf32>
    %cst_15 = arith.constant 0.000000e+00 : f32
    %44 = vector.broadcast %cst_15 : f32 to vector<32x64xf32>
    %45 = arith.maximumf %43, %44 : vector<32x64xf32>
    %c0_16 = arith.constant 0 : index
    %c0_17 = arith.constant 0 : index
    %46 = vector.load %arg3[%c0_16, %c0_17] : memref<32x1xf32, #tpu.memory_space<vmem>>, vector<32x1xf32>
    %47 = vector.broadcast %46 : vector<32x1xf32> to vector<32x64xf32>
    %48 = arith.mulf %45, %47 : vector<32x64xf32>
    %c0_18 = arith.constant 0 : index
    %c0_19 = arith.constant 0 : index
    %49 = vector.load %arg4[%c0_18, %c0_19] : memref<32x1xf32, #tpu.memory_space<vmem>>, vector<32x1xf32>
    %50 = vector.broadcast %49 : vector<32x1xf32> to vector<32x64xf32>
    %51 = arith.addf %48, %50 : vector<32x64xf32>
    %c0_20 = arith.constant 0 : index
    %c0_21 = arith.constant 0 : index
    %52 = vector.load %arg5[%c0_20, %c0_21] : memref<48x64xf32, #tpu.memory_space<vmem>>, vector<48x64xf32>
    %cst_22 = arith.constant 0.000000e+00 : f32
    %53 = vector.broadcast %cst_22 : f32 to vector<8x64xf32>
    %c0_23 = arith.constant 0 : index
    %c0_24 = arith.constant 0 : index
    %54 = vector.load %arg6[%c0_23, %c0_24] : memref<64x256xf32, #tpu.memory_space<vmem>>, vector<64x256xf32>
    %cst_25 = arith.constant dense<0.000000e+00> : vector<32x256xf32>
    %55 = tpu.matmul %51, %54, %cst_25 {dimension_numbers = #tpu.dot_dimension_numbers<[1], [0], [0], [1], [0, 0, 1, 1], [], []>} : vector<32x64xf32>, vector<64x256xf32>, vector<32x256xf32> -> vector<32x256xf32>
    %c0_26 = arith.constant 0 : index
    %c0_27 = arith.constant 0 : index
    %c0_28 = arith.constant 0 : index
    %56 = vector.load %arg10[%c0_26, %c0_27, %c0_28] : memref<2x1x256xf32, #tpu.memory_space<vmem>>, vector<1x1x256xf32>
    %57 = vector.shape_cast %56 : vector<1x1x256xf32> to vector<1x256xf32>
    %58 = vector.broadcast %57 : vector<1x256xf32> to vector<32x256xf32>
    %59 = arith.addf %55, %58 : vector<32x256xf32>
    %60 = vector.extract_strided_slice %59 {offsets = [24, 0], sizes = [8, 256], strides = [1, 1]} : vector<32x256xf32> to vector<8x256xf32>
    %61 = vector.extract_strided_slice %59 {offsets = [16, 0], sizes = [8, 256], strides = [1, 1]} : vector<32x256xf32> to vector<8x256xf32>
    %62 = vector.extract_strided_slice %59 {offsets = [8, 0], sizes = [8, 256], strides = [1, 1]} : vector<32x256xf32> to vector<8x256xf32>
    %63 = vector.extract_strided_slice %59 {offsets = [0, 0], sizes = [8, 256], strides = [1, 1]} : vector<32x256xf32> to vector<8x256xf32>
    %64 = tpu.concatenate %60, %61, %62, %63 in 0 : vector<8x256xf32>, vector<8x256xf32>, vector<8x256xf32>, vector<8x256xf32> -> vector<32x256xf32>
    %65 = vector.shape_cast %18 : vector<1x256xi1> to vector<1x256xi1>
    %66 = vector.broadcast %65 : vector<1x256xi1> to vector<32x256xi1>
    %67 = arith.select %66, %64, %59 : vector<32x256xi1>, vector<32x256xf32>
    %c0_29 = arith.constant 0 : index
    %c0_30 = arith.constant 0 : index
    %68 = vector.load %arg8[%c0_29, %c0_30] : memref<64x256xf32, #tpu.memory_space<vmem>>, vector<64x256xf32>
    %cst_31 = arith.constant dense<0.000000e+00> : vector<48x256xf32>
    %69 = tpu.matmul %52, %68, %cst_31 {dimension_numbers = #tpu.dot_dimension_numbers<[1], [0], [0], [1], [0, 0, 1, 1], [], []>} : vector<48x64xf32>, vector<64x256xf32>, vector<48x256xf32> -> vector<48x256xf32>
    %c0_32 = arith.constant 0 : index
    %c0_33 = arith.constant 0 : index
    %c0_34 = arith.constant 0 : index
    %70 = vector.load %arg11[%c0_32, %c0_33, %c0_34] : memref<2x1x256xf32, #tpu.memory_space<vmem>>, vector<1x1x256xf32>
    %71 = vector.shape_cast %70 : vector<1x1x256xf32> to vector<1x256xf32>
    %72 = vector.broadcast %71 : vector<1x256xf32> to vector<48x256xf32>
    %73 = arith.addf %69, %72 : vector<48x256xf32>
    %74 = vector.extract_strided_slice %73 {offsets = [40, 0], sizes = [8, 256], strides = [1, 1]} : vector<48x256xf32> to vector<8x256xf32>
    %75 = vector.extract_strided_slice %73 {offsets = [32, 0], sizes = [8, 256], strides = [1, 1]} : vector<48x256xf32> to vector<8x256xf32>
    %76 = vector.extract_strided_slice %73 {offsets = [24, 0], sizes = [8, 256], strides = [1, 1]} : vector<48x256xf32> to vector<8x256xf32>
    %77 = vector.extract_strided_slice %73 {offsets = [16, 0], sizes = [8, 256], strides = [1, 1]} : vector<48x256xf32> to vector<8x256xf32>
    %78 = vector.extract_strided_slice %73 {offsets = [8, 0], sizes = [8, 256], strides = [1, 1]} : vector<48x256xf32> to vector<8x256xf32>
    %79 = vector.extract_strided_slice %73 {offsets = [0, 0], sizes = [8, 256], strides = [1, 1]} : vector<48x256xf32> to vector<8x256xf32>
    %80 = tpu.concatenate %74, %75, %76, %77, %78, %79 in 0 : vector<8x256xf32>, vector<8x256xf32>, vector<8x256xf32>, vector<8x256xf32>, vector<8x256xf32>, vector<8x256xf32> -> vector<48x256xf32>
    %81 = vector.shape_cast %18 : vector<1x256xi1> to vector<1x256xi1>
    %82 = vector.broadcast %81 : vector<1x256xi1> to vector<48x256xi1>
    %83 = arith.select %82, %80, %73 : vector<48x256xi1>, vector<48x256xf32>
    %c0_35 = arith.constant 0 : index
    %c0_36 = arith.constant 0 : index
    %c0_37 = arith.constant 0 : index
    %84 = vector.load %arg12[%c0_35, %c0_36, %c0_37] : memref<2x64x256xbf16, #tpu.memory_space<vmem>>, vector<1x64x256xbf16>
    %85 = vector.shape_cast %84 : vector<1x64x256xbf16> to vector<64x256xbf16>
    %86 = tpu.iota {dimensions = array<i32: 1>} : vector<1x64xi32>
    %87 = vector.extract_strided_slice %67 {offsets = [0, 0], sizes = [8, 256], strides = [1, 1]} : vector<32x256xf32> to vector<8x256xf32>
    %88 = vector.extract_strided_slice %83 {offsets = [0, 0], sizes = [8, 256], strides = [1, 1]} : vector<48x256xf32> to vector<8x256xf32>
    %89 = arith.addf %87, %88 : vector<8x256xf32>
    %90 = arith.negf %89 : vector<8x256xf32>
    %91 = math.exp %90 : vector<8x256xf32>
    %cst_38 = arith.constant 1.000000e+00 : f32
    %92 = vector.broadcast %cst_38 : f32 to vector<8x256xf32>
    %93 = arith.addf %92, %91 : vector<8x256xf32>
    %94 = arith.divf %92, %93 : vector<8x256xf32>
    %95 = math.tanh %89 : vector<8x256xf32>
    %96 = vector.extract_strided_slice %94 {offsets = [0, 64], sizes = [8, 64], strides = [1, 1]} : vector<8x256xf32> to vector<8x64xf32>
    %97 = arith.mulf %96, %53 : vector<8x64xf32>
    %98 = vector.extract_strided_slice %94 {offsets = [0, 0], sizes = [8, 64], strides = [1, 1]} : vector<8x256xf32> to vector<8x64xf32>
    %99 = vector.extract_strided_slice %95 {offsets = [0, 128], sizes = [8, 64], strides = [1, 1]} : vector<8x256xf32> to vector<8x64xf32>
    %100 = arith.mulf %98, %99 : vector<8x64xf32>
    %101 = arith.addf %97, %100 : vector<8x64xf32>
    %102 = vector.extract_strided_slice %94 {offsets = [0, 192], sizes = [8, 64], strides = [1, 1]} : vector<8x256xf32> to vector<8x64xf32>
    %103 = math.tanh %101 : vector<8x64xf32>
    %104 = arith.mulf %102, %103 : vector<8x64xf32>
    %105 = vector.extract_strided_slice %67 {offsets = [8, 0], sizes = [8, 256], strides = [1, 1]} : vector<32x256xf32> to vector<8x256xf32>
    %106 = vector.extract_strided_slice %83 {offsets = [8, 0], sizes = [8, 256], strides = [1, 1]} : vector<48x256xf32> to vector<8x256xf32>
    %107 = arith.addf %105, %106 : vector<8x256xf32>
    %108 = arith.truncf %104 : vector<8x64xf32> to vector<8x64xbf16>
    %cst_39 = arith.constant dense<0.000000e+00> : vector<8x256xf32>
    %109 = tpu.matmul %108, %85, %cst_39 {dimension_numbers = #tpu.dot_dimension_numbers<[1], [0], [0], [1], [0, 0, 1, 1], [], []>} : vector<8x64xbf16>, vector<64x256xbf16>, vector<8x256xf32> -> vector<8x256xf32>
    %110 = arith.addf %107, %109 : vector<8x256xf32>
    %111 = arith.negf %110 : vector<8x256xf32>
    %112 = math.exp %111 : vector<8x256xf32>
    %cst_40 = arith.constant 1.000000e+00 : f32
    %113 = vector.broadcast %cst_40 : f32 to vector<8x256xf32>
    %114 = arith.addf %113, %112 : vector<8x256xf32>
    %115 = arith.divf %113, %114 : vector<8x256xf32>
    %116 = math.tanh %110 : vector<8x256xf32>
    %117 = vector.extract_strided_slice %115 {offsets = [0, 64], sizes = [8, 64], strides = [1, 1]} : vector<8x256xf32> to vector<8x64xf32>
    %118 = arith.mulf %117, %101 : vector<8x64xf32>
    %119 = vector.extract_strided_slice %115 {offsets = [0, 0], sizes = [8, 64], strides = [1, 1]} : vector<8x256xf32> to vector<8x64xf32>
    %120 = vector.extract_strided_slice %116 {offsets = [0, 128], sizes = [8, 64], strides = [1, 1]} : vector<8x256xf32> to vector<8x64xf32>
    %121 = arith.mulf %119, %120 : vector<8x64xf32>
    %122 = arith.addf %118, %121 : vector<8x64xf32>
    %123 = vector.extract_strided_slice %115 {offsets = [0, 192], sizes = [8, 64], strides = [1, 1]} : vector<8x256xf32> to vector<8x64xf32>
    %124 = math.tanh %122 : vector<8x64xf32>
    %125 = arith.mulf %123, %124 : vector<8x64xf32>
    %126 = vector.extract_strided_slice %67 {offsets = [16, 0], sizes = [8, 256], strides = [1, 1]} : vector<32x256xf32> to vector<8x256xf32>
    %127 = vector.extract_strided_slice %83 {offsets = [16, 0], sizes = [8, 256], strides = [1, 1]} : vector<48x256xf32> to vector<8x256xf32>
    %128 = arith.addf %126, %127 : vector<8x256xf32>
    %129 = arith.truncf %125 : vector<8x64xf32> to vector<8x64xbf16>
    %cst_41 = arith.constant dense<0.000000e+00> : vector<8x256xf32>
    %130 = tpu.matmul %129, %85, %cst_41 {dimension_numbers = #tpu.dot_dimension_numbers<[1], [0], [0], [1], [0, 0, 1, 1], [], []>} : vector<8x64xbf16>, vector<64x256xbf16>, vector<8x256xf32> -> vector<8x256xf32>
    %131 = arith.addf %128, %130 : vector<8x256xf32>
    %132 = arith.negf %131 : vector<8x256xf32>
    %133 = math.exp %132 : vector<8x256xf32>
    %cst_42 = arith.constant 1.000000e+00 : f32
    %134 = vector.broadcast %cst_42 : f32 to vector<8x256xf32>
    %135 = arith.addf %134, %133 : vector<8x256xf32>
    %136 = arith.divf %134, %135 : vector<8x256xf32>
    %137 = math.tanh %131 : vector<8x256xf32>
    %138 = vector.extract_strided_slice %136 {offsets = [0, 64], sizes = [8, 64], strides = [1, 1]} : vector<8x256xf32> to vector<8x64xf32>
    %139 = arith.mulf %138, %122 : vector<8x64xf32>
    %140 = vector.extract_strided_slice %136 {offsets = [0, 0], sizes = [8, 64], strides = [1, 1]} : vector<8x256xf32> to vector<8x64xf32>
    %141 = vector.extract_strided_slice %137 {offsets = [0, 128], sizes = [8, 64], strides = [1, 1]} : vector<8x256xf32> to vector<8x64xf32>
    %142 = arith.mulf %140, %141 : vector<8x64xf32>
    %143 = arith.addf %139, %142 : vector<8x64xf32>
    %144 = vector.extract_strided_slice %136 {offsets = [0, 192], sizes = [8, 64], strides = [1, 1]} : vector<8x256xf32> to vector<8x64xf32>
    %145 = math.tanh %143 : vector<8x64xf32>
    %146 = arith.mulf %144, %145 : vector<8x64xf32>
    %147 = vector.extract_strided_slice %67 {offsets = [24, 0], sizes = [8, 256], strides = [1, 1]} : vector<32x256xf32> to vector<8x256xf32>
    %148 = vector.extract_strided_slice %83 {offsets = [24, 0], sizes = [8, 256], strides = [1, 1]} : vector<48x256xf32> to vector<8x256xf32>
    %149 = arith.addf %147, %148 : vector<8x256xf32>
    %150 = arith.truncf %146 : vector<8x64xf32> to vector<8x64xbf16>
    %cst_43 = arith.constant dense<0.000000e+00> : vector<8x256xf32>
    %151 = tpu.matmul %150, %85, %cst_43 {dimension_numbers = #tpu.dot_dimension_numbers<[1], [0], [0], [1], [0, 0, 1, 1], [], []>} : vector<8x64xbf16>, vector<64x256xbf16>, vector<8x256xf32> -> vector<8x256xf32>
    %152 = arith.addf %149, %151 : vector<8x256xf32>
    %153 = arith.negf %152 : vector<8x256xf32>
    %154 = math.exp %153 : vector<8x256xf32>
    %cst_44 = arith.constant 1.000000e+00 : f32
    %155 = vector.broadcast %cst_44 : f32 to vector<8x256xf32>
    %156 = arith.addf %155, %154 : vector<8x256xf32>
    %157 = arith.divf %155, %156 : vector<8x256xf32>
    %158 = math.tanh %152 : vector<8x256xf32>
    %159 = vector.extract_strided_slice %157 {offsets = [0, 64], sizes = [8, 64], strides = [1, 1]} : vector<8x256xf32> to vector<8x64xf32>
    %160 = arith.mulf %159, %143 : vector<8x64xf32>
    %161 = vector.extract_strided_slice %157 {offsets = [0, 0], sizes = [8, 64], strides = [1, 1]} : vector<8x256xf32> to vector<8x64xf32>
    %162 = vector.extract_strided_slice %158 {offsets = [0, 128], sizes = [8, 64], strides = [1, 1]} : vector<8x256xf32> to vector<8x64xf32>
    %163 = arith.mulf %161, %162 : vector<8x64xf32>
    %164 = arith.addf %160, %163 : vector<8x64xf32>
    %165 = vector.extract_strided_slice %157 {offsets = [0, 192], sizes = [8, 64], strides = [1, 1]} : vector<8x256xf32> to vector<8x64xf32>
    %166 = math.tanh %164 : vector<8x64xf32>
    %167 = arith.mulf %165, %166 : vector<8x64xf32>
    %168 = vector.extract_strided_slice %83 {offsets = [32, 0], sizes = [8, 256], strides = [1, 1]} : vector<48x256xf32> to vector<8x256xf32>
    %169 = arith.truncf %167 : vector<8x64xf32> to vector<8x64xbf16>
    %cst_45 = arith.constant dense<0.000000e+00> : vector<8x256xf32>
    %170 = tpu.matmul %169, %85, %cst_45 {dimension_numbers = #tpu.dot_dimension_numbers<[1], [0], [0], [1], [0, 0, 1, 1], [], []>} : vector<8x64xbf16>, vector<64x256xbf16>, vector<8x256xf32> -> vector<8x256xf32>
    %171 = arith.addf %168, %170 : vector<8x256xf32>
    %172 = arith.negf %171 : vector<8x256xf32>
    %173 = math.exp %172 : vector<8x256xf32>
    %cst_46 = arith.constant 1.000000e+00 : f32
    %174 = vector.broadcast %cst_46 : f32 to vector<8x256xf32>
    %175 = arith.addf %174, %173 : vector<8x256xf32>
    %176 = arith.divf %174, %175 : vector<8x256xf32>
    %177 = math.tanh %171 : vector<8x256xf32>
    %178 = vector.extract_strided_slice %176 {offsets = [0, 64], sizes = [8, 64], strides = [1, 1]} : vector<8x256xf32> to vector<8x64xf32>
    %179 = arith.mulf %178, %164 : vector<8x64xf32>
    %180 = vector.extract_strided_slice %176 {offsets = [0, 0], sizes = [8, 64], strides = [1, 1]} : vector<8x256xf32> to vector<8x64xf32>
    %181 = vector.extract_strided_slice %177 {offsets = [0, 128], sizes = [8, 64], strides = [1, 1]} : vector<8x256xf32> to vector<8x64xf32>
    %182 = arith.mulf %180, %181 : vector<8x64xf32>
    %183 = arith.addf %179, %182 : vector<8x64xf32>
    %184 = vector.extract_strided_slice %176 {offsets = [0, 192], sizes = [8, 64], strides = [1, 1]} : vector<8x256xf32> to vector<8x64xf32>
    %185 = math.tanh %183 : vector<8x64xf32>
    %186 = arith.mulf %184, %185 : vector<8x64xf32>
    %c32_i32_47 = arith.constant 32 : i32
    %187 = vector.broadcast %c32_i32_47 : i32 to vector<1x64xi32>
    %188 = arith.cmpi sge, %86, %187 : vector<1x64xi32>
    %c64_i32 = arith.constant 64 : i32
    %189 = vector.broadcast %c64_i32 : i32 to vector<1x64xi32>
    %190 = arith.cmpi slt, %86, %189 : vector<1x64xi32>
    %191 = arith.andi %188, %190 : vector<1x64xi1>
    %192 = vector.shape_cast %191 : vector<1x64xi1> to vector<1x64xi1>
    %193 = vector.broadcast %192 : vector<1x64xi1> to vector<8x64xi1>
    %194 = arith.select %193, %183, %164 : vector<8x64xi1>, vector<8x64xf32>
    %195 = vector.shape_cast %191 : vector<1x64xi1> to vector<1x64xi1>
    %196 = vector.broadcast %195 : vector<1x64xi1> to vector<8x64xi1>
    %197 = arith.select %196, %186, %167 : vector<8x64xi1>, vector<8x64xf32>
    %198 = vector.extract_strided_slice %83 {offsets = [40, 0], sizes = [8, 256], strides = [1, 1]} : vector<48x256xf32> to vector<8x256xf32>
    %199 = arith.truncf %197 : vector<8x64xf32> to vector<8x64xbf16>
    %cst_48 = arith.constant dense<0.000000e+00> : vector<8x256xf32>
    %200 = tpu.matmul %199, %85, %cst_48 {dimension_numbers = #tpu.dot_dimension_numbers<[1], [0], [0], [1], [0, 0, 1, 1], [], []>} : vector<8x64xbf16>, vector<64x256xbf16>, vector<8x256xf32> -> vector<8x256xf32>
    %201 = arith.addf %198, %200 : vector<8x256xf32>
    %202 = arith.negf %201 : vector<8x256xf32>
    %203 = math.exp %202 : vector<8x256xf32>
    %cst_49 = arith.constant 1.000000e+00 : f32
    %204 = vector.broadcast %cst_49 : f32 to vector<8x256xf32>
    %205 = arith.addf %204, %203 : vector<8x256xf32>
    %206 = arith.divf %204, %205 : vector<8x256xf32>
    %207 = math.tanh %201 : vector<8x256xf32>
    %208 = vector.extract_strided_slice %206 {offsets = [0, 64], sizes = [8, 64], strides = [1, 1]} : vector<8x256xf32> to vector<8x64xf32>
    %209 = arith.mulf %208, %194 : vector<8x64xf32>
    %210 = vector.extract_strided_slice %206 {offsets = [0, 0], sizes = [8, 64], strides = [1, 1]} : vector<8x256xf32> to vector<8x64xf32>
    %211 = vector.extract_strided_slice %207 {offsets = [0, 128], sizes = [8, 64], strides = [1, 1]} : vector<8x256xf32> to vector<8x64xf32>
    %212 = arith.mulf %210, %211 : vector<8x64xf32>
    %213 = arith.addf %209, %212 : vector<8x64xf32>
    %214 = vector.extract_strided_slice %206 {offsets = [0, 192], sizes = [8, 64], strides = [1, 1]} : vector<8x256xf32> to vector<8x64xf32>
    %215 = math.tanh %213 : vector<8x64xf32>
    %216 = arith.mulf %214, %215 : vector<8x64xf32>
    %c32_i32_50 = arith.constant 32 : i32
    %217 = vector.broadcast %c32_i32_50 : i32 to vector<1x64xi32>
    %218 = arith.cmpi sge, %86, %217 : vector<1x64xi32>
    %c64_i32_51 = arith.constant 64 : i32
    %219 = vector.broadcast %c64_i32_51 : i32 to vector<1x64xi32>
    %220 = arith.cmpi slt, %86, %219 : vector<1x64xi32>
    %221 = arith.andi %218, %220 : vector<1x64xi1>
    %222 = vector.shape_cast %221 : vector<1x64xi1> to vector<1x64xi1>
    %223 = vector.broadcast %222 : vector<1x64xi1> to vector<8x64xi1>
    %224 = arith.select %223, %213, %194 : vector<8x64xi1>, vector<8x64xf32>
    %225 = vector.shape_cast %221 : vector<1x64xi1> to vector<1x64xi1>
    %226 = vector.broadcast %225 : vector<1x64xi1> to vector<8x64xi1>
    %227 = arith.select %226, %216, %197 : vector<8x64xi1>, vector<8x64xf32>
    %c0_52 = arith.constant 0 : index
    %c0_53 = arith.constant 0 : index
    %c0_54 = arith.constant 0 : index
    %228 = vector.load %arg13[%c0_52, %c0_53, %c0_54] : memref<2x32x16xf32, #tpu.memory_space<vmem>>, vector<1x32x16xf32>
    %229 = vector.shape_cast %228 : vector<1x32x16xf32> to vector<32x16xf32>
    %230 = vector.extract_strided_slice %104 {offsets = [0, 0], sizes = [8, 32], strides = [1, 1]} : vector<8x64xf32> to vector<8x32xf32>
    %231 = vector.extract_strided_slice %125 {offsets = [0, 0], sizes = [8, 32], strides = [1, 1]} : vector<8x64xf32> to vector<8x32xf32>
    %232 = vector.extract_strided_slice %146 {offsets = [0, 0], sizes = [8, 32], strides = [1, 1]} : vector<8x64xf32> to vector<8x32xf32>
    %233 = vector.extract_strided_slice %167 {offsets = [0, 0], sizes = [8, 32], strides = [1, 1]} : vector<8x64xf32> to vector<8x32xf32>
    %234 = tpu.concatenate %230, %231, %232, %233 in 0 : vector<8x32xf32>, vector<8x32xf32>, vector<8x32xf32>, vector<8x32xf32> -> vector<32x32xf32>
    %cst_55 = arith.constant dense<0.000000e+00> : vector<32x16xf32>
    %235 = tpu.matmul %234, %229, %cst_55 {dimension_numbers = #tpu.dot_dimension_numbers<[1], [0], [0], [1], [0, 0, 1, 1], [], []>} : vector<32x32xf32>, vector<32x16xf32>, vector<32x16xf32> -> vector<32x16xf32>
    %236 = vector.extract_strided_slice %235 {offsets = [0, 0], sizes = [8, 8], strides = [1, 1]} : vector<32x16xf32> to vector<8x8xf32>
    %237 = vector.extract_strided_slice %235 {offsets = [24, 8], sizes = [8, 8], strides = [1, 1]} : vector<32x16xf32> to vector<8x8xf32>
    %238 = tpu.concatenate %236, %237 in 1 : vector<8x8xf32>, vector<8x8xf32> -> vector<8x16xf32>
    %239 = vector.extract_strided_slice %235 {offsets = [8, 0], sizes = [8, 8], strides = [1, 1]} : vector<32x16xf32> to vector<8x8xf32>
    %240 = vector.extract_strided_slice %235 {offsets = [16, 8], sizes = [8, 8], strides = [1, 1]} : vector<32x16xf32> to vector<8x8xf32>
    %241 = tpu.concatenate %239, %240 in 1 : vector<8x8xf32>, vector<8x8xf32> -> vector<8x16xf32>
    %242 = vector.extract_strided_slice %235 {offsets = [16, 0], sizes = [8, 8], strides = [1, 1]} : vector<32x16xf32> to vector<8x8xf32>
    %243 = vector.extract_strided_slice %235 {offsets = [8, 8], sizes = [8, 8], strides = [1, 1]} : vector<32x16xf32> to vector<8x8xf32>
    %244 = tpu.concatenate %242, %243 in 1 : vector<8x8xf32>, vector<8x8xf32> -> vector<8x16xf32>
    %245 = vector.extract_strided_slice %235 {offsets = [24, 0], sizes = [8, 8], strides = [1, 1]} : vector<32x16xf32> to vector<8x8xf32>
    %246 = vector.extract_strided_slice %235 {offsets = [0, 8], sizes = [8, 8], strides = [1, 1]} : vector<32x16xf32> to vector<8x8xf32>
    %247 = tpu.concatenate %245, %246 in 1 : vector<8x8xf32>, vector<8x8xf32> -> vector<8x16xf32>
    %248 = tpu.concatenate %238, %241, %244, %247 in 0 : vector<8x16xf32>, vector<8x16xf32>, vector<8x16xf32>, vector<8x16xf32> -> vector<32x16xf32>
    %249 = vector.extract_strided_slice %235 {offsets = [24, 0], sizes = [8, 16], strides = [1, 1]} : vector<32x16xf32> to vector<8x16xf32>
    %c0_56 = arith.constant 0 : index
    %c0_57 = arith.constant 0 : index
    %c0_58 = arith.constant 0 : index
    %250 = vector.load %arg14[%c0_56, %c0_57, %c0_58] : memref<2x32x16xf32, #tpu.memory_space<vmem>>, vector<1x32x16xf32>
    %251 = vector.shape_cast %250 : vector<1x32x16xf32> to vector<32x16xf32>
    %252 = vector.extract_strided_slice %104 {offsets = [0, 32], sizes = [8, 32], strides = [1, 1]} : vector<8x64xf32> to vector<8x32xf32>
    %253 = vector.extract_strided_slice %125 {offsets = [0, 32], sizes = [8, 32], strides = [1, 1]} : vector<8x64xf32> to vector<8x32xf32>
    %254 = vector.extract_strided_slice %146 {offsets = [0, 32], sizes = [8, 32], strides = [1, 1]} : vector<8x64xf32> to vector<8x32xf32>
    %255 = vector.extract_strided_slice %167 {offsets = [0, 32], sizes = [8, 32], strides = [1, 1]} : vector<8x64xf32> to vector<8x32xf32>
    %256 = vector.extract_strided_slice %197 {offsets = [0, 32], sizes = [8, 32], strides = [1, 1]} : vector<8x64xf32> to vector<8x32xf32>
    %257 = vector.extract_strided_slice %227 {offsets = [0, 32], sizes = [8, 32], strides = [1, 1]} : vector<8x64xf32> to vector<8x32xf32>
    %258 = tpu.concatenate %252, %253, %254, %255, %256, %257 in 0 : vector<8x32xf32>, vector<8x32xf32>, vector<8x32xf32>, vector<8x32xf32>, vector<8x32xf32>, vector<8x32xf32> -> vector<48x32xf32>
    %cst_59 = arith.constant dense<0.000000e+00> : vector<48x16xf32>
    %259 = tpu.matmul %258, %251, %cst_59 {dimension_numbers = #tpu.dot_dimension_numbers<[1], [0], [0], [1], [0, 0, 1, 1], [], []>} : vector<48x32xf32>, vector<32x16xf32>, vector<48x16xf32> -> vector<48x16xf32>
    %260 = vector.extract_strided_slice %259 {offsets = [0, 0], sizes = [8, 8], strides = [1, 1]} : vector<48x16xf32> to vector<8x8xf32>
    %261 = vector.extract_strided_slice %259 {offsets = [40, 8], sizes = [8, 8], strides = [1, 1]} : vector<48x16xf32> to vector<8x8xf32>
    %262 = tpu.concatenate %260, %261 in 1 : vector<8x8xf32>, vector<8x8xf32> -> vector<8x16xf32>
    %263 = vector.extract_strided_slice %259 {offsets = [8, 0], sizes = [8, 8], strides = [1, 1]} : vector<48x16xf32> to vector<8x8xf32>
    %264 = vector.extract_strided_slice %259 {offsets = [32, 8], sizes = [8, 8], strides = [1, 1]} : vector<48x16xf32> to vector<8x8xf32>
    %265 = tpu.concatenate %263, %264 in 1 : vector<8x8xf32>, vector<8x8xf32> -> vector<8x16xf32>
    %266 = vector.extract_strided_slice %259 {offsets = [16, 0], sizes = [8, 8], strides = [1, 1]} : vector<48x16xf32> to vector<8x8xf32>
    %267 = vector.extract_strided_slice %259 {offsets = [24, 8], sizes = [8, 8], strides = [1, 1]} : vector<48x16xf32> to vector<8x8xf32>
    %268 = tpu.concatenate %266, %267 in 1 : vector<8x8xf32>, vector<8x8xf32> -> vector<8x16xf32>
    %269 = vector.extract_strided_slice %259 {offsets = [24, 0], sizes = [8, 8], strides = [1, 1]} : vector<48x16xf32> to vector<8x8xf32>
    %270 = vector.extract_strided_slice %259 {offsets = [16, 8], sizes = [8, 8], strides = [1, 1]} : vector<48x16xf32> to vector<8x8xf32>
    %271 = tpu.concatenate %269, %270 in 1 : vector<8x8xf32>, vector<8x8xf32> -> vector<8x16xf32>
    %272 = vector.extract_strided_slice %259 {offsets = [32, 0], sizes = [8, 8], strides = [1, 1]} : vector<48x16xf32> to vector<8x8xf32>
    %273 = vector.extract_strided_slice %259 {offsets = [8, 8], sizes = [8, 8], strides = [1, 1]} : vector<48x16xf32> to vector<8x8xf32>
    %274 = tpu.concatenate %272, %273 in 1 : vector<8x8xf32>, vector<8x8xf32> -> vector<8x16xf32>
    %275 = vector.extract_strided_slice %259 {offsets = [40, 0], sizes = [8, 8], strides = [1, 1]} : vector<48x16xf32> to vector<8x8xf32>
    %276 = vector.extract_strided_slice %259 {offsets = [0, 8], sizes = [8, 8], strides = [1, 1]} : vector<48x16xf32> to vector<8x8xf32>
    %277 = tpu.concatenate %275, %276 in 1 : vector<8x8xf32>, vector<8x8xf32> -> vector<8x16xf32>
    %278 = tpu.concatenate %262, %265, %268, %271, %274, %277 in 0 : vector<8x16xf32>, vector<8x16xf32>, vector<8x16xf32>, vector<8x16xf32>, vector<8x16xf32>, vector<8x16xf32> -> vector<48x16xf32>
    %279 = vector.extract_strided_slice %259 {offsets = [40, 0], sizes = [8, 16], strides = [1, 1]} : vector<48x16xf32> to vector<8x16xf32>
    %280 = vector.extract_strided_slice %224 {offsets = [0, 0], sizes = [8, 32], strides = [1, 1]} : vector<8x64xf32> to vector<8x32xf32>
    %281 = vector.extract_strided_slice %224 {offsets = [0, 32], sizes = [8, 32], strides = [1, 1]} : vector<8x64xf32> to vector<8x32xf32>
    %c0_60 = arith.constant 0 : index
    %c0_61 = arith.constant 0 : index
    %282 = vector.load %arg7[%c0_60, %c0_61] : memref<16x256xf32, #tpu.memory_space<vmem>>, vector<16x256xf32>
    %cst_62 = arith.constant dense<0.000000e+00> : vector<32x256xf32>
    %283 = tpu.matmul %248, %282, %cst_62 {dimension_numbers = #tpu.dot_dimension_numbers<[1], [0], [0], [1], [0, 0, 1, 1], [], []>} : vector<32x16xf32>, vector<16x256xf32>, vector<32x256xf32> -> vector<32x256xf32>
    %c1 = arith.constant 1 : index
    %c0_63 = arith.constant 0 : index
    %c0_64 = arith.constant 0 : index
    %284 = vector.load %arg10[%c1, %c0_63, %c0_64] : memref<2x1x256xf32, #tpu.memory_space<vmem>>, vector<1x1x256xf32>
    %285 = vector.shape_cast %284 : vector<1x1x256xf32> to vector<1x256xf32>
    %286 = vector.broadcast %285 : vector<1x256xf32> to vector<32x256xf32>
    %287 = arith.addf %283, %286 : vector<32x256xf32>
    %288 = vector.extract_strided_slice %287 {offsets = [24, 0], sizes = [8, 256], strides = [1, 1]} : vector<32x256xf32> to vector<8x256xf32>
    %289 = vector.extract_strided_slice %287 {offsets = [16, 0], sizes = [8, 256], strides = [1, 1]} : vector<32x256xf32> to vector<8x256xf32>
    %290 = vector.extract_strided_slice %287 {offsets = [8, 0], sizes = [8, 256], strides = [1, 1]} : vector<32x256xf32> to vector<8x256xf32>
    %291 = vector.extract_strided_slice %287 {offsets = [0, 0], sizes = [8, 256], strides = [1, 1]} : vector<32x256xf32> to vector<8x256xf32>
    %292 = tpu.concatenate %288, %289, %290, %291 in 0 : vector<8x256xf32>, vector<8x256xf32>, vector<8x256xf32>, vector<8x256xf32> -> vector<32x256xf32>
    %293 = vector.shape_cast %18 : vector<1x256xi1> to vector<1x256xi1>
    %294 = vector.broadcast %293 : vector<1x256xi1> to vector<32x256xi1>
    %295 = arith.select %294, %292, %287 : vector<32x256xi1>, vector<32x256xf32>
    %c0_65 = arith.constant 0 : index
    %c0_66 = arith.constant 0 : index
    %296 = vector.load %arg9[%c0_65, %c0_66] : memref<16x256xf32, #tpu.memory_space<vmem>>, vector<16x256xf32>
    %cst_67 = arith.constant dense<0.000000e+00> : vector<48x256xf32>
    %297 = tpu.matmul %278, %296, %cst_67 {dimension_numbers = #tpu.dot_dimension_numbers<[1], [0], [0], [1], [0, 0, 1, 1], [], []>} : vector<48x16xf32>, vector<16x256xf32>, vector<48x256xf32> -> vector<48x256xf32>
    %c1_68 = arith.constant 1 : index
    %c0_69 = arith.constant 0 : index
    %c0_70 = arith.constant 0 : index
    %298 = vector.load %arg11[%c1_68, %c0_69, %c0_70] : memref<2x1x256xf32, #tpu.memory_space<vmem>>, vector<1x1x256xf32>
    %299 = vector.shape_cast %298 : vector<1x1x256xf32> to vector<1x256xf32>
    %300 = vector.broadcast %299 : vector<1x256xf32> to vector<48x256xf32>
    %301 = arith.addf %297, %300 : vector<48x256xf32>
    %302 = vector.extract_strided_slice %301 {offsets = [40, 0], sizes = [8, 256], strides = [1, 1]} : vector<48x256xf32> to vector<8x256xf32>
    %303 = vector.extract_strided_slice %301 {offsets = [32, 0], sizes = [8, 256], strides = [1, 1]} : vector<48x256xf32> to vector<8x256xf32>
    %304 = vector.extract_strided_slice %301 {offsets = [24, 0], sizes = [8, 256], strides = [1, 1]} : vector<48x256xf32> to vector<8x256xf32>
    %305 = vector.extract_strided_slice %301 {offsets = [16, 0], sizes = [8, 256], strides = [1, 1]} : vector<48x256xf32> to vector<8x256xf32>
    %306 = vector.extract_strided_slice %301 {offsets = [8, 0], sizes = [8, 256], strides = [1, 1]} : vector<48x256xf32> to vector<8x256xf32>
    %307 = vector.extract_strided_slice %301 {offsets = [0, 0], sizes = [8, 256], strides = [1, 1]} : vector<48x256xf32> to vector<8x256xf32>
    %308 = tpu.concatenate %302, %303, %304, %305, %306, %307 in 0 : vector<8x256xf32>, vector<8x256xf32>, vector<8x256xf32>, vector<8x256xf32>, vector<8x256xf32>, vector<8x256xf32> -> vector<48x256xf32>
    %309 = vector.shape_cast %18 : vector<1x256xi1> to vector<1x256xi1>
    %310 = vector.broadcast %309 : vector<1x256xi1> to vector<48x256xi1>
    %311 = arith.select %310, %308, %301 : vector<48x256xi1>, vector<48x256xf32>
    %c1_71 = arith.constant 1 : index
    %c0_72 = arith.constant 0 : index
    %c0_73 = arith.constant 0 : index
    %312 = vector.load %arg12[%c1_71, %c0_72, %c0_73] : memref<2x64x256xbf16, #tpu.memory_space<vmem>>, vector<1x64x256xbf16>
    %313 = vector.shape_cast %312 : vector<1x64x256xbf16> to vector<64x256xbf16>
    %314 = tpu.iota {dimensions = array<i32: 1>} : vector<1x64xi32>
    %315 = vector.extract_strided_slice %295 {offsets = [0, 0], sizes = [8, 256], strides = [1, 1]} : vector<32x256xf32> to vector<8x256xf32>
    %316 = vector.extract_strided_slice %311 {offsets = [0, 0], sizes = [8, 256], strides = [1, 1]} : vector<48x256xf32> to vector<8x256xf32>
    %317 = arith.addf %315, %316 : vector<8x256xf32>
    %318 = arith.negf %317 : vector<8x256xf32>
    %319 = math.exp %318 : vector<8x256xf32>
    %cst_74 = arith.constant 1.000000e+00 : f32
    %320 = vector.broadcast %cst_74 : f32 to vector<8x256xf32>
    %321 = arith.addf %320, %319 : vector<8x256xf32>
    %322 = arith.divf %320, %321 : vector<8x256xf32>
    %323 = math.tanh %317 : vector<8x256xf32>
    %324 = vector.extract_strided_slice %322 {offsets = [0, 64], sizes = [8, 64], strides = [1, 1]} : vector<8x256xf32> to vector<8x64xf32>
    %325 = arith.mulf %324, %53 : vector<8x64xf32>
    %326 = vector.extract_strided_slice %322 {offsets = [0, 0], sizes = [8, 64], strides = [1, 1]} : vector<8x256xf32> to vector<8x64xf32>
    %327 = vector.extract_strided_slice %323 {offsets = [0, 128], sizes = [8, 64], strides = [1, 1]} : vector<8x256xf32> to vector<8x64xf32>
    %328 = arith.mulf %326, %327 : vector<8x64xf32>
    %329 = arith.addf %325, %328 : vector<8x64xf32>
    %330 = vector.extract_strided_slice %322 {offsets = [0, 192], sizes = [8, 64], strides = [1, 1]} : vector<8x256xf32> to vector<8x64xf32>
    %331 = math.tanh %329 : vector<8x64xf32>
    %332 = arith.mulf %330, %331 : vector<8x64xf32>
    %333 = vector.extract_strided_slice %295 {offsets = [8, 0], sizes = [8, 256], strides = [1, 1]} : vector<32x256xf32> to vector<8x256xf32>
    %334 = vector.extract_strided_slice %311 {offsets = [8, 0], sizes = [8, 256], strides = [1, 1]} : vector<48x256xf32> to vector<8x256xf32>
    %335 = arith.addf %333, %334 : vector<8x256xf32>
    %336 = arith.truncf %332 : vector<8x64xf32> to vector<8x64xbf16>
    %cst_75 = arith.constant dense<0.000000e+00> : vector<8x256xf32>
    %337 = tpu.matmul %336, %313, %cst_75 {dimension_numbers = #tpu.dot_dimension_numbers<[1], [0], [0], [1], [0, 0, 1, 1], [], []>} : vector<8x64xbf16>, vector<64x256xbf16>, vector<8x256xf32> -> vector<8x256xf32>
    %338 = arith.addf %335, %337 : vector<8x256xf32>
    %339 = arith.negf %338 : vector<8x256xf32>
    %340 = math.exp %339 : vector<8x256xf32>
    %cst_76 = arith.constant 1.000000e+00 : f32
    %341 = vector.broadcast %cst_76 : f32 to vector<8x256xf32>
    %342 = arith.addf %341, %340 : vector<8x256xf32>
    %343 = arith.divf %341, %342 : vector<8x256xf32>
    %344 = math.tanh %338 : vector<8x256xf32>
    %345 = vector.extract_strided_slice %343 {offsets = [0, 64], sizes = [8, 64], strides = [1, 1]} : vector<8x256xf32> to vector<8x64xf32>
    %346 = arith.mulf %345, %329 : vector<8x64xf32>
    %347 = vector.extract_strided_slice %343 {offsets = [0, 0], sizes = [8, 64], strides = [1, 1]} : vector<8x256xf32> to vector<8x64xf32>
    %348 = vector.extract_strided_slice %344 {offsets = [0, 128], sizes = [8, 64], strides = [1, 1]} : vector<8x256xf32> to vector<8x64xf32>
    %349 = arith.mulf %347, %348 : vector<8x64xf32>
    %350 = arith.addf %346, %349 : vector<8x64xf32>
    %351 = vector.extract_strided_slice %343 {offsets = [0, 192], sizes = [8, 64], strides = [1, 1]} : vector<8x256xf32> to vector<8x64xf32>
    %352 = math.tanh %350 : vector<8x64xf32>
    %353 = arith.mulf %351, %352 : vector<8x64xf32>
    %354 = vector.extract_strided_slice %295 {offsets = [16, 0], sizes = [8, 256], strides = [1, 1]} : vector<32x256xf32> to vector<8x256xf32>
    %355 = vector.extract_strided_slice %311 {offsets = [16, 0], sizes = [8, 256], strides = [1, 1]} : vector<48x256xf32> to vector<8x256xf32>
    %356 = arith.addf %354, %355 : vector<8x256xf32>
    %357 = arith.truncf %353 : vector<8x64xf32> to vector<8x64xbf16>
    %cst_77 = arith.constant dense<0.000000e+00> : vector<8x256xf32>
    %358 = tpu.matmul %357, %313, %cst_77 {dimension_numbers = #tpu.dot_dimension_numbers<[1], [0], [0], [1], [0, 0, 1, 1], [], []>} : vector<8x64xbf16>, vector<64x256xbf16>, vector<8x256xf32> -> vector<8x256xf32>
    %359 = arith.addf %356, %358 : vector<8x256xf32>
    %360 = arith.negf %359 : vector<8x256xf32>
    %361 = math.exp %360 : vector<8x256xf32>
    %cst_78 = arith.constant 1.000000e+00 : f32
    %362 = vector.broadcast %cst_78 : f32 to vector<8x256xf32>
    %363 = arith.addf %362, %361 : vector<8x256xf32>
    %364 = arith.divf %362, %363 : vector<8x256xf32>
    %365 = math.tanh %359 : vector<8x256xf32>
    %366 = vector.extract_strided_slice %364 {offsets = [0, 64], sizes = [8, 64], strides = [1, 1]} : vector<8x256xf32> to vector<8x64xf32>
    %367 = arith.mulf %366, %350 : vector<8x64xf32>
    %368 = vector.extract_strided_slice %364 {offsets = [0, 0], sizes = [8, 64], strides = [1, 1]} : vector<8x256xf32> to vector<8x64xf32>
    %369 = vector.extract_strided_slice %365 {offsets = [0, 128], sizes = [8, 64], strides = [1, 1]} : vector<8x256xf32> to vector<8x64xf32>
    %370 = arith.mulf %368, %369 : vector<8x64xf32>
    %371 = arith.addf %367, %370 : vector<8x64xf32>
    %372 = vector.extract_strided_slice %364 {offsets = [0, 192], sizes = [8, 64], strides = [1, 1]} : vector<8x256xf32> to vector<8x64xf32>
    %373 = math.tanh %371 : vector<8x64xf32>
    %374 = arith.mulf %372, %373 : vector<8x64xf32>
    %375 = vector.extract_strided_slice %295 {offsets = [24, 0], sizes = [8, 256], strides = [1, 1]} : vector<32x256xf32> to vector<8x256xf32>
    %376 = vector.extract_strided_slice %311 {offsets = [24, 0], sizes = [8, 256], strides = [1, 1]} : vector<48x256xf32> to vector<8x256xf32>
    %377 = arith.addf %375, %376 : vector<8x256xf32>
    %378 = arith.truncf %374 : vector<8x64xf32> to vector<8x64xbf16>
    %cst_79 = arith.constant dense<0.000000e+00> : vector<8x256xf32>
    %379 = tpu.matmul %378, %313, %cst_79 {dimension_numbers = #tpu.dot_dimension_numbers<[1], [0], [0], [1], [0, 0, 1, 1], [], []>} : vector<8x64xbf16>, vector<64x256xbf16>, vector<8x256xf32> -> vector<8x256xf32>
    %380 = arith.addf %377, %379 : vector<8x256xf32>
    %381 = arith.negf %380 : vector<8x256xf32>
    %382 = math.exp %381 : vector<8x256xf32>
    %cst_80 = arith.constant 1.000000e+00 : f32
    %383 = vector.broadcast %cst_80 : f32 to vector<8x256xf32>
    %384 = arith.addf %383, %382 : vector<8x256xf32>
    %385 = arith.divf %383, %384 : vector<8x256xf32>
    %386 = math.tanh %380 : vector<8x256xf32>
    %387 = vector.extract_strided_slice %385 {offsets = [0, 64], sizes = [8, 64], strides = [1, 1]} : vector<8x256xf32> to vector<8x64xf32>
    %388 = arith.mulf %387, %371 : vector<8x64xf32>
    %389 = vector.extract_strided_slice %385 {offsets = [0, 0], sizes = [8, 64], strides = [1, 1]} : vector<8x256xf32> to vector<8x64xf32>
    %390 = vector.extract_strided_slice %386 {offsets = [0, 128], sizes = [8, 64], strides = [1, 1]} : vector<8x256xf32> to vector<8x64xf32>
    %391 = arith.mulf %389, %390 : vector<8x64xf32>
    %392 = arith.addf %388, %391 : vector<8x64xf32>
    %393 = vector.extract_strided_slice %385 {offsets = [0, 192], sizes = [8, 64], strides = [1, 1]} : vector<8x256xf32> to vector<8x64xf32>
    %394 = math.tanh %392 : vector<8x64xf32>
    %395 = arith.mulf %393, %394 : vector<8x64xf32>
    %396 = vector.extract_strided_slice %311 {offsets = [32, 0], sizes = [8, 256], strides = [1, 1]} : vector<48x256xf32> to vector<8x256xf32>
    %397 = arith.truncf %395 : vector<8x64xf32> to vector<8x64xbf16>
    %cst_81 = arith.constant dense<0.000000e+00> : vector<8x256xf32>
    %398 = tpu.matmul %397, %313, %cst_81 {dimension_numbers = #tpu.dot_dimension_numbers<[1], [0], [0], [1], [0, 0, 1, 1], [], []>} : vector<8x64xbf16>, vector<64x256xbf16>, vector<8x256xf32> -> vector<8x256xf32>
    %399 = arith.addf %396, %398 : vector<8x256xf32>
    %400 = arith.negf %399 : vector<8x256xf32>
    %401 = math.exp %400 : vector<8x256xf32>
    %cst_82 = arith.constant 1.000000e+00 : f32
    %402 = vector.broadcast %cst_82 : f32 to vector<8x256xf32>
    %403 = arith.addf %402, %401 : vector<8x256xf32>
    %404 = arith.divf %402, %403 : vector<8x256xf32>
    %405 = math.tanh %399 : vector<8x256xf32>
    %406 = vector.extract_strided_slice %404 {offsets = [0, 64], sizes = [8, 64], strides = [1, 1]} : vector<8x256xf32> to vector<8x64xf32>
    %407 = arith.mulf %406, %392 : vector<8x64xf32>
    %408 = vector.extract_strided_slice %404 {offsets = [0, 0], sizes = [8, 64], strides = [1, 1]} : vector<8x256xf32> to vector<8x64xf32>
    %409 = vector.extract_strided_slice %405 {offsets = [0, 128], sizes = [8, 64], strides = [1, 1]} : vector<8x256xf32> to vector<8x64xf32>
    %410 = arith.mulf %408, %409 : vector<8x64xf32>
    %411 = arith.addf %407, %410 : vector<8x64xf32>
    %412 = vector.extract_strided_slice %404 {offsets = [0, 192], sizes = [8, 64], strides = [1, 1]} : vector<8x256xf32> to vector<8x64xf32>
    %413 = math.tanh %411 : vector<8x64xf32>
    %414 = arith.mulf %412, %413 : vector<8x64xf32>
    %c32_i32_83 = arith.constant 32 : i32
    %415 = vector.broadcast %c32_i32_83 : i32 to vector<1x64xi32>
    %416 = arith.cmpi sge, %314, %415 : vector<1x64xi32>
    %c64_i32_84 = arith.constant 64 : i32
    %417 = vector.broadcast %c64_i32_84 : i32 to vector<1x64xi32>
    %418 = arith.cmpi slt, %314, %417 : vector<1x64xi32>
    %419 = arith.andi %416, %418 : vector<1x64xi1>
    %420 = vector.shape_cast %419 : vector<1x64xi1> to vector<1x64xi1>
    %421 = vector.broadcast %420 : vector<1x64xi1> to vector<8x64xi1>
    %422 = arith.select %421, %411, %392 : vector<8x64xi1>, vector<8x64xf32>
    %423 = vector.shape_cast %419 : vector<1x64xi1> to vector<1x64xi1>
    %424 = vector.broadcast %423 : vector<1x64xi1> to vector<8x64xi1>
    %425 = arith.select %424, %414, %395 : vector<8x64xi1>, vector<8x64xf32>
    %426 = vector.extract_strided_slice %311 {offsets = [40, 0], sizes = [8, 256], strides = [1, 1]} : vector<48x256xf32> to vector<8x256xf32>
    %427 = arith.truncf %425 : vector<8x64xf32> to vector<8x64xbf16>
    %cst_85 = arith.constant dense<0.000000e+00> : vector<8x256xf32>
    %428 = tpu.matmul %427, %313, %cst_85 {dimension_numbers = #tpu.dot_dimension_numbers<[1], [0], [0], [1], [0, 0, 1, 1], [], []>} : vector<8x64xbf16>, vector<64x256xbf16>, vector<8x256xf32> -> vector<8x256xf32>
    %429 = arith.addf %426, %428 : vector<8x256xf32>
    %430 = arith.negf %429 : vector<8x256xf32>
    %431 = math.exp %430 : vector<8x256xf32>
    %cst_86 = arith.constant 1.000000e+00 : f32
    %432 = vector.broadcast %cst_86 : f32 to vector<8x256xf32>
    %433 = arith.addf %432, %431 : vector<8x256xf32>
    %434 = arith.divf %432, %433 : vector<8x256xf32>
    %435 = math.tanh %429 : vector<8x256xf32>
    %436 = vector.extract_strided_slice %434 {offsets = [0, 64], sizes = [8, 64], strides = [1, 1]} : vector<8x256xf32> to vector<8x64xf32>
    %437 = arith.mulf %436, %422 : vector<8x64xf32>
    %438 = vector.extract_strided_slice %434 {offsets = [0, 0], sizes = [8, 64], strides = [1, 1]} : vector<8x256xf32> to vector<8x64xf32>
    %439 = vector.extract_strided_slice %435 {offsets = [0, 128], sizes = [8, 64], strides = [1, 1]} : vector<8x256xf32> to vector<8x64xf32>
    %440 = arith.mulf %438, %439 : vector<8x64xf32>
    %441 = arith.addf %437, %440 : vector<8x64xf32>
    %442 = vector.extract_strided_slice %434 {offsets = [0, 192], sizes = [8, 64], strides = [1, 1]} : vector<8x256xf32> to vector<8x64xf32>
    %443 = math.tanh %441 : vector<8x64xf32>
    %444 = arith.mulf %442, %443 : vector<8x64xf32>
    %c32_i32_87 = arith.constant 32 : i32
    %445 = vector.broadcast %c32_i32_87 : i32 to vector<1x64xi32>
    %446 = arith.cmpi sge, %314, %445 : vector<1x64xi32>
    %c64_i32_88 = arith.constant 64 : i32
    %447 = vector.broadcast %c64_i32_88 : i32 to vector<1x64xi32>
    %448 = arith.cmpi slt, %314, %447 : vector<1x64xi32>
    %449 = arith.andi %446, %448 : vector<1x64xi1>
    %450 = vector.shape_cast %449 : vector<1x64xi1> to vector<1x64xi1>
    %451 = vector.broadcast %450 : vector<1x64xi1> to vector<8x64xi1>
    %452 = arith.select %451, %441, %422 : vector<8x64xi1>, vector<8x64xf32>
    %453 = vector.shape_cast %449 : vector<1x64xi1> to vector<1x64xi1>
    %454 = vector.broadcast %453 : vector<1x64xi1> to vector<8x64xi1>
    %455 = arith.select %454, %444, %425 : vector<8x64xi1>, vector<8x64xf32>
    %c1_89 = arith.constant 1 : index
    %c0_90 = arith.constant 0 : index
    %c0_91 = arith.constant 0 : index
    %456 = vector.load %arg13[%c1_89, %c0_90, %c0_91] : memref<2x32x16xf32, #tpu.memory_space<vmem>>, vector<1x32x16xf32>
    %457 = vector.shape_cast %456 : vector<1x32x16xf32> to vector<32x16xf32>
    %458 = vector.extract_strided_slice %332 {offsets = [0, 0], sizes = [8, 32], strides = [1, 1]} : vector<8x64xf32> to vector<8x32xf32>
    %459 = vector.extract_strided_slice %353 {offsets = [0, 0], sizes = [8, 32], strides = [1, 1]} : vector<8x64xf32> to vector<8x32xf32>
    %460 = vector.extract_strided_slice %374 {offsets = [0, 0], sizes = [8, 32], strides = [1, 1]} : vector<8x64xf32> to vector<8x32xf32>
    %461 = vector.extract_strided_slice %395 {offsets = [0, 0], sizes = [8, 32], strides = [1, 1]} : vector<8x64xf32> to vector<8x32xf32>
    %462 = tpu.concatenate %458, %459, %460, %461 in 0 : vector<8x32xf32>, vector<8x32xf32>, vector<8x32xf32>, vector<8x32xf32> -> vector<32x32xf32>
    %cst_92 = arith.constant dense<0.000000e+00> : vector<32x16xf32>
    %463 = tpu.matmul %462, %457, %cst_92 {dimension_numbers = #tpu.dot_dimension_numbers<[1], [0], [0], [1], [0, 0, 1, 1], [], []>} : vector<32x32xf32>, vector<32x16xf32>, vector<32x16xf32> -> vector<32x16xf32>
    %464 = vector.extract_strided_slice %463 {offsets = [0, 0], sizes = [8, 8], strides = [1, 1]} : vector<32x16xf32> to vector<8x8xf32>
    %465 = vector.extract_strided_slice %463 {offsets = [24, 8], sizes = [8, 8], strides = [1, 1]} : vector<32x16xf32> to vector<8x8xf32>
    %466 = tpu.concatenate %464, %465 in 1 : vector<8x8xf32>, vector<8x8xf32> -> vector<8x16xf32>
    %467 = vector.extract_strided_slice %463 {offsets = [8, 0], sizes = [8, 8], strides = [1, 1]} : vector<32x16xf32> to vector<8x8xf32>
    %468 = vector.extract_strided_slice %463 {offsets = [16, 8], sizes = [8, 8], strides = [1, 1]} : vector<32x16xf32> to vector<8x8xf32>
    %469 = tpu.concatenate %467, %468 in 1 : vector<8x8xf32>, vector<8x8xf32> -> vector<8x16xf32>
    %470 = vector.extract_strided_slice %463 {offsets = [16, 0], sizes = [8, 8], strides = [1, 1]} : vector<32x16xf32> to vector<8x8xf32>
    %471 = vector.extract_strided_slice %463 {offsets = [8, 8], sizes = [8, 8], strides = [1, 1]} : vector<32x16xf32> to vector<8x8xf32>
    %472 = tpu.concatenate %470, %471 in 1 : vector<8x8xf32>, vector<8x8xf32> -> vector<8x16xf32>
    %473 = vector.extract_strided_slice %463 {offsets = [24, 0], sizes = [8, 8], strides = [1, 1]} : vector<32x16xf32> to vector<8x8xf32>
    %474 = vector.extract_strided_slice %463 {offsets = [0, 8], sizes = [8, 8], strides = [1, 1]} : vector<32x16xf32> to vector<8x8xf32>
    %475 = tpu.concatenate %473, %474 in 1 : vector<8x8xf32>, vector<8x8xf32> -> vector<8x16xf32>
    %476 = tpu.concatenate %466, %469, %472, %475 in 0 : vector<8x16xf32>, vector<8x16xf32>, vector<8x16xf32>, vector<8x16xf32> -> vector<32x16xf32>
    %477 = vector.extract_strided_slice %463 {offsets = [24, 0], sizes = [8, 16], strides = [1, 1]} : vector<32x16xf32> to vector<8x16xf32>
    %c1_93 = arith.constant 1 : index
    %c0_94 = arith.constant 0 : index
    %c0_95 = arith.constant 0 : index
    %478 = vector.load %arg14[%c1_93, %c0_94, %c0_95] : memref<2x32x16xf32, #tpu.memory_space<vmem>>, vector<1x32x16xf32>
    %479 = vector.shape_cast %478 : vector<1x32x16xf32> to vector<32x16xf32>
    %480 = vector.extract_strided_slice %332 {offsets = [0, 32], sizes = [8, 32], strides = [1, 1]} : vector<8x64xf32> to vector<8x32xf32>
    %481 = vector.extract_strided_slice %353 {offsets = [0, 32], sizes = [8, 32], strides = [1, 1]} : vector<8x64xf32> to vector<8x32xf32>
    %482 = vector.extract_strided_slice %374 {offsets = [0, 32], sizes = [8, 32], strides = [1, 1]} : vector<8x64xf32> to vector<8x32xf32>
    %483 = vector.extract_strided_slice %395 {offsets = [0, 32], sizes = [8, 32], strides = [1, 1]} : vector<8x64xf32> to vector<8x32xf32>
    %484 = vector.extract_strided_slice %425 {offsets = [0, 32], sizes = [8, 32], strides = [1, 1]} : vector<8x64xf32> to vector<8x32xf32>
    %485 = vector.extract_strided_slice %455 {offsets = [0, 32], sizes = [8, 32], strides = [1, 1]} : vector<8x64xf32> to vector<8x32xf32>
    %486 = tpu.concatenate %480, %481, %482, %483, %484, %485 in 0 : vector<8x32xf32>, vector<8x32xf32>, vector<8x32xf32>, vector<8x32xf32>, vector<8x32xf32>, vector<8x32xf32> -> vector<48x32xf32>
    %cst_96 = arith.constant dense<0.000000e+00> : vector<48x16xf32>
    %487 = tpu.matmul %486, %479, %cst_96 {dimension_numbers = #tpu.dot_dimension_numbers<[1], [0], [0], [1], [0, 0, 1, 1], [], []>} : vector<48x32xf32>, vector<32x16xf32>, vector<48x16xf32> -> vector<48x16xf32>
    %488 = vector.extract_strided_slice %487 {offsets = [0, 0], sizes = [8, 8], strides = [1, 1]} : vector<48x16xf32> to vector<8x8xf32>
    %489 = vector.extract_strided_slice %487 {offsets = [40, 8], sizes = [8, 8], strides = [1, 1]} : vector<48x16xf32> to vector<8x8xf32>
    %490 = tpu.concatenate %488, %489 in 1 : vector<8x8xf32>, vector<8x8xf32> -> vector<8x16xf32>
    %491 = vector.extract_strided_slice %487 {offsets = [8, 0], sizes = [8, 8], strides = [1, 1]} : vector<48x16xf32> to vector<8x8xf32>
    %492 = vector.extract_strided_slice %487 {offsets = [32, 8], sizes = [8, 8], strides = [1, 1]} : vector<48x16xf32> to vector<8x8xf32>
    %493 = tpu.concatenate %491, %492 in 1 : vector<8x8xf32>, vector<8x8xf32> -> vector<8x16xf32>
    %494 = vector.extract_strided_slice %487 {offsets = [16, 0], sizes = [8, 8], strides = [1, 1]} : vector<48x16xf32> to vector<8x8xf32>
    %495 = vector.extract_strided_slice %487 {offsets = [24, 8], sizes = [8, 8], strides = [1, 1]} : vector<48x16xf32> to vector<8x8xf32>
    %496 = tpu.concatenate %494, %495 in 1 : vector<8x8xf32>, vector<8x8xf32> -> vector<8x16xf32>
    %497 = vector.extract_strided_slice %487 {offsets = [24, 0], sizes = [8, 8], strides = [1, 1]} : vector<48x16xf32> to vector<8x8xf32>
    %498 = vector.extract_strided_slice %487 {offsets = [16, 8], sizes = [8, 8], strides = [1, 1]} : vector<48x16xf32> to vector<8x8xf32>
    %499 = tpu.concatenate %497, %498 in 1 : vector<8x8xf32>, vector<8x8xf32> -> vector<8x16xf32>
    %500 = vector.extract_strided_slice %487 {offsets = [32, 0], sizes = [8, 8], strides = [1, 1]} : vector<48x16xf32> to vector<8x8xf32>
    %501 = vector.extract_strided_slice %487 {offsets = [8, 8], sizes = [8, 8], strides = [1, 1]} : vector<48x16xf32> to vector<8x8xf32>
    %502 = tpu.concatenate %500, %501 in 1 : vector<8x8xf32>, vector<8x8xf32> -> vector<8x16xf32>
    %503 = vector.extract_strided_slice %487 {offsets = [40, 0], sizes = [8, 8], strides = [1, 1]} : vector<48x16xf32> to vector<8x8xf32>
    %504 = vector.extract_strided_slice %487 {offsets = [0, 8], sizes = [8, 8], strides = [1, 1]} : vector<48x16xf32> to vector<8x8xf32>
    %505 = tpu.concatenate %503, %504 in 1 : vector<8x8xf32>, vector<8x8xf32> -> vector<8x16xf32>
    %506 = tpu.concatenate %490, %493, %496, %499, %502, %505 in 0 : vector<8x16xf32>, vector<8x16xf32>, vector<8x16xf32>, vector<8x16xf32>, vector<8x16xf32>, vector<8x16xf32> -> vector<48x16xf32>
    %507 = vector.extract_strided_slice %487 {offsets = [40, 0], sizes = [8, 16], strides = [1, 1]} : vector<48x16xf32> to vector<8x16xf32>
    %508 = vector.extract_strided_slice %452 {offsets = [0, 0], sizes = [8, 32], strides = [1, 1]} : vector<8x64xf32> to vector<8x32xf32>
    %509 = vector.extract_strided_slice %452 {offsets = [0, 32], sizes = [8, 32], strides = [1, 1]} : vector<8x64xf32> to vector<8x32xf32>
    %510 = tpu.concatenate %476, %506 in 0 : vector<32x16xf32>, vector<48x16xf32> -> vector<80x16xf32>
    %511 = arith.addf %249, %279 : vector<8x16xf32>
    %512 = arith.addf %477, %507 : vector<8x16xf32>
    %513 = arith.addf %280, %281 : vector<8x32xf32>
    %514 = arith.addf %508, %509 : vector<8x32xf32>
    %c0_97 = arith.constant 0 : index
    %c0_98 = arith.constant 0 : index
    %c0_99 = arith.constant 0 : index
    %515 = vector.load %arg15[%c0_97, %c0_98, %c0_99] : memref<2x16x128xf32, #tpu.memory_space<vmem>>, vector<1x16x128xf32>
    %516 = vector.shape_cast %515 : vector<1x16x128xf32> to vector<16x128xf32>
    %cst_100 = arith.constant dense<0.000000e+00> : vector<80x128xf32>
    %517 = tpu.matmul %510, %516, %cst_100 {dimension_numbers = #tpu.dot_dimension_numbers<[1], [0], [0], [1], [0, 0, 1, 1], [], []>} : vector<80x16xf32>, vector<16x128xf32>, vector<80x128xf32> -> vector<80x128xf32>
    %c0_101 = arith.constant 0 : index
    %c0_102 = arith.constant 0 : index
    %c0_103 = arith.constant 0 : index
    %518 = vector.load %arg16[%c0_101, %c0_102, %c0_103] : memref<2x1x128xf32, #tpu.memory_space<vmem>>, vector<1x1x128xf32>
    %519 = vector.shape_cast %518 : vector<1x1x128xf32> to vector<1x128xf32>
    %520 = vector.broadcast %519 : vector<1x128xf32> to vector<80x128xf32>
    %521 = arith.addf %517, %520 : vector<80x128xf32>
    %522 = vector.extract_strided_slice %521 {offsets = [72, 0], sizes = [8, 128], strides = [1, 1]} : vector<80x128xf32> to vector<8x128xf32>
    %523 = vector.extract_strided_slice %521 {offsets = [64, 0], sizes = [8, 128], strides = [1, 1]} : vector<80x128xf32> to vector<8x128xf32>
    %524 = vector.extract_strided_slice %521 {offsets = [56, 0], sizes = [8, 128], strides = [1, 1]} : vector<80x128xf32> to vector<8x128xf32>
    %525 = vector.extract_strided_slice %521 {offsets = [48, 0], sizes = [8, 128], strides = [1, 1]} : vector<80x128xf32> to vector<8x128xf32>
    %526 = vector.extract_strided_slice %521 {offsets = [40, 0], sizes = [8, 128], strides = [1, 1]} : vector<80x128xf32> to vector<8x128xf32>
    %527 = vector.extract_strided_slice %521 {offsets = [32, 0], sizes = [8, 128], strides = [1, 1]} : vector<80x128xf32> to vector<8x128xf32>
    %528 = vector.extract_strided_slice %521 {offsets = [24, 0], sizes = [8, 128], strides = [1, 1]} : vector<80x128xf32> to vector<8x128xf32>
    %529 = vector.extract_strided_slice %521 {offsets = [16, 0], sizes = [8, 128], strides = [1, 1]} : vector<80x128xf32> to vector<8x128xf32>
    %530 = vector.extract_strided_slice %521 {offsets = [8, 0], sizes = [8, 128], strides = [1, 1]} : vector<80x128xf32> to vector<8x128xf32>
    %531 = vector.extract_strided_slice %521 {offsets = [0, 0], sizes = [8, 128], strides = [1, 1]} : vector<80x128xf32> to vector<8x128xf32>
    %532 = tpu.concatenate %522, %523, %524, %525, %526, %527, %528, %529, %530, %531 in 0 : vector<8x128xf32>, vector<8x128xf32>, vector<8x128xf32>, vector<8x128xf32>, vector<8x128xf32>, vector<8x128xf32>, vector<8x128xf32>, vector<8x128xf32>, vector<8x128xf32>, vector<8x128xf32> -> vector<80x128xf32>
    %533 = vector.shape_cast %37 : vector<1x128xi1> to vector<1x128xi1>
    %534 = vector.broadcast %533 : vector<1x128xi1> to vector<80x128xi1>
    %535 = arith.select %534, %532, %521 : vector<80x128xi1>, vector<80x128xf32>
    %c0_104 = arith.constant 0 : index
    %c0_105 = arith.constant 0 : index
    %c0_106 = arith.constant 0 : index
    %536 = vector.load %arg18[%c0_104, %c0_105, %c0_106] : memref<2x16x128xf32, #tpu.memory_space<vmem>>, vector<1x16x128xf32>
    %537 = vector.shape_cast %536 : vector<1x16x128xf32> to vector<16x128xf32>
    %cst_107 = arith.constant dense<0.000000e+00> : vector<8x128xf32>
    %538 = tpu.matmul %511, %537, %cst_107 {dimension_numbers = #tpu.dot_dimension_numbers<[1], [0], [0], [1], [0, 0, 1, 1], [], []>} : vector<8x16xf32>, vector<16x128xf32>, vector<8x128xf32> -> vector<8x128xf32>
    %c0_108 = arith.constant 0 : index
    %c0_109 = arith.constant 0 : index
    %c0_110 = arith.constant 0 : index
    %539 = vector.load %arg17[%c0_108, %c0_109, %c0_110] : memref<2x32x128xbf16, #tpu.memory_space<vmem>>, vector<1x32x128xbf16>
    %540 = vector.shape_cast %539 : vector<1x32x128xbf16> to vector<32x128xbf16>
    %541 = vector.extract_strided_slice %535 {offsets = [0, 0], sizes = [8, 128], strides = [1, 1]} : vector<80x128xf32> to vector<8x128xf32>
    %542 = arith.addf %538, %541 : vector<8x128xf32>
    %543 = arith.negf %542 : vector<8x128xf32>
    %544 = math.exp %543 : vector<8x128xf32>
    %cst_111 = arith.constant 1.000000e+00 : f32
    %545 = vector.broadcast %cst_111 : f32 to vector<8x128xf32>
    %546 = arith.addf %545, %544 : vector<8x128xf32>
    %547 = arith.divf %545, %546 : vector<8x128xf32>
    %548 = math.tanh %542 : vector<8x128xf32>
    %549 = vector.extract_strided_slice %547 {offsets = [0, 32], sizes = [8, 32], strides = [1, 1]} : vector<8x128xf32> to vector<8x32xf32>
    %550 = arith.mulf %549, %513 : vector<8x32xf32>
    %551 = vector.extract_strided_slice %547 {offsets = [0, 0], sizes = [8, 32], strides = [1, 1]} : vector<8x128xf32> to vector<8x32xf32>
    %552 = vector.extract_strided_slice %548 {offsets = [0, 64], sizes = [8, 32], strides = [1, 1]} : vector<8x128xf32> to vector<8x32xf32>
    %553 = arith.mulf %551, %552 : vector<8x32xf32>
    %554 = arith.addf %550, %553 : vector<8x32xf32>
    %555 = vector.extract_strided_slice %547 {offsets = [0, 96], sizes = [8, 32], strides = [1, 1]} : vector<8x128xf32> to vector<8x32xf32>
    %556 = math.tanh %554 : vector<8x32xf32>
    %557 = arith.mulf %555, %556 : vector<8x32xf32>
    %558 = vector.extract_strided_slice %535 {offsets = [8, 0], sizes = [8, 128], strides = [1, 1]} : vector<80x128xf32> to vector<8x128xf32>
    %559 = arith.truncf %557 : vector<8x32xf32> to vector<8x32xbf16>
    %cst_112 = arith.constant dense<0.000000e+00> : vector<8x128xf32>
    %560 = tpu.matmul %559, %540, %cst_112 {dimension_numbers = #tpu.dot_dimension_numbers<[1], [0], [0], [1], [0, 0, 1, 1], [], []>} : vector<8x32xbf16>, vector<32x128xbf16>, vector<8x128xf32> -> vector<8x128xf32>
    %561 = arith.addf %558, %560 : vector<8x128xf32>
    %562 = arith.negf %561 : vector<8x128xf32>
    %563 = math.exp %562 : vector<8x128xf32>
    %cst_113 = arith.constant 1.000000e+00 : f32
    %564 = vector.broadcast %cst_113 : f32 to vector<8x128xf32>
    %565 = arith.addf %564, %563 : vector<8x128xf32>
    %566 = arith.divf %564, %565 : vector<8x128xf32>
    %567 = math.tanh %561 : vector<8x128xf32>
    %568 = vector.extract_strided_slice %566 {offsets = [0, 32], sizes = [8, 32], strides = [1, 1]} : vector<8x128xf32> to vector<8x32xf32>
    %569 = arith.mulf %568, %554 : vector<8x32xf32>
    %570 = vector.extract_strided_slice %566 {offsets = [0, 0], sizes = [8, 32], strides = [1, 1]} : vector<8x128xf32> to vector<8x32xf32>
    %571 = vector.extract_strided_slice %567 {offsets = [0, 64], sizes = [8, 32], strides = [1, 1]} : vector<8x128xf32> to vector<8x32xf32>
    %572 = arith.mulf %570, %571 : vector<8x32xf32>
    %573 = arith.addf %569, %572 : vector<8x32xf32>
    %574 = vector.extract_strided_slice %566 {offsets = [0, 96], sizes = [8, 32], strides = [1, 1]} : vector<8x128xf32> to vector<8x32xf32>
    %575 = math.tanh %573 : vector<8x32xf32>
    %576 = arith.mulf %574, %575 : vector<8x32xf32>
    %577 = vector.extract_strided_slice %535 {offsets = [16, 0], sizes = [8, 128], strides = [1, 1]} : vector<80x128xf32> to vector<8x128xf32>
    %578 = arith.truncf %576 : vector<8x32xf32> to vector<8x32xbf16>
    %cst_114 = arith.constant dense<0.000000e+00> : vector<8x128xf32>
    %579 = tpu.matmul %578, %540, %cst_114 {dimension_numbers = #tpu.dot_dimension_numbers<[1], [0], [0], [1], [0, 0, 1, 1], [], []>} : vector<8x32xbf16>, vector<32x128xbf16>, vector<8x128xf32> -> vector<8x128xf32>
    %580 = arith.addf %577, %579 : vector<8x128xf32>
    %581 = arith.negf %580 : vector<8x128xf32>
    %582 = math.exp %581 : vector<8x128xf32>
    %cst_115 = arith.constant 1.000000e+00 : f32
    %583 = vector.broadcast %cst_115 : f32 to vector<8x128xf32>
    %584 = arith.addf %583, %582 : vector<8x128xf32>
    %585 = arith.divf %583, %584 : vector<8x128xf32>
    %586 = math.tanh %580 : vector<8x128xf32>
    %587 = vector.extract_strided_slice %585 {offsets = [0, 32], sizes = [8, 32], strides = [1, 1]} : vector<8x128xf32> to vector<8x32xf32>
    %588 = arith.mulf %587, %573 : vector<8x32xf32>
    %589 = vector.extract_strided_slice %585 {offsets = [0, 0], sizes = [8, 32], strides = [1, 1]} : vector<8x128xf32> to vector<8x32xf32>
    %590 = vector.extract_strided_slice %586 {offsets = [0, 64], sizes = [8, 32], strides = [1, 1]} : vector<8x128xf32> to vector<8x32xf32>
    %591 = arith.mulf %589, %590 : vector<8x32xf32>
    %592 = arith.addf %588, %591 : vector<8x32xf32>
    %593 = vector.extract_strided_slice %585 {offsets = [0, 96], sizes = [8, 32], strides = [1, 1]} : vector<8x128xf32> to vector<8x32xf32>
    %594 = math.tanh %592 : vector<8x32xf32>
    %595 = arith.mulf %593, %594 : vector<8x32xf32>
    %596 = vector.extract_strided_slice %535 {offsets = [24, 0], sizes = [8, 128], strides = [1, 1]} : vector<80x128xf32> to vector<8x128xf32>
    %597 = arith.truncf %595 : vector<8x32xf32> to vector<8x32xbf16>
    %cst_116 = arith.constant dense<0.000000e+00> : vector<8x128xf32>
    %598 = tpu.matmul %597, %540, %cst_116 {dimension_numbers = #tpu.dot_dimension_numbers<[1], [0], [0], [1], [0, 0, 1, 1], [], []>} : vector<8x32xbf16>, vector<32x128xbf16>, vector<8x128xf32> -> vector<8x128xf32>
    %599 = arith.addf %596, %598 : vector<8x128xf32>
    %600 = arith.negf %599 : vector<8x128xf32>
    %601 = math.exp %600 : vector<8x128xf32>
    %cst_117 = arith.constant 1.000000e+00 : f32
    %602 = vector.broadcast %cst_117 : f32 to vector<8x128xf32>
    %603 = arith.addf %602, %601 : vector<8x128xf32>
    %604 = arith.divf %602, %603 : vector<8x128xf32>
    %605 = math.tanh %599 : vector<8x128xf32>
    %606 = vector.extract_strided_slice %604 {offsets = [0, 32], sizes = [8, 32], strides = [1, 1]} : vector<8x128xf32> to vector<8x32xf32>
    %607 = arith.mulf %606, %592 : vector<8x32xf32>
    %608 = vector.extract_strided_slice %604 {offsets = [0, 0], sizes = [8, 32], strides = [1, 1]} : vector<8x128xf32> to vector<8x32xf32>
    %609 = vector.extract_strided_slice %605 {offsets = [0, 64], sizes = [8, 32], strides = [1, 1]} : vector<8x128xf32> to vector<8x32xf32>
    %610 = arith.mulf %608, %609 : vector<8x32xf32>
    %611 = arith.addf %607, %610 : vector<8x32xf32>
    %612 = vector.extract_strided_slice %604 {offsets = [0, 96], sizes = [8, 32], strides = [1, 1]} : vector<8x128xf32> to vector<8x32xf32>
    %613 = math.tanh %611 : vector<8x32xf32>
    %614 = arith.mulf %612, %613 : vector<8x32xf32>
    %615 = vector.extract_strided_slice %535 {offsets = [32, 0], sizes = [8, 128], strides = [1, 1]} : vector<80x128xf32> to vector<8x128xf32>
    %616 = arith.truncf %614 : vector<8x32xf32> to vector<8x32xbf16>
    %cst_118 = arith.constant dense<0.000000e+00> : vector<8x128xf32>
    %617 = tpu.matmul %616, %540, %cst_118 {dimension_numbers = #tpu.dot_dimension_numbers<[1], [0], [0], [1], [0, 0, 1, 1], [], []>} : vector<8x32xbf16>, vector<32x128xbf16>, vector<8x128xf32> -> vector<8x128xf32>
    %618 = arith.addf %615, %617 : vector<8x128xf32>
    %619 = arith.negf %618 : vector<8x128xf32>
    %620 = math.exp %619 : vector<8x128xf32>
    %cst_119 = arith.constant 1.000000e+00 : f32
    %621 = vector.broadcast %cst_119 : f32 to vector<8x128xf32>
    %622 = arith.addf %621, %620 : vector<8x128xf32>
    %623 = arith.divf %621, %622 : vector<8x128xf32>
    %624 = math.tanh %618 : vector<8x128xf32>
    %625 = vector.extract_strided_slice %623 {offsets = [0, 32], sizes = [8, 32], strides = [1, 1]} : vector<8x128xf32> to vector<8x32xf32>
    %626 = arith.mulf %625, %611 : vector<8x32xf32>
    %627 = vector.extract_strided_slice %623 {offsets = [0, 0], sizes = [8, 32], strides = [1, 1]} : vector<8x128xf32> to vector<8x32xf32>
    %628 = vector.extract_strided_slice %624 {offsets = [0, 64], sizes = [8, 32], strides = [1, 1]} : vector<8x128xf32> to vector<8x32xf32>
    %629 = arith.mulf %627, %628 : vector<8x32xf32>
    %630 = arith.addf %626, %629 : vector<8x32xf32>
    %631 = vector.extract_strided_slice %623 {offsets = [0, 96], sizes = [8, 32], strides = [1, 1]} : vector<8x128xf32> to vector<8x32xf32>
    %632 = math.tanh %630 : vector<8x32xf32>
    %633 = arith.mulf %631, %632 : vector<8x32xf32>
    %634 = vector.extract_strided_slice %535 {offsets = [40, 0], sizes = [8, 128], strides = [1, 1]} : vector<80x128xf32> to vector<8x128xf32>
    %635 = arith.truncf %633 : vector<8x32xf32> to vector<8x32xbf16>
    %cst_120 = arith.constant dense<0.000000e+00> : vector<8x128xf32>
    %636 = tpu.matmul %635, %540, %cst_120 {dimension_numbers = #tpu.dot_dimension_numbers<[1], [0], [0], [1], [0, 0, 1, 1], [], []>} : vector<8x32xbf16>, vector<32x128xbf16>, vector<8x128xf32> -> vector<8x128xf32>
    %637 = arith.addf %634, %636 : vector<8x128xf32>
    %638 = arith.negf %637 : vector<8x128xf32>
    %639 = math.exp %638 : vector<8x128xf32>
    %cst_121 = arith.constant 1.000000e+00 : f32
    %640 = vector.broadcast %cst_121 : f32 to vector<8x128xf32>
    %641 = arith.addf %640, %639 : vector<8x128xf32>
    %642 = arith.divf %640, %641 : vector<8x128xf32>
    %643 = math.tanh %637 : vector<8x128xf32>
    %644 = vector.extract_strided_slice %642 {offsets = [0, 32], sizes = [8, 32], strides = [1, 1]} : vector<8x128xf32> to vector<8x32xf32>
    %645 = arith.mulf %644, %630 : vector<8x32xf32>
    %646 = vector.extract_strided_slice %642 {offsets = [0, 0], sizes = [8, 32], strides = [1, 1]} : vector<8x128xf32> to vector<8x32xf32>
    %647 = vector.extract_strided_slice %643 {offsets = [0, 64], sizes = [8, 32], strides = [1, 1]} : vector<8x128xf32> to vector<8x32xf32>
    %648 = arith.mulf %646, %647 : vector<8x32xf32>
    %649 = arith.addf %645, %648 : vector<8x32xf32>
    %650 = vector.extract_strided_slice %642 {offsets = [0, 96], sizes = [8, 32], strides = [1, 1]} : vector<8x128xf32> to vector<8x32xf32>
    %651 = math.tanh %649 : vector<8x32xf32>
    %652 = arith.mulf %650, %651 : vector<8x32xf32>
    %653 = vector.extract_strided_slice %535 {offsets = [48, 0], sizes = [8, 128], strides = [1, 1]} : vector<80x128xf32> to vector<8x128xf32>
    %654 = arith.truncf %652 : vector<8x32xf32> to vector<8x32xbf16>
    %cst_122 = arith.constant dense<0.000000e+00> : vector<8x128xf32>
    %655 = tpu.matmul %654, %540, %cst_122 {dimension_numbers = #tpu.dot_dimension_numbers<[1], [0], [0], [1], [0, 0, 1, 1], [], []>} : vector<8x32xbf16>, vector<32x128xbf16>, vector<8x128xf32> -> vector<8x128xf32>
    %656 = arith.addf %653, %655 : vector<8x128xf32>
    %657 = arith.negf %656 : vector<8x128xf32>
    %658 = math.exp %657 : vector<8x128xf32>
    %cst_123 = arith.constant 1.000000e+00 : f32
    %659 = vector.broadcast %cst_123 : f32 to vector<8x128xf32>
    %660 = arith.addf %659, %658 : vector<8x128xf32>
    %661 = arith.divf %659, %660 : vector<8x128xf32>
    %662 = math.tanh %656 : vector<8x128xf32>
    %663 = vector.extract_strided_slice %661 {offsets = [0, 32], sizes = [8, 32], strides = [1, 1]} : vector<8x128xf32> to vector<8x32xf32>
    %664 = arith.mulf %663, %649 : vector<8x32xf32>
    %665 = vector.extract_strided_slice %661 {offsets = [0, 0], sizes = [8, 32], strides = [1, 1]} : vector<8x128xf32> to vector<8x32xf32>
    %666 = vector.extract_strided_slice %662 {offsets = [0, 64], sizes = [8, 32], strides = [1, 1]} : vector<8x128xf32> to vector<8x32xf32>
    %667 = arith.mulf %665, %666 : vector<8x32xf32>
    %668 = arith.addf %664, %667 : vector<8x32xf32>
    %669 = vector.extract_strided_slice %661 {offsets = [0, 96], sizes = [8, 32], strides = [1, 1]} : vector<8x128xf32> to vector<8x32xf32>
    %670 = math.tanh %668 : vector<8x32xf32>
    %671 = arith.mulf %669, %670 : vector<8x32xf32>
    %672 = vector.extract_strided_slice %535 {offsets = [56, 0], sizes = [8, 128], strides = [1, 1]} : vector<80x128xf32> to vector<8x128xf32>
    %673 = arith.truncf %671 : vector<8x32xf32> to vector<8x32xbf16>
    %cst_124 = arith.constant dense<0.000000e+00> : vector<8x128xf32>
    %674 = tpu.matmul %673, %540, %cst_124 {dimension_numbers = #tpu.dot_dimension_numbers<[1], [0], [0], [1], [0, 0, 1, 1], [], []>} : vector<8x32xbf16>, vector<32x128xbf16>, vector<8x128xf32> -> vector<8x128xf32>
    %675 = arith.addf %672, %674 : vector<8x128xf32>
    %676 = arith.negf %675 : vector<8x128xf32>
    %677 = math.exp %676 : vector<8x128xf32>
    %cst_125 = arith.constant 1.000000e+00 : f32
    %678 = vector.broadcast %cst_125 : f32 to vector<8x128xf32>
    %679 = arith.addf %678, %677 : vector<8x128xf32>
    %680 = arith.divf %678, %679 : vector<8x128xf32>
    %681 = math.tanh %675 : vector<8x128xf32>
    %682 = vector.extract_strided_slice %680 {offsets = [0, 32], sizes = [8, 32], strides = [1, 1]} : vector<8x128xf32> to vector<8x32xf32>
    %683 = arith.mulf %682, %668 : vector<8x32xf32>
    %684 = vector.extract_strided_slice %680 {offsets = [0, 0], sizes = [8, 32], strides = [1, 1]} : vector<8x128xf32> to vector<8x32xf32>
    %685 = vector.extract_strided_slice %681 {offsets = [0, 64], sizes = [8, 32], strides = [1, 1]} : vector<8x128xf32> to vector<8x32xf32>
    %686 = arith.mulf %684, %685 : vector<8x32xf32>
    %687 = arith.addf %683, %686 : vector<8x32xf32>
    %688 = vector.extract_strided_slice %680 {offsets = [0, 96], sizes = [8, 32], strides = [1, 1]} : vector<8x128xf32> to vector<8x32xf32>
    %689 = math.tanh %687 : vector<8x32xf32>
    %690 = arith.mulf %688, %689 : vector<8x32xf32>
    %691 = vector.extract_strided_slice %535 {offsets = [64, 0], sizes = [8, 128], strides = [1, 1]} : vector<80x128xf32> to vector<8x128xf32>
    %692 = arith.truncf %690 : vector<8x32xf32> to vector<8x32xbf16>
    %cst_126 = arith.constant dense<0.000000e+00> : vector<8x128xf32>
    %693 = tpu.matmul %692, %540, %cst_126 {dimension_numbers = #tpu.dot_dimension_numbers<[1], [0], [0], [1], [0, 0, 1, 1], [], []>} : vector<8x32xbf16>, vector<32x128xbf16>, vector<8x128xf32> -> vector<8x128xf32>
    %694 = arith.addf %691, %693 : vector<8x128xf32>
    %695 = arith.negf %694 : vector<8x128xf32>
    %696 = math.exp %695 : vector<8x128xf32>
    %cst_127 = arith.constant 1.000000e+00 : f32
    %697 = vector.broadcast %cst_127 : f32 to vector<8x128xf32>
    %698 = arith.addf %697, %696 : vector<8x128xf32>
    %699 = arith.divf %697, %698 : vector<8x128xf32>
    %700 = math.tanh %694 : vector<8x128xf32>
    %701 = vector.extract_strided_slice %699 {offsets = [0, 32], sizes = [8, 32], strides = [1, 1]} : vector<8x128xf32> to vector<8x32xf32>
    %702 = arith.mulf %701, %687 : vector<8x32xf32>
    %703 = vector.extract_strided_slice %699 {offsets = [0, 0], sizes = [8, 32], strides = [1, 1]} : vector<8x128xf32> to vector<8x32xf32>
    %704 = vector.extract_strided_slice %700 {offsets = [0, 64], sizes = [8, 32], strides = [1, 1]} : vector<8x128xf32> to vector<8x32xf32>
    %705 = arith.mulf %703, %704 : vector<8x32xf32>
    %706 = arith.addf %702, %705 : vector<8x32xf32>
    %707 = vector.extract_strided_slice %699 {offsets = [0, 96], sizes = [8, 32], strides = [1, 1]} : vector<8x128xf32> to vector<8x32xf32>
    %708 = math.tanh %706 : vector<8x32xf32>
    %709 = arith.mulf %707, %708 : vector<8x32xf32>
    %710 = vector.extract_strided_slice %535 {offsets = [72, 0], sizes = [8, 128], strides = [1, 1]} : vector<80x128xf32> to vector<8x128xf32>
    %711 = arith.truncf %709 : vector<8x32xf32> to vector<8x32xbf16>
    %cst_128 = arith.constant dense<0.000000e+00> : vector<8x128xf32>
    %712 = tpu.matmul %711, %540, %cst_128 {dimension_numbers = #tpu.dot_dimension_numbers<[1], [0], [0], [1], [0, 0, 1, 1], [], []>} : vector<8x32xbf16>, vector<32x128xbf16>, vector<8x128xf32> -> vector<8x128xf32>
    %713 = arith.addf %710, %712 : vector<8x128xf32>
    %714 = arith.negf %713 : vector<8x128xf32>
    %715 = math.exp %714 : vector<8x128xf32>
    %cst_129 = arith.constant 1.000000e+00 : f32
    %716 = vector.broadcast %cst_129 : f32 to vector<8x128xf32>
    %717 = arith.addf %716, %715 : vector<8x128xf32>
    %718 = arith.divf %716, %717 : vector<8x128xf32>
    %719 = math.tanh %713 : vector<8x128xf32>
    %720 = vector.extract_strided_slice %718 {offsets = [0, 32], sizes = [8, 32], strides = [1, 1]} : vector<8x128xf32> to vector<8x32xf32>
    %721 = arith.mulf %720, %706 : vector<8x32xf32>
    %722 = vector.extract_strided_slice %718 {offsets = [0, 0], sizes = [8, 32], strides = [1, 1]} : vector<8x128xf32> to vector<8x32xf32>
    %723 = vector.extract_strided_slice %719 {offsets = [0, 64], sizes = [8, 32], strides = [1, 1]} : vector<8x128xf32> to vector<8x32xf32>
    %724 = arith.mulf %722, %723 : vector<8x32xf32>
    %725 = arith.addf %721, %724 : vector<8x32xf32>
    %726 = vector.extract_strided_slice %718 {offsets = [0, 96], sizes = [8, 32], strides = [1, 1]} : vector<8x128xf32> to vector<8x32xf32>
    %727 = math.tanh %725 : vector<8x32xf32>
    %728 = arith.mulf %726, %727 : vector<8x32xf32>
    %c0_130 = arith.constant 0 : index
    %c0_131 = arith.constant 0 : index
    %c0_132 = arith.constant 0 : index
    %729 = vector.load %arg19[%c0_130, %c0_131, %c0_132] : memref<2x32x16xf32, #tpu.memory_space<vmem>>, vector<1x32x16xf32>
    %730 = vector.shape_cast %729 : vector<1x32x16xf32> to vector<32x16xf32>
    %731 = tpu.concatenate %557, %576, %595, %614, %633, %652, %671, %690, %709, %728 in 0 : vector<8x32xf32>, vector<8x32xf32>, vector<8x32xf32>, vector<8x32xf32>, vector<8x32xf32>, vector<8x32xf32>, vector<8x32xf32>, vector<8x32xf32>, vector<8x32xf32>, vector<8x32xf32> -> vector<80x32xf32>
    %cst_133 = arith.constant dense<0.000000e+00> : vector<80x16xf32>
    %732 = tpu.matmul %731, %730, %cst_133 {dimension_numbers = #tpu.dot_dimension_numbers<[1], [0], [0], [1], [0, 0, 1, 1], [], []>} : vector<80x32xf32>, vector<32x16xf32>, vector<80x16xf32> -> vector<80x16xf32>
    %733 = vector.extract_strided_slice %732 {offsets = [0, 0], sizes = [8, 8], strides = [1, 1]} : vector<80x16xf32> to vector<8x8xf32>
    %734 = vector.extract_strided_slice %732 {offsets = [72, 8], sizes = [8, 8], strides = [1, 1]} : vector<80x16xf32> to vector<8x8xf32>
    %735 = tpu.concatenate %733, %734 in 1 : vector<8x8xf32>, vector<8x8xf32> -> vector<8x16xf32>
    %736 = vector.extract_strided_slice %732 {offsets = [8, 0], sizes = [8, 8], strides = [1, 1]} : vector<80x16xf32> to vector<8x8xf32>
    %737 = vector.extract_strided_slice %732 {offsets = [64, 8], sizes = [8, 8], strides = [1, 1]} : vector<80x16xf32> to vector<8x8xf32>
    %738 = tpu.concatenate %736, %737 in 1 : vector<8x8xf32>, vector<8x8xf32> -> vector<8x16xf32>
    %739 = vector.extract_strided_slice %732 {offsets = [16, 0], sizes = [8, 8], strides = [1, 1]} : vector<80x16xf32> to vector<8x8xf32>
    %740 = vector.extract_strided_slice %732 {offsets = [56, 8], sizes = [8, 8], strides = [1, 1]} : vector<80x16xf32> to vector<8x8xf32>
    %741 = tpu.concatenate %739, %740 in 1 : vector<8x8xf32>, vector<8x8xf32> -> vector<8x16xf32>
    %742 = vector.extract_strided_slice %732 {offsets = [24, 0], sizes = [8, 8], strides = [1, 1]} : vector<80x16xf32> to vector<8x8xf32>
    %743 = vector.extract_strided_slice %732 {offsets = [48, 8], sizes = [8, 8], strides = [1, 1]} : vector<80x16xf32> to vector<8x8xf32>
    %744 = tpu.concatenate %742, %743 in 1 : vector<8x8xf32>, vector<8x8xf32> -> vector<8x16xf32>
    %745 = vector.extract_strided_slice %732 {offsets = [32, 0], sizes = [8, 8], strides = [1, 1]} : vector<80x16xf32> to vector<8x8xf32>
    %746 = vector.extract_strided_slice %732 {offsets = [40, 8], sizes = [8, 8], strides = [1, 1]} : vector<80x16xf32> to vector<8x8xf32>
    %747 = tpu.concatenate %745, %746 in 1 : vector<8x8xf32>, vector<8x8xf32> -> vector<8x16xf32>
    %748 = vector.extract_strided_slice %732 {offsets = [40, 0], sizes = [8, 8], strides = [1, 1]} : vector<80x16xf32> to vector<8x8xf32>
    %749 = vector.extract_strided_slice %732 {offsets = [32, 8], sizes = [8, 8], strides = [1, 1]} : vector<80x16xf32> to vector<8x8xf32>
    %750 = tpu.concatenate %748, %749 in 1 : vector<8x8xf32>, vector<8x8xf32> -> vector<8x16xf32>
    %751 = vector.extract_strided_slice %732 {offsets = [48, 0], sizes = [8, 8], strides = [1, 1]} : vector<80x16xf32> to vector<8x8xf32>
    %752 = vector.extract_strided_slice %732 {offsets = [24, 8], sizes = [8, 8], strides = [1, 1]} : vector<80x16xf32> to vector<8x8xf32>
    %753 = tpu.concatenate %751, %752 in 1 : vector<8x8xf32>, vector<8x8xf32> -> vector<8x16xf32>
    %754 = vector.extract_strided_slice %732 {offsets = [56, 0], sizes = [8, 8], strides = [1, 1]} : vector<80x16xf32> to vector<8x8xf32>
    %755 = vector.extract_strided_slice %732 {offsets = [16, 8], sizes = [8, 8], strides = [1, 1]} : vector<80x16xf32> to vector<8x8xf32>
    %756 = tpu.concatenate %754, %755 in 1 : vector<8x8xf32>, vector<8x8xf32> -> vector<8x16xf32>
    %757 = vector.extract_strided_slice %732 {offsets = [64, 0], sizes = [8, 8], strides = [1, 1]} : vector<80x16xf32> to vector<8x8xf32>
    %758 = vector.extract_strided_slice %732 {offsets = [8, 8], sizes = [8, 8], strides = [1, 1]} : vector<80x16xf32> to vector<8x8xf32>
    %759 = tpu.concatenate %757, %758 in 1 : vector<8x8xf32>, vector<8x8xf32> -> vector<8x16xf32>
    %760 = vector.extract_strided_slice %732 {offsets = [72, 0], sizes = [8, 8], strides = [1, 1]} : vector<80x16xf32> to vector<8x8xf32>
    %761 = vector.extract_strided_slice %732 {offsets = [0, 8], sizes = [8, 8], strides = [1, 1]} : vector<80x16xf32> to vector<8x8xf32>
    %762 = tpu.concatenate %760, %761 in 1 : vector<8x8xf32>, vector<8x8xf32> -> vector<8x16xf32>
    %763 = tpu.concatenate %735, %738, %741, %744, %747, %750, %753, %756, %759, %762 in 0 : vector<8x16xf32>, vector<8x16xf32>, vector<8x16xf32>, vector<8x16xf32>, vector<8x16xf32>, vector<8x16xf32>, vector<8x16xf32>, vector<8x16xf32>, vector<8x16xf32>, vector<8x16xf32> -> vector<80x16xf32>
    %c1_134 = arith.constant 1 : index
    %c0_135 = arith.constant 0 : index
    %c0_136 = arith.constant 0 : index
    %764 = vector.load %arg15[%c1_134, %c0_135, %c0_136] : memref<2x16x128xf32, #tpu.memory_space<vmem>>, vector<1x16x128xf32>
    %765 = vector.shape_cast %764 : vector<1x16x128xf32> to vector<16x128xf32>
    %cst_137 = arith.constant dense<0.000000e+00> : vector<80x128xf32>
    %766 = tpu.matmul %763, %765, %cst_137 {dimension_numbers = #tpu.dot_dimension_numbers<[1], [0], [0], [1], [0, 0, 1, 1], [], []>} : vector<80x16xf32>, vector<16x128xf32>, vector<80x128xf32> -> vector<80x128xf32>
    %c1_138 = arith.constant 1 : index
    %c0_139 = arith.constant 0 : index
    %c0_140 = arith.constant 0 : index
    %767 = vector.load %arg16[%c1_138, %c0_139, %c0_140] : memref<2x1x128xf32, #tpu.memory_space<vmem>>, vector<1x1x128xf32>
    %768 = vector.shape_cast %767 : vector<1x1x128xf32> to vector<1x128xf32>
    %769 = vector.broadcast %768 : vector<1x128xf32> to vector<80x128xf32>
    %770 = arith.addf %766, %769 : vector<80x128xf32>
    %771 = vector.extract_strided_slice %770 {offsets = [72, 0], sizes = [8, 128], strides = [1, 1]} : vector<80x128xf32> to vector<8x128xf32>
    %772 = vector.extract_strided_slice %770 {offsets = [64, 0], sizes = [8, 128], strides = [1, 1]} : vector<80x128xf32> to vector<8x128xf32>
    %773 = vector.extract_strided_slice %770 {offsets = [56, 0], sizes = [8, 128], strides = [1, 1]} : vector<80x128xf32> to vector<8x128xf32>
    %774 = vector.extract_strided_slice %770 {offsets = [48, 0], sizes = [8, 128], strides = [1, 1]} : vector<80x128xf32> to vector<8x128xf32>
    %775 = vector.extract_strided_slice %770 {offsets = [40, 0], sizes = [8, 128], strides = [1, 1]} : vector<80x128xf32> to vector<8x128xf32>
    %776 = vector.extract_strided_slice %770 {offsets = [32, 0], sizes = [8, 128], strides = [1, 1]} : vector<80x128xf32> to vector<8x128xf32>
    %777 = vector.extract_strided_slice %770 {offsets = [24, 0], sizes = [8, 128], strides = [1, 1]} : vector<80x128xf32> to vector<8x128xf32>
    %778 = vector.extract_strided_slice %770 {offsets = [16, 0], sizes = [8, 128], strides = [1, 1]} : vector<80x128xf32> to vector<8x128xf32>
    %779 = vector.extract_strided_slice %770 {offsets = [8, 0], sizes = [8, 128], strides = [1, 1]} : vector<80x128xf32> to vector<8x128xf32>
    %780 = vector.extract_strided_slice %770 {offsets = [0, 0], sizes = [8, 128], strides = [1, 1]} : vector<80x128xf32> to vector<8x128xf32>
    %781 = tpu.concatenate %771, %772, %773, %774, %775, %776, %777, %778, %779, %780 in 0 : vector<8x128xf32>, vector<8x128xf32>, vector<8x128xf32>, vector<8x128xf32>, vector<8x128xf32>, vector<8x128xf32>, vector<8x128xf32>, vector<8x128xf32>, vector<8x128xf32>, vector<8x128xf32> -> vector<80x128xf32>
    %782 = vector.shape_cast %37 : vector<1x128xi1> to vector<1x128xi1>
    %783 = vector.broadcast %782 : vector<1x128xi1> to vector<80x128xi1>
    %784 = arith.select %783, %781, %770 : vector<80x128xi1>, vector<80x128xf32>
    %c1_141 = arith.constant 1 : index
    %c0_142 = arith.constant 0 : index
    %c0_143 = arith.constant 0 : index
    %785 = vector.load %arg18[%c1_141, %c0_142, %c0_143] : memref<2x16x128xf32, #tpu.memory_space<vmem>>, vector<1x16x128xf32>
    %786 = vector.shape_cast %785 : vector<1x16x128xf32> to vector<16x128xf32>
    %cst_144 = arith.constant dense<0.000000e+00> : vector<8x128xf32>
    %787 = tpu.matmul %512, %786, %cst_144 {dimension_numbers = #tpu.dot_dimension_numbers<[1], [0], [0], [1], [0, 0, 1, 1], [], []>} : vector<8x16xf32>, vector<16x128xf32>, vector<8x128xf32> -> vector<8x128xf32>
    %c1_145 = arith.constant 1 : index
    %c0_146 = arith.constant 0 : index
    %c0_147 = arith.constant 0 : index
    %788 = vector.load %arg17[%c1_145, %c0_146, %c0_147] : memref<2x32x128xbf16, #tpu.memory_space<vmem>>, vector<1x32x128xbf16>
    %789 = vector.shape_cast %788 : vector<1x32x128xbf16> to vector<32x128xbf16>
    %790 = vector.extract_strided_slice %784 {offsets = [0, 0], sizes = [8, 128], strides = [1, 1]} : vector<80x128xf32> to vector<8x128xf32>
    %791 = arith.addf %787, %790 : vector<8x128xf32>
    %792 = arith.negf %791 : vector<8x128xf32>
    %793 = math.exp %792 : vector<8x128xf32>
    %cst_148 = arith.constant 1.000000e+00 : f32
    %794 = vector.broadcast %cst_148 : f32 to vector<8x128xf32>
    %795 = arith.addf %794, %793 : vector<8x128xf32>
    %796 = arith.divf %794, %795 : vector<8x128xf32>
    %797 = math.tanh %791 : vector<8x128xf32>
    %798 = vector.extract_strided_slice %796 {offsets = [0, 32], sizes = [8, 32], strides = [1, 1]} : vector<8x128xf32> to vector<8x32xf32>
    %799 = arith.mulf %798, %514 : vector<8x32xf32>
    %800 = vector.extract_strided_slice %796 {offsets = [0, 0], sizes = [8, 32], strides = [1, 1]} : vector<8x128xf32> to vector<8x32xf32>
    %801 = vector.extract_strided_slice %797 {offsets = [0, 64], sizes = [8, 32], strides = [1, 1]} : vector<8x128xf32> to vector<8x32xf32>
    %802 = arith.mulf %800, %801 : vector<8x32xf32>
    %803 = arith.addf %799, %802 : vector<8x32xf32>
    %804 = vector.extract_strided_slice %796 {offsets = [0, 96], sizes = [8, 32], strides = [1, 1]} : vector<8x128xf32> to vector<8x32xf32>
    %805 = math.tanh %803 : vector<8x32xf32>
    %806 = arith.mulf %804, %805 : vector<8x32xf32>
    %807 = vector.extract_strided_slice %784 {offsets = [8, 0], sizes = [8, 128], strides = [1, 1]} : vector<80x128xf32> to vector<8x128xf32>
    %808 = arith.truncf %806 : vector<8x32xf32> to vector<8x32xbf16>
    %cst_149 = arith.constant dense<0.000000e+00> : vector<8x128xf32>
    %809 = tpu.matmul %808, %789, %cst_149 {dimension_numbers = #tpu.dot_dimension_numbers<[1], [0], [0], [1], [0, 0, 1, 1], [], []>} : vector<8x32xbf16>, vector<32x128xbf16>, vector<8x128xf32> -> vector<8x128xf32>
    %810 = arith.addf %807, %809 : vector<8x128xf32>
    %811 = arith.negf %810 : vector<8x128xf32>
    %812 = math.exp %811 : vector<8x128xf32>
    %cst_150 = arith.constant 1.000000e+00 : f32
    %813 = vector.broadcast %cst_150 : f32 to vector<8x128xf32>
    %814 = arith.addf %813, %812 : vector<8x128xf32>
    %815 = arith.divf %813, %814 : vector<8x128xf32>
    %816 = math.tanh %810 : vector<8x128xf32>
    %817 = vector.extract_strided_slice %815 {offsets = [0, 32], sizes = [8, 32], strides = [1, 1]} : vector<8x128xf32> to vector<8x32xf32>
    %818 = arith.mulf %817, %803 : vector<8x32xf32>
    %819 = vector.extract_strided_slice %815 {offsets = [0, 0], sizes = [8, 32], strides = [1, 1]} : vector<8x128xf32> to vector<8x32xf32>
    %820 = vector.extract_strided_slice %816 {offsets = [0, 64], sizes = [8, 32], strides = [1, 1]} : vector<8x128xf32> to vector<8x32xf32>
    %821 = arith.mulf %819, %820 : vector<8x32xf32>
    %822 = arith.addf %818, %821 : vector<8x32xf32>
    %823 = vector.extract_strided_slice %815 {offsets = [0, 96], sizes = [8, 32], strides = [1, 1]} : vector<8x128xf32> to vector<8x32xf32>
    %824 = math.tanh %822 : vector<8x32xf32>
    %825 = arith.mulf %823, %824 : vector<8x32xf32>
    %826 = vector.extract_strided_slice %784 {offsets = [16, 0], sizes = [8, 128], strides = [1, 1]} : vector<80x128xf32> to vector<8x128xf32>
    %827 = arith.truncf %825 : vector<8x32xf32> to vector<8x32xbf16>
    %cst_151 = arith.constant dense<0.000000e+00> : vector<8x128xf32>
    %828 = tpu.matmul %827, %789, %cst_151 {dimension_numbers = #tpu.dot_dimension_numbers<[1], [0], [0], [1], [0, 0, 1, 1], [], []>} : vector<8x32xbf16>, vector<32x128xbf16>, vector<8x128xf32> -> vector<8x128xf32>
    %829 = arith.addf %826, %828 : vector<8x128xf32>
    %830 = arith.negf %829 : vector<8x128xf32>
    %831 = math.exp %830 : vector<8x128xf32>
    %cst_152 = arith.constant 1.000000e+00 : f32
    %832 = vector.broadcast %cst_152 : f32 to vector<8x128xf32>
    %833 = arith.addf %832, %831 : vector<8x128xf32>
    %834 = arith.divf %832, %833 : vector<8x128xf32>
    %835 = math.tanh %829 : vector<8x128xf32>
    %836 = vector.extract_strided_slice %834 {offsets = [0, 32], sizes = [8, 32], strides = [1, 1]} : vector<8x128xf32> to vector<8x32xf32>
    %837 = arith.mulf %836, %822 : vector<8x32xf32>
    %838 = vector.extract_strided_slice %834 {offsets = [0, 0], sizes = [8, 32], strides = [1, 1]} : vector<8x128xf32> to vector<8x32xf32>
    %839 = vector.extract_strided_slice %835 {offsets = [0, 64], sizes = [8, 32], strides = [1, 1]} : vector<8x128xf32> to vector<8x32xf32>
    %840 = arith.mulf %838, %839 : vector<8x32xf32>
    %841 = arith.addf %837, %840 : vector<8x32xf32>
    %842 = vector.extract_strided_slice %834 {offsets = [0, 96], sizes = [8, 32], strides = [1, 1]} : vector<8x128xf32> to vector<8x32xf32>
    %843 = math.tanh %841 : vector<8x32xf32>
    %844 = arith.mulf %842, %843 : vector<8x32xf32>
    %845 = vector.extract_strided_slice %784 {offsets = [24, 0], sizes = [8, 128], strides = [1, 1]} : vector<80x128xf32> to vector<8x128xf32>
    %846 = arith.truncf %844 : vector<8x32xf32> to vector<8x32xbf16>
    %cst_153 = arith.constant dense<0.000000e+00> : vector<8x128xf32>
    %847 = tpu.matmul %846, %789, %cst_153 {dimension_numbers = #tpu.dot_dimension_numbers<[1], [0], [0], [1], [0, 0, 1, 1], [], []>} : vector<8x32xbf16>, vector<32x128xbf16>, vector<8x128xf32> -> vector<8x128xf32>
    %848 = arith.addf %845, %847 : vector<8x128xf32>
    %849 = arith.negf %848 : vector<8x128xf32>
    %850 = math.exp %849 : vector<8x128xf32>
    %cst_154 = arith.constant 1.000000e+00 : f32
    %851 = vector.broadcast %cst_154 : f32 to vector<8x128xf32>
    %852 = arith.addf %851, %850 : vector<8x128xf32>
    %853 = arith.divf %851, %852 : vector<8x128xf32>
    %854 = math.tanh %848 : vector<8x128xf32>
    %855 = vector.extract_strided_slice %853 {offsets = [0, 32], sizes = [8, 32], strides = [1, 1]} : vector<8x128xf32> to vector<8x32xf32>
    %856 = arith.mulf %855, %841 : vector<8x32xf32>
    %857 = vector.extract_strided_slice %853 {offsets = [0, 0], sizes = [8, 32], strides = [1, 1]} : vector<8x128xf32> to vector<8x32xf32>
    %858 = vector.extract_strided_slice %854 {offsets = [0, 64], sizes = [8, 32], strides = [1, 1]} : vector<8x128xf32> to vector<8x32xf32>
    %859 = arith.mulf %857, %858 : vector<8x32xf32>
    %860 = arith.addf %856, %859 : vector<8x32xf32>
    %861 = vector.extract_strided_slice %853 {offsets = [0, 96], sizes = [8, 32], strides = [1, 1]} : vector<8x128xf32> to vector<8x32xf32>
    %862 = math.tanh %860 : vector<8x32xf32>
    %863 = arith.mulf %861, %862 : vector<8x32xf32>
    %864 = vector.extract_strided_slice %784 {offsets = [32, 0], sizes = [8, 128], strides = [1, 1]} : vector<80x128xf32> to vector<8x128xf32>
    %865 = arith.truncf %863 : vector<8x32xf32> to vector<8x32xbf16>
    %cst_155 = arith.constant dense<0.000000e+00> : vector<8x128xf32>
    %866 = tpu.matmul %865, %789, %cst_155 {dimension_numbers = #tpu.dot_dimension_numbers<[1], [0], [0], [1], [0, 0, 1, 1], [], []>} : vector<8x32xbf16>, vector<32x128xbf16>, vector<8x128xf32> -> vector<8x128xf32>
    %867 = arith.addf %864, %866 : vector<8x128xf32>
    %868 = arith.negf %867 : vector<8x128xf32>
    %869 = math.exp %868 : vector<8x128xf32>
    %cst_156 = arith.constant 1.000000e+00 : f32
    %870 = vector.broadcast %cst_156 : f32 to vector<8x128xf32>
    %871 = arith.addf %870, %869 : vector<8x128xf32>
    %872 = arith.divf %870, %871 : vector<8x128xf32>
    %873 = math.tanh %867 : vector<8x128xf32>
    %874 = vector.extract_strided_slice %872 {offsets = [0, 32], sizes = [8, 32], strides = [1, 1]} : vector<8x128xf32> to vector<8x32xf32>
    %875 = arith.mulf %874, %860 : vector<8x32xf32>
    %876 = vector.extract_strided_slice %872 {offsets = [0, 0], sizes = [8, 32], strides = [1, 1]} : vector<8x128xf32> to vector<8x32xf32>
    %877 = vector.extract_strided_slice %873 {offsets = [0, 64], sizes = [8, 32], strides = [1, 1]} : vector<8x128xf32> to vector<8x32xf32>
    %878 = arith.mulf %876, %877 : vector<8x32xf32>
    %879 = arith.addf %875, %878 : vector<8x32xf32>
    %880 = vector.extract_strided_slice %872 {offsets = [0, 96], sizes = [8, 32], strides = [1, 1]} : vector<8x128xf32> to vector<8x32xf32>
    %881 = math.tanh %879 : vector<8x32xf32>
    %882 = arith.mulf %880, %881 : vector<8x32xf32>
    %883 = vector.extract_strided_slice %784 {offsets = [40, 0], sizes = [8, 128], strides = [1, 1]} : vector<80x128xf32> to vector<8x128xf32>
    %884 = arith.truncf %882 : vector<8x32xf32> to vector<8x32xbf16>
    %cst_157 = arith.constant dense<0.000000e+00> : vector<8x128xf32>
    %885 = tpu.matmul %884, %789, %cst_157 {dimension_numbers = #tpu.dot_dimension_numbers<[1], [0], [0], [1], [0, 0, 1, 1], [], []>} : vector<8x32xbf16>, vector<32x128xbf16>, vector<8x128xf32> -> vector<8x128xf32>
    %886 = arith.addf %883, %885 : vector<8x128xf32>
    %887 = arith.negf %886 : vector<8x128xf32>
    %888 = math.exp %887 : vector<8x128xf32>
    %cst_158 = arith.constant 1.000000e+00 : f32
    %889 = vector.broadcast %cst_158 : f32 to vector<8x128xf32>
    %890 = arith.addf %889, %888 : vector<8x128xf32>
    %891 = arith.divf %889, %890 : vector<8x128xf32>
    %892 = math.tanh %886 : vector<8x128xf32>
    %893 = vector.extract_strided_slice %891 {offsets = [0, 32], sizes = [8, 32], strides = [1, 1]} : vector<8x128xf32> to vector<8x32xf32>
    %894 = arith.mulf %893, %879 : vector<8x32xf32>
    %895 = vector.extract_strided_slice %891 {offsets = [0, 0], sizes = [8, 32], strides = [1, 1]} : vector<8x128xf32> to vector<8x32xf32>
    %896 = vector.extract_strided_slice %892 {offsets = [0, 64], sizes = [8, 32], strides = [1, 1]} : vector<8x128xf32> to vector<8x32xf32>
    %897 = arith.mulf %895, %896 : vector<8x32xf32>
    %898 = arith.addf %894, %897 : vector<8x32xf32>
    %899 = vector.extract_strided_slice %891 {offsets = [0, 96], sizes = [8, 32], strides = [1, 1]} : vector<8x128xf32> to vector<8x32xf32>
    %900 = math.tanh %898 : vector<8x32xf32>
    %901 = arith.mulf %899, %900 : vector<8x32xf32>
    %902 = vector.extract_strided_slice %784 {offsets = [48, 0], sizes = [8, 128], strides = [1, 1]} : vector<80x128xf32> to vector<8x128xf32>
    %903 = arith.truncf %901 : vector<8x32xf32> to vector<8x32xbf16>
    %cst_159 = arith.constant dense<0.000000e+00> : vector<8x128xf32>
    %904 = tpu.matmul %903, %789, %cst_159 {dimension_numbers = #tpu.dot_dimension_numbers<[1], [0], [0], [1], [0, 0, 1, 1], [], []>} : vector<8x32xbf16>, vector<32x128xbf16>, vector<8x128xf32> -> vector<8x128xf32>
    %905 = arith.addf %902, %904 : vector<8x128xf32>
    %906 = arith.negf %905 : vector<8x128xf32>
    %907 = math.exp %906 : vector<8x128xf32>
    %cst_160 = arith.constant 1.000000e+00 : f32
    %908 = vector.broadcast %cst_160 : f32 to vector<8x128xf32>
    %909 = arith.addf %908, %907 : vector<8x128xf32>
    %910 = arith.divf %908, %909 : vector<8x128xf32>
    %911 = math.tanh %905 : vector<8x128xf32>
    %912 = vector.extract_strided_slice %910 {offsets = [0, 32], sizes = [8, 32], strides = [1, 1]} : vector<8x128xf32> to vector<8x32xf32>
    %913 = arith.mulf %912, %898 : vector<8x32xf32>
    %914 = vector.extract_strided_slice %910 {offsets = [0, 0], sizes = [8, 32], strides = [1, 1]} : vector<8x128xf32> to vector<8x32xf32>
    %915 = vector.extract_strided_slice %911 {offsets = [0, 64], sizes = [8, 32], strides = [1, 1]} : vector<8x128xf32> to vector<8x32xf32>
    %916 = arith.mulf %914, %915 : vector<8x32xf32>
    %917 = arith.addf %913, %916 : vector<8x32xf32>
    %918 = vector.extract_strided_slice %910 {offsets = [0, 96], sizes = [8, 32], strides = [1, 1]} : vector<8x128xf32> to vector<8x32xf32>
    %919 = math.tanh %917 : vector<8x32xf32>
    %920 = arith.mulf %918, %919 : vector<8x32xf32>
    %921 = vector.extract_strided_slice %784 {offsets = [56, 0], sizes = [8, 128], strides = [1, 1]} : vector<80x128xf32> to vector<8x128xf32>
    %922 = arith.truncf %920 : vector<8x32xf32> to vector<8x32xbf16>
    %cst_161 = arith.constant dense<0.000000e+00> : vector<8x128xf32>
    %923 = tpu.matmul %922, %789, %cst_161 {dimension_numbers = #tpu.dot_dimension_numbers<[1], [0], [0], [1], [0, 0, 1, 1], [], []>} : vector<8x32xbf16>, vector<32x128xbf16>, vector<8x128xf32> -> vector<8x128xf32>
    %924 = arith.addf %921, %923 : vector<8x128xf32>
    %925 = arith.negf %924 : vector<8x128xf32>
    %926 = math.exp %925 : vector<8x128xf32>
    %cst_162 = arith.constant 1.000000e+00 : f32
    %927 = vector.broadcast %cst_162 : f32 to vector<8x128xf32>
    %928 = arith.addf %927, %926 : vector<8x128xf32>
    %929 = arith.divf %927, %928 : vector<8x128xf32>
    %930 = math.tanh %924 : vector<8x128xf32>
    %931 = vector.extract_strided_slice %929 {offsets = [0, 32], sizes = [8, 32], strides = [1, 1]} : vector<8x128xf32> to vector<8x32xf32>
    %932 = arith.mulf %931, %917 : vector<8x32xf32>
    %933 = vector.extract_strided_slice %929 {offsets = [0, 0], sizes = [8, 32], strides = [1, 1]} : vector<8x128xf32> to vector<8x32xf32>
    %934 = vector.extract_strided_slice %930 {offsets = [0, 64], sizes = [8, 32], strides = [1, 1]} : vector<8x128xf32> to vector<8x32xf32>
    %935 = arith.mulf %933, %934 : vector<8x32xf32>
    %936 = arith.addf %932, %935 : vector<8x32xf32>
    %937 = vector.extract_strided_slice %929 {offsets = [0, 96], sizes = [8, 32], strides = [1, 1]} : vector<8x128xf32> to vector<8x32xf32>
    %938 = math.tanh %936 : vector<8x32xf32>
    %939 = arith.mulf %937, %938 : vector<8x32xf32>
    %940 = vector.extract_strided_slice %784 {offsets = [64, 0], sizes = [8, 128], strides = [1, 1]} : vector<80x128xf32> to vector<8x128xf32>
    %941 = arith.truncf %939 : vector<8x32xf32> to vector<8x32xbf16>
    %cst_163 = arith.constant dense<0.000000e+00> : vector<8x128xf32>
    %942 = tpu.matmul %941, %789, %cst_163 {dimension_numbers = #tpu.dot_dimension_numbers<[1], [0], [0], [1], [0, 0, 1, 1], [], []>} : vector<8x32xbf16>, vector<32x128xbf16>, vector<8x128xf32> -> vector<8x128xf32>
    %943 = arith.addf %940, %942 : vector<8x128xf32>
    %944 = arith.negf %943 : vector<8x128xf32>
    %945 = math.exp %944 : vector<8x128xf32>
    %cst_164 = arith.constant 1.000000e+00 : f32
    %946 = vector.broadcast %cst_164 : f32 to vector<8x128xf32>
    %947 = arith.addf %946, %945 : vector<8x128xf32>
    %948 = arith.divf %946, %947 : vector<8x128xf32>
    %949 = math.tanh %943 : vector<8x128xf32>
    %950 = vector.extract_strided_slice %948 {offsets = [0, 32], sizes = [8, 32], strides = [1, 1]} : vector<8x128xf32> to vector<8x32xf32>
    %951 = arith.mulf %950, %936 : vector<8x32xf32>
    %952 = vector.extract_strided_slice %948 {offsets = [0, 0], sizes = [8, 32], strides = [1, 1]} : vector<8x128xf32> to vector<8x32xf32>
    %953 = vector.extract_strided_slice %949 {offsets = [0, 64], sizes = [8, 32], strides = [1, 1]} : vector<8x128xf32> to vector<8x32xf32>
    %954 = arith.mulf %952, %953 : vector<8x32xf32>
    %955 = arith.addf %951, %954 : vector<8x32xf32>
    %956 = vector.extract_strided_slice %948 {offsets = [0, 96], sizes = [8, 32], strides = [1, 1]} : vector<8x128xf32> to vector<8x32xf32>
    %957 = math.tanh %955 : vector<8x32xf32>
    %958 = arith.mulf %956, %957 : vector<8x32xf32>
    %959 = vector.extract_strided_slice %784 {offsets = [72, 0], sizes = [8, 128], strides = [1, 1]} : vector<80x128xf32> to vector<8x128xf32>
    %960 = arith.truncf %958 : vector<8x32xf32> to vector<8x32xbf16>
    %cst_165 = arith.constant dense<0.000000e+00> : vector<8x128xf32>
    %961 = tpu.matmul %960, %789, %cst_165 {dimension_numbers = #tpu.dot_dimension_numbers<[1], [0], [0], [1], [0, 0, 1, 1], [], []>} : vector<8x32xbf16>, vector<32x128xbf16>, vector<8x128xf32> -> vector<8x128xf32>
    %962 = arith.addf %959, %961 : vector<8x128xf32>
    %963 = arith.negf %962 : vector<8x128xf32>
    %964 = math.exp %963 : vector<8x128xf32>
    %cst_166 = arith.constant 1.000000e+00 : f32
    %965 = vector.broadcast %cst_166 : f32 to vector<8x128xf32>
    %966 = arith.addf %965, %964 : vector<8x128xf32>
    %967 = arith.divf %965, %966 : vector<8x128xf32>
    %968 = math.tanh %962 : vector<8x128xf32>
    %969 = vector.extract_strided_slice %967 {offsets = [0, 32], sizes = [8, 32], strides = [1, 1]} : vector<8x128xf32> to vector<8x32xf32>
    %970 = arith.mulf %969, %955 : vector<8x32xf32>
    %971 = vector.extract_strided_slice %967 {offsets = [0, 0], sizes = [8, 32], strides = [1, 1]} : vector<8x128xf32> to vector<8x32xf32>
    %972 = vector.extract_strided_slice %968 {offsets = [0, 64], sizes = [8, 32], strides = [1, 1]} : vector<8x128xf32> to vector<8x32xf32>
    %973 = arith.mulf %971, %972 : vector<8x32xf32>
    %974 = arith.addf %970, %973 : vector<8x32xf32>
    %975 = vector.extract_strided_slice %967 {offsets = [0, 96], sizes = [8, 32], strides = [1, 1]} : vector<8x128xf32> to vector<8x32xf32>
    %976 = math.tanh %974 : vector<8x32xf32>
    %977 = arith.mulf %975, %976 : vector<8x32xf32>
    %978 = arith.addf %806, %825 : vector<8x32xf32>
    %979 = arith.addf %978, %844 : vector<8x32xf32>
    %980 = arith.addf %979, %863 : vector<8x32xf32>
    %981 = arith.addf %980, %882 : vector<8x32xf32>
    %982 = arith.addf %981, %901 : vector<8x32xf32>
    %983 = arith.addf %982, %920 : vector<8x32xf32>
    %984 = arith.addf %983, %939 : vector<8x32xf32>
    %985 = arith.addf %984, %958 : vector<8x32xf32>
    %986 = arith.addf %985, %977 : vector<8x32xf32>
    %c1_167 = arith.constant 1 : index
    %c0_168 = arith.constant 0 : index
    %c0_169 = arith.constant 0 : index
    %987 = vector.load %arg19[%c1_167, %c0_168, %c0_169] : memref<2x32x16xf32, #tpu.memory_space<vmem>>, vector<1x32x16xf32>
    %988 = vector.shape_cast %987 : vector<1x32x16xf32> to vector<32x16xf32>
    %cst_170 = arith.constant dense<0.000000e+00> : vector<8x16xf32>
    %989 = tpu.matmul %986, %988, %cst_170 {dimension_numbers = #tpu.dot_dimension_numbers<[1], [0], [0], [1], [0, 0, 1, 1], [], []>} : vector<8x32xf32>, vector<32x16xf32>, vector<8x16xf32> -> vector<8x16xf32>
    %cst_171 = arith.constant 1.000000e-01 : f32
    %990 = vector.broadcast %cst_171 : f32 to vector<8x16xf32>
    %991 = arith.mulf %989, %990 : vector<8x16xf32>
    %c0_172 = arith.constant 0 : index
    %c0_173 = arith.constant 0 : index
    %992 = vector.load %arg20[%c0_172, %c0_173] : memref<16x256xf32, #tpu.memory_space<vmem>>, vector<16x256xf32>
    %cst_174 = arith.constant dense<0.000000e+00> : vector<8x256xf32>
    %993 = tpu.matmul %991, %992, %cst_174 {dimension_numbers = #tpu.dot_dimension_numbers<[1], [0], [0], [1], [0, 0, 1, 1], [], []>} : vector<8x16xf32>, vector<16x256xf32>, vector<8x256xf32> -> vector<8x256xf32>
    %c0_175 = arith.constant 0 : index
    %c0_176 = arith.constant 0 : index
    %994 = vector.load %arg21[%c0_175, %c0_176] : memref<1x256xf32, #tpu.memory_space<vmem>>, vector<1x256xf32>
    %995 = vector.broadcast %994 : vector<1x256xf32> to vector<8x256xf32>
    %996 = arith.addf %993, %995 : vector<8x256xf32>
    %cst_177 = arith.constant 0.000000e+00 : f32
    %997 = vector.broadcast %cst_177 : f32 to vector<8x256xf32>
    %998 = arith.maximumf %996, %997 : vector<8x256xf32>
    %c0_178 = arith.constant 0 : index
    %c0_179 = arith.constant 0 : index
    %999 = vector.load %arg22[%c0_178, %c0_179] : memref<256x1xf32, #tpu.memory_space<vmem>>, vector<256x1xf32>
    %cst_180 = arith.constant dense<0.000000e+00> : vector<8x1xf32>
    %1000 = tpu.matmul %998, %999, %cst_180 {dimension_numbers = #tpu.dot_dimension_numbers<[1], [0], [0], [1], [0, 0, 1, 1], [], []>} : vector<8x256xf32>, vector<256x1xf32>, vector<8x1xf32> -> vector<8x1xf32>
    %c0_181 = arith.constant 0 : index
    %c0_182 = arith.constant 0 : index
    %1001 = vector.load %arg23[%c0_181, %c0_182] : memref<1x1xf32, #tpu.memory_space<vmem>>, vector<1x1xf32>
    %1002 = vector.broadcast %1001 : vector<1x1xf32> to vector<8x1xf32>
    %1003 = arith.addf %1000, %1002 : vector<8x1xf32>
    %c0_183 = arith.constant 0 : index
    %c0_184 = arith.constant 0 : index
    %1004 = vector.load %arg24[%c0_183, %c0_184] : memref<8x1xf32, #tpu.memory_space<vmem>>, vector<8x1xf32>
    tpu.vector_store %arg24[%c0_183, %c0_184], %1003 {strides = array<i32>} : memref<8x1xf32, #tpu.memory_space<vmem>>, vector<8x1xf32>,
    return
  }
}

</mosaic_0001>

<llo_original>
// kernel: forward.1
$region0: #{forward.1}
  #allocation0 [shape = 'u32[]', space=smem, size = 0x4, offset = 0x4, fixed_abs, tag = 'smem constant byte address 0x4 - core index']
  #allocation1 [shape = 'u32[144,128]{1,0:T(1,128)}', space=vmem, size = 0x12000, scoped, tag = 'internal scratch']
  #allocation2 [shape = 'f32[1,1]{1,0:T(1,128)S(1)}', space=vmem, size = 0x200, scoped, tag = 'scoped memory for forward.1']
  %s0 = inlined_call_operand.vmem [shape: f32[512,64], index: 0, kind: input, shape index: {}]
  %s1 = inlined_call_operand.vmem [shape: f32[32,512], index: 1, kind: input, shape index: {}]
  %s2 = inlined_call_operand.vmem [shape: f32[32,1], index: 2, kind: input, shape index: {}]
  %s3 = inlined_call_operand.vmem [shape: f32[32,1], index: 3, kind: input, shape index: {}]
  %s4 = inlined_call_operand.vmem [shape: f32[32,1], index: 4, kind: input, shape index: {}]
  %s5 = inlined_call_operand.vmem [shape: f32[48,64], index: 5, kind: input, shape index: {}]
  %s6 = inlined_call_operand.vmem [shape: f32[64,256], index: 6, kind: input, shape index: {}]
  %s7 = inlined_call_operand.vmem [shape: f32[16,256], index: 7, kind: input, shape index: {}]
  %s8 = inlined_call_operand.vmem [shape: f32[64,256], index: 8, kind: input, shape index: {}]
  %s9 = inlined_call_operand.vmem [shape: f32[16,256], index: 9, kind: input, shape index: {}]
  %s10 = inlined_call_operand.vmem [shape: f32[2,1,256], index: 10, kind: input, shape index: {}]
  %s11 = inlined_call_operand.vmem [shape: f32[2,1,256], index: 11, kind: input, shape index: {}]
  %s12 = inlined_call_operand.vmem [shape: bf16[2,64,256], index: 12, kind: input, shape index: {}]
  %s13 = inlined_call_operand.vmem [shape: f32[2,32,16], index: 13, kind: input, shape index: {}]
  %s14 = inlined_call_operand.vmem [shape: f32[2,32,16], index: 14, kind: input, shape index: {}]
  %s15 = inlined_call_operand.vmem [shape: f32[2,16,128], index: 15, kind: input, shape index: {}]
  %s16 = inlined_call_operand.vmem [shape: f32[2,1,128], index: 16, kind: input, shape index: {}]
  %s17 = inlined_call_operand.vmem [shape: bf16[2,32,128], index: 17, kind: input, shape index: {}]
  %s18 = inlined_call_operand.vmem [shape: f32[2,16,128], index: 18, kind: input, shape index: {}]
  %s19 = inlined_call_operand.vmem [shape: f32[2,32,16], index: 19, kind: input, shape index: {}]
  %s20 = inlined_call_operand.vmem [shape: f32[16,256], index: 20, kind: input, shape index: {}]
  %s21 = inlined_call_operand.vmem [shape: f32[1,256], index: 21, kind: input, shape index: {}]
  %s22 = inlined_call_operand.vmem [shape: f32[256,1], index: 22, kind: input, shape index: {}]
  %s23 = inlined_call_operand.<no memory space> [shape: f32[1,1], index: 23, kind: input, shape index: {}]
  %s24 = inlined_call_operand.vmem [shape: f32[8,1], index: 24, kind: output, shape index: {}]
  %s25 = sld [smem:[#allocation0]]
  $region106: #{forward.1} parent=0
    _
  %s27 = ssub.s32 1, %s25
  %s28 = scalar_select 0, %s27, %s25
  %v29 = vstv %s23
  %30 = vst [vmem:[#allocation2] sm:$0x1] %v29
  // Predicated region
  $region2: #{forward.1} parent=0 // pred_check
    _
  $region3: #{forward.1} parent=0 // pred_check_branch
    %32 = sbr.rel (0) target = $region5
  $region4: #{forward.1} parent=0 // pred_region
    _
  $region5: #{forward.1} parent=0 // pred_fallthru
    _
  // Predicated region
  $region6: #{forward.1} parent=0 // pred_check
    _
  $region7: #{forward.1} parent=0 // pred_check_branch
    %34 = sbr.rel (0) target = $region9
  $region8: #{forward.1} parent=0 // pred_region
    _
  $region9: #{forward.1} parent=0 // pred_fallthru
    _
  // Predicated region
  $region10: #{forward.1} parent=0 // pred_check
    _
  $region11: #{forward.1} parent=0 // pred_check_branch
    %36 = sbr.rel (0) target = $region13
  $region12: #{forward.1} parent=0 // pred_region
    _
  $region13: #{forward.1} parent=0 // pred_fallthru
    _
  // Predicated region
  $region14: #{forward.1} parent=0 // pred_check
    _
  $region15: #{forward.1} parent=0 // pred_check_branch
    %38 = sbr.rel (0) target = $region17
  $region16: #{forward.1} parent=0 // pred_region
    _
  $region17: #{forward.1} parent=0 // pred_fallthru
    _
  // Predicated region
  $region18: #{forward.1} parent=0 // pred_check
    _
  $region19: #{forward.1} parent=0 // pred_check_branch
    %40 = sbr.rel (0) target = $region21
  $region20: #{forward.1} parent=0 // pred_region
    _
  $region21: #{forward.1} parent=0 // pred_fallthru
    _
  // Predicated region
  $region22: #{forward.1} parent=0 // pred_check
    _
  $region23: #{forward.1} parent=0 // pred_check_branch
    %42 = sbr.rel (0) target = $region25
  $region24: #{forward.1} parent=0 // pred_region
    _
  $region25: #{forward.1} parent=0 // pred_fallthru
    _
  // Predicated region
  $region26: #{forward.1} parent=0 // pred_check
    _
  $region27: #{forward.1} parent=0 // pred_check_branch
    %44 = sbr.rel (0) target = $region29
  $region28: #{forward.1} parent=0 // pred_region
    _
  $region29: #{forward.1} parent=0 // pred_fallthru
    _
  // Predicated region
  $region30: #{forward.1} parent=0 // pred_check
    _
  $region31: #{forward.1} parent=0 // pred_check_branch
    %46 = sbr.rel (0) target = $region33
  $region32: #{forward.1} parent=0 // pred_region
    _
  $region33: #{forward.1} parent=0 // pred_fallthru
    _
  // Predicated region
  $region34: #{forward.1} parent=0 // pred_check
    _
  $region35: #{forward.1} parent=0 // pred_check_branch
    %48 = sbr.rel (0) target = $region37
  $region36: #{forward.1} parent=0 // pred_region
    _
  $region37: #{forward.1} parent=0 // pred_fallthru
    _
  // Predicated region
  $region38: #{forward.1} parent=0 // pred_check
    _
  $region39: #{forward.1} parent=0 // pred_check_branch
    %50 = sbr.rel (0) target = $region41
  $region40: #{forward.1} parent=0 // pred_region
    _
  $region41: #{forward.1} parent=0 // pred_fallthru
    _
  // Predicated region
  $region42: #{forward.1} parent=0 // pred_check
    _
  $region43: #{forward.1} parent=0 // pred_check_branch
    %52 = sbr.rel (0) target = $region45
  $region44: #{forward.1} parent=0 // pred_region
    _
  $region45: #{forward.1} parent=0 // pred_fallthru
    _
  // Predicated region
  $region46: #{forward.1} parent=0 // pred_check
    _
  $region47: #{forward.1} parent=0 // pred_check_branch
    %54 = sbr.rel (0) target = $region49
  $region48: #{forward.1} parent=0 // pred_region
    _
  $region49: #{forward.1} parent=0 // pred_fallthru
    _
  // Predicated region
  $region50: #{forward.1} parent=0 // pred_check
    _
  $region51: #{forward.1} parent=0 // pred_check_branch
    %56 = sbr.rel (0) target = $region53
  $region52: #{forward.1} parent=0 // pred_region
    _
  $region53: #{forward.1} parent=0 // pred_fallthru
    _
  // Predicated region
  $region54: #{forward.1} parent=0 // pred_check
    _
  $region55: #{forward.1} parent=0 // pred_check_branch
    %58 = sbr.rel (0) target = $region57
  $region56: #{forward.1} parent=0 // pred_region
    _
  $region57: #{forward.1} parent=0 // pred_fallthru
    _
  // Predicated region
  $region58: #{forward.1} parent=0 // pred_check
    _
  $region59: #{forward.1} parent=0 // pred_check_branch
    %60 = sbr.rel (0) target = $region61
  $region60: #{forward.1} parent=0 // pred_region
    _
  $region61: #{forward.1} parent=0 // pred_fallthru
    _
  // Predicated region
  $region62: #{forward.1} parent=0 // pred_check
    _
  $region63: #{forward.1} parent=0 // pred_check_branch
    %62 = sbr.rel (0) target = $region65
  $region64: #{forward.1} parent=0 // pred_region
    _
  $region65: #{forward.1} parent=0 // pred_fallthru
    _
  // Predicated region
  $region66: #{forward.1} parent=0 // pred_check
    _
  $region67: #{forward.1} parent=0 // pred_check_branch
    %64 = sbr.rel (0) target = $region69
  $region68: #{forward.1} parent=0 // pred_region
    _
  $region69: #{forward.1} parent=0 // pred_fallthru
    _
  // Predicated region
  $region70: #{forward.1} parent=0 // pred_check
    _
  $region71: #{forward.1} parent=0 // pred_check_branch
    %66 = sbr.rel (0) target = $region73
  $region72: #{forward.1} parent=0 // pred_region
    _
  $region73: #{forward.1} parent=0 // pred_fallthru
    _
  // Predicated region
  $region74: #{forward.1} parent=0 // pred_check
    _
  $region75: #{forward.1} parent=0 // pred_check_branch
    %68 = sbr.rel (0) target = $region77
  $region76: #{forward.1} parent=0 // pred_region
    _
  $region77: #{forward.1} parent=0 // pred_fallthru
    _
  // Predicated region
  $region78: #{forward.1} parent=0 // pred_check
    _
  $region79: #{forward.1} parent=0 // pred_check_branch
    %70 = sbr.rel (0) target = $region81
  $region80: #{forward.1} parent=0 // pred_region
    _
  $region81: #{forward.1} parent=0 // pred_fallthru
    _
  // Predicated region
  $region82: #{forward.1} parent=0 // pred_check
    _
  $region83: #{forward.1} parent=0 // pred_check_branch
    %72 = sbr.rel (0) target = $region85
  $region84: #{forward.1} parent=0 // pred_region
    _
  $region85: #{forward.1} parent=0 // pred_fallthru
    _
  // Predicated region
  $region86: #{forward.1} parent=0 // pred_check
    _
  $region87: #{forward.1} parent=0 // pred_check_branch
    %74 = sbr.rel (0) target = $region89
  $region88: #{forward.1} parent=0 // pred_region
    _
  $region89: #{forward.1} parent=0 // pred_fallthru
    _
  // Predicated region
  $region90: #{forward.1} parent=0 // pred_check
    _
  $region91: #{forward.1} parent=0 // pred_check_branch
    %76 = sbr.rel (0) target = $region93
  $region92: #{forward.1} parent=0 // pred_region
    _
  $region93: #{forward.1} parent=0 // pred_fallthru
    _
  // Predicated region
  $region94: #{forward.1} parent=0 // pred_check
    _
  $region95: #{forward.1} parent=0 // pred_check_branch
    %78 = sbr.rel (0) target = $region97
  $region96: #{forward.1} parent=0 // pred_region
    _
  $region97: #{forward.1} parent=0 // pred_fallthru
    _
  %v80 = vlaneseq
  %v81 = vand.u32 %v80, 127
  %v82 = vadd.s32 %v81, 128
  %vm83 = vcmp.lt.s32.totalorder %v81, 0
  %v84 = vsub.s32 0, %v81
  %v85 = vsel %vm83, %v84, %v81
  %v86 = vshrl.u32 %v85, 5
  %v87 = vand.u32 %v85, 31
  %v88 = vsub.s32 0, %v87
  %v89 = vsel %vm83, %v88, %v87
  %vm90 = vcmp.lt.s32.totalorder %v82, 0
  %v91 = vsub.s32 0, %v82
  %v92 = vsel %vm90, %v91, %v82
  %v93 = vshrl.u32 %v92, 5
  %v94 = vand.u32 %v92, 31
  %v95 = vsub.s32 0, %v94
  %v96 = vsel %vm90, %v95, %v94
  %vm97 = vcmp.ne.s32.totalorder %v89, 0
  %vm98 = vcmp.ne.s32.totalorder %v96, 0
  %vm99 = vcmp.lt.s32.totalorder %v89, 0
  %vm100 = vcmp.lt.s32.totalorder %v96, 0
  %vm101 = vmand %vm99, %vm97
  %vm102 = vmand %vm100, %vm98
  %v103 = vadd.s32 %v89, 32
  %v104 = vadd.s32 %v96, 32
  %v105 = vsel %vm101, %v103, %v89
  %v106 = vsel %vm102, %v104, %v96
  %vm107 = vcmp.ge.s32.totalorder %v105, 16
  %vm108 = vcmp.ge.s32.totalorder %v106, 16
  %v109 = vld [vmem:[%s1] sm:$0xff]
  %v110 = vld [vmem:[%s1 + $0x8] sm:$0xff]
  %v111 = vld [vmem:[%s1 + $0x10] sm:$0xff]
  %v112 = vld [vmem:[%s1 + $0x18] sm:$0xff]
  %v113 = vld [vmem:[%s1 + $0x20] sm:$0xff]
  %v114 = vld [vmem:[%s1 + $0x28] sm:$0xff]
  %v115 = vld [vmem:[%s1 + $0x30] sm:$0xff]
  %v116 = vld [vmem:[%s1 + $0x38] sm:$0xff]
  %v117 = vld [vmem:[%s1 + $0x40] sm:$0xff]
  %v118 = vld [vmem:[%s1 + $0x48] sm:$0xff]
  %v119 = vld [vmem:[%s1 + $0x50] sm:$0xff]
  %v120 = vld [vmem:[%s1 + $0x58] sm:$0xff]
  %v121 = vld [vmem:[%s1 + $0x60] sm:$0xff]
  %v122 = vld [vmem:[%s1 + $0x68] sm:$0xff]
  %v123 = vld [vmem:[%s1 + $0x70] sm:$0xff]
  %v124 = vld [vmem:[%s1 + $0x78] sm:$0xff]
  %v125 = vld [vmem:[%s0] sm:$0xff]
  %v126 = vld [vmem:[%s0 + $0x8] sm:$0xff]
  %v127 = vld [vmem:[%s0 + $0x10] sm:$0xff]
  %v128 = vld [vmem:[%s0 + $0x18] sm:$0xff]
  %v129 = vld [vmem:[%s0 + $0x20] sm:$0xff]
  %v130 = vld [vmem:[%s0 + $0x28] sm:$0xff]
  %v131 = vld [vmem:[%s0 + $0x30] sm:$0xff]
  %v132 = vld [vmem:[%s0 + $0x38] sm:$0xff]
  %v133 = vld [vmem:[%s0 + $0x40] sm:$0xff]
  %v134 = vld [vmem:[%s0 + $0x48] sm:$0xff]
  %v135 = vld [vmem:[%s0 + $0x50] sm:$0xff]
  %v136 = vld [vmem:[%s0 + $0x58] sm:$0xff]
  %v137 = vld [vmem:[%s0 + $0x60] sm:$0xff]
  %v138 = vld [vmem:[%s0 + $0x68] sm:$0xff]
  %v139 = vld [vmem:[%s0 + $0x70] sm:$0xff]
  %v140 = vld [vmem:[%s0 + $0x78] sm:$0xff]
  %v141 = vld [vmem:[%s0 + $0x80] sm:$0xff]
  %v142 = vld [vmem:[%s0 + $0x88] sm:$0xff]
  %v143 = vld [vmem:[%s0 + $0x90] sm:$0xff]
  %v144 = vld [vmem:[%s0 + $0x98] sm:$0xff]
  %v145 = vld [vmem:[%s0 + $0xa0] sm:$0xff]
  %v146 = vld [vmem:[%s0 + $0xa8] sm:$0xff]
  %v147 = vld [vmem:[%s0 + $0xb0] sm:$0xff]
  %v148 = vld [vmem:[%s0 + $0xb8] sm:$0xff]
  %v149 = vld [vmem:[%s0 + $0xc0] sm:$0xff]
  %v150 = vld [vmem:[%s0 + $0xc8] sm:$0xff]
  %v151 = vld [vmem:[%s0 + $0xd0] sm:$0xff]
  %v152 = vld [vmem:[%s0 + $0xd8] sm:$0xff]
  %v153 = vld [vmem:[%s0 + $0xe0] sm:$0xff]
  %v154 = vld [vmem:[%s0 + $0xe8] sm:$0xff]
  %v155 = vld [vmem:[%s0 + $0xf0] sm:$0xff]
  %v156 = vld [vmem:[%s0 + $0xf8] sm:$0xff]
  %v157 = vld [vmem:[%s0 + $0x100] sm:$0xff]
  %v158 = vld [vmem:[%s0 + $0x108] sm:$0xff]
  %v159 = vld [vmem:[%s0 + $0x110] sm:$0xff]
  %v160 = vld [vmem:[%s0 + $0x118] sm:$0xff]
  %v161 = vld [vmem:[%s0 + $0x120] sm:$0xff]
  %v162 = vld [vmem:[%s0 + $0x128] sm:$0xff]
  %v163 = vld [vmem:[%s0 + $0x130] sm:$0xff]
  %v164 = vld [vmem:[%s0 + $0x138] sm:$0xff]
  %v165 = vld [vmem:[%s0 + $0x140] sm:$0xff]
  %v166 = vld [vmem:[%s0 + $0x148] sm:$0xff]
  %v167 = vld [vmem:[%s0 + $0x150] sm:$0xff]
  %v168 = vld [vmem:[%s0 + $0x158] sm:$0xff]
  %v169 = vld [vmem:[%s0 + $0x160] sm:$0xff]
  %v170 = vld [vmem:[%s0 + $0x168] sm:$0xff]
  %v171 = vld [vmem:[%s0 + $0x170] sm:$0xff]
  %v172 = vld [vmem:[%s0 + $0x178] sm:$0xff]
  %v173 = vld [vmem:[%s0 + $0x180] sm:$0xff]
  %v174 = vld [vmem:[%s0 + $0x188] sm:$0xff]
  %v175 = vld [vmem:[%s0 + $0x190] sm:$0xff]
  %v176 = vld [vmem:[%s0 + $0x198] sm:$0xff]
  %v177 = vld [vmem:[%s0 + $0x1a0] sm:$0xff]
  %v178 = vld [vmem:[%s0 + $0x1a8] sm:$0xff]
  %v179 = vld [vmem:[%s0 + $0x1b0] sm:$0xff]
  %v180 = vld [vmem:[%s0 + $0x1b8] sm:$0xff]
  %v181 = vld [vmem:[%s0 + $0x1c0] sm:$0xff]
  %v182 = vld [vmem:[%s0 + $0x1c8] sm:$0xff]
  %v183 = vld [vmem:[%s0 + $0x1d0] sm:$0xff]
  %v184 = vld [vmem:[%s0 + $0x1d8] sm:$0xff]
  %v185 = vld [vmem:[%s0 + $0x1e0] sm:$0xff]
  %v186 = vld [vmem:[%s0 + $0x1e8] sm:$0xff]
  %v187 = vld [vmem:[%s0 + $0x1f0] sm:$0xff]
  %v188 = vld [vmem:[%s0 + $0x1f8] sm:$0xff]
  %v189 = vld [vmem:[%s2] sm:$0xff]
  %v190 = vld [vmem:[%s2 + $0x8] sm:$0xff]
  %v191 = vld [vmem:[%s2 + $0x10] sm:$0xff]
  %v192 = vld [vmem:[%s2 + $0x18] sm:$0xff]
  %194 = vset.pattern.permute.xlu0 0
  %195 = vperm.xlu0 %194, %v189
  %v196 = vpop.permute.xlu0 %195
  %199 = vset.pattern.permute.xlu0 0
  %200 = vperm.xlu0 %199, %v190
  %v201 = vpop.permute.xlu0 %200
  %204 = vset.pattern.permute.xlu0 0
  %205 = vperm.xlu0 %204, %v191
  %v206 = vpop.permute.xlu0 %205
  %209 = vset.pattern.permute.xlu0 0
  %210 = vperm.xlu0 %209, %v192
  %v211 = vpop.permute.xlu0 %210
  %213 = vmatprep.subr.mxu0 0.0
  %214 = vmatpush1.msra.mxu0 %v125
  %215 = vmatprep.subr.mxu0 0.0
  %216 = vmatpush1.msra.mxu0 %v126
  %217 = vmatprep.subr.mxu0 0.0
  %218 = vmatpush1.msra.mxu0 %v127
  %219 = vmatprep.subr.mxu0 0.0
  %220 = vmatpush1.msra.mxu0 %v128
  %221 = vmatprep.subr.mxu0 0.0
  %222 = vmatpush1.msra.mxu0 %v129
  %223 = vmatprep.subr.mxu0 0.0
  %224 = vmatpush1.msra.mxu0 %v130
  %225 = vmatprep.subr.mxu0 0.0
  %226 = vmatpush1.msra.mxu0 %v131
  %227 = vmatprep.subr.mxu0 0.0
  %228 = vmatpush1.msra.mxu0 %v132
  %229 = vmatprep.subr.mxu0 0.0
  %230 = vmatpush1.msra.mxu0 %v133
  %231 = vmatprep.subr.mxu0 0.0
  %232 = vmatpush1.msra.mxu0 %v134
  %233 = vmatprep.subr.mxu0 0.0
  %234 = vmatpush1.msra.mxu0 %v135
  %235 = vmatprep.subr.mxu0 0.0
  %236 = vmatpush1.msra.mxu0 %v136
  %237 = vmatprep.subr.mxu0 0.0
  %238 = vmatpush1.msra.mxu0 %v137
  %239 = vmatprep.subr.mxu0 0.0
  %240 = vmatpush1.msra.mxu0 %v138
  %241 = vmatprep.subr.mxu0 0.0
  %242 = vmatpush1.msra.mxu0 %v139
  %243 = vmatprep.subr.mxu0 0.0
  %244 = vmatpush1.msra.mxu0 %v140
  %245 = vmatprep.subr.mxu0 0.0
  %246 = vmatpush1.msra.mxu0 %v141
  %247 = vmatprep.subr.mxu0 0.0
  %248 = vmatpush1.msra.mxu0 %v142
  %249 = vmatprep.subr.mxu0 0.0
  %250 = vmatpush1.msra.mxu0 %v143
  %251 = vmatprep.subr.mxu0 0.0
  %252 = vmatpush1.msra.mxu0 %v144
  %253 = vmatprep.subr.mxu0 0.0
  %254 = vmatpush1.msra.mxu0 %v145
  %255 = vmatprep.subr.mxu0 0.0
  %256 = vmatpush1.msra.mxu0 %v146
  %257 = vmatprep.subr.mxu0 0.0
  %258 = vmatpush1.msra.mxu0 %v147
  %259 = vmatprep.subr.mxu0 0.0
  %260 = vmatpush1.msra.mxu0 %v148
  %261 = vmatprep.subr.mxu0 0.0
  %262 = vmatpush1.msra.mxu0 %v149
  %263 = vmatprep.subr.mxu0 0.0
  %264 = vmatpush1.msra.mxu0 %v150
  %265 = vmatprep.subr.mxu0 0.0
  %266 = vmatpush1.msra.mxu0 %v151
  %267 = vmatprep.subr.mxu0 0.0
  %268 = vmatpush1.msra.mxu0 %v152
  %269 = vmatprep.subr.mxu0 0.0
  %270 = vmatpush1.msra.mxu0 %v153
  %271 = vmatprep.subr.mxu0 0.0
  %272 = vmatpush1.msra.mxu0 %v154
  %273 = vmatprep.subr.mxu0 0.0
  %274 = vmatpush1.msra.mxu0 %v155
  %275 = vmatprep.subr.mxu0 0.0
  %276 = vmatpush1.msra.mxu0 %v156
  %277 = vmatprep.mubr.f32.mxu0 %v110
  %278 = vmatmul.mubr.f32.gmra.mrb[0].mxu0 %v109
  %v279 = vpop.f32.mrb[0].mxu0
  %v280 = vadd.f32 %v196, %v279
  %v281 = vpop.f32.mrb[0].mxu0
  %282 = vmatprep.mubr.f32.mxu0 %v114
  %283 = vmatmul.mubr.f32.gmra.mrb[0].mxu0 %v113
  %v284 = vpop.f32.mrb[0].mxu0
  %v285 = vadd.f32 %v201, %v284
  %v286 = vpop.f32.mrb[0].mxu0
  %287 = vmatprep.mubr.f32.mxu0 %v118
  %288 = vmatmul.mubr.f32.gmra.mrb[0].mxu0 %v117
  %v289 = vpop.f32.mrb[0].mxu0
  %v290 = vadd.f32 %v206, %v289
  %v291 = vpop.f32.mrb[0].mxu0
  %292 = vmatprep.mubr.f32.mxu0 %v122
  %293 = vmatmul.mubr.f32.gmra.mrb[0].mxu0 %v121
  %v294 = vpop.f32.mrb[0].mxu0
  %v295 = vadd.f32 %v211, %v294
  %v296 = vpop.f32.mrb[0].mxu0
  %297 = vdwg.mxu0
  %298 = vmatprep.subr.mxu0 0.0
  %299 = vmatpush1.msra.mxu0 %v157
  %300 = vmatprep.subr.mxu0 0.0
  %301 = vmatpush1.msra.mxu0 %v158
  %302 = vmatprep.subr.mxu0 0.0
  %303 = vmatpush1.msra.mxu0 %v159
  %304 = vmatprep.subr.mxu0 0.0
  %305 = vmatpush1.msra.mxu0 %v160
  %306 = vmatprep.subr.mxu0 0.0
  %307 = vmatpush1.msra.mxu0 %v161
  %308 = vmatprep.subr.mxu0 0.0
  %309 = vmatpush1.msra.mxu0 %v162
  %310 = vmatprep.subr.mxu0 0.0
  %311 = vmatpush1.msra.mxu0 %v163
  %312 = vmatprep.subr.mxu0 0.0
  %313 = vmatpush1.msra.mxu0 %v164
  %314 = vmatprep.subr.mxu0 0.0
  %315 = vmatpush1.msra.mxu0 %v165
  %316 = vmatprep.subr.mxu0 0.0
  %317 = vmatpush1.msra.mxu0 %v166
  %318 = vmatprep.subr.mxu0 0.0
  %319 = vmatpush1.msra.mxu0 %v167
  %320 = vmatprep.subr.mxu0 0.0
  %321 = vmatpush1.msra.mxu0 %v168
  %322 = vmatprep.subr.mxu0 0.0
  %323 = vmatpush1.msra.mxu0 %v169
  %324 = vmatprep.subr.mxu0 0.0
  %325 = vmatpush1.msra.mxu0 %v170
  %326 = vmatprep.subr.mxu0 0.0
  %327 = vmatpush1.msra.mxu0 %v171
  %328 = vmatprep.subr.mxu0 0.0
  %329 = vmatpush1.msra.mxu0 %v172
  %330 = vmatprep.subr.mxu0 0.0
  %331 = vmatpush1.msra.mxu0 %v173
  %332 = vmatprep.subr.mxu0 0.0
  %333 = vmatpush1.msra.mxu0 %v174
  %334 = vmatprep.subr.mxu0 0.0
  %335 = vmatpush1.msra.mxu0 %v175
  %336 = vmatprep.subr.mxu0 0.0
  %337 = vmatpush1.msra.mxu0 %v176
  %338 = vmatprep.subr.mxu0 0.0
  %339 = vmatpush1.msra.mxu0 %v177
  %340 = vmatprep.subr.mxu0 0.0
  %341 = vmatpush1.msra.mxu0 %v178
  %342 = vmatprep.subr.mxu0 0.0
  %343 = vmatpush1.msra.mxu0 %v179
  %344 = vmatprep.subr.mxu0 0.0
  %345 = vmatpush1.msra.mxu0 %v180
  %346 = vmatprep.subr.mxu0 0.0
  %347 = vmatpush1.msra.mxu0 %v181
  %348 = vmatprep.subr.mxu0 0.0
  %349 = vmatpush1.msra.mxu0 %v182
  %350 = vmatprep.subr.mxu0 0.0
  %351 = vmatpush1.msra.mxu0 %v183
  %352 = vmatprep.subr.mxu0 0.0
  %353 = vmatpush1.msra.mxu0 %v184
  %354 = vmatprep.subr.mxu0 0.0
  %355 = vmatpush1.msra.mxu0 %v185
  %356 = vmatprep.subr.mxu0 0.0
  %357 = vmatpush1.msra.mxu0 %v186
  %358 = vmatprep.subr.mxu0 0.0
  %359 = vmatpush1.msra.mxu0 %v187
  %360 = vmatprep.subr.mxu0 0.0
  %361 = vmatpush1.msra.mxu0 %v188
  %362 = vmatprep.mubr.f32.mxu0 %v112
  %363 = vmatmul.mubr.f32.gmra.mrb[0].mxu0 %v111
  %v364 = vpop.f32.mrb[0].mxu0
  %v365 = vadd.f32 %v280, %v364
  %v366 = vpop.f32.mrb[0].mxu0
  %367 = vmatprep.mubr.f32.mxu0 %v116
  %368 = vmatmul.mubr.f32.gmra.mrb[0].mxu0 %v115
  %v369 = vpop.f32.mrb[0].mxu0
  %v370 = vadd.f32 %v285, %v369
  %v371 = vpop.f32.mrb[0].mxu0
  %372 = vmatprep.mubr.f32.mxu0 %v120
  %373 = vmatmul.mubr.f32.gmra.mrb[0].mxu0 %v119
  %v374 = vpop.f32.mrb[0].mxu0
  %v375 = vadd.f32 %v290, %v374
  %v376 = vpop.f32.mrb[0].mxu0
  %377 = vmatprep.mubr.f32.mxu0 %v124
  %378 = vmatmul.mubr.f32.gmra.mrb[0].mxu0 %v123
  %v379 = vpop.f32.mrb[0].mxu0
  %v380 = vadd.f32 %v295, %v379
  %v381 = vpop.f32.mrb[0].mxu0
  %382 = vdwg.mxu0
  %v383 = vmax.f32 %v365, 0.0
  %v384 = vmax.f32 %v370, 0.0
  %v385 = vmax.f32 %v375, 0.0
  %v386 = vmax.f32 %v380, 0.0
  %v387 = vld [vmem:[%s3] sm:$0xff]
  %v388 = vld [vmem:[%s3 + $0x8] sm:$0xff]
  %v389 = vld [vmem:[%s3 + $0x10] sm:$0xff]
  %v390 = vld [vmem:[%s3 + $0x18] sm:$0xff]
  %392 = vset.pattern.permute.xlu0 0
  %393 = vperm.xlu0 %392, %v387
  %v394 = vpop.permute.xlu0 %393
  %397 = vset.pattern.permute.xlu0 0
  %398 = vperm.xlu0 %397, %v388
  %v399 = vpop.permute.xlu0 %398
  %402 = vset.pattern.permute.xlu0 0
  %403 = vperm.xlu0 %402, %v389
  %v404 = vpop.permute.xlu0 %403
  %407 = vset.pattern.permute.xlu0 0
  %408 = vperm.xlu0 %407, %v390
  %v409 = vpop.permute.xlu0 %408
  %v411 = vmul.f32 %v383, %v394
  %v412 = vmul.f32 %v384, %v399
  %v413 = vmul.f32 %v385, %v404
  %v414 = vmul.f32 %v386, %v409
  %v415 = vld [vmem:[%s4] sm:$0xff]
  %v416 = vld [vmem:[%s4 + $0x8] sm:$0xff]
  %v417 = vld [vmem:[%s4 + $0x10] sm:$0xff]
  %v418 = vld [vmem:[%s4 + $0x18] sm:$0xff]
  %420 = vset.pattern.permute.xlu0 0
  %421 = vperm.xlu0 %420, %v415
  %v422 = vpop.permute.xlu0 %421
  %425 = vset.pattern.permute.xlu0 0
  %426 = vperm.xlu0 %425, %v416
  %v427 = vpop.permute.xlu0 %426
  %430 = vset.pattern.permute.xlu0 0
  %431 = vperm.xlu0 %430, %v417
  %v432 = vpop.permute.xlu0 %431
  %435 = vset.pattern.permute.xlu0 0
  %436 = vperm.xlu0 %435, %v418
  %v437 = vpop.permute.xlu0 %436
  %v439 = vadd.f32 %v411, %v422
  %v440 = vadd.f32 %v412, %v427
  %v441 = vadd.f32 %v413, %v432
  %v442 = vadd.f32 %v414, %v437
  %v443 = vld [vmem:[%s5] sm:$0xff]
  %v444 = vld [vmem:[%s5 + $0x8] sm:$0xff]
  %v445 = vld [vmem:[%s5 + $0x10] sm:$0xff]
  %v446 = vld [vmem:[%s5 + $0x18] sm:$0xff]
  %v447 = vld [vmem:[%s5 + $0x20] sm:$0xff]
  %v448 = vld [vmem:[%s5 + $0x28] sm:$0xff]
  %v449 = vld [vmem:[%s6] sm:$0xff]
  %v450 = vld [vmem:[%s6 + $0x8] sm:$0xff]
  %v451 = vld [vmem:[%s6 + $0x10] sm:$0xff]
  %v452 = vld [vmem:[%s6 + $0x18] sm:$0xff]
  %v453 = vld [vmem:[%s6 + $0x20] sm:$0xff]
  %v454 = vld [vmem:[%s6 + $0x28] sm:$0xff]
  %v455 = vld [vmem:[%s6 + $0x30] sm:$0xff]
  %v456 = vld [vmem:[%s6 + $0x38] sm:$0xff]
  %v457 = vld [vmem:[%s6 + $0x40] sm:$0xff]
  %v458 = vld [vmem:[%s6 + $0x48] sm:$0xff]
  %v459 = vld [vmem:[%s6 + $0x50] sm:$0xff]
  %v460 = vld [vmem:[%s6 + $0x58] sm:$0xff]
  %v461 = vld [vmem:[%s6 + $0x60] sm:$0xff]
  %v462 = vld [vmem:[%s6 + $0x68] sm:$0xff]
  %v463 = vld [vmem:[%s6 + $0x70] sm:$0xff]
  %v464 = vld [vmem:[%s6 + $0x78] sm:$0xff]
  %v465 = vld [vmem:[%s10] sm:$0x3]
  %v467 = vlaneseq
  %v468 = vshrl.u32 %v467, 7
  %v469 = vsub.s32 0, %v468
  %v470 = vrot.slane %v465, %v469
  %v471 = vlaneseq
  %v472 = vshrl.u32 %v471, 7
  %v473 = vsub.s32 1, %v472
  %v474 = vrot.slane %v465, %v473
  %vm477 = vcmask 523264
  %v479 = vsel %vm477, %v439, 0
  %v482 = vsel %vm477, %v440, 0
  %v485 = vsel %vm477, %v441, 0
  %v488 = vsel %vm477, %v442, 0
  %490 = vmatprep.subr.mxu0 %v450
  %491 = vmatpush1.msra.mxu0 %v449
  %492 = vmatprep.subr.mxu0 %v452
  %493 = vmatpush1.msra.mxu0 %v451
  %494 = vmatprep.subr.mxu0 %v454
  %495 = vmatpush1.msra.mxu0 %v453
  %496 = vmatprep.subr.mxu0 %v456
  %497 = vmatpush1.msra.mxu0 %v455
  %498 = vmatprep.subr.mxu0 %v458
  %499 = vmatpush1.msra.mxu0 %v457
  %500 = vmatprep.subr.mxu0 %v460
  %501 = vmatpush1.msra.mxu0 %v459
  %502 = vmatprep.subr.mxu0 %v462
  %503 = vmatpush1.msra.mxu0 %v461
  %504 = vmatprep.subr.mxu0 %v464
  %505 = vmatpush1.msra.mxu0 %v463
  %506 = vmatprep.subr.mxu0 0.0
  %507 = vmatpush1.msra.mxu0 0.0
  %508 = vmatprep.subr.mxu0 0.0
  %509 = vmatpush1.msra.mxu0 0.0
  %510 = vmatprep.subr.mxu0 0.0
  %511 = vmatpush1.msra.mxu0 0.0
  %512 = vmatprep.subr.mxu0 0.0
  %513 = vmatpush1.msra.mxu0 0.0
  %514 = vmatprep.subr.mxu0 0.0
  %515 = vmatpush1.msra.mxu0 0.0
  %516 = vmatprep.subr.mxu0 0.0
  %517 = vmatpush1.msra.mxu0 0.0
  %518 = vmatprep.subr.mxu0 0.0
  %519 = vmatpush1.msra.mxu0 0.0
  %520 = vmatprep.subr.mxu0 0.0
  %521 = vmatpush1.msra.mxu0 0.0
  %522 = vmatprep.subr.mxu0 0.0
  %523 = vmatpush1.msra.mxu0 0.0
  %524 = vmatprep.subr.mxu0 0.0
  %525 = vmatpush1.msra.mxu0 0.0
  %526 = vmatprep.subr.mxu0 0.0
  %527 = vmatpush1.msra.mxu0 0.0
  %528 = vmatprep.subr.mxu0 0.0
  %529 = vmatpush1.msra.mxu0 0.0
  %530 = vmatprep.subr.mxu0 0.0
  %531 = vmatpush1.msra.mxu0 0.0
  %532 = vmatprep.subr.mxu0 0.0
  %533 = vmatpush1.msra.mxu0 0.0
  %534 = vmatprep.subr.mxu0 0.0
  %535 = vmatpush1.msra.mxu0 0.0
  %536 = vmatprep.subr.mxu0 0.0
  %537 = vmatpush1.msra.mxu0 0.0
  %538 = vmatprep.subr.mxu0 0.0
  %539 = vmatpush1.msra.mxu0 0.0
  %540 = vmatprep.subr.mxu0 0.0
  %541 = vmatpush1.msra.mxu0 0.0
  %542 = vmatprep.subr.mxu0 0.0
  %543 = vmatpush1.msra.mxu0 0.0
  %544 = vmatprep.subr.mxu0 0.0
  %545 = vmatpush1.msra.mxu0 0.0
  %546 = vmatprep.subr.mxu0 0.0
  %547 = vmatpush1.msra.mxu0 0.0
  %548 = vmatprep.subr.mxu0 0.0
  %549 = vmatpush1.msra.mxu0 0.0
  %550 = vmatprep.subr.mxu0 0.0
  %551 = vmatpush1.msra.mxu0 0.0
  %552 = vmatprep.subr.mxu0 0.0
  %553 = vmatpush1.msra.mxu0 0.0
  %554 = vmatprep.mubr.f32.mxu0 0.0
  %555 = vmatmul.mubr.f32.gmra.mrb[0].mxu0 %v479
  %v556 = vpop.f32.mrb[0].mxu0
  %v557 = vadd.f32 %v470, %v556
  %v558 = vpop.f32.mrb[0].mxu0
  %v559 = vadd.f32 %v474, %v558
  %560 = vmatprep.mubr.f32.mxu0 0.0
  %561 = vmatmul.mubr.f32.gmra.mrb[0].mxu0 %v482
  %v562 = vpop.f32.mrb[0].mxu0
  %v563 = vadd.f32 %v470, %v562
  %v564 = vpop.f32.mrb[0].mxu0
  %v565 = vadd.f32 %v474, %v564
  %566 = vmatprep.mubr.f32.mxu0 0.0
  %567 = vmatmul.mubr.f32.gmra.mrb[0].mxu0 %v485
  %v568 = vpop.f32.mrb[0].mxu0
  %v569 = vadd.f32 %v470, %v568
  %v570 = vpop.f32.mrb[0].mxu0
  %v571 = vadd.f32 %v474, %v570
  %572 = vmatprep.mubr.f32.mxu0 0.0
  %573 = vmatmul.mubr.f32.gmra.mrb[0].mxu0 %v488
  %v574 = vpop.f32.mrb[0].mxu0
  %v575 = vadd.f32 %v470, %v574
  %v576 = vpop.f32.mrb[0].mxu0
  %v577 = vadd.f32 %v474, %v576
  %578 = vdwg.mxu0
  %v579 = vsel %vm107, 1, 0
  %v580 = vsel %vm108, 1, 0
  %vm581 = vcmp.eq.s32.totalorder %v579, 1
  %vm582 = vcmp.eq.s32.totalorder %v580, 1
  %v583 = vsel %vm581, %v575, %v557
  %v584 = vsel %vm582, %v577, %v559
  %v585 = vsel %vm581, %v569, %v563
  %v586 = vsel %vm582, %v571, %v565
  %v587 = vsel %vm581, %v563, %v569
  %v588 = vsel %vm582, %v565, %v571
  %v589 = vsel %vm581, %v557, %v575
  %v590 = vsel %vm582, %v559, %v577
  %v591 = vld [vmem:[%s8] sm:$0xff]
  %v592 = vld [vmem:[%s8 + $0x8] sm:$0xff]
  %v593 = vld [vmem:[%s8 + $0x10] sm:$0xff]
  %v594 = vld [vmem:[%s8 + $0x18] sm:$0xff]
  %v595 = vld [vmem:[%s8 + $0x20] sm:$0xff]
  %v596 = vld [vmem:[%s8 + $0x28] sm:$0xff]
  %v597 = vld [vmem:[%s8 + $0x30] sm:$0xff]
  %v598 = vld [vmem:[%s8 + $0x38] sm:$0xff]
  %v599 = vld [vmem:[%s8 + $0x40] sm:$0xff]
  %v600 = vld [vmem:[%s8 + $0x48] sm:$0xff]
  %v601 = vld [vmem:[%s8 + $0x50] sm:$0xff]
  %v602 = vld [vmem:[%s8 + $0x58] sm:$0xff]
  %v603 = vld [vmem:[%s8 + $0x60] sm:$0xff]
  %v604 = vld [vmem:[%s8 + $0x68] sm:$0xff]
  %v605 = vld [vmem:[%s8 + $0x70] sm:$0xff]
  %v606 = vld [vmem:[%s8 + $0x78] sm:$0xff]
  %v607 = vld [vmem:[%s11] sm:$0x3]
  %v609 = vlaneseq
  %v610 = vshrl.u32 %v609, 7
  %v611 = vsub.s32 0, %v610
  %v612 = vrot.slane %v607, %v611
  %v613 = vlaneseq
  %v614 = vshrl.u32 %v613, 7
  %v615 = vsub.s32 1, %v614
  %v616 = vrot.slane %v607, %v615
  %v620 = vsel %vm477, %v443, 0
  %v623 = vsel %vm477, %v444, 0
  %v626 = vsel %vm477, %v445, 0
  %v629 = vsel %vm477, %v446, 0
  %v632 = vsel %vm477, %v447, 0
  %v635 = vsel %vm477, %v448, 0
  %637 = vmatprep.subr.mxu0 %v592
  %638 = vmatpush1.msra.mxu0 %v591
  %639 = vmatprep.subr.mxu0 %v594
  %640 = vmatpush1.msra.mxu0 %v593
  %641 = vmatprep.subr.mxu0 %v596
  %642 = vmatpush1.msra.mxu0 %v595
  %643 = vmatprep.subr.mxu0 %v598
  %644 = vmatpush1.msra.mxu0 %v597
  %645 = vmatprep.subr.mxu0 %v600
  %646 = vmatpush1.msra.mxu0 %v599
  %647 = vmatprep.subr.mxu0 %v602
  %648 = vmatpush1.msra.mxu0 %v601
  %649 = vmatprep.subr.mxu0 %v604
  %650 = vmatpush1.msra.mxu0 %v603
  %651 = vmatprep.subr.mxu0 %v606
  %652 = vmatpush1.msra.mxu0 %v605
  %653 = vmatprep.subr.mxu0 0.0
  %654 = vmatpush1.msra.mxu0 0.0
  %655 = vmatprep.subr.mxu0 0.0
  %656 = vmatpush1.msra.mxu0 0.0
  %657 = vmatprep.subr.mxu0 0.0
  %658 = vmatpush1.msra.mxu0 0.0
  %659 = vmatprep.subr.mxu0 0.0
  %660 = vmatpush1.msra.mxu0 0.0
  %661 = vmatprep.subr.mxu0 0.0
  %662 = vmatpush1.msra.mxu0 0.0
  %663 = vmatprep.subr.mxu0 0.0
  %664 = vmatpush1.msra.mxu0 0.0
  %665 = vmatprep.subr.mxu0 0.0
  %666 = vmatpush1.msra.mxu0 0.0
  %667 = vmatprep.subr.mxu0 0.0
  %668 = vmatpush1.msra.mxu0 0.0
  %669 = vmatprep.subr.mxu0 0.0
  %670 = vmatpush1.msra.mxu0 0.0
  %671 = vmatprep.subr.mxu0 0.0
  %672 = vmatpush1.msra.mxu0 0.0
  %673 = vmatprep.subr.mxu0 0.0
  %674 = vmatpush1.msra.mxu0 0.0
  %675 = vmatprep.subr.mxu0 0.0
  %676 = vmatpush1.msra.mxu0 0.0
  %677 = vmatprep.subr.mxu0 0.0
  %678 = vmatpush1.msra.mxu0 0.0
  %679 = vmatprep.subr.mxu0 0.0
  %680 = vmatpush1.msra.mxu0 0.0
  %681 = vmatprep.subr.mxu0 0.0
  %682 = vmatpush1.msra.mxu0 0.0
  %683 = vmatprep.subr.mxu0 0.0
  %684 = vmatpush1.msra.mxu0 0.0
  %685 = vmatprep.subr.mxu0 0.0
  %686 = vmatpush1.msra.mxu0 0.0
  %687 = vmatprep.subr.mxu0 0.0
  %688 = vmatpush1.msra.mxu0 0.0
  %689 = vmatprep.subr.mxu0 0.0
  %690 = vmatpush1.msra.mxu0 0.0
  %691 = vmatprep.subr.mxu0 0.0
  %692 = vmatpush1.msra.mxu0 0.0
  %693 = vmatprep.subr.mxu0 0.0
  %694 = vmatpush1.msra.mxu0 0.0
  %695 = vmatprep.subr.mxu0 0.0
  %696 = vmatpush1.msra.mxu0 0.0
  %697 = vmatprep.subr.mxu0 0.0
  %698 = vmatpush1.msra.mxu0 0.0
  %699 = vmatprep.subr.mxu0 0.0
  %700 = vmatpush1.msra.mxu0 0.0
  %701 = vmatprep.mubr.f32.mxu0 0.0
  %702 = vmatmul.mubr.f32.gmra.mrb[0].mxu0 %v620
  %v703 = vpop.f32.mrb[0].mxu0
  %v704 = vadd.f32 %v612, %v703
  %v705 = vpop.f32.mrb[0].mxu0
  %v706 = vadd.f32 %v616, %v705
  %707 = vmatprep.mubr.f32.mxu0 0.0
  %708 = vmatmul.mubr.f32.gmra.mrb[0].mxu0 %v623
  %v709 = vpop.f32.mrb[0].mxu0
  %v710 = vadd.f32 %v612, %v709
  %v711 = vpop.f32.mrb[0].mxu0
  %v712 = vadd.f32 %v616, %v711
  %713 = vmatprep.mubr.f32.mxu0 0.0
  %714 = vmatmul.mubr.f32.gmra.mrb[0].mxu0 %v626
  %v715 = vpop.f32.mrb[0].mxu0
  %v716 = vadd.f32 %v612, %v715
  %v717 = vpop.f32.mrb[0].mxu0
  %v718 = vadd.f32 %v616, %v717
  %719 = vmatprep.mubr.f32.mxu0 0.0
  %720 = vmatmul.mubr.f32.gmra.mrb[0].mxu0 %v629
  %v721 = vpop.f32.mrb[0].mxu0
  %v722 = vadd.f32 %v612, %v721
  %v723 = vpop.f32.mrb[0].mxu0
  %v724 = vadd.f32 %v616, %v723
  %725 = vmatprep.mubr.f32.mxu0 0.0
  %726 = vmatmul.mubr.f32.gmra.mrb[0].mxu0 %v632
  %v727 = vpop.f32.mrb[0].mxu0
  %v728 = vadd.f32 %v612, %v727
  %v729 = vpop.f32.mrb[0].mxu0
  %v730 = vadd.f32 %v616, %v729
  %731 = vmatprep.mubr.f32.mxu0 0.0
  %732 = vmatmul.mubr.f32.gmra.mrb[0].mxu0 %v635
  %v733 = vpop.f32.mrb[0].mxu0
  %v734 = vadd.f32 %v612, %v733
  %v735 = vpop.f32.mrb[0].mxu0
  %v736 = vadd.f32 %v616, %v735
  %737 = vdwg.mxu0
  %v738 = vsel %vm581, %v734, %v704
  %v739 = vsel %vm582, %v736, %v706
  %v740 = vsel %vm581, %v728, %v710
  %v741 = vsel %vm582, %v730, %v712
  %v742 = vsel %vm581, %v722, %v716
  %v743 = vsel %vm582, %v724, %v718
  %v744 = vsel %vm581, %v716, %v722
  %v745 = vsel %vm582, %v718, %v724
  %v746 = vsel %vm581, %v710, %v728
  %v747 = vsel %vm582, %v712, %v730
  %v748 = vsel %vm581, %v704, %v734
  %v749 = vsel %vm582, %v706, %v736
  %v750 = vld [vmem:[%s12] sm:$0xff]
  %v751 = vld [vmem:[%s12 + $0x8] sm:$0xff]
  %v752 = vld [vmem:[%s12 + $0x10] sm:$0xff]
  %v753 = vld [vmem:[%s12 + $0x18] sm:$0xff]
  %v754 = vld [vmem:[%s12 + $0x20] sm:$0xff]
  %v755 = vld [vmem:[%s12 + $0x28] sm:$0xff]
  %v756 = vld [vmem:[%s12 + $0x30] sm:$0xff]
  %v757 = vld [vmem:[%s12 + $0x38] sm:$0xff]
  %v758 = vadd.f32 %v583, %v738
  %v759 = vadd.f32 %v584, %v739
  %v760 = vxor.u32 %v758, 2147483648
  %v761 = vxor.u32 %v759, 2147483648
  %v762 = vmul.f32 %v760, 1.442695
  %v763 = vpow.pop %v762
  %v764 = vmul.f32 %v761, 1.442695
  %v765 = vpow.pop %v764
  %v766 = vadd.f32 %v763, 1.0
  %v767 = vadd.f32 %v765, 1.0
  %v768 = vrcp.pop %v766
  %v769 = vmul.f32 1.0, %v768
  %v770 = vrcp.pop %v767
  %v771 = vmul.f32 1.0, %v770
  %v772 = vtanh.pop %v759
  %v773 = vmul.f32 %v769, 0.0
  %v774 = vmul.f32 %v769, %v772
  %776 = vrot.lane.b32.xlu0 %v774, 64
  %v777 = vpop.permute.xlu0 %776
  %v779 = vadd.f32 %v773, %v777
  %v780 = vtanh.pop %v779
  %v781 = vmul.f32 %v771, %v780
  %v782 = vadd.f32 %v585, %v740
  %v783 = vadd.f32 %v586, %v741
  %v784 = vpack.c.bf16 %v781, %v781
  %786 = vrot.lane.b32.xlu0 %v784, 64
  %v787 = vpop.permute.xlu0 %786
  %v796 = vunpack.c.l.b16 %v750
  %v797 = vunpack.c.h.b16 %v750
  %v798 = vunpack.c.l.b16 %v751
  %v799 = vunpack.c.h.b16 %v751
  %v800 = vunpack.c.l.b16 %v752
  %v801 = vunpack.c.h.b16 %v752
  %v802 = vunpack.c.l.b16 %v753
  %v803 = vunpack.c.h.b16 %v753
  %v804 = vunpack.c.l.b16 %v754
  %v805 = vunpack.c.h.b16 %v754
  %v806 = vunpack.c.l.b16 %v755
  %v807 = vunpack.c.h.b16 %v755
  %v808 = vunpack.c.l.b16 %v756
  %v809 = vunpack.c.h.b16 %v756
  %v810 = vunpack.c.l.b16 %v757
  %v811 = vunpack.c.h.b16 %v757
  %v812 = vpack.c.b16 %v798, %v796
  %v813 = vpack.c.b16 %v799, %v797
  %v814 = vpack.c.b16 %v802, %v800
  %v815 = vpack.c.b16 %v803, %v801
  %v816 = vpack.c.b16 %v806, %v804
  %v817 = vpack.c.b16 %v807, %v805
  %v818 = vpack.c.b16 %v810, %v808
  %v819 = vpack.c.b16 %v811, %v809
  %v829 = vsel %vm477, %v787, 0
  %831 = vmatprep.subr.bf16.mxu0 %v813
  %832 = vmatpush1.bf16.msra.mxu0 %v812
  %833 = vmatprep.subr.bf16.mxu0 %v815
  %834 = vmatpush1.bf16.msra.mxu0 %v814
  %835 = vmatprep.subr.bf16.mxu0 %v817
  %836 = vmatpush1.bf16.msra.mxu0 %v816
  %837 = vmatprep.subr.bf16.mxu0 %v819
  %838 = vmatpush1.bf16.msra.mxu0 %v818
  %839 = vmatprep.subr.bf16.mxu0 0
  %840 = vmatpush1.bf16.msra.mxu0 0
  %841 = vmatprep.subr.bf16.mxu0 0
  %842 = vmatpush1.bf16.msra.mxu0 0
  %843 = vmatprep.subr.bf16.mxu0 0
  %844 = vmatpush1.bf16.msra.mxu0 0
  %845 = vmatprep.subr.bf16.mxu0 0
  %846 = vmatpush1.bf16.msra.mxu0 0
  %847 = vmatprep.subr.bf16.mxu0 0
  %848 = vmatpush1.bf16.msra.mxu0 0
  %849 = vmatprep.subr.bf16.mxu0 0
  %850 = vmatpush1.bf16.msra.mxu0 0
  %851 = vmatprep.subr.bf16.mxu0 0
  %852 = vmatpush1.bf16.msra.mxu0 0
  %853 = vmatprep.subr.bf16.mxu0 0
  %854 = vmatpush1.bf16.msra.mxu0 0
  %855 = vmatprep.subr.bf16.mxu0 0
  %856 = vmatpush1.bf16.msra.mxu0 0
  %857 = vmatprep.subr.bf16.mxu0 0
  %858 = vmatpush1.bf16.msra.mxu0 0
  %859 = vmatprep.subr.bf16.mxu0 0
  %860 = vmatpush1.bf16.msra.mxu0 0
  %861 = vmatprep.subr.bf16.mxu0 0
  %862 = vmatpush1.bf16.msra.mxu0 0
  %863 = vmatprep.mubr.bf16.mxu0 0
  %864 = vmatmul.mubr.bf16.gmra.mrb[0].mxu0 %v829
  %v865 = vpop.f32.mrb[0].mxu0
  %v866 = vadd.f32 0.0, %v865
  %v867 = vpop.f32.mrb[0].mxu0
  %v868 = vadd.f32 0.0, %v867
  %v869 = vpop.f32.mrb[0].mxu0
  %v870 = vpop.f32.mrb[0].mxu0
  %871 = vdwg.mxu0
  %v872 = vadd.f32 %v782, %v866
  %v873 = vadd.f32 %v783, %v868
  %v874 = vxor.u32 %v872, 2147483648
  %v875 = vxor.u32 %v873, 2147483648
  %v876 = vmul.f32 %v874, 1.442695
  %v877 = vpow.pop %v876
  %v878 = vmul.f32 %v875, 1.442695
  %v879 = vpow.pop %v878
  %v880 = vadd.f32 %v877, 1.0
  %v881 = vadd.f32 %v879, 1.0
  %v882 = vrcp.pop %v880
  %v883 = vmul.f32 1.0, %v882
  %v884 = vrcp.pop %v881
  %v885 = vmul.f32 1.0, %v884
  %v886 = vtanh.pop %v873
  %v887 = vmul.f32 %v883, %v779
  %v888 = vmul.f32 %v883, %v886
  %890 = vrot.lane.b32.xlu0 %v888, 64
  %v891 = vpop.permute.xlu0 %890
  %v893 = vadd.f32 %v887, %v891
  %v894 = vtanh.pop %v893
  %v895 = vmul.f32 %v885, %v894
  %v896 = vadd.f32 %v587, %v742
  %v897 = vadd.f32 %v588, %v743
  %v898 = vpack.c.bf16 %v895, %v895
  %900 = vrot.lane.b32.xlu0 %v898, 64
  %v901 = vpop.permute.xlu0 %900
  %v903 = vsel %vm477, %v901, 0
  %905 = vmatprep.subr.bf16.mxu0 %v813
  %906 = vmatpush1.bf16.msra.mxu0 %v812
  %907 = vmatprep.subr.bf16.mxu0 %v815
  %908 = vmatpush1.bf16.msra.mxu0 %v814
  %909 = vmatprep.subr.bf16.mxu0 %v817
  %910 = vmatpush1.bf16.msra.mxu0 %v816
  %911 = vmatprep.subr.bf16.mxu0 %v819
  %912 = vmatpush1.bf16.msra.mxu0 %v818
  %913 = vmatprep.subr.bf16.mxu0 0
  %914 = vmatpush1.bf16.msra.mxu0 0
  %915 = vmatprep.subr.bf16.mxu0 0
  %916 = vmatpush1.bf16.msra.mxu0 0
  %917 = vmatprep.subr.bf16.mxu0 0
  %918 = vmatpush1.bf16.msra.mxu0 0
  %919 = vmatprep.subr.bf16.mxu0 0
  %920 = vmatpush1.bf16.msra.mxu0 0
  %921 = vmatprep.subr.bf16.mxu0 0
  %922 = vmatpush1.bf16.msra.mxu0 0
  %923 = vmatprep.subr.bf16.mxu0 0
  %924 = vmatpush1.bf16.msra.mxu0 0
  %925 = vmatprep.subr.bf16.mxu0 0
  %926 = vmatpush1.bf16.msra.mxu0 0
  %927 = vmatprep.subr.bf16.mxu0 0
  %928 = vmatpush1.bf16.msra.mxu0 0
  %929 = vmatprep.subr.bf16.mxu0 0
  %930 = vmatpush1.bf16.msra.mxu0 0
  %931 = vmatprep.subr.bf16.mxu0 0
  %932 = vmatpush1.bf16.msra.mxu0 0
  %933 = vmatprep.subr.bf16.mxu0 0
  %934 = vmatpush1.bf16.msra.mxu0 0
  %935 = vmatprep.subr.bf16.mxu0 0
  %936 = vmatpush1.bf16.msra.mxu0 0
  %937 = vmatprep.mubr.bf16.mxu0 0
  %938 = vmatmul.mubr.bf16.gmra.mrb[0].mxu0 %v903
  %v939 = vpop.f32.mrb[0].mxu0
  %v940 = vadd.f32 0.0, %v939
  %v941 = vpop.f32.mrb[0].mxu0
  %v942 = vadd.f32 0.0, %v941
  %v943 = vpop.f32.mrb[0].mxu0
  %v944 = vpop.f32.mrb[0].mxu0
  %945 = vdwg.mxu0
  %v946 = vadd.f32 %v896, %v940
  %v947 = vadd.f32 %v897, %v942
  %v948 = vxor.u32 %v946, 2147483648
  %v949 = vxor.u32 %v947, 2147483648
  %v950 = vmul.f32 %v948, 1.442695
  %v951 = vpow.pop %v950
  %v952 = vmul.f32 %v949, 1.442695
  %v953 = vpow.pop %v952
  %v954 = vadd.f32 %v951, 1.0
  %v955 = vadd.f32 %v953, 1.0
  %v956 = vrcp.pop %v954
  %v957 = vmul.f32 1.0, %v956
  %v958 = vrcp.pop %v955
  %v959 = vmul.f32 1.0, %v958
  %v960 = vtanh.pop %v947
  %v961 = vmul.f32 %v957, %v893
  %v962 = vmul.f32 %v957, %v960
  %964 = vrot.lane.b32.xlu0 %v962, 64
  %v965 = vpop.permute.xlu0 %964
  %v967 = vadd.f32 %v961, %v965
  %v968 = vtanh.pop %v967
  %v969 = vmul.f32 %v959, %v968
  %v970 = vadd.f32 %v589, %v744
  %v971 = vadd.f32 %v590, %v745
  %v972 = vpack.c.bf16 %v969, %v969
  %974 = vrot.lane.b32.xlu0 %v972, 64
  %v975 = vpop.permute.xlu0 %974
  %v977 = vsel %vm477, %v975, 0
  %979 = vmatprep.subr.bf16.mxu0 %v813
  %980 = vmatpush1.bf16.msra.mxu0 %v812
  %981 = vmatprep.subr.bf16.mxu0 %v815
  %982 = vmatpush1.bf16.msra.mxu0 %v814
  %983 = vmatprep.subr.bf16.mxu0 %v817
  %984 = vmatpush1.bf16.msra.mxu0 %v816
  %985 = vmatprep.subr.bf16.mxu0 %v819
  %986 = vmatpush1.bf16.msra.mxu0 %v818
  %987 = vmatprep.subr.bf16.mxu0 0
  %988 = vmatpush1.bf16.msra.mxu0 0
  %989 = vmatprep.subr.bf16.mxu0 0
  %990 = vmatpush1.bf16.msra.mxu0 0
  %991 = vmatprep.subr.bf16.mxu0 0
  %992 = vmatpush1.bf16.msra.mxu0 0
  %993 = vmatprep.subr.bf16.mxu0 0
  %994 = vmatpush1.bf16.msra.mxu0 0
  %995 = vmatprep.subr.bf16.mxu0 0
  %996 = vmatpush1.bf16.msra.mxu0 0
  %997 = vmatprep.subr.bf16.mxu0 0
  %998 = vmatpush1.bf16.msra.mxu0 0
  %999 = vmatprep.subr.bf16.mxu0 0
  %1000 = vmatpush1.bf16.msra.mxu0 0
  %1001 = vmatprep.subr.bf16.mxu0 0
  %1002 = vmatpush1.bf16.msra.mxu0 0
  %1003 = vmatprep.subr.bf16.mxu0 0
  %1004 = vmatpush1.bf16.msra.mxu0 0
  %1005 = vmatprep.subr.bf16.mxu0 0
  %1006 = vmatpush1.bf16.msra.mxu0 0
  %1007 = vmatprep.subr.bf16.mxu0 0
  %1008 = vmatpush1.bf16.msra.mxu0 0
  %1009 = vmatprep.subr.bf16.mxu0 0
  %1010 = vmatpush1.bf16.msra.mxu0 0
  %1011 = vmatprep.mubr.bf16.mxu0 0
  %1012 = vmatmul.mubr.bf16.gmra.mrb[0].mxu0 %v977
  %v1013 = vpop.f32.mrb[0].mxu0
  %v1014 = vadd.f32 0.0, %v1013
  %v1015 = vpop.f32.mrb[0].mxu0
  %v1016 = vadd.f32 0.0, %v1015
  %v1017 = vpop.f32.mrb[0].mxu0
  %v1018 = vpop.f32.mrb[0].mxu0
  %1019 = vdwg.mxu0
  %v1020 = vadd.f32 %v970, %v1014
  %v1021 = vadd.f32 %v971, %v1016
  %v1022 = vxor.u32 %v1020, 2147483648
  %v1023 = vxor.u32 %v1021, 2147483648
  %v1024 = vmul.f32 %v1022, 1.442695
  %v1025 = vpow.pop %v1024
  %v1026 = vmul.f32 %v1023, 1.442695
  %v1027 = vpow.pop %v1026
  %v1028 = vadd.f32 %v1025, 1.0
  %v1029 = vadd.f32 %v1027, 1.0
  %v1030 = vrcp.pop %v1028
  %v1031 = vmul.f32 1.0, %v1030
  %v1032 = vrcp.pop %v1029
  %v1033 = vmul.f32 1.0, %v1032
  %v1034 = vtanh.pop %v1021
  %v1035 = vmul.f32 %v1031, %v967
  %v1036 = vmul.f32 %v1031, %v1034
  %1038 = vrot.lane.b32.xlu0 %v1036, 64
  %v1039 = vpop.permute.xlu0 %1038
  %v1041 = vadd.f32 %v1035, %v1039
  %v1042 = vtanh.pop %v1041
  %v1043 = vmul.f32 %v1033, %v1042
  %v1044 = vpack.c.bf16 %v1043, %v1043
  %1046 = vrot.lane.b32.xlu0 %v1044, 64
  %v1047 = vpop.permute.xlu0 %1046
  %v1049 = vsel %vm477, %v1047, 0
  %1051 = vmatprep.subr.bf16.mxu0 %v813
  %1052 = vmatpush1.bf16.msra.mxu0 %v812
  %1053 = vmatprep.subr.bf16.mxu0 %v815
  %1054 = vmatpush1.bf16.msra.mxu0 %v814
  %1055 = vmatprep.subr.bf16.mxu0 %v817
  %1056 = vmatpush1.bf16.msra.mxu0 %v816
  %1057 = vmatprep.subr.bf16.mxu0 %v819
  %1058 = vmatpush1.bf16.msra.mxu0 %v818
  %1059 = vmatprep.subr.bf16.mxu0 0
  %1060 = vmatpush1.bf16.msra.mxu0 0
  %1061 = vmatprep.subr.bf16.mxu0 0
  %1062 = vmatpush1.bf16.msra.mxu0 0
  %1063 = vmatprep.subr.bf16.mxu0 0
  %1064 = vmatpush1.bf16.msra.mxu0 0
  %1065 = vmatprep.subr.bf16.mxu0 0
  %1066 = vmatpush1.bf16.msra.mxu0 0
  %1067 = vmatprep.subr.bf16.mxu0 0
  %1068 = vmatpush1.bf16.msra.mxu0 0
  %1069 = vmatprep.subr.bf16.mxu0 0
  %1070 = vmatpush1.bf16.msra.mxu0 0
  %1071 = vmatprep.subr.bf16.mxu0 0
  %1072 = vmatpush1.bf16.msra.mxu0 0
  %1073 = vmatprep.subr.bf16.mxu0 0
  %1074 = vmatpush1.bf16.msra.mxu0 0
  %1075 = vmatprep.subr.bf16.mxu0 0
  %1076 = vmatpush1.bf16.msra.mxu0 0
  %1077 = vmatprep.subr.bf16.mxu0 0
  %1078 = vmatpush1.bf16.msra.mxu0 0
  %1079 = vmatprep.subr.bf16.mxu0 0
  %1080 = vmatpush1.bf16.msra.mxu0 0
  %1081 = vmatprep.subr.bf16.mxu0 0
  %1082 = vmatpush1.bf16.msra.mxu0 0
  %1083 = vmatprep.mubr.bf16.mxu0 0
  %1084 = vmatmul.mubr.bf16.gmra.mrb[0].mxu0 %v1049
  %v1085 = vpop.f32.mrb[0].mxu0
  %v1086 = vadd.f32 0.0, %v1085
  %v1087 = vpop.f32.mrb[0].mxu0
  %v1088 = vadd.f32 0.0, %v1087
  %v1089 = vpop.f32.mrb[0].mxu0
  %v1090 = vpop.f32.mrb[0].mxu0
  %1091 = vdwg.mxu0
  %v1092 = vadd.f32 %v746, %v1086
  %v1093 = vadd.f32 %v747, %v1088
  %v1094 = vxor.u32 %v1092, 2147483648
  %v1095 = vxor.u32 %v1093, 2147483648
  %v1096 = vmul.f32 %v1094, 1.442695
  %v1097 = vpow.pop %v1096
  %v1098 = vmul.f32 %v1095, 1.442695
  %v1099 = vpow.pop %v1098
  %v1100 = vadd.f32 %v1097, 1.0
  %v1101 = vadd.f32 %v1099, 1.0
  %v1102 = vrcp.pop %v1100
  %v1103 = vmul.f32 1.0, %v1102
  %v1104 = vrcp.pop %v1101
  %v1105 = vmul.f32 1.0, %v1104
  %v1106 = vtanh.pop %v1093
  %v1107 = vmul.f32 %v1103, %v1041
  %v1108 = vmul.f32 %v1103, %v1106
  %1110 = vrot.lane.b32.xlu0 %v1108, 64
  %v1111 = vpop.permute.xlu0 %1110
  %v1113 = vadd.f32 %v1107, %v1111
  %v1114 = vtanh.pop %v1113
  %v1115 = vmul.f32 %v1105, %v1114
  %vm1116 = vcmp.ge.s32.totalorder %v81, 32
  %vm1117 = vcmp.lt.s32.totalorder %v81, 64
  %vm1118 = vmand %vm1116, %vm1117
  %v1119 = vsel %vm1118, 1, 0
  %vm1120 = vcmp.eq.s32.totalorder %v1119, 1
  %1122 = vrot.lane.b32.xlu0 %v1113, 64
  %v1123 = vpop.permute.xlu0 %1122
  %1126 = vrot.lane.b32.xlu0 %v1041, 64
  %v1127 = vpop.permute.xlu0 %1126
  %v1129 = vsel %vm1120, %v1123, %v1127
  %1131 = vrot.lane.b32.xlu0 %v1115, 64
  %v1132 = vpop.permute.xlu0 %1131
  %1135 = vrot.lane.b32.xlu0 %v1043, 64
  %v1136 = vpop.permute.xlu0 %1135
  %v1138 = vsel %vm1120, %v1132, %v1136
  %v1139 = vpack.c.bf16 %v1138, %v1138
  %v1141 = vsel %vm477, %v1139, 0
  %1143 = vmatprep.subr.bf16.mxu0 %v813
  %1144 = vmatpush1.bf16.msra.mxu0 %v812
  %1145 = vmatprep.subr.bf16.mxu0 %v815
  %1146 = vmatpush1.bf16.msra.mxu0 %v814
  %1147 = vmatprep.subr.bf16.mxu0 %v817
  %1148 = vmatpush1.bf16.msra.mxu0 %v816
  %1149 = vmatprep.subr.bf16.mxu0 %v819
  %1150 = vmatpush1.bf16.msra.mxu0 %v818
  %1151 = vmatprep.subr.bf16.mxu0 0
  %1152 = vmatpush1.bf16.msra.mxu0 0
  %1153 = vmatprep.subr.bf16.mxu0 0
  %1154 = vmatpush1.bf16.msra.mxu0 0
  %1155 = vmatprep.subr.bf16.mxu0 0
  %1156 = vmatpush1.bf16.msra.mxu0 0
  %1157 = vmatprep.subr.bf16.mxu0 0
  %1158 = vmatpush1.bf16.msra.mxu0 0
  %1159 = vmatprep.subr.bf16.mxu0 0
  %1160 = vmatpush1.bf16.msra.mxu0 0
  %1161 = vmatprep.subr.bf16.mxu0 0
  %1162 = vmatpush1.bf16.msra.mxu0 0
  %1163 = vmatprep.subr.bf16.mxu0 0
  %1164 = vmatpush1.bf16.msra.mxu0 0
  %1165 = vmatprep.subr.bf16.mxu0 0
  %1166 = vmatpush1.bf16.msra.mxu0 0
  %1167 = vmatprep.subr.bf16.mxu0 0
  %1168 = vmatpush1.bf16.msra.mxu0 0
  %1169 = vmatprep.subr.bf16.mxu0 0
  %1170 = vmatpush1.bf16.msra.mxu0 0
  %1171 = vmatprep.subr.bf16.mxu0 0
  %1172 = vmatpush1.bf16.msra.mxu0 0
  %1173 = vmatprep.subr.bf16.mxu0 0
  %1174 = vmatpush1.bf16.msra.mxu0 0
  %1175 = vmatprep.mubr.bf16.mxu0 0
  %1176 = vmatmul.mubr.bf16.gmra.mrb[0].mxu0 %v1141
  %v1177 = vpop.f32.mrb[0].mxu0
  %v1178 = vadd.f32 0.0, %v1177
  %v1179 = vpop.f32.mrb[0].mxu0
  %v1180 = vadd.f32 0.0, %v1179
  %v1181 = vpop.f32.mrb[0].mxu0
  %v1182 = vpop.f32.mrb[0].mxu0
  %1183 = vdwg.mxu0
  %v1184 = vadd.f32 %v748, %v1178
  %v1185 = vadd.f32 %v749, %v1180
  %v1186 = vxor.u32 %v1184, 2147483648
  %v1187 = vxor.u32 %v1185, 2147483648
  %v1188 = vmul.f32 %v1186, 1.442695
  %v1189 = vpow.pop %v1188
  %v1190 = vmul.f32 %v1187, 1.442695
  %v1191 = vpow.pop %v1190
  %v1192 = vadd.f32 %v1189, 1.0
  %v1193 = vadd.f32 %v1191, 1.0
  %v1194 = vrcp.pop %v1192
  %v1195 = vmul.f32 1.0, %v1194
  %v1196 = vrcp.pop %v1193
  %v1197 = vmul.f32 1.0, %v1196
  %v1198 = vtanh.pop %v1185
  %1200 = vrot.lane.b32.xlu0 %v1129, 64
  %v1201 = vpop.permute.xlu0 %1200
  %v1203 = vmul.f32 %v1195, %v1201
  %v1204 = vmul.f32 %v1195, %v1198
  %1206 = vrot.lane.b32.xlu0 %v1204, 64
  %v1207 = vpop.permute.xlu0 %1206
  %v1209 = vadd.f32 %v1203, %v1207
  %v1210 = vtanh.pop %v1209
  %v1211 = vmul.f32 %v1197, %v1210
  %1213 = vrot.lane.b32.xlu0 %v1209, 64
  %v1214 = vpop.permute.xlu0 %1213
  %v1216 = vsel %vm1120, %v1214, %v1127
  %1218 = vrot.lane.b32.xlu0 %v1211, 64
  %v1219 = vpop.permute.xlu0 %1218
  %v1221 = vsel %vm1120, %v1219, %v1136
  %v1222 = vld [vmem:[%s13] sm:$0xff]
  %v1223 = vld [vmem:[%s13 + $0x8] sm:$0xff]
  %v1224 = vld [vmem:[%s13 + $0x10] sm:$0xff]
  %v1225 = vld [vmem:[%s13 + $0x18] sm:$0xff]
  %1229 = vrot.lane.b32.xlu0 %v781, 64
  %v1230 = vpop.permute.xlu0 %1229
  %1231 = vrot.lane.b32.xlu0 %v895, 64
  %v1232 = vpop.permute.xlu0 %1231
  %1233 = vrot.lane.b32.xlu0 %v969, 64
  %v1234 = vpop.permute.xlu0 %1233
  %vm1235 = vcmask 261120
  %v1236 = vsel %vm1235, %v1230, 0
  %v1238 = vsel %vm1235, %v1232, 0
  %v1240 = vsel %vm1235, %v1234, 0
  %v1242 = vsel %vm1235, %v1136, 0
  %1244 = vmatprep.subr.mxu0 0.0
  %1245 = vmatpush1.msra.mxu0 %v1222
  %1246 = vmatprep.subr.mxu0 0.0
  %1247 = vmatpush1.msra.mxu0 %v1223
  %1248 = vmatprep.subr.mxu0 0.0
  %1249 = vmatpush1.msra.mxu0 %v1224
  %1250 = vmatprep.subr.mxu0 0.0
  %1251 = vmatpush1.msra.mxu0 %v1225
  %1252 = vmatprep.subr.mxu0 0.0
  %1253 = vmatpush1.msra.mxu0 0.0
  %1254 = vmatprep.subr.mxu0 0.0
  %1255 = vmatpush1.msra.mxu0 0.0
  %1256 = vmatprep.subr.mxu0 0.0
  %1257 = vmatpush1.msra.mxu0 0.0
  %1258 = vmatprep.subr.mxu0 0.0
  %1259 = vmatpush1.msra.mxu0 0.0
  %1260 = vmatprep.subr.mxu0 0.0
  %1261 = vmatpush1.msra.mxu0 0.0
  %1262 = vmatprep.subr.mxu0 0.0
  %1263 = vmatpush1.msra.mxu0 0.0
  %1264 = vmatprep.subr.mxu0 0.0
  %1265 = vmatpush1.msra.mxu0 0.0
  %1266 = vmatprep.subr.mxu0 0.0
  %1267 = vmatpush1.msra.mxu0 0.0
  %1268 = vmatprep.subr.mxu0 0.0
  %1269 = vmatpush1.msra.mxu0 0.0
  %1270 = vmatprep.subr.mxu0 0.0
  %1271 = vmatpush1.msra.mxu0 0.0
  %1272 = vmatprep.subr.mxu0 0.0
  %1273 = vmatpush1.msra.mxu0 0.0
  %1274 = vmatprep.subr.mxu0 0.0
  %1275 = vmatpush1.msra.mxu0 0.0
  %1276 = vmatprep.subr.mxu0 0.0
  %1277 = vmatpush1.msra.mxu0 0.0
  %1278 = vmatprep.subr.mxu0 0.0
  %1279 = vmatpush1.msra.mxu0 0.0
  %1280 = vmatprep.subr.mxu0 0.0
  %1281 = vmatpush1.msra.mxu0 0.0
  %1282 = vmatprep.subr.mxu0 0.0
  %1283 = vmatpush1.msra.mxu0 0.0
  %1284 = vmatprep.subr.mxu0 0.0
  %1285 = vmatpush1.msra.mxu0 0.0
  %1286 = vmatprep.subr.mxu0 0.0
  %1287 = vmatpush1.msra.mxu0 0.0
  %1288 = vmatprep.subr.mxu0 0.0
  %1289 = vmatpush1.msra.mxu0 0.0
  %1290 = vmatprep.subr.mxu0 0.0
  %1291 = vmatpush1.msra.mxu0 0.0
  %1292 = vmatprep.subr.mxu0 0.0
  %1293 = vmatpush1.msra.mxu0 0.0
  %1294 = vmatprep.subr.mxu0 0.0
  %1295 = vmatpush1.msra.mxu0 0.0
  %1296 = vmatprep.subr.mxu0 0.0
  %1297 = vmatpush1.msra.mxu0 0.0
  %1298 = vmatprep.subr.mxu0 0.0
  %1299 = vmatpush1.msra.mxu0 0.0
  %1300 = vmatprep.subr.mxu0 0.0
  %1301 = vmatpush1.msra.mxu0 0.0
  %1302 = vmatprep.subr.mxu0 0.0
  %1303 = vmatpush1.msra.mxu0 0.0
  %1304 = vmatprep.subr.mxu0 0.0
  %1305 = vmatpush1.msra.mxu0 0.0
  %1306 = vmatprep.subr.mxu0 0.0
  %1307 = vmatpush1.msra.mxu0 0.0
  %1308 = vmatprep.mubr.f32.mxu0 0.0
  %1309 = vmatmul.mubr.f32.gmra.mrb[0].mxu0 %v1236
  %v1310 = vpop.f32.mrb[0].mxu0
  %v1311 = vadd.f32 0.0, %v1310
  %v1312 = vpop.f32.mrb[0].mxu0
  %1313 = vmatprep.mubr.f32.mxu0 0.0
  %1314 = vmatmul.mubr.f32.gmra.mrb[0].mxu0 %v1238
  %v1315 = vpop.f32.mrb[0].mxu0
  %v1316 = vadd.f32 0.0, %v1315
  %v1317 = vpop.f32.mrb[0].mxu0
  %1318 = vmatprep.mubr.f32.mxu0 0.0
  %1319 = vmatmul.mubr.f32.gmra.mrb[0].mxu0 %v1240
  %v1320 = vpop.f32.mrb[0].mxu0
  %v1321 = vadd.f32 0.0, %v1320
  %v1322 = vpop.f32.mrb[0].mxu0
  %1323 = vmatprep.mubr.f32.mxu0 0.0
  %1324 = vmatmul.mubr.f32.gmra.mrb[0].mxu0 %v1242
  %v1325 = vpop.f32.mrb[0].mxu0
  %v1326 = vadd.f32 0.0, %v1325
  %v1327 = vpop.f32.mrb[0].mxu0
  %1328 = vdwg.mxu0
  %vm1329 = vcmask 64512
  %v1330 = vsel %vm1329, %v1311, %v1326
  %v1331 = vsel %vm1329, %v1316, %v1321
  %v1332 = vsel %vm1329, %v1321, %v1316
  %v1333 = vsel %vm1329, %v1326, %v1311
  %v1334 = vld [vmem:[%s14] sm:$0xff]
  %v1335 = vld [vmem:[%s14 + $0x8] sm:$0xff]
  %v1336 = vld [vmem:[%s14 + $0x10] sm:$0xff]
  %v1337 = vld [vmem:[%s14 + $0x18] sm:$0xff]
  %1339 = vrot.lane.b32.xlu0 %v1138, 64
  %v1340 = vpop.permute.xlu0 %1339
  %1342 = vrot.lane.b32.xlu0 %v1221, 64
  %v1343 = vpop.permute.xlu0 %1342
  %1344 = vrot.lane.b32.xlu0 %v781, 32
  %v1345 = vpop.permute.xlu0 %1344
  %1346 = vrot.lane.b32.xlu0 %v895, 32
  %v1347 = vpop.permute.xlu0 %1346
  %1348 = vrot.lane.b32.xlu0 %v969, 32
  %v1349 = vpop.permute.xlu0 %1348
  %1350 = vrot.lane.b32.xlu0 %v1043, 32
  %v1351 = vpop.permute.xlu0 %1350
  %1352 = vrot.lane.b32.xlu0 %v1340, 32
  %v1353 = vpop.permute.xlu0 %1352
  %1354 = vrot.lane.b32.xlu0 %v1343, 32
  %v1355 = vpop.permute.xlu0 %1354
  %v1356 = vsel %vm1235, %v1345, 0
  %v1358 = vsel %vm1235, %v1347, 0
  %v1360 = vsel %vm1235, %v1349, 0
  %v1362 = vsel %vm1235, %v1351, 0
  %v1364 = vsel %vm1235, %v1353, 0
  %v1366 = vsel %vm1235, %v1355, 0
  %1368 = vmatprep.subr.mxu0 0.0
  %1369 = vmatpush1.msra.mxu0 %v1334
  %1370 = vmatprep.subr.mxu0 0.0
  %1371 = vmatpush1.msra.mxu0 %v1335
  %1372 = vmatprep.subr.mxu0 0.0
  %1373 = vmatpush1.msra.mxu0 %v1336
  %1374 = vmatprep.subr.mxu0 0.0
  %1375 = vmatpush1.msra.mxu0 %v1337
  %1376 = vmatprep.subr.mxu0 0.0
  %1377 = vmatpush1.msra.mxu0 0.0
  %1378 = vmatprep.subr.mxu0 0.0
  %1379 = vmatpush1.msra.mxu0 0.0
  %1380 = vmatprep.subr.mxu0 0.0
  %1381 = vmatpush1.msra.mxu0 0.0
  %1382 = vmatprep.subr.mxu0 0.0
  %1383 = vmatpush1.msra.mxu0 0.0
  %1384 = vmatprep.subr.mxu0 0.0
  %1385 = vmatpush1.msra.mxu0 0.0
  %1386 = vmatprep.subr.mxu0 0.0
  %1387 = vmatpush1.msra.mxu0 0.0
  %1388 = vmatprep.subr.mxu0 0.0
  %1389 = vmatpush1.msra.mxu0 0.0
  %1390 = vmatprep.subr.mxu0 0.0
  %1391 = vmatpush1.msra.mxu0 0.0
  %1392 = vmatprep.subr.mxu0 0.0
  %1393 = vmatpush1.msra.mxu0 0.0
  %1394 = vmatprep.subr.mxu0 0.0
  %1395 = vmatpush1.msra.mxu0 0.0
  %1396 = vmatprep.subr.mxu0 0.0
  %1397 = vmatpush1.msra.mxu0 0.0
  %1398 = vmatprep.subr.mxu0 0.0
  %1399 = vmatpush1.msra.mxu0 0.0
  %1400 = vmatprep.subr.mxu0 0.0
  %1401 = vmatpush1.msra.mxu0 0.0
  %1402 = vmatprep.subr.mxu0 0.0
  %1403 = vmatpush1.msra.mxu0 0.0
  %1404 = vmatprep.subr.mxu0 0.0
  %1405 = vmatpush1.msra.mxu0 0.0
  %1406 = vmatprep.subr.mxu0 0.0
  %1407 = vmatpush1.msra.mxu0 0.0
  %1408 = vmatprep.subr.mxu0 0.0
  %1409 = vmatpush1.msra.mxu0 0.0
  %1410 = vmatprep.subr.mxu0 0.0
  %1411 = vmatpush1.msra.mxu0 0.0
  %1412 = vmatprep.subr.mxu0 0.0
  %1413 = vmatpush1.msra.mxu0 0.0
  %1414 = vmatprep.subr.mxu0 0.0
  %1415 = vmatpush1.msra.mxu0 0.0
  %1416 = vmatprep.subr.mxu0 0.0
  %1417 = vmatpush1.msra.mxu0 0.0
  %1418 = vmatprep.subr.mxu0 0.0
  %1419 = vmatpush1.msra.mxu0 0.0
  %1420 = vmatprep.subr.mxu0 0.0
  %1421 = vmatpush1.msra.mxu0 0.0
  %1422 = vmatprep.subr.mxu0 0.0
  %1423 = vmatpush1.msra.mxu0 0.0
  %1424 = vmatprep.subr.mxu0 0.0
  %1425 = vmatpush1.msra.mxu0 0.0
  %1426 = vmatprep.subr.mxu0 0.0
  %1427 = vmatpush1.msra.mxu0 0.0
  %1428 = vmatprep.subr.mxu0 0.0
  %1429 = vmatpush1.msra.mxu0 0.0
  %1430 = vmatprep.subr.mxu0 0.0
  %1431 = vmatpush1.msra.mxu0 0.0
  %1432 = vmatprep.mubr.f32.mxu0 0.0
  %1433 = vmatmul.mubr.f32.gmra.mrb[0].mxu0 %v1356
  %v1434 = vpop.f32.mrb[0].mxu0
  %v1435 = vadd.f32 0.0, %v1434
  %v1436 = vpop.f32.mrb[0].mxu0
  %1437 = vmatprep.mubr.f32.mxu0 0.0
  %1438 = vmatmul.mubr.f32.gmra.mrb[0].mxu0 %v1358
  %v1439 = vpop.f32.mrb[0].mxu0
  %v1440 = vadd.f32 0.0, %v1439
  %v1441 = vpop.f32.mrb[0].mxu0
  %1442 = vmatprep.mubr.f32.mxu0 0.0
  %1443 = vmatmul.mubr.f32.gmra.mrb[0].mxu0 %v1360
  %v1444 = vpop.f32.mrb[0].mxu0
  %v1445 = vadd.f32 0.0, %v1444
  %v1446 = vpop.f32.mrb[0].mxu0
  %1447 = vmatprep.mubr.f32.mxu0 0.0
  %1448 = vmatmul.mubr.f32.gmra.mrb[0].mxu0 %v1362
  %v1449 = vpop.f32.mrb[0].mxu0
  %v1450 = vadd.f32 0.0, %v1449
  %v1451 = vpop.f32.mrb[0].mxu0
  %1452 = vmatprep.mubr.f32.mxu0 0.0
  %1453 = vmatmul.mubr.f32.gmra.mrb[0].mxu0 %v1364
  %v1454 = vpop.f32.mrb[0].mxu0
  %v1455 = vadd.f32 0.0, %v1454
  %v1456 = vpop.f32.mrb[0].mxu0
  %1457 = vmatprep.mubr.f32.mxu0 0.0
  %1458 = vmatmul.mubr.f32.gmra.mrb[0].mxu0 %v1366
  %v1459 = vpop.f32.mrb[0].mxu0
  %v1460 = vadd.f32 0.0, %v1459
  %v1461 = vpop.f32.mrb[0].mxu0
  %1462 = vdwg.mxu0
  %v1463 = vsel %vm1329, %v1435, %v1460
  %v1464 = vsel %vm1329, %v1440, %v1455
  %v1465 = vsel %vm1329, %v1445, %v1450
  %v1466 = vsel %vm1329, %v1450, %v1445
  %v1467 = vsel %vm1329, %v1455, %v1440
  %v1468 = vsel %vm1329, %v1460, %v1435
  %v1469 = vld [vmem:[%s7] sm:$0xff]
  %v1470 = vld [vmem:[%s7 + $0x8] sm:$0xff]
  %v1471 = vld [vmem:[%s7 + $0x10] sm:$0xff]
  %v1472 = vld [vmem:[%s7 + $0x18] sm:$0xff]
  %s1473 = scalar_lea.vmem %s10, 2
  %v1474 = vld [vmem:[%s1473] sm:$0x3]
  %v1476 = vlaneseq
  %v1477 = vshrl.u32 %v1476, 7
  %v1478 = vsub.s32 0, %v1477
  %v1479 = vrot.slane %v1474, %v1478
  %v1480 = vlaneseq
  %v1481 = vshrl.u32 %v1480, 7
  %v1482 = vsub.s32 1, %v1481
  %v1483 = vrot.slane %v1474, %v1482
  %vm1486 = vcmask 130048
  %v1488 = vsel %vm1486, %v1330, 0
  %v1491 = vsel %vm1486, %v1331, 0
  %v1494 = vsel %vm1486, %v1332, 0
  %v1497 = vsel %vm1486, %v1333, 0
  %1499 = vmatprep.subr.mxu0 %v1470
  %1500 = vmatpush1.msra.mxu0 %v1469
  %1501 = vmatprep.subr.mxu0 %v1472
  %1502 = vmatpush1.msra.mxu0 %v1471
  %1503 = vmatprep.subr.mxu0 0.0
  %1504 = vmatpush1.msra.mxu0 0.0
  %1505 = vmatprep.subr.mxu0 0.0
  %1506 = vmatpush1.msra.mxu0 0.0
  %1507 = vmatprep.subr.mxu0 0.0
  %1508 = vmatpush1.msra.mxu0 0.0
  %1509 = vmatprep.subr.mxu0 0.0
  %1510 = vmatpush1.msra.mxu0 0.0
  %1511 = vmatprep.subr.mxu0 0.0
  %1512 = vmatpush1.msra.mxu0 0.0
  %1513 = vmatprep.subr.mxu0 0.0
  %1514 = vmatpush1.msra.mxu0 0.0
  %1515 = vmatprep.subr.mxu0 0.0
  %1516 = vmatpush1.msra.mxu0 0.0
  %1517 = vmatprep.subr.mxu0 0.0
  %1518 = vmatpush1.msra.mxu0 0.0
  %1519 = vmatprep.subr.mxu0 0.0
  %1520 = vmatpush1.msra.mxu0 0.0
  %1521 = vmatprep.subr.mxu0 0.0
  %1522 = vmatpush1.msra.mxu0 0.0
  %1523 = vmatprep.subr.mxu0 0.0
  %1524 = vmatpush1.msra.mxu0 0.0
  %1525 = vmatprep.subr.mxu0 0.0
  %1526 = vmatpush1.msra.mxu0 0.0
  %1527 = vmatprep.subr.mxu0 0.0
  %1528 = vmatpush1.msra.mxu0 0.0
  %1529 = vmatprep.subr.mxu0 0.0
  %1530 = vmatpush1.msra.mxu0 0.0
  %1531 = vmatprep.subr.mxu0 0.0
  %1532 = vmatpush1.msra.mxu0 0.0
  %1533 = vmatprep.subr.mxu0 0.0
  %1534 = vmatpush1.msra.mxu0 0.0
  %1535 = vmatprep.subr.mxu0 0.0
  %1536 = vmatpush1.msra.mxu0 0.0
  %1537 = vmatprep.subr.mxu0 0.0
  %1538 = vmatpush1.msra.mxu0 0.0
  %1539 = vmatprep.subr.mxu0 0.0
  %1540 = vmatpush1.msra.mxu0 0.0
  %1541 = vmatprep.subr.mxu0 0.0
  %1542 = vmatpush1.msra.mxu0 0.0
  %1543 = vmatprep.subr.mxu0 0.0
  %1544 = vmatpush1.msra.mxu0 0.0
  %1545 = vmatprep.subr.mxu0 0.0
  %1546 = vmatpush1.msra.mxu0 0.0
  %1547 = vmatprep.subr.mxu0 0.0
  %1548 = vmatpush1.msra.mxu0 0.0
  %1549 = vmatprep.subr.mxu0 0.0
  %1550 = vmatpush1.msra.mxu0 0.0
  %1551 = vmatprep.subr.mxu0 0.0
  %1552 = vmatpush1.msra.mxu0 0.0
  %1553 = vmatprep.subr.mxu0 0.0
  %1554 = vmatpush1.msra.mxu0 0.0
  %1555 = vmatprep.subr.mxu0 0.0
  %1556 = vmatpush1.msra.mxu0 0.0
  %1557 = vmatprep.subr.mxu0 0.0
  %1558 = vmatpush1.msra.mxu0 0.0
  %1559 = vmatprep.subr.mxu0 0.0
  %1560 = vmatpush1.msra.mxu0 0.0
  %1561 = vmatprep.subr.mxu0 0.0
  %1562 = vmatpush1.msra.mxu0 0.0
  %1563 = vmatprep.mubr.f32.mxu0 0.0
  %1564 = vmatmul.mubr.f32.gmra.mrb[0].mxu0 %v1488
  %v1565 = vpop.f32.mrb[0].mxu0
  %v1566 = vadd.f32 %v1479, %v1565
  %v1567 = vpop.f32.mrb[0].mxu0
  %v1568 = vadd.f32 %v1483, %v1567
  %1569 = vmatprep.mubr.f32.mxu0 0.0
  %1570 = vmatmul.mubr.f32.gmra.mrb[0].mxu0 %v1491
  %v1571 = vpop.f32.mrb[0].mxu0
  %v1572 = vadd.f32 %v1479, %v1571
  %v1573 = vpop.f32.mrb[0].mxu0
  %v1574 = vadd.f32 %v1483, %v1573
  %1575 = vmatprep.mubr.f32.mxu0 0.0
  %1576 = vmatmul.mubr.f32.gmra.mrb[0].mxu0 %v1494
  %v1577 = vpop.f32.mrb[0].mxu0
  %v1578 = vadd.f32 %v1479, %v1577
  %v1579 = vpop.f32.mrb[0].mxu0
  %v1580 = vadd.f32 %v1483, %v1579
  %1581 = vmatprep.mubr.f32.mxu0 0.0
  %1582 = vmatmul.mubr.f32.gmra.mrb[0].mxu0 %v1497
  %v1583 = vpop.f32.mrb[0].mxu0
  %v1584 = vadd.f32 %v1479, %v1583
  %v1585 = vpop.f32.mrb[0].mxu0
  %v1586 = vadd.f32 %v1483, %v1585
  %1587 = vdwg.mxu0
  %v1588 = vsel %vm581, %v1584, %v1566
  %v1589 = vsel %vm582, %v1586, %v1568
  %v1590 = vsel %vm581, %v1578, %v1572
  %v1591 = vsel %vm582, %v1580, %v1574
  %v1592 = vsel %vm581, %v1572, %v1578
  %v1593 = vsel %vm582, %v1574, %v1580
  %v1594 = vsel %vm581, %v1566, %v1584
  %v1595 = vsel %vm582, %v1568, %v1586
  %v1596 = vld [vmem:[%s9] sm:$0xff]
  %v1597 = vld [vmem:[%s9 + $0x8] sm:$0xff]
  %v1598 = vld [vmem:[%s9 + $0x10] sm:$0xff]
  %v1599 = vld [vmem:[%s9 + $0x18] sm:$0xff]
  %s1600 = scalar_lea.vmem %s11, 2
  %v1601 = vld [vmem:[%s1600] sm:$0x3]
  %v1603 = vlaneseq
  %v1604 = vshrl.u32 %v1603, 7
  %v1605 = vsub.s32 0, %v1604
  %v1606 = vrot.slane %v1601, %v1605
  %v1607 = vlaneseq
  %v1608 = vshrl.u32 %v1607, 7
  %v1609 = vsub.s32 1, %v1608
  %v1610 = vrot.slane %v1601, %v1609
  %v1614 = vsel %vm1486, %v1463, 0
  %v1617 = vsel %vm1486, %v1464, 0
  %v1620 = vsel %vm1486, %v1465, 0
  %v1623 = vsel %vm1486, %v1466, 0
  %v1626 = vsel %vm1486, %v1467, 0
  %v1629 = vsel %vm1486, %v1468, 0
  %1631 = vmatprep.subr.mxu0 %v1597
  %1632 = vmatpush1.msra.mxu0 %v1596
  %1633 = vmatprep.subr.mxu0 %v1599
  %1634 = vmatpush1.msra.mxu0 %v1598
  %1635 = vmatprep.subr.mxu0 0.0
  %1636 = vmatpush1.msra.mxu0 0.0
  %1637 = vmatprep.subr.mxu0 0.0
  %1638 = vmatpush1.msra.mxu0 0.0
  %1639 = vmatprep.subr.mxu0 0.0
  %1640 = vmatpush1.msra.mxu0 0.0
  %1641 = vmatprep.subr.mxu0 0.0
  %1642 = vmatpush1.msra.mxu0 0.0
  %1643 = vmatprep.subr.mxu0 0.0
  %1644 = vmatpush1.msra.mxu0 0.0
  %1645 = vmatprep.subr.mxu0 0.0
  %1646 = vmatpush1.msra.mxu0 0.0
  %1647 = vmatprep.subr.mxu0 0.0
  %1648 = vmatpush1.msra.mxu0 0.0
  %1649 = vmatprep.subr.mxu0 0.0
  %1650 = vmatpush1.msra.mxu0 0.0
  %1651 = vmatprep.subr.mxu0 0.0
  %1652 = vmatpush1.msra.mxu0 0.0
  %1653 = vmatprep.subr.mxu0 0.0
  %1654 = vmatpush1.msra.mxu0 0.0
  %1655 = vmatprep.subr.mxu0 0.0
  %1656 = vmatpush1.msra.mxu0 0.0
  %1657 = vmatprep.subr.mxu0 0.0
  %1658 = vmatpush1.msra.mxu0 0.0
  %1659 = vmatprep.subr.mxu0 0.0
  %1660 = vmatpush1.msra.mxu0 0.0
  %1661 = vmatprep.subr.mxu0 0.0
  %1662 = vmatpush1.msra.mxu0 0.0
  %1663 = vmatprep.subr.mxu0 0.0
  %1664 = vmatpush1.msra.mxu0 0.0
  %1665 = vmatprep.subr.mxu0 0.0
  %1666 = vmatpush1.msra.mxu0 0.0
  %1667 = vmatprep.subr.mxu0 0.0
  %1668 = vmatpush1.msra.mxu0 0.0
  %1669 = vmatprep.subr.mxu0 0.0
  %1670 = vmatpush1.msra.mxu0 0.0
  %1671 = vmatprep.subr.mxu0 0.0
  %1672 = vmatpush1.msra.mxu0 0.0
  %1673 = vmatprep.subr.mxu0 0.0
  %1674 = vmatpush1.msra.mxu0 0.0
  %1675 = vmatprep.subr.mxu0 0.0
  %1676 = vmatpush1.msra.mxu0 0.0
  %1677 = vmatprep.subr.mxu0 0.0
  %1678 = vmatpush1.msra.mxu0 0.0
  %1679 = vmatprep.subr.mxu0 0.0
  %1680 = vmatpush1.msra.mxu0 0.0
  %1681 = vmatprep.subr.mxu0 0.0
  %1682 = vmatpush1.msra.mxu0 0.0
  %1683 = vmatprep.subr.mxu0 0.0
  %1684 = vmatpush1.msra.mxu0 0.0
  %1685 = vmatprep.subr.mxu0 0.0
  %1686 = vmatpush1.msra.mxu0 0.0
  %1687 = vmatprep.subr.mxu0 0.0
  %1688 = vmatpush1.msra.mxu0 0.0
  %1689 = vmatprep.subr.mxu0 0.0
  %1690 = vmatpush1.msra.mxu0 0.0
  %1691 = vmatprep.subr.mxu0 0.0
  %1692 = vmatpush1.msra.mxu0 0.0
  %1693 = vmatprep.subr.mxu0 0.0
  %1694 = vmatpush1.msra.mxu0 0.0
  %1695 = vmatprep.mubr.f32.mxu0 0.0
  %1696 = vmatmul.mubr.f32.gmra.mrb[0].mxu0 %v1614
  %v1697 = vpop.f32.mrb[0].mxu0
  %v1698 = vadd.f32 %v1606, %v1697
  %v1699 = vpop.f32.mrb[0].mxu0
  %v1700 = vadd.f32 %v1610, %v1699
  %1701 = vmatprep.mubr.f32.mxu0 0.0
  %1702 = vmatmul.mubr.f32.gmra.mrb[0].mxu0 %v1617
  %v1703 = vpop.f32.mrb[0].mxu0
  %v1704 = vadd.f32 %v1606, %v1703
  %v1705 = vpop.f32.mrb[0].mxu0
  %v1706 = vadd.f32 %v1610, %v1705
  %1707 = vmatprep.mubr.f32.mxu0 0.0
  %1708 = vmatmul.mubr.f32.gmra.mrb[0].mxu0 %v1620
  %v1709 = vpop.f32.mrb[0].mxu0
  %v1710 = vadd.f32 %v1606, %v1709
  %v1711 = vpop.f32.mrb[0].mxu0
  %v1712 = vadd.f32 %v1610, %v1711
  %1713 = vmatprep.mubr.f32.mxu0 0.0
  %1714 = vmatmul.mubr.f32.gmra.mrb[0].mxu0 %v1623
  %v1715 = vpop.f32.mrb[0].mxu0
  %v1716 = vadd.f32 %v1606, %v1715
  %v1717 = vpop.f32.mrb[0].mxu0
  %v1718 = vadd.f32 %v1610, %v1717
  %1719 = vmatprep.mubr.f32.mxu0 0.0
  %1720 = vmatmul.mubr.f32.gmra.mrb[0].mxu0 %v1626
  %v1721 = vpop.f32.mrb[0].mxu0
  %v1722 = vadd.f32 %v1606, %v1721
  %v1723 = vpop.f32.mrb[0].mxu0
  %v1724 = vadd.f32 %v1610, %v1723
  %1725 = vmatprep.mubr.f32.mxu0 0.0
  %1726 = vmatmul.mubr.f32.gmra.mrb[0].mxu0 %v1629
  %v1727 = vpop.f32.mrb[0].mxu0
  %v1728 = vadd.f32 %v1606, %v1727
  %v1729 = vpop.f32.mrb[0].mxu0
  %v1730 = vadd.f32 %v1610, %v1729
  %1731 = vdwg.mxu0
  %v1732 = vsel %vm581, %v1728, %v1698
  %v1733 = vsel %vm582, %v1730, %v1700
  %v1734 = vsel %vm581, %v1722, %v1704
  %v1735 = vsel %vm582, %v1724, %v1706
  %v1736 = vsel %vm581, %v1716, %v1710
  %v1737 = vsel %vm582, %v1718, %v1712
  %v1738 = vsel %vm581, %v1710, %v1716
  %v1739 = vsel %vm582, %v1712, %v1718
  %v1740 = vsel %vm581, %v1704, %v1722
  %v1741 = vsel %vm582, %v1706, %v1724
  %v1742 = vsel %vm581, %v1698, %v1728
  %v1743 = vsel %vm582, %v1700, %v1730
  %s1744 = scalar_lea.vmem %s12, 64
  %v1745 = vld [vmem:[%s1744] sm:$0xff]
  %v1746 = vld [vmem:[%s1744 + $0x8] sm:$0xff]
  %v1747 = vld [vmem:[%s1744 + $0x10] sm:$0xff]
  %v1748 = vld [vmem:[%s1744 + $0x18] sm:$0xff]
  %v1749 = vld [vmem:[%s1744 + $0x20] sm:$0xff]
  %v1750 = vld [vmem:[%s1744 + $0x28] sm:$0xff]
  %v1751 = vld [vmem:[%s1744 + $0x30] sm:$0xff]
  %v1752 = vld [vmem:[%s1744 + $0x38] sm:$0xff]
  %v1753 = vadd.f32 %v1588, %v1732
  %v1754 = vadd.f32 %v1589, %v1733
  %v1755 = vxor.u32 %v1753, 2147483648
  %v1756 = vxor.u32 %v1754, 2147483648
  %v1757 = vmul.f32 %v1755, 1.442695
  %v1758 = vpow.pop %v1757
  %v1759 = vmul.f32 %v1756, 1.442695
  %v1760 = vpow.pop %v1759
  %v1761 = vadd.f32 %v1758, 1.0
  %v1762 = vadd.f32 %v1760, 1.0
  %v1763 = vrcp.pop %v1761
  %v1764 = vmul.f32 1.0, %v1763
  %v1765 = vrcp.pop %v1762
  %v1766 = vmul.f32 1.0, %v1765
  %v1767 = vtanh.pop %v1754
  %v1768 = vmul.f32 %v1764, 0.0
  %v1769 = vmul.f32 %v1764, %v1767
  %1771 = vrot.lane.b32.xlu0 %v1769, 64
  %v1772 = vpop.permute.xlu0 %1771
  %v1774 = vadd.f32 %v1768, %v1772
  %v1775 = vtanh.pop %v1774
  %v1776 = vmul.f32 %v1766, %v1775
  %v1777 = vadd.f32 %v1590, %v1734
  %v1778 = vadd.f32 %v1591, %v1735
  %v1779 = vpack.c.bf16 %v1776, %v1776
  %1781 = vrot.lane.b32.xlu0 %v1779, 64
  %v1782 = vpop.permute.xlu0 %1781
  %v1791 = vunpack.c.l.b16 %v1745
  %v1792 = vunpack.c.h.b16 %v1745
  %v1793 = vunpack.c.l.b16 %v1746
  %v1794 = vunpack.c.h.b16 %v1746
  %v1795 = vunpack.c.l.b16 %v1747
  %v1796 = vunpack.c.h.b16 %v1747
  %v1797 = vunpack.c.l.b16 %v1748
  %v1798 = vunpack.c.h.b16 %v1748
  %v1799 = vunpack.c.l.b16 %v1749
  %v1800 = vunpack.c.h.b16 %v1749
  %v1801 = vunpack.c.l.b16 %v1750
  %v1802 = vunpack.c.h.b16 %v1750
  %v1803 = vunpack.c.l.b16 %v1751
  %v1804 = vunpack.c.h.b16 %v1751
  %v1805 = vunpack.c.l.b16 %v1752
  %v1806 = vunpack.c.h.b16 %v1752
  %v1807 = vpack.c.b16 %v1793, %v1791
  %v1808 = vpack.c.b16 %v1794, %v1792
  %v1809 = vpack.c.b16 %v1797, %v1795
  %v1810 = vpack.c.b16 %v1798, %v1796
  %v1811 = vpack.c.b16 %v1801, %v1799
  %v1812 = vpack.c.b16 %v1802, %v1800
  %v1813 = vpack.c.b16 %v1805, %v1803
  %v1814 = vpack.c.b16 %v1806, %v1804
  %v1824 = vsel %vm477, %v1782, 0
  %1826 = vmatprep.subr.bf16.mxu0 %v1808
  %1827 = vmatpush1.bf16.msra.mxu0 %v1807
  %1828 = vmatprep.subr.bf16.mxu0 %v1810
  %1829 = vmatpush1.bf16.msra.mxu0 %v1809
  %1830 = vmatprep.subr.bf16.mxu0 %v1812
  %1831 = vmatpush1.bf16.msra.mxu0 %v1811
  %1832 = vmatprep.subr.bf16.mxu0 %v1814
  %1833 = vmatpush1.bf16.msra.mxu0 %v1813
  %1834 = vmatprep.subr.bf16.mxu0 0
  %1835 = vmatpush1.bf16.msra.mxu0 0
  %1836 = vmatprep.subr.bf16.mxu0 0
  %1837 = vmatpush1.bf16.msra.mxu0 0
  %1838 = vmatprep.subr.bf16.mxu0 0
  %1839 = vmatpush1.bf16.msra.mxu0 0
  %1840 = vmatprep.subr.bf16.mxu0 0
  %1841 = vmatpush1.bf16.msra.mxu0 0
  %1842 = vmatprep.subr.bf16.mxu0 0
  %1843 = vmatpush1.bf16.msra.mxu0 0
  %1844 = vmatprep.subr.bf16.mxu0 0
  %1845 = vmatpush1.bf16.msra.mxu0 0
  %1846 = vmatprep.subr.bf16.mxu0 0
  %1847 = vmatpush1.bf16.msra.mxu0 0
  %1848 = vmatprep.subr.bf16.mxu0 0
  %1849 = vmatpush1.bf16.msra.mxu0 0
  %1850 = vmatprep.subr.bf16.mxu0 0
  %1851 = vmatpush1.bf16.msra.mxu0 0
  %1852 = vmatprep.subr.bf16.mxu0 0
  %1853 = vmatpush1.bf16.msra.mxu0 0
  %1854 = vmatprep.subr.bf16.mxu0 0
  %1855 = vmatpush1.bf16.msra.mxu0 0
  %1856 = vmatprep.subr.bf16.mxu0 0
  %1857 = vmatpush1.bf16.msra.mxu0 0
  %1858 = vmatprep.mubr.bf16.mxu0 0
  %1859 = vmatmul.mubr.bf16.gmra.mrb[0].mxu0 %v1824
  %v1860 = vpop.f32.mrb[0].mxu0
  %v1861 = vadd.f32 0.0, %v1860
  %v1862 = vpop.f32.mrb[0].mxu0
  %v1863 = vadd.f32 0.0, %v1862
  %v1864 = vpop.f32.mrb[0].mxu0
  %v1865 = vpop.f32.mrb[0].mxu0
  %1866 = vdwg.mxu0
  %v1867 = vadd.f32 %v1777, %v1861
  %v1868 = vadd.f32 %v1778, %v1863
  %v1869 = vxor.u32 %v1867, 2147483648
  %v1870 = vxor.u32 %v1868, 2147483648
  %v1871 = vmul.f32 %v1869, 1.442695
  %v1872 = vpow.pop %v1871
  %v1873 = vmul.f32 %v1870, 1.442695
  %v1874 = vpow.pop %v1873
  %v1875 = vadd.f32 %v1872, 1.0
  %v1876 = vadd.f32 %v1874, 1.0
  %v1877 = vrcp.pop %v1875
  %v1878 = vmul.f32 1.0, %v1877
  %v1879 = vrcp.pop %v1876
  %v1880 = vmul.f32 1.0, %v1879
  %v1881 = vtanh.pop %v1868
  %v1882 = vmul.f32 %v1878, %v1774
  %v1883 = vmul.f32 %v1878, %v1881
  %1885 = vrot.lane.b32.xlu0 %v1883, 64
  %v1886 = vpop.permute.xlu0 %1885
  %v1888 = vadd.f32 %v1882, %v1886
  %v1889 = vtanh.pop %v1888
  %v1890 = vmul.f32 %v1880, %v1889
  %v1891 = vadd.f32 %v1592, %v1736
  %v1892 = vadd.f32 %v1593, %v1737
  %v1893 = vpack.c.bf16 %v1890, %v1890
  %1895 = vrot.lane.b32.xlu0 %v1893, 64
  %v1896 = vpop.permute.xlu0 %1895
  %v1898 = vsel %vm477, %v1896, 0
  %1900 = vmatprep.subr.bf16.mxu0 %v1808
  %1901 = vmatpush1.bf16.msra.mxu0 %v1807
  %1902 = vmatprep.subr.bf16.mxu0 %v1810
  %1903 = vmatpush1.bf16.msra.mxu0 %v1809
  %1904 = vmatprep.subr.bf16.mxu0 %v1812
  %1905 = vmatpush1.bf16.msra.mxu0 %v1811
  %1906 = vmatprep.subr.bf16.mxu0 %v1814
  %1907 = vmatpush1.bf16.msra.mxu0 %v1813
  %1908 = vmatprep.subr.bf16.mxu0 0
  %1909 = vmatpush1.bf16.msra.mxu0 0
  %1910 = vmatprep.subr.bf16.mxu0 0
  %1911 = vmatpush1.bf16.msra.mxu0 0
  %1912 = vmatprep.subr.bf16.mxu0 0
  %1913 = vmatpush1.bf16.msra.mxu0 0
  %1914 = vmatprep.subr.bf16.mxu0 0
  %1915 = vmatpush1.bf16.msra.mxu0 0
  %1916 = vmatprep.subr.bf16.mxu0 0
  %1917 = vmatpush1.bf16.msra.mxu0 0
  %1918 = vmatprep.subr.bf16.mxu0 0
  %1919 = vmatpush1.bf16.msra.mxu0 0
  %1920 = vmatprep.subr.bf16.mxu0 0
  %1921 = vmatpush1.bf16.msra.mxu0 0
  %1922 = vmatprep.subr.bf16.mxu0 0
  %1923 = vmatpush1.bf16.msra.mxu0 0
  %1924 = vmatprep.subr.bf16.mxu0 0
  %1925 = vmatpush1.bf16.msra.mxu0 0
  %1926 = vmatprep.subr.bf16.mxu0 0
  %1927 = vmatpush1.bf16.msra.mxu0 0
  %1928 = vmatprep.subr.bf16.mxu0 0
  %1929 = vmatpush1.bf16.msra.mxu0 0
  %1930 = vmatprep.subr.bf16.mxu0 0
  %1931 = vmatpush1.bf16.msra.mxu0 0
  %1932 = vmatprep.mubr.bf16.mxu0 0
  %1933 = vmatmul.mubr.bf16.gmra.mrb[0].mxu0 %v1898
  %v1934 = vpop.f32.mrb[0].mxu0
  %v1935 = vadd.f32 0.0, %v1934
  %v1936 = vpop.f32.mrb[0].mxu0
  %v1937 = vadd.f32 0.0, %v1936
  %v1938 = vpop.f32.mrb[0].mxu0
  %v1939 = vpop.f32.mrb[0].mxu0
  %1940 = vdwg.mxu0
  %v1941 = vadd.f32 %v1891, %v1935
  %v1942 = vadd.f32 %v1892, %v1937
  %v1943 = vxor.u32 %v1941, 2147483648
  %v1944 = vxor.u32 %v1942, 2147483648
  %v1945 = vmul.f32 %v1943, 1.442695
  %v1946 = vpow.pop %v1945
  %v1947 = vmul.f32 %v1944, 1.442695
  %v1948 = vpow.pop %v1947
  %v1949 = vadd.f32 %v1946, 1.0
  %v1950 = vadd.f32 %v1948, 1.0
  %v1951 = vrcp.pop %v1949
  %v1952 = vmul.f32 1.0, %v1951
  %v1953 = vrcp.pop %v1950
  %v1954 = vmul.f32 1.0, %v1953
  %v1955 = vtanh.pop %v1942
  %v1956 = vmul.f32 %v1952, %v1888
  %v1957 = vmul.f32 %v1952, %v1955
  %1959 = vrot.lane.b32.xlu0 %v1957, 64
  %v1960 = vpop.permute.xlu0 %1959
  %v1962 = vadd.f32 %v1956, %v1960
  %v1963 = vtanh.pop %v1962
  %v1964 = vmul.f32 %v1954, %v1963
  %v1965 = vadd.f32 %v1594, %v1738
  %v1966 = vadd.f32 %v1595, %v1739
  %v1967 = vpack.c.bf16 %v1964, %v1964
  %1969 = vrot.lane.b32.xlu0 %v1967, 64
  %v1970 = vpop.permute.xlu0 %1969
  %v1972 = vsel %vm477, %v1970, 0
  %1974 = vmatprep.subr.bf16.mxu0 %v1808
  %1975 = vmatpush1.bf16.msra.mxu0 %v1807
  %1976 = vmatprep.subr.bf16.mxu0 %v1810
  %1977 = vmatpush1.bf16.msra.mxu0 %v1809
  %1978 = vmatprep.subr.bf16.mxu0 %v1812
  %1979 = vmatpush1.bf16.msra.mxu0 %v1811
  %1980 = vmatprep.subr.bf16.mxu0 %v1814
  %1981 = vmatpush1.bf16.msra.mxu0 %v1813
  %1982 = vmatprep.subr.bf16.mxu0 0
  %1983 = vmatpush1.bf16.msra.mxu0 0
  %1984 = vmatprep.subr.bf16.mxu0 0
  %1985 = vmatpush1.bf16.msra.mxu0 0
  %1986 = vmatprep.subr.bf16.mxu0 0
  %1987 = vmatpush1.bf16.msra.mxu0 0
  %1988 = vmatprep.subr.bf16.mxu0 0
  %1989 = vmatpush1.bf16.msra.mxu0 0
  %1990 = vmatprep.subr.bf16.mxu0 0
  %1991 = vmatpush1.bf16.msra.mxu0 0
  %1992 = vmatprep.subr.bf16.mxu0 0
  %1993 = vmatpush1.bf16.msra.mxu0 0
  %1994 = vmatprep.subr.bf16.mxu0 0
  %1995 = vmatpush1.bf16.msra.mxu0 0
  %1996 = vmatprep.subr.bf16.mxu0 0
  %1997 = vmatpush1.bf16.msra.mxu0 0
  %1998 = vmatprep.subr.bf16.mxu0 0
  %1999 = vmatpush1.bf16.msra.mxu0 0
  %2000 = vmatprep.subr.bf16.mxu0 0
  %2001 = vmatpush1.bf16.msra.mxu0 0
  %2002 = vmatprep.subr.bf16.mxu0 0
  %2003 = vmatpush1.bf16.msra.mxu0 0
  %2004 = vmatprep.subr.bf16.mxu0 0
  %2005 = vmatpush1.bf16.msra.mxu0 0
  %2006 = vmatprep.mubr.bf16.mxu0 0
  %2007 = vmatmul.mubr.bf16.gmra.mrb[0].mxu0 %v1972
  %v2008 = vpop.f32.mrb[0].mxu0
  %v2009 = vadd.f32 0.0, %v2008
  %v2010 = vpop.f32.mrb[0].mxu0
  %v2011 = vadd.f32 0.0, %v2010
  %v2012 = vpop.f32.mrb[0].mxu0
  %v2013 = vpop.f32.mrb[0].mxu0
  %2014 = vdwg.mxu0
  %v2015 = vadd.f32 %v1965, %v2009
  %v2016 = vadd.f32 %v1966, %v2011
  %v2017 = vxor.u32 %v2015, 2147483648
  %v2018 = vxor.u32 %v2016, 2147483648
  %v2019 = vmul.f32 %v2017, 1.442695
  %v2020 = vpow.pop %v2019
  %v2021 = vmul.f32 %v2018, 1.442695
  %v2022 = vpow.pop %v2021
  %v2023 = vadd.f32 %v2020, 1.0
  %v2024 = vadd.f32 %v2022, 1.0
  %v2025 = vrcp.pop %v2023
  %v2026 = vmul.f32 1.0, %v2025
  %v2027 = vrcp.pop %v2024
  %v2028 = vmul.f32 1.0, %v2027
  %v2029 = vtanh.pop %v2016
  %v2030 = vmul.f32 %v2026, %v1962
  %v2031 = vmul.f32 %v2026, %v2029
  %2033 = vrot.lane.b32.xlu0 %v2031, 64
  %v2034 = vpop.permute.xlu0 %2033
  %v2036 = vadd.f32 %v2030, %v2034
  %v2037 = vtanh.pop %v2036
  %v2038 = vmul.f32 %v2028, %v2037
  %v2039 = vpack.c.bf16 %v2038, %v2038
  %2041 = vrot.lane.b32.xlu0 %v2039, 64
  %v2042 = vpop.permute.xlu0 %2041
  %v2044 = vsel %vm477, %v2042, 0
  %2046 = vmatprep.subr.bf16.mxu0 %v1808
  %2047 = vmatpush1.bf16.msra.mxu0 %v1807
  %2048 = vmatprep.subr.bf16.mxu0 %v1810
  %2049 = vmatpush1.bf16.msra.mxu0 %v1809
  %2050 = vmatprep.subr.bf16.mxu0 %v1812
  %2051 = vmatpush1.bf16.msra.mxu0 %v1811
  %2052 = vmatprep.subr.bf16.mxu0 %v1814
  %2053 = vmatpush1.bf16.msra.mxu0 %v1813
  %2054 = vmatprep.subr.bf16.mxu0 0
  %2055 = vmatpush1.bf16.msra.mxu0 0
  %2056 = vmatprep.subr.bf16.mxu0 0
  %2057 = vmatpush1.bf16.msra.mxu0 0
  %2058 = vmatprep.subr.bf16.mxu0 0
  %2059 = vmatpush1.bf16.msra.mxu0 0
  %2060 = vmatprep.subr.bf16.mxu0 0
  %2061 = vmatpush1.bf16.msra.mxu0 0
  %2062 = vmatprep.subr.bf16.mxu0 0
  %2063 = vmatpush1.bf16.msra.mxu0 0
  %2064 = vmatprep.subr.bf16.mxu0 0
  %2065 = vmatpush1.bf16.msra.mxu0 0
  %2066 = vmatprep.subr.bf16.mxu0 0
  %2067 = vmatpush1.bf16.msra.mxu0 0
  %2068 = vmatprep.subr.bf16.mxu0 0
  %2069 = vmatpush1.bf16.msra.mxu0 0
  %2070 = vmatprep.subr.bf16.mxu0 0
  %2071 = vmatpush1.bf16.msra.mxu0 0
  %2072 = vmatprep.subr.bf16.mxu0 0
  %2073 = vmatpush1.bf16.msra.mxu0 0
  %2074 = vmatprep.subr.bf16.mxu0 0
  %2075 = vmatpush1.bf16.msra.mxu0 0
  %2076 = vmatprep.subr.bf16.mxu0 0
  %2077 = vmatpush1.bf16.msra.mxu0 0
  %2078 = vmatprep.mubr.bf16.mxu0 0
  %2079 = vmatmul.mubr.bf16.gmra.mrb[0].mxu0 %v2044
  %v2080 = vpop.f32.mrb[0].mxu0
  %v2081 = vadd.f32 0.0, %v2080
  %v2082 = vpop.f32.mrb[0].mxu0
  %v2083 = vadd.f32 0.0, %v2082
  %v2084 = vpop.f32.mrb[0].mxu0
  %v2085 = vpop.f32.mrb[0].mxu0
  %2086 = vdwg.mxu0
  %v2087 = vadd.f32 %v1740, %v2081
  %v2088 = vadd.f32 %v1741, %v2083
  %v2089 = vxor.u32 %v2087, 2147483648
  %v2090 = vxor.u32 %v2088, 2147483648
  %v2091 = vmul.f32 %v2089, 1.442695
  %v2092 = vpow.pop %v2091
  %v2093 = vmul.f32 %v2090, 1.442695
  %v2094 = vpow.pop %v2093
  %v2095 = vadd.f32 %v2092, 1.0
  %v2096 = vadd.f32 %v2094, 1.0
  %v2097 = vrcp.pop %v2095
  %v2098 = vmul.f32 1.0, %v2097
  %v2099 = vrcp.pop %v2096
  %v2100 = vmul.f32 1.0, %v2099
  %v2101 = vtanh.pop %v2088
  %v2102 = vmul.f32 %v2098, %v2036
  %v2103 = vmul.f32 %v2098, %v2101
  %2105 = vrot.lane.b32.xlu0 %v2103, 64
  %v2106 = vpop.permute.xlu0 %2105
  %v2108 = vadd.f32 %v2102, %v2106
  %v2109 = vtanh.pop %v2108
  %v2110 = vmul.f32 %v2100, %v2109
  %2112 = vrot.lane.b32.xlu0 %v2108, 64
  %v2113 = vpop.permute.xlu0 %2112
  %2116 = vrot.lane.b32.xlu0 %v2036, 64
  %v2117 = vpop.permute.xlu0 %2116
  %v2119 = vsel %vm1120, %v2113, %v2117
  %2121 = vrot.lane.b32.xlu0 %v2110, 64
  %v2122 = vpop.permute.xlu0 %2121
  %2125 = vrot.lane.b32.xlu0 %v2038, 64
  %v2126 = vpop.permute.xlu0 %2125
  %v2128 = vsel %vm1120, %v2122, %v2126
  %v2129 = vpack.c.bf16 %v2128, %v2128
  %v2131 = vsel %vm477, %v2129, 0
  %2133 = vmatprep.subr.bf16.mxu0 %v1808
  %2134 = vmatpush1.bf16.msra.mxu0 %v1807
  %2135 = vmatprep.subr.bf16.mxu0 %v1810
  %2136 = vmatpush1.bf16.msra.mxu0 %v1809
  %2137 = vmatprep.subr.bf16.mxu0 %v1812
  %2138 = vmatpush1.bf16.msra.mxu0 %v1811
  %2139 = vmatprep.subr.bf16.mxu0 %v1814
  %2140 = vmatpush1.bf16.msra.mxu0 %v1813
  %2141 = vmatprep.subr.bf16.mxu0 0
  %2142 = vmatpush1.bf16.msra.mxu0 0
  %2143 = vmatprep.subr.bf16.mxu0 0
  %2144 = vmatpush1.bf16.msra.mxu0 0
  %2145 = vmatprep.subr.bf16.mxu0 0
  %2146 = vmatpush1.bf16.msra.mxu0 0
  %2147 = vmatprep.subr.bf16.mxu0 0
  %2148 = vmatpush1.bf16.msra.mxu0 0
  %2149 = vmatprep.subr.bf16.mxu0 0
  %2150 = vmatpush1.bf16.msra.mxu0 0
  %2151 = vmatprep.subr.bf16.mxu0 0
  %2152 = vmatpush1.bf16.msra.mxu0 0
  %2153 = vmatprep.subr.bf16.mxu0 0
  %2154 = vmatpush1.bf16.msra.mxu0 0
  %2155 = vmatprep.subr.bf16.mxu0 0
  %2156 = vmatpush1.bf16.msra.mxu0 0
  %2157 = vmatprep.subr.bf16.mxu0 0
  %2158 = vmatpush1.bf16.msra.mxu0 0
  %2159 = vmatprep.subr.bf16.mxu0 0
  %2160 = vmatpush1.bf16.msra.mxu0 0
  %2161 = vmatprep.subr.bf16.mxu0 0
  %2162 = vmatpush1.bf16.msra.mxu0 0
  %2163 = vmatprep.subr.bf16.mxu0 0
  %2164 = vmatpush1.bf16.msra.mxu0 0
  %2165 = vmatprep.mubr.bf16.mxu0 0
  %2166 = vmatmul.mubr.bf16.gmra.mrb[0].mxu0 %v2131
  %v2167 = vpop.f32.mrb[0].mxu0
  %v2168 = vadd.f32 0.0, %v2167
  %v2169 = vpop.f32.mrb[0].mxu0
  %v2170 = vadd.f32 0.0, %v2169
  %v2171 = vpop.f32.mrb[0].mxu0
  %v2172 = vpop.f32.mrb[0].mxu0
  %2173 = vdwg.mxu0
  %v2174 = vadd.f32 %v1742, %v2168
  %v2175 = vadd.f32 %v1743, %v2170
  %v2176 = vxor.u32 %v2174, 2147483648
  %v2177 = vxor.u32 %v2175, 2147483648
  %v2178 = vmul.f32 %v2176, 1.442695
  %v2179 = vpow.pop %v2178
  %v2180 = vmul.f32 %v2177, 1.442695
  %v2181 = vpow.pop %v2180
  %v2182 = vadd.f32 %v2179, 1.0
  %v2183 = vadd.f32 %v2181, 1.0
  %v2184 = vrcp.pop %v2182
  %v2185 = vmul.f32 1.0, %v2184
  %v2186 = vrcp.pop %v2183
  %v2187 = vmul.f32 1.0, %v2186
  %v2188 = vtanh.pop %v2175
  %2190 = vrot.lane.b32.xlu0 %v2119, 64
  %v2191 = vpop.permute.xlu0 %2190
  %v2193 = vmul.f32 %v2185, %v2191
  %v2194 = vmul.f32 %v2185, %v2188
  %2196 = vrot.lane.b32.xlu0 %v2194, 64
  %v2197 = vpop.permute.xlu0 %2196
  %v2199 = vadd.f32 %v2193, %v2197
  %v2200 = vtanh.pop %v2199
  %v2201 = vmul.f32 %v2187, %v2200
  %2203 = vrot.lane.b32.xlu0 %v2199, 64
  %v2204 = vpop.permute.xlu0 %2203
  %v2206 = vsel %vm1120, %v2204, %v2117
  %2208 = vrot.lane.b32.xlu0 %v2201, 64
  %v2209 = vpop.permute.xlu0 %2208
  %v2211 = vsel %vm1120, %v2209, %v2126
  %s2212 = scalar_lea.vmem %s13, 32
  %v2213 = vld [vmem:[%s2212] sm:$0xff]
  %v2214 = vld [vmem:[%s2212 + $0x8] sm:$0xff]
  %v2215 = vld [vmem:[%s2212 + $0x10] sm:$0xff]
  %v2216 = vld [vmem:[%s2212 + $0x18] sm:$0xff]
  %2220 = vrot.lane.b32.xlu0 %v1776, 64
  %v2221 = vpop.permute.xlu0 %2220
  %2222 = vrot.lane.b32.xlu0 %v1890, 64
  %v2223 = vpop.permute.xlu0 %2222
  %2224 = vrot.lane.b32.xlu0 %v1964, 64
  %v2225 = vpop.permute.xlu0 %2224
  %v2226 = vsel %vm1235, %v2221, 0
  %v2228 = vsel %vm1235, %v2223, 0
  %v2230 = vsel %vm1235, %v2225, 0
  %v2232 = vsel %vm1235, %v2126, 0
  %2234 = vmatprep.subr.mxu0 0.0
  %2235 = vmatpush1.msra.mxu0 %v2213
  %2236 = vmatprep.subr.mxu0 0.0
  %2237 = vmatpush1.msra.mxu0 %v2214
  %2238 = vmatprep.subr.mxu0 0.0
  %2239 = vmatpush1.msra.mxu0 %v2215
  %2240 = vmatprep.subr.mxu0 0.0
  %2241 = vmatpush1.msra.mxu0 %v2216
  %2242 = vmatprep.subr.mxu0 0.0
  %2243 = vmatpush1.msra.mxu0 0.0
  %2244 = vmatprep.subr.mxu0 0.0
  %2245 = vmatpush1.msra.mxu0 0.0
  %2246 = vmatprep.subr.mxu0 0.0
  %2247 = vmatpush1.msra.mxu0 0.0
  %2248 = vmatprep.subr.mxu0 0.0
  %2249 = vmatpush1.msra.mxu0 0.0
  %2250 = vmatprep.subr.mxu0 0.0
  %2251 = vmatpush1.msra.mxu0 0.0
  %2252 = vmatprep.subr.mxu0 0.0
  %2253 = vmatpush1.msra.mxu0 0.0
  %2254 = vmatprep.subr.mxu0 0.0
  %2255 = vmatpush1.msra.mxu0 0.0
  %2256 = vmatprep.subr.mxu0 0.0
  %2257 = vmatpush1.msra.mxu0 0.0
  %2258 = vmatprep.subr.mxu0 0.0
  %2259 = vmatpush1.msra.mxu0 0.0
  %2260 = vmatprep.subr.mxu0 0.0
  %2261 = vmatpush1.msra.mxu0 0.0
  %2262 = vmatprep.subr.mxu0 0.0
  %2263 = vmatpush1.msra.mxu0 0.0
  %2264 = vmatprep.subr.mxu0 0.0
  %2265 = vmatpush1.msra.mxu0 0.0
  %2266 = vmatprep.subr.mxu0 0.0
  %2267 = vmatpush1.msra.mxu0 0.0
  %2268 = vmatprep.subr.mxu0 0.0
  %2269 = vmatpush1.msra.mxu0 0.0
  %2270 = vmatprep.subr.mxu0 0.0
  %2271 = vmatpush1.msra.mxu0 0.0
  %2272 = vmatprep.subr.mxu0 0.0
  %2273 = vmatpush1.msra.mxu0 0.0
  %2274 = vmatprep.subr.mxu0 0.0
  %2275 = vmatpush1.msra.mxu0 0.0
  %2276 = vmatprep.subr.mxu0 0.0
  %2277 = vmatpush1.msra.mxu0 0.0
  %2278 = vmatprep.subr.mxu0 0.0
  %2279 = vmatpush1.msra.mxu0 0.0
  %2280 = vmatprep.subr.mxu0 0.0
  %2281 = vmatpush1.msra.mxu0 0.0
  %2282 = vmatprep.subr.mxu0 0.0
  %2283 = vmatpush1.msra.mxu0 0.0
  %2284 = vmatprep.subr.mxu0 0.0
  %2285 = vmatpush1.msra.mxu0 0.0
  %2286 = vmatprep.subr.mxu0 0.0
  %2287 = vmatpush1.msra.mxu0 0.0
  %2288 = vmatprep.subr.mxu0 0.0
  %2289 = vmatpush1.msra.mxu0 0.0
  %2290 = vmatprep.subr.mxu0 0.0
  %2291 = vmatpush1.msra.mxu0 0.0
  %2292 = vmatprep.subr.mxu0 0.0
  %2293 = vmatpush1.msra.mxu0 0.0
  %2294 = vmatprep.subr.mxu0 0.0
  %2295 = vmatpush1.msra.mxu0 0.0
  %2296 = vmatprep.subr.mxu0 0.0
  %2297 = vmatpush1.msra.mxu0 0.0
  %2298 = vmatprep.mubr.f32.mxu0 0.0
  %2299 = vmatmul.mubr.f32.gmra.mrb[0].mxu0 %v2226
  %v2300 = vpop.f32.mrb[0].mxu0
  %v2301 = vadd.f32 0.0, %v2300
  %v2302 = vpop.f32.mrb[0].mxu0
  %2303 = vmatprep.mubr.f32.mxu0 0.0
  %2304 = vmatmul.mubr.f32.gmra.mrb[0].mxu0 %v2228
  %v2305 = vpop.f32.mrb[0].mxu0
  %v2306 = vadd.f32 0.0, %v2305
  %v2307 = vpop.f32.mrb[0].mxu0
  %2308 = vmatprep.mubr.f32.mxu0 0.0
  %2309 = vmatmul.mubr.f32.gmra.mrb[0].mxu0 %v2230
  %v2310 = vpop.f32.mrb[0].mxu0
  %v2311 = vadd.f32 0.0, %v2310
  %v2312 = vpop.f32.mrb[0].mxu0
  %2313 = vmatprep.mubr.f32.mxu0 0.0
  %2314 = vmatmul.mubr.f32.gmra.mrb[0].mxu0 %v2232
  %v2315 = vpop.f32.mrb[0].mxu0
  %v2316 = vadd.f32 0.0, %v2315
  %v2317 = vpop.f32.mrb[0].mxu0
  %2318 = vdwg.mxu0
  %v2319 = vsel %vm1329, %v2301, %v2316
  %v2320 = vsel %vm1329, %v2306, %v2311
  %v2321 = vsel %vm1329, %v2311, %v2306
  %v2322 = vsel %vm1329, %v2316, %v2301
  %s2323 = scalar_lea.vmem %s14, 32
  %v2324 = vld [vmem:[%s2323] sm:$0xff]
  %v2325 = vld [vmem:[%s2323 + $0x8] sm:$0xff]
  %v2326 = vld [vmem:[%s2323 + $0x10] sm:$0xff]
  %v2327 = vld [vmem:[%s2323 + $0x18] sm:$0xff]
  %2329 = vrot.lane.b32.xlu0 %v2128, 64
  %v2330 = vpop.permute.xlu0 %2329
  %2332 = vrot.lane.b32.xlu0 %v2211, 64
  %v2333 = vpop.permute.xlu0 %2332
  %2334 = vrot.lane.b32.xlu0 %v1776, 32
  %v2335 = vpop.permute.xlu0 %2334
  %2336 = vrot.lane.b32.xlu0 %v1890, 32
  %v2337 = vpop.permute.xlu0 %2336
  %2338 = vrot.lane.b32.xlu0 %v1964, 32
  %v2339 = vpop.permute.xlu0 %2338
  %2340 = vrot.lane.b32.xlu0 %v2038, 32
  %v2341 = vpop.permute.xlu0 %2340
  %2342 = vrot.lane.b32.xlu0 %v2330, 32
  %v2343 = vpop.permute.xlu0 %2342
  %2344 = vrot.lane.b32.xlu0 %v2333, 32
  %v2345 = vpop.permute.xlu0 %2344
  %v2346 = vsel %vm1235, %v2335, 0
  %v2348 = vsel %vm1235, %v2337, 0
  %v2350 = vsel %vm1235, %v2339, 0
  %v2352 = vsel %vm1235, %v2341, 0
  %v2354 = vsel %vm1235, %v2343, 0
  %v2356 = vsel %vm1235, %v2345, 0
  %2358 = vmatprep.subr.mxu0 0.0
  %2359 = vmatpush1.msra.mxu0 %v2324
  %2360 = vmatprep.subr.mxu0 0.0
  %2361 = vmatpush1.msra.mxu0 %v2325
  %2362 = vmatprep.subr.mxu0 0.0
  %2363 = vmatpush1.msra.mxu0 %v2326
  %2364 = vmatprep.subr.mxu0 0.0
  %2365 = vmatpush1.msra.mxu0 %v2327
  %2366 = vmatprep.subr.mxu0 0.0
  %2367 = vmatpush1.msra.mxu0 0.0
  %2368 = vmatprep.subr.mxu0 0.0
  %2369 = vmatpush1.msra.mxu0 0.0
  %2370 = vmatprep.subr.mxu0 0.0
  %2371 = vmatpush1.msra.mxu0 0.0
  %2372 = vmatprep.subr.mxu0 0.0
  %2373 = vmatpush1.msra.mxu0 0.0
  %2374 = vmatprep.subr.mxu0 0.0
  %2375 = vmatpush1.msra.mxu0 0.0
  %2376 = vmatprep.subr.mxu0 0.0
  %2377 = vmatpush1.msra.mxu0 0.0
  %2378 = vmatprep.subr.mxu0 0.0
  %2379 = vmatpush1.msra.mxu0 0.0
  %2380 = vmatprep.subr.mxu0 0.0
  %2381 = vmatpush1.msra.mxu0 0.0
  %2382 = vmatprep.subr.mxu0 0.0
  %2383 = vmatpush1.msra.mxu0 0.0
  %2384 = vmatprep.subr.mxu0 0.0
  %2385 = vmatpush1.msra.mxu0 0.0
  %2386 = vmatprep.subr.mxu0 0.0
  %2387 = vmatpush1.msra.mxu0 0.0
  %2388 = vmatprep.subr.mxu0 0.0
  %2389 = vmatpush1.msra.mxu0 0.0
  %2390 = vmatprep.subr.mxu0 0.0
  %2391 = vmatpush1.msra.mxu0 0.0
  %2392 = vmatprep.subr.mxu0 0.0
  %2393 = vmatpush1.msra.mxu0 0.0
  %2394 = vmatprep.subr.mxu0 0.0
  %2395 = vmatpush1.msra.mxu0 0.0
  %2396 = vmatprep.subr.mxu0 0.0
  %2397 = vmatpush1.msra.mxu0 0.0
  %2398 = vmatprep.subr.mxu0 0.0
  %2399 = vmatpush1.msra.mxu0 0.0
  %2400 = vmatprep.subr.mxu0 0.0
  %2401 = vmatpush1.msra.mxu0 0.0
  %2402 = vmatprep.subr.mxu0 0.0
  %2403 = vmatpush1.msra.mxu0 0.0
  %2404 = vmatprep.subr.mxu0 0.0
  %2405 = vmatpush1.msra.mxu0 0.0
  %2406 = vmatprep.subr.mxu0 0.0
  %2407 = vmatpush1.msra.mxu0 0.0
  %2408 = vmatprep.subr.mxu0 0.0
  %2409 = vmatpush1.msra.mxu0 0.0
  %2410 = vmatprep.subr.mxu0 0.0
  %2411 = vmatpush1.msra.mxu0 0.0
  %2412 = vmatprep.subr.mxu0 0.0
  %2413 = vmatpush1.msra.mxu0 0.0
  %2414 = vmatprep.subr.mxu0 0.0
  %2415 = vmatpush1.msra.mxu0 0.0
  %2416 = vmatprep.subr.mxu0 0.0
  %2417 = vmatpush1.msra.mxu0 0.0
  %2418 = vmatprep.subr.mxu0 0.0
  %2419 = vmatpush1.msra.mxu0 0.0
  %2420 = vmatprep.subr.mxu0 0.0
  %2421 = vmatpush1.msra.mxu0 0.0
  %2422 = vmatprep.mubr.f32.mxu0 0.0
  %2423 = vmatmul.mubr.f32.gmra.mrb[0].mxu0 %v2346
  %v2424 = vpop.f32.mrb[0].mxu0
  %v2425 = vadd.f32 0.0, %v2424
  %v2426 = vpop.f32.mrb[0].mxu0
  %2427 = vmatprep.mubr.f32.mxu0 0.0
  %2428 = vmatmul.mubr.f32.gmra.mrb[0].mxu0 %v2348
  %v2429 = vpop.f32.mrb[0].mxu0
  %v2430 = vadd.f32 0.0, %v2429
  %v2431 = vpop.f32.mrb[0].mxu0
  %2432 = vmatprep.mubr.f32.mxu0 0.0
  %2433 = vmatmul.mubr.f32.gmra.mrb[0].mxu0 %v2350
  %v2434 = vpop.f32.mrb[0].mxu0
  %v2435 = vadd.f32 0.0, %v2434
  %v2436 = vpop.f32.mrb[0].mxu0
  %2437 = vmatprep.mubr.f32.mxu0 0.0
  %2438 = vmatmul.mubr.f32.gmra.mrb[0].mxu0 %v2352
  %v2439 = vpop.f32.mrb[0].mxu0
  %v2440 = vadd.f32 0.0, %v2439
  %v2441 = vpop.f32.mrb[0].mxu0
  %2442 = vmatprep.mubr.f32.mxu0 0.0
  %2443 = vmatmul.mubr.f32.gmra.mrb[0].mxu0 %v2354
  %v2444 = vpop.f32.mrb[0].mxu0
  %v2445 = vadd.f32 0.0, %v2444
  %v2446 = vpop.f32.mrb[0].mxu0
  %2447 = vmatprep.mubr.f32.mxu0 0.0
  %2448 = vmatmul.mubr.f32.gmra.mrb[0].mxu0 %v2356
  %v2449 = vpop.f32.mrb[0].mxu0
  %v2450 = vadd.f32 0.0, %v2449
  %v2451 = vpop.f32.mrb[0].mxu0
  %2452 = vdwg.mxu0
  %v2453 = vsel %vm1329, %v2425, %v2450
  %v2454 = vsel %vm1329, %v2430, %v2445
  %v2455 = vsel %vm1329, %v2435, %v2440
  %v2456 = vsel %vm1329, %v2440, %v2435
  %v2457 = vsel %vm1329, %v2445, %v2430
  %v2458 = vsel %vm1329, %v2450, %v2425
  %v2459 = vadd.f32 %v1326, %v1460
  %v2460 = vadd.f32 %v2316, %v2450
  %2462 = vrot.lane.b32.xlu0 %v1216, 96
  %v2463 = vpop.permute.xlu0 %2462
  %v2465 = vadd.f32 %v1216, %v2463
  %2467 = vrot.lane.b32.xlu0 %v2206, 96
  %v2468 = vpop.permute.xlu0 %2467
  %v2470 = vadd.f32 %v2206, %v2468
  %v2471 = vld [vmem:[%s15] sm:$0xff]
  %v2472 = vld [vmem:[%s15 + $0x8] sm:$0xff]
  %v2473 = vld [vmem:[%s16] sm:$0x1]
  %v2475 = vlaneseq
  %v2476 = vshrl.u32 %v2475, 7
  %v2477 = vsub.s32 0, %v2476
  %v2478 = vrot.slane %v2473, %v2477
  %v2481 = vsel %vm1486, %v2319, 0
  %v2484 = vsel %vm1486, %v2320, 0
  %v2487 = vsel %vm1486, %v2321, 0
  %v2490 = vsel %vm1486, %v2322, 0
  %v2493 = vsel %vm1486, %v2453, 0
  %v2496 = vsel %vm1486, %v2454, 0
  %v2499 = vsel %vm1486, %v2455, 0
  %v2502 = vsel %vm1486, %v2456, 0
  %v2505 = vsel %vm1486, %v2457, 0
  %v2508 = vsel %vm1486, %v2458, 0
  %2510 = vmatprep.subr.mxu0 0.0
  %2511 = vmatpush1.msra.mxu0 %v2471
  %2512 = vmatprep.subr.mxu0 0.0
  %2513 = vmatpush1.msra.mxu0 %v2472
  %2514 = vmatprep.subr.mxu0 0.0
  %2515 = vmatpush1.msra.mxu0 0.0
  %2516 = vmatprep.subr.mxu0 0.0
  %2517 = vmatpush1.msra.mxu0 0.0
  %2518 = vmatprep.subr.mxu0 0.0
  %2519 = vmatpush1.msra.mxu0 0.0
  %2520 = vmatprep.subr.mxu0 0.0
  %2521 = vmatpush1.msra.mxu0 0.0
  %2522 = vmatprep.subr.mxu0 0.0
  %2523 = vmatpush1.msra.mxu0 0.0
  %2524 = vmatprep.subr.mxu0 0.0
  %2525 = vmatpush1.msra.mxu0 0.0
  %2526 = vmatprep.subr.mxu0 0.0
  %2527 = vmatpush1.msra.mxu0 0.0
  %2528 = vmatprep.subr.mxu0 0.0
  %2529 = vmatpush1.msra.mxu0 0.0
  %2530 = vmatprep.subr.mxu0 0.0
  %2531 = vmatpush1.msra.mxu0 0.0
  %2532 = vmatprep.subr.mxu0 0.0
  %2533 = vmatpush1.msra.mxu0 0.0
  %2534 = vmatprep.subr.mxu0 0.0
  %2535 = vmatpush1.msra.mxu0 0.0
  %2536 = vmatprep.subr.mxu0 0.0
  %2537 = vmatpush1.msra.mxu0 0.0
  %2538 = vmatprep.subr.mxu0 0.0
  %2539 = vmatpush1.msra.mxu0 0.0
  %2540 = vmatprep.subr.mxu0 0.0
  %2541 = vmatpush1.msra.mxu0 0.0
  %2542 = vmatprep.subr.mxu0 0.0
  %2543 = vmatpush1.msra.mxu0 0.0
  %2544 = vmatprep.subr.mxu0 0.0
  %2545 = vmatpush1.msra.mxu0 0.0
  %2546 = vmatprep.subr.mxu0 0.0
  %2547 = vmatpush1.msra.mxu0 0.0
  %2548 = vmatprep.subr.mxu0 0.0
  %2549 = vmatpush1.msra.mxu0 0.0
  %2550 = vmatprep.subr.mxu0 0.0
  %2551 = vmatpush1.msra.mxu0 0.0
  %2552 = vmatprep.subr.mxu0 0.0
  %2553 = vmatpush1.msra.mxu0 0.0
  %2554 = vmatprep.subr.mxu0 0.0
  %2555 = vmatpush1.msra.mxu0 0.0
  %2556 = vmatprep.subr.mxu0 0.0
  %2557 = vmatpush1.msra.mxu0 0.0
  %2558 = vmatprep.subr.mxu0 0.0
  %2559 = vmatpush1.msra.mxu0 0.0
  %2560 = vmatprep.subr.mxu0 0.0
  %2561 = vmatpush1.msra.mxu0 0.0
  %2562 = vmatprep.subr.mxu0 0.0
  %2563 = vmatpush1.msra.mxu0 0.0
  %2564 = vmatprep.subr.mxu0 0.0
  %2565 = vmatpush1.msra.mxu0 0.0
  %2566 = vmatprep.subr.mxu0 0.0
  %2567 = vmatpush1.msra.mxu0 0.0
  %2568 = vmatprep.subr.mxu0 0.0
  %2569 = vmatpush1.msra.mxu0 0.0
  %2570 = vmatprep.subr.mxu0 0.0
  %2571 = vmatpush1.msra.mxu0 0.0
  %2572 = vmatprep.subr.mxu0 0.0
  %2573 = vmatpush1.msra.mxu0 0.0
  %2574 = vmatprep.mubr.f32.mxu0 0.0
  %2575 = vmatmul.mubr.f32.gmra.mrb[0].mxu0 %v2481
  %v2576 = vpop.f32.mrb[0].mxu0
  %v2577 = vadd.f32 %v2478, %v2576
  %v2578 = vpop.f32.mrb[0].mxu0
  %2579 = vmatprep.mubr.f32.mxu0 0.0
  %2580 = vmatmul.mubr.f32.gmra.mrb[0].mxu0 %v2484
  %v2581 = vpop.f32.mrb[0].mxu0
  %v2582 = vadd.f32 %v2478, %v2581
  %v2583 = vpop.f32.mrb[0].mxu0
  %2584 = vmatprep.mubr.f32.mxu0 0.0
  %2585 = vmatmul.mubr.f32.gmra.mrb[0].mxu0 %v2487
  %v2586 = vpop.f32.mrb[0].mxu0
  %v2587 = vadd.f32 %v2478, %v2586
  %v2588 = vpop.f32.mrb[0].mxu0
  %2589 = vmatprep.mubr.f32.mxu0 0.0
  %2590 = vmatmul.mubr.f32.gmra.mrb[0].mxu0 %v2490
  %v2591 = vpop.f32.mrb[0].mxu0
  %v2592 = vadd.f32 %v2478, %v2591
  %v2593 = vpop.f32.mrb[0].mxu0
  %2594 = vmatprep.mubr.f32.mxu0 0.0
  %2595 = vmatmul.mubr.f32.gmra.mrb[0].mxu0 %v2493
  %v2596 = vpop.f32.mrb[0].mxu0
  %v2597 = vadd.f32 %v2478, %v2596
  %v2598 = vpop.f32.mrb[0].mxu0
  %2599 = vmatprep.mubr.f32.mxu0 0.0
  %2600 = vmatmul.mubr.f32.gmra.mrb[0].mxu0 %v2496
  %v2601 = vpop.f32.mrb[0].mxu0
  %v2602 = vadd.f32 %v2478, %v2601
  %v2603 = vpop.f32.mrb[0].mxu0
  %2604 = vmatprep.mubr.f32.mxu0 0.0
  %2605 = vmatmul.mubr.f32.gmra.mrb[0].mxu0 %v2499
  %v2606 = vpop.f32.mrb[0].mxu0
  %v2607 = vadd.f32 %v2478, %v2606
  %v2608 = vpop.f32.mrb[0].mxu0
  %2609 = vmatprep.mubr.f32.mxu0 0.0
  %2610 = vmatmul.mubr.f32.gmra.mrb[0].mxu0 %v2502
  %v2611 = vpop.f32.mrb[0].mxu0
  %v2612 = vadd.f32 %v2478, %v2611
  %v2613 = vpop.f32.mrb[0].mxu0
  %2614 = vmatprep.mubr.f32.mxu0 0.0
  %2615 = vmatmul.mubr.f32.gmra.mrb[0].mxu0 %v2505
  %v2616 = vpop.f32.mrb[0].mxu0
  %v2617 = vadd.f32 %v2478, %v2616
  %v2618 = vpop.f32.mrb[0].mxu0
  %2619 = vmatprep.mubr.f32.mxu0 0.0
  %2620 = vmatmul.mubr.f32.gmra.mrb[0].mxu0 %v2508
  %v2621 = vpop.f32.mrb[0].mxu0
  %v2622 = vadd.f32 %v2478, %v2621
  %v2623 = vpop.f32.mrb[0].mxu0
  %2624 = vdwg.mxu0
  %v2625 = vsel %vm581, %v2622, %v2577
  %v2626 = vsel %vm581, %v2617, %v2582
  %v2627 = vsel %vm581, %v2612, %v2587
  %v2628 = vsel %vm581, %v2607, %v2592
  %v2629 = vsel %vm581, %v2602, %v2597
  %v2630 = vsel %vm581, %v2597, %v2602
  %v2631 = vsel %vm581, %v2592, %v2607
  %v2632 = vsel %vm581, %v2587, %v2612
  %v2633 = vsel %vm581, %v2582, %v2617
  %v2634 = vsel %vm581, %v2577, %v2622
  %v2635 = vld [vmem:[%s18] sm:$0xff]
  %v2636 = vld [vmem:[%s18 + $0x8] sm:$0xff]
  %v2637 = vld [vmem:[%s17] sm:$0xf]
  %v2638 = vld [vmem:[%s17 + $0x4] sm:$0xf]
  %v2639 = vld [vmem:[%s17 + $0x8] sm:$0xf]
  %v2640 = vld [vmem:[%s17 + $0xc] sm:$0xf]
  %v2642 = vsel %vm1486, %v2459, 0
  %2644 = vmatprep.subr.mxu0 0.0
  %2645 = vmatpush1.msra.mxu0 %v2635
  %2646 = vmatprep.subr.mxu0 0.0
  %2647 = vmatpush1.msra.mxu0 %v2636
  %2648 = vmatprep.subr.mxu0 0.0
  %2649 = vmatpush1.msra.mxu0 0.0
  %2650 = vmatprep.subr.mxu0 0.0
  %2651 = vmatpush1.msra.mxu0 0.0
  %2652 = vmatprep.subr.mxu0 0.0
  %2653 = vmatpush1.msra.mxu0 0.0
  %2654 = vmatprep.subr.mxu0 0.0
  %2655 = vmatpush1.msra.mxu0 0.0
  %2656 = vmatprep.subr.mxu0 0.0
  %2657 = vmatpush1.msra.mxu0 0.0
  %2658 = vmatprep.subr.mxu0 0.0
  %2659 = vmatpush1.msra.mxu0 0.0
  %2660 = vmatprep.subr.mxu0 0.0
  %2661 = vmatpush1.msra.mxu0 0.0
  %2662 = vmatprep.subr.mxu0 0.0
  %2663 = vmatpush1.msra.mxu0 0.0
  %2664 = vmatprep.subr.mxu0 0.0
  %2665 = vmatpush1.msra.mxu0 0.0
  %2666 = vmatprep.subr.mxu0 0.0
  %2667 = vmatpush1.msra.mxu0 0.0
  %2668 = vmatprep.subr.mxu0 0.0
  %2669 = vmatpush1.msra.mxu0 0.0
  %2670 = vmatprep.subr.mxu0 0.0
  %2671 = vmatpush1.msra.mxu0 0.0
  %2672 = vmatprep.subr.mxu0 0.0
  %2673 = vmatpush1.msra.mxu0 0.0
  %2674 = vmatprep.subr.mxu0 0.0
  %2675 = vmatpush1.msra.mxu0 0.0
  %2676 = vmatprep.subr.mxu0 0.0
  %2677 = vmatpush1.msra.mxu0 0.0
  %2678 = vmatprep.subr.mxu0 0.0
  %2679 = vmatpush1.msra.mxu0 0.0
  %2680 = vmatprep.subr.mxu0 0.0
  %2681 = vmatpush1.msra.mxu0 0.0
  %2682 = vmatprep.subr.mxu0 0.0
  %2683 = vmatpush1.msra.mxu0 0.0
  %2684 = vmatprep.subr.mxu0 0.0
  %2685 = vmatpush1.msra.mxu0 0.0
  %2686 = vmatprep.subr.mxu0 0.0
  %2687 = vmatpush1.msra.mxu0 0.0
  %2688 = vmatprep.subr.mxu0 0.0
  %2689 = vmatpush1.msra.mxu0 0.0
  %2690 = vmatprep.subr.mxu0 0.0
  %2691 = vmatpush1.msra.mxu0 0.0
  %2692 = vmatprep.subr.mxu0 0.0
  %2693 = vmatpush1.msra.mxu0 0.0
  %2694 = vmatprep.subr.mxu0 0.0
  %2695 = vmatpush1.msra.mxu0 0.0
  %2696 = vmatprep.subr.mxu0 0.0
  %2697 = vmatpush1.msra.mxu0 0.0
  %2698 = vmatprep.subr.mxu0 0.0
  %2699 = vmatpush1.msra.mxu0 0.0
  %2700 = vmatprep.subr.mxu0 0.0
  %2701 = vmatpush1.msra.mxu0 0.0
  %2702 = vmatprep.subr.mxu0 0.0
  %2703 = vmatpush1.msra.mxu0 0.0
  %2704 = vmatprep.subr.mxu0 0.0
  %2705 = vmatpush1.msra.mxu0 0.0
  %2706 = vmatprep.subr.mxu0 0.0
  %2707 = vmatpush1.msra.mxu0 0.0
  %2708 = vmatprep.mubr.f32.mxu0 0.0
  %2709 = vmatmul.mubr.f32.gmra.mrb[0].mxu0 %v2642
  %v2710 = vpop.f32.mrb[0].mxu0
  %v2711 = vadd.f32 %v2625, %v2710
  %v2712 = vpop.f32.mrb[0].mxu0
  %2713 = vdwg.mxu0
  %v2714 = vxor.u32 %v2711, 2147483648
  %v2715 = vmul.f32 %v2714, 1.442695
  %v2716 = vpow.pop %v2715
  %v2717 = vadd.f32 %v2716, 1.0
  %v2718 = vrcp.pop %v2717
  %v2719 = vmul.f32 1.0, %v2718
  %v2720 = vtanh.pop %v2711
  %2722 = vrot.lane.b32.xlu0 %v2465, 32
  %v2723 = vpop.permute.xlu0 %2722
  %v2725 = vmul.f32 %v2719, %v2723
  %2727 = vrot.lane.b32.xlu0 %v2720, 64
  %v2728 = vpop.permute.xlu0 %2727
  %v2730 = vmul.f32 %v2719, %v2728
  %2732 = vrot.lane.b32.xlu0 %v2730, 32
  %v2733 = vpop.permute.xlu0 %2732
  %v2735 = vadd.f32 %v2725, %v2733
  %v2736 = vtanh.pop %v2735
  %2738 = vrot.lane.b32.xlu0 %v2736, 64
  %v2739 = vpop.permute.xlu0 %2738
  %v2741 = vmul.f32 %v2719, %v2739
  %v2742 = vpack.c.bf16 %v2741, %v2741
  %2744 = vrot.lane.b32.xlu0 %v2742, 32
  %v2745 = vpop.permute.xlu0 %2744
  %v2750 = vunpack.c.l.b16 %v2637
  %v2751 = vunpack.c.l.b16 %v2638
  %v2752 = vunpack.c.l.b16 %v2639
  %v2753 = vunpack.c.l.b16 %v2640
  %v2754 = vpack.c.b16 %v2751, %v2750
  %v2755 = vpack.c.b16 %v2753, %v2752
  %v2759 = vsel %vm1235, %v2745, 0
  %2761 = vmatprep.subr.bf16.mxu0 0
  %2762 = vmatpush1.bf16.msra.mxu0 %v2754
  %2763 = vmatprep.subr.bf16.mxu0 0
  %2764 = vmatpush1.bf16.msra.mxu0 %v2755
  %2765 = vmatprep.subr.bf16.mxu0 0
  %2766 = vmatpush1.bf16.msra.mxu0 0
  %2767 = vmatprep.subr.bf16.mxu0 0
  %2768 = vmatpush1.bf16.msra.mxu0 0
  %2769 = vmatprep.subr.bf16.mxu0 0
  %2770 = vmatpush1.bf16.msra.mxu0 0
  %2771 = vmatprep.subr.bf16.mxu0 0
  %2772 = vmatpush1.bf16.msra.mxu0 0
  %2773 = vmatprep.subr.bf16.mxu0 0
  %2774 = vmatpush1.bf16.msra.mxu0 0
  %2775 = vmatprep.subr.bf16.mxu0 0
  %2776 = vmatpush1.bf16.msra.mxu0 0
  %2777 = vmatprep.subr.bf16.mxu0 0
  %2778 = vmatpush1.bf16.msra.mxu0 0
  %2779 = vmatprep.subr.bf16.mxu0 0
  %2780 = vmatpush1.bf16.msra.mxu0 0
  %2781 = vmatprep.subr.bf16.mxu0 0
  %2782 = vmatpush1.bf16.msra.mxu0 0
  %2783 = vmatprep.subr.bf16.mxu0 0
  %2784 = vmatpush1.bf16.msra.mxu0 0
  %2785 = vmatprep.subr.bf16.mxu0 0
  %2786 = vmatpush1.bf16.msra.mxu0 0
  %2787 = vmatprep.subr.bf16.mxu0 0
  %2788 = vmatpush1.bf16.msra.mxu0 0
  %2789 = vmatprep.subr.bf16.mxu0 0
  %2790 = vmatpush1.bf16.msra.mxu0 0
  %2791 = vmatprep.subr.bf16.mxu0 0
  %2792 = vmatpush1.bf16.msra.mxu0 0
  %2793 = vmatprep.mubr.bf16.mxu0 0
  %2794 = vmatmul.mubr.bf16.gmra.mrb[0].mxu0 %v2759
  %v2795 = vpop.f32.mrb[0].mxu0
  %v2796 = vadd.f32 0.0, %v2795
  %v2797 = vpop.f32.mrb[0].mxu0
  %v2798 = vpop.f32.mrb[0].mxu0
  %v2799 = vpop.f32.mrb[0].mxu0
  %2800 = vdwg.mxu0
  %v2801 = vadd.f32 %v2626, %v2796
  %v2802 = vxor.u32 %v2801, 2147483648
  %v2803 = vmul.f32 %v2802, 1.442695
  %v2804 = vpow.pop %v2803
  %v2805 = vadd.f32 %v2804, 1.0
  %v2806 = vrcp.pop %v2805
  %v2807 = vmul.f32 1.0, %v2806
  %v2808 = vtanh.pop %v2801
  %v2809 = vmul.f32 %v2807, %v2735
  %2811 = vrot.lane.b32.xlu0 %v2808, 64
  %v2812 = vpop.permute.xlu0 %2811
  %v2814 = vmul.f32 %v2807, %v2812
  %2816 = vrot.lane.b32.xlu0 %v2814, 32
  %v2817 = vpop.permute.xlu0 %2816
  %v2819 = vadd.f32 %v2809, %v2817
  %v2820 = vtanh.pop %v2819
  %2822 = vrot.lane.b32.xlu0 %v2820, 64
  %v2823 = vpop.permute.xlu0 %2822
  %v2825 = vmul.f32 %v2807, %v2823
  %v2826 = vpack.c.bf16 %v2825, %v2825
  %2828 = vrot.lane.b32.xlu0 %v2826, 32
  %v2829 = vpop.permute.xlu0 %2828
  %v2831 = vsel %vm1235, %v2829, 0
  %2833 = vmatprep.subr.bf16.mxu0 0
  %2834 = vmatpush1.bf16.msra.mxu0 %v2754
  %2835 = vmatprep.subr.bf16.mxu0 0
  %2836 = vmatpush1.bf16.msra.mxu0 %v2755
  %2837 = vmatprep.subr.bf16.mxu0 0
  %2838 = vmatpush1.bf16.msra.mxu0 0
  %2839 = vmatprep.subr.bf16.mxu0 0
  %2840 = vmatpush1.bf16.msra.mxu0 0
  %2841 = vmatprep.subr.bf16.mxu0 0
  %2842 = vmatpush1.bf16.msra.mxu0 0
  %2843 = vmatprep.subr.bf16.mxu0 0
  %2844 = vmatpush1.bf16.msra.mxu0 0
  %2845 = vmatprep.subr.bf16.mxu0 0
  %2846 = vmatpush1.bf16.msra.mxu0 0
  %2847 = vmatprep.subr.bf16.mxu0 0
  %2848 = vmatpush1.bf16.msra.mxu0 0
  %2849 = vmatprep.subr.bf16.mxu0 0
  %2850 = vmatpush1.bf16.msra.mxu0 0
  %2851 = vmatprep.subr.bf16.mxu0 0
  %2852 = vmatpush1.bf16.msra.mxu0 0
  %2853 = vmatprep.subr.bf16.mxu0 0
  %2854 = vmatpush1.bf16.msra.mxu0 0
  %2855 = vmatprep.subr.bf16.mxu0 0
  %2856 = vmatpush1.bf16.msra.mxu0 0
  %2857 = vmatprep.subr.bf16.mxu0 0
  %2858 = vmatpush1.bf16.msra.mxu0 0
  %2859 = vmatprep.subr.bf16.mxu0 0
  %2860 = vmatpush1.bf16.msra.mxu0 0
  %2861 = vmatprep.subr.bf16.mxu0 0
  %2862 = vmatpush1.bf16.msra.mxu0 0
  %2863 = vmatprep.subr.bf16.mxu0 0
  %2864 = vmatpush1.bf16.msra.mxu0 0
  %2865 = vmatprep.mubr.bf16.mxu0 0
  %2866 = vmatmul.mubr.bf16.gmra.mrb[0].mxu0 %v2831
  %v2867 = vpop.f32.mrb[0].mxu0
  %v2868 = vadd.f32 0.0, %v2867
  %v2869 = vpop.f32.mrb[0].mxu0
  %v2870 = vpop.f32.mrb[0].mxu0
  %v2871 = vpop.f32.mrb[0].mxu0
  %2872 = vdwg.mxu0
  %v2873 = vadd.f32 %v2627, %v2868
  %v2874 = vxor.u32 %v2873, 2147483648
  %v2875 = vmul.f32 %v2874, 1.442695
  %v2876 = vpow.pop %v2875
  %v2877 = vadd.f32 %v2876, 1.0
  %v2878 = vrcp.pop %v2877
  %v2879 = vmul.f32 1.0, %v2878
  %v2880 = vtanh.pop %v2873
  %v2881 = vmul.f32 %v2879, %v2819
  %2883 = vrot.lane.b32.xlu0 %v2880, 64
  %v2884 = vpop.permute.xlu0 %2883
  %v2886 = vmul.f32 %v2879, %v2884
  %2888 = vrot.lane.b32.xlu0 %v2886, 32
  %v2889 = vpop.permute.xlu0 %2888
  %v2891 = vadd.f32 %v2881, %v2889
  %v2892 = vtanh.pop %v2891
  %2894 = vrot.lane.b32.xlu0 %v2892, 64
  %v2895 = vpop.permute.xlu0 %2894
  %v2897 = vmul.f32 %v2879, %v2895
  %v2898 = vpack.c.bf16 %v2897, %v2897
  %2900 = vrot.lane.b32.xlu0 %v2898, 32
  %v2901 = vpop.permute.xlu0 %2900
  %v2903 = vsel %vm1235, %v2901, 0
  %2905 = vmatprep.subr.bf16.mxu0 0
  %2906 = vmatpush1.bf16.msra.mxu0 %v2754
  %2907 = vmatprep.subr.bf16.mxu0 0
  %2908 = vmatpush1.bf16.msra.mxu0 %v2755
  %2909 = vmatprep.subr.bf16.mxu0 0
  %2910 = vmatpush1.bf16.msra.mxu0 0
  %2911 = vmatprep.subr.bf16.mxu0 0
  %2912 = vmatpush1.bf16.msra.mxu0 0
  %2913 = vmatprep.subr.bf16.mxu0 0
  %2914 = vmatpush1.bf16.msra.mxu0 0
  %2915 = vmatprep.subr.bf16.mxu0 0
  %2916 = vmatpush1.bf16.msra.mxu0 0
  %2917 = vmatprep.subr.bf16.mxu0 0
  %2918 = vmatpush1.bf16.msra.mxu0 0
  %2919 = vmatprep.subr.bf16.mxu0 0
  %2920 = vmatpush1.bf16.msra.mxu0 0
  %2921 = vmatprep.subr.bf16.mxu0 0
  %2922 = vmatpush1.bf16.msra.mxu0 0
  %2923 = vmatprep.subr.bf16.mxu0 0
  %2924 = vmatpush1.bf16.msra.mxu0 0
  %2925 = vmatprep.subr.bf16.mxu0 0
  %2926 = vmatpush1.bf16.msra.mxu0 0
  %2927 = vmatprep.subr.bf16.mxu0 0
  %2928 = vmatpush1.bf16.msra.mxu0 0
  %2929 = vmatprep.subr.bf16.mxu0 0
  %2930 = vmatpush1.bf16.msra.mxu0 0
  %2931 = vmatprep.subr.bf16.mxu0 0
  %2932 = vmatpush1.bf16.msra.mxu0 0
  %2933 = vmatprep.subr.bf16.mxu0 0
  %2934 = vmatpush1.bf16.msra.mxu0 0
  %2935 = vmatprep.subr.bf16.mxu0 0
  %2936 = vmatpush1.bf16.msra.mxu0 0
  %2937 = vmatprep.mubr.bf16.mxu0 0
  %2938 = vmatmul.mubr.bf16.gmra.mrb[0].mxu0 %v2903
  %v2939 = vpop.f32.mrb[0].mxu0
  %v2940 = vadd.f32 0.0, %v2939
  %v2941 = vpop.f32.mrb[0].mxu0
  %v2942 = vpop.f32.mrb[0].mxu0
  %v2943 = vpop.f32.mrb[0].mxu0
  %2944 = vdwg.mxu0
  %v2945 = vadd.f32 %v2628, %v2940
  %v2946 = vxor.u32 %v2945, 2147483648
  %v2947 = vmul.f32 %v2946, 1.442695
  %v2948 = vpow.pop %v2947
  %v2949 = vadd.f32 %v2948, 1.0
  %v2950 = vrcp.pop %v2949
  %v2951 = vmul.f32 1.0, %v2950
  %v2952 = vtanh.pop %v2945
  %v2953 = vmul.f32 %v2951, %v2891
  %2955 = vrot.lane.b32.xlu0 %v2952, 64
  %v2956 = vpop.permute.xlu0 %2955
  %v2958 = vmul.f32 %v2951, %v2956
  %2960 = vrot.lane.b32.xlu0 %v2958, 32
  %v2961 = vpop.permute.xlu0 %2960
  %v2963 = vadd.f32 %v2953, %v2961
  %v2964 = vtanh.pop %v2963
  %2966 = vrot.lane.b32.xlu0 %v2964, 64
  %v2967 = vpop.permute.xlu0 %2966
  %v2969 = vmul.f32 %v2951, %v2967
  %v2970 = vpack.c.bf16 %v2969, %v2969
  %2972 = vrot.lane.b32.xlu0 %v2970, 32
  %v2973 = vpop.permute.xlu0 %2972
  %v2975 = vsel %vm1235, %v2973, 0
  %2977 = vmatprep.subr.bf16.mxu0 0
  %2978 = vmatpush1.bf16.msra.mxu0 %v2754
  %2979 = vmatprep.subr.bf16.mxu0 0
  %2980 = vmatpush1.bf16.msra.mxu0 %v2755
  %2981 = vmatprep.subr.bf16.mxu0 0
  %2982 = vmatpush1.bf16.msra.mxu0 0
  %2983 = vmatprep.subr.bf16.mxu0 0
  %2984 = vmatpush1.bf16.msra.mxu0 0
  %2985 = vmatprep.subr.bf16.mxu0 0
  %2986 = vmatpush1.bf16.msra.mxu0 0
  %2987 = vmatprep.subr.bf16.mxu0 0
  %2988 = vmatpush1.bf16.msra.mxu0 0
  %2989 = vmatprep.subr.bf16.mxu0 0
  %2990 = vmatpush1.bf16.msra.mxu0 0
  %2991 = vmatprep.subr.bf16.mxu0 0
  %2992 = vmatpush1.bf16.msra.mxu0 0
  %2993 = vmatprep.subr.bf16.mxu0 0
  %2994 = vmatpush1.bf16.msra.mxu0 0
  %2995 = vmatprep.subr.bf16.mxu0 0
  %2996 = vmatpush1.bf16.msra.mxu0 0
  %2997 = vmatprep.subr.bf16.mxu0 0
  %2998 = vmatpush1.bf16.msra.mxu0 0
  %2999 = vmatprep.subr.bf16.mxu0 0
  %3000 = vmatpush1.bf16.msra.mxu0 0
  %3001 = vmatprep.subr.bf16.mxu0 0
  %3002 = vmatpush1.bf16.msra.mxu0 0
  %3003 = vmatprep.subr.bf16.mxu0 0
  %3004 = vmatpush1.bf16.msra.mxu0 0
  %3005 = vmatprep.subr.bf16.mxu0 0
  %3006 = vmatpush1.bf16.msra.mxu0 0
  %3007 = vmatprep.subr.bf16.mxu0 0
  %3008 = vmatpush1.bf16.msra.mxu0 0
  %3009 = vmatprep.mubr.bf16.mxu0 0
  %3010 = vmatmul.mubr.bf16.gmra.mrb[0].mxu0 %v2975
  %v3011 = vpop.f32.mrb[0].mxu0
  %v3012 = vadd.f32 0.0, %v3011
  %v3013 = vpop.f32.mrb[0].mxu0
  %v3014 = vpop.f32.mrb[0].mxu0
  %v3015 = vpop.f32.mrb[0].mxu0
  %3016 = vdwg.mxu0
  %v3017 = vadd.f32 %v2629, %v3012
  %v3018 = vxor.u32 %v3017, 2147483648
  %v3019 = vmul.f32 %v3018, 1.442695
  %v3020 = vpow.pop %v3019
  %v3021 = vadd.f32 %v3020, 1.0
  %v3022 = vrcp.pop %v3021
  %v3023 = vmul.f32 1.0, %v3022
  %v3024 = vtanh.pop %v3017
  %v3025 = vmul.f32 %v3023, %v2963
  %3027 = vrot.lane.b32.xlu0 %v3024, 64
  %v3028 = vpop.permute.xlu0 %3027
  %v3030 = vmul.f32 %v3023, %v3028
  %3032 = vrot.lane.b32.xlu0 %v3030, 32
  %v3033 = vpop.permute.xlu0 %3032
  %v3035 = vadd.f32 %v3025, %v3033
  %v3036 = vtanh.pop %v3035
  %3038 = vrot.lane.b32.xlu0 %v3036, 64
  %v3039 = vpop.permute.xlu0 %3038
  %v3041 = vmul.f32 %v3023, %v3039
  %v3042 = vpack.c.bf16 %v3041, %v3041
  %3044 = vrot.lane.b32.xlu0 %v3042, 32
  %v3045 = vpop.permute.xlu0 %3044
  %v3047 = vsel %vm1235, %v3045, 0
  %3049 = vmatprep.subr.bf16.mxu0 0
  %3050 = vmatpush1.bf16.msra.mxu0 %v2754
  %3051 = vmatprep.subr.bf16.mxu0 0
  %3052 = vmatpush1.bf16.msra.mxu0 %v2755
  %3053 = vmatprep.subr.bf16.mxu0 0
  %3054 = vmatpush1.bf16.msra.mxu0 0
  %3055 = vmatprep.subr.bf16.mxu0 0
  %3056 = vmatpush1.bf16.msra.mxu0 0
  %3057 = vmatprep.subr.bf16.mxu0 0
  %3058 = vmatpush1.bf16.msra.mxu0 0
  %3059 = vmatprep.subr.bf16.mxu0 0
  %3060 = vmatpush1.bf16.msra.mxu0 0
  %3061 = vmatprep.subr.bf16.mxu0 0
  %3062 = vmatpush1.bf16.msra.mxu0 0
  %3063 = vmatprep.subr.bf16.mxu0 0
  %3064 = vmatpush1.bf16.msra.mxu0 0
  %3065 = vmatprep.subr.bf16.mxu0 0
  %3066 = vmatpush1.bf16.msra.mxu0 0
  %3067 = vmatprep.subr.bf16.mxu0 0
  %3068 = vmatpush1.bf16.msra.mxu0 0
  %3069 = vmatprep.subr.bf16.mxu0 0
  %3070 = vmatpush1.bf16.msra.mxu0 0
  %3071 = vmatprep.subr.bf16.mxu0 0
  %3072 = vmatpush1.bf16.msra.mxu0 0
  %3073 = vmatprep.subr.bf16.mxu0 0
  %3074 = vmatpush1.bf16.msra.mxu0 0
  %3075 = vmatprep.subr.bf16.mxu0 0
  %3076 = vmatpush1.bf16.msra.mxu0 0
  %3077 = vmatprep.subr.bf16.mxu0 0
  %3078 = vmatpush1.bf16.msra.mxu0 0
  %3079 = vmatprep.subr.bf16.mxu0 0
  %3080 = vmatpush1.bf16.msra.mxu0 0
  %3081 = vmatprep.mubr.bf16.mxu0 0
  %3082 = vmatmul.mubr.bf16.gmra.mrb[0].mxu0 %v3047
  %v3083 = vpop.f32.mrb[0].mxu0
  %v3084 = vadd.f32 0.0, %v3083
  %v3085 = vpop.f32.mrb[0].mxu0
  %v3086 = vpop.f32.mrb[0].mxu0
  %v3087 = vpop.f32.mrb[0].mxu0
  %3088 = vdwg.mxu0
  %v3089 = vadd.f32 %v2630, %v3084
  %v3090 = vxor.u32 %v3089, 2147483648
  %v3091 = vmul.f32 %v3090, 1.442695
  %v3092 = vpow.pop %v3091
  %v3093 = vadd.f32 %v3092, 1.0
  %v3094 = vrcp.pop %v3093
  %v3095 = vmul.f32 1.0, %v3094
  %v3096 = vtanh.pop %v3089
  %v3097 = vmul.f32 %v3095, %v3035
  %3099 = vrot.lane.b32.xlu0 %v3096, 64
  %v3100 = vpop.permute.xlu0 %3099
  %v3102 = vmul.f32 %v3095, %v3100
  %3104 = vrot.lane.b32.xlu0 %v3102, 32
  %v3105 = vpop.permute.xlu0 %3104
  %v3107 = vadd.f32 %v3097, %v3105
  %v3108 = vtanh.pop %v3107
  %3110 = vrot.lane.b32.xlu0 %v3108, 64
  %v3111 = vpop.permute.xlu0 %3110
  %v3113 = vmul.f32 %v3095, %v3111
  %v3114 = vpack.c.bf16 %v3113, %v3113
  %3116 = vrot.lane.b32.xlu0 %v3114, 32
  %v3117 = vpop.permute.xlu0 %3116
  %v3119 = vsel %vm1235, %v3117, 0
  %3121 = vmatprep.subr.bf16.mxu0 0
  %3122 = vmatpush1.bf16.msra.mxu0 %v2754
  %3123 = vmatprep.subr.bf16.mxu0 0
  %3124 = vmatpush1.bf16.msra.mxu0 %v2755
  %3125 = vmatprep.subr.bf16.mxu0 0
  %3126 = vmatpush1.bf16.msra.mxu0 0
  %3127 = vmatprep.subr.bf16.mxu0 0
  %3128 = vmatpush1.bf16.msra.mxu0 0
  %3129 = vmatprep.subr.bf16.mxu0 0
  %3130 = vmatpush1.bf16.msra.mxu0 0
  %3131 = vmatprep.subr.bf16.mxu0 0
  %3132 = vmatpush1.bf16.msra.mxu0 0
  %3133 = vmatprep.subr.bf16.mxu0 0
  %3134 = vmatpush1.bf16.msra.mxu0 0
  %3135 = vmatprep.subr.bf16.mxu0 0
  %3136 = vmatpush1.bf16.msra.mxu0 0
  %3137 = vmatprep.subr.bf16.mxu0 0
  %3138 = vmatpush1.bf16.msra.mxu0 0
  %3139 = vmatprep.subr.bf16.mxu0 0
  %3140 = vmatpush1.bf16.msra.mxu0 0
  %3141 = vmatprep.subr.bf16.mxu0 0
  %3142 = vmatpush1.bf16.msra.mxu0 0
  %3143 = vmatprep.subr.bf16.mxu0 0
  %3144 = vmatpush1.bf16.msra.mxu0 0
  %3145 = vmatprep.subr.bf16.mxu0 0
  %3146 = vmatpush1.bf16.msra.mxu0 0
  %3147 = vmatprep.subr.bf16.mxu0 0
  %3148 = vmatpush1.bf16.msra.mxu0 0
  %3149 = vmatprep.subr.bf16.mxu0 0
  %3150 = vmatpush1.bf16.msra.mxu0 0
  %3151 = vmatprep.subr.bf16.mxu0 0
  %3152 = vmatpush1.bf16.msra.mxu0 0
  %3153 = vmatprep.mubr.bf16.mxu0 0
  %3154 = vmatmul.mubr.bf16.gmra.mrb[0].mxu0 %v3119
  %v3155 = vpop.f32.mrb[0].mxu0
  %v3156 = vadd.f32 0.0, %v3155
  %v3157 = vpop.f32.mrb[0].mxu0
  %v3158 = vpop.f32.mrb[0].mxu0
  %v3159 = vpop.f32.mrb[0].mxu0
  %3160 = vdwg.mxu0
  %v3161 = vadd.f32 %v2631, %v3156
  %v3162 = vxor.u32 %v3161, 2147483648
  %v3163 = vmul.f32 %v3162, 1.442695
  %v3164 = vpow.pop %v3163
  %v3165 = vadd.f32 %v3164, 1.0
  %v3166 = vrcp.pop %v3165
  %v3167 = vmul.f32 1.0, %v3166
  %v3168 = vtanh.pop %v3161
  %v3169 = vmul.f32 %v3167, %v3107
  %3171 = vrot.lane.b32.xlu0 %v3168, 64
  %v3172 = vpop.permute.xlu0 %3171
  %v3174 = vmul.f32 %v3167, %v3172
  %3176 = vrot.lane.b32.xlu0 %v3174, 32
  %v3177 = vpop.permute.xlu0 %3176
  %v3179 = vadd.f32 %v3169, %v3177
  %v3180 = vtanh.pop %v3179
  %3182 = vrot.lane.b32.xlu0 %v3180, 64
  %v3183 = vpop.permute.xlu0 %3182
  %v3185 = vmul.f32 %v3167, %v3183
  %v3186 = vpack.c.bf16 %v3185, %v3185
  %3188 = vrot.lane.b32.xlu0 %v3186, 32
  %v3189 = vpop.permute.xlu0 %3188
  %v3191 = vsel %vm1235, %v3189, 0
  %3193 = vmatprep.subr.bf16.mxu0 0
  %3194 = vmatpush1.bf16.msra.mxu0 %v2754
  %3195 = vmatprep.subr.bf16.mxu0 0
  %3196 = vmatpush1.bf16.msra.mxu0 %v2755
  %3197 = vmatprep.subr.bf16.mxu0 0
  %3198 = vmatpush1.bf16.msra.mxu0 0
  %3199 = vmatprep.subr.bf16.mxu0 0
  %3200 = vmatpush1.bf16.msra.mxu0 0
  %3201 = vmatprep.subr.bf16.mxu0 0
  %3202 = vmatpush1.bf16.msra.mxu0 0
  %3203 = vmatprep.subr.bf16.mxu0 0
  %3204 = vmatpush1.bf16.msra.mxu0 0
  %3205 = vmatprep.subr.bf16.mxu0 0
  %3206 = vmatpush1.bf16.msra.mxu0 0
  %3207 = vmatprep.subr.bf16.mxu0 0
  %3208 = vmatpush1.bf16.msra.mxu0 0
  %3209 = vmatprep.subr.bf16.mxu0 0
  %3210 = vmatpush1.bf16.msra.mxu0 0
  %3211 = vmatprep.subr.bf16.mxu0 0
  %3212 = vmatpush1.bf16.msra.mxu0 0
  %3213 = vmatprep.subr.bf16.mxu0 0
  %3214 = vmatpush1.bf16.msra.mxu0 0
  %3215 = vmatprep.subr.bf16.mxu0 0
  %3216 = vmatpush1.bf16.msra.mxu0 0
  %3217 = vmatprep.subr.bf16.mxu0 0
  %3218 = vmatpush1.bf16.msra.mxu0 0
  %3219 = vmatprep.subr.bf16.mxu0 0
  %3220 = vmatpush1.bf16.msra.mxu0 0
  %3221 = vmatprep.subr.bf16.mxu0 0
  %3222 = vmatpush1.bf16.msra.mxu0 0
  %3223 = vmatprep.subr.bf16.mxu0 0
  %3224 = vmatpush1.bf16.msra.mxu0 0
  %3225 = vmatprep.mubr.bf16.mxu0 0
  %3226 = vmatmul.mubr.bf16.gmra.mrb[0].mxu0 %v3191
  %v3227 = vpop.f32.mrb[0].mxu0
  %v3228 = vadd.f32 0.0, %v3227
  %v3229 = vpop.f32.mrb[0].mxu0
  %v3230 = vpop.f32.mrb[0].mxu0
  %v3231 = vpop.f32.mrb[0].mxu0
  %3232 = vdwg.mxu0
  %v3233 = vadd.f32 %v2632, %v3228
  %v3234 = vxor.u32 %v3233, 2147483648
  %v3235 = vmul.f32 %v3234, 1.442695
  %v3236 = vpow.pop %v3235
  %v3237 = vadd.f32 %v3236, 1.0
  %v3238 = vrcp.pop %v3237
  %v3239 = vmul.f32 1.0, %v3238
  %v3240 = vtanh.pop %v3233
  %v3241 = vmul.f32 %v3239, %v3179
  %3243 = vrot.lane.b32.xlu0 %v3240, 64
  %v3244 = vpop.permute.xlu0 %3243
  %v3246 = vmul.f32 %v3239, %v3244
  %3248 = vrot.lane.b32.xlu0 %v3246, 32
  %v3249 = vpop.permute.xlu0 %3248
  %v3251 = vadd.f32 %v3241, %v3249
  %v3252 = vtanh.pop %v3251
  %3254 = vrot.lane.b32.xlu0 %v3252, 64
  %v3255 = vpop.permute.xlu0 %3254
  %v3257 = vmul.f32 %v3239, %v3255
  %v3258 = vpack.c.bf16 %v3257, %v3257
  %3260 = vrot.lane.b32.xlu0 %v3258, 32
  %v3261 = vpop.permute.xlu0 %3260
  %v3263 = vsel %vm1235, %v3261, 0
  %3265 = vmatprep.subr.bf16.mxu0 0
  %3266 = vmatpush1.bf16.msra.mxu0 %v2754
  %3267 = vmatprep.subr.bf16.mxu0 0
  %3268 = vmatpush1.bf16.msra.mxu0 %v2755
  %3269 = vmatprep.subr.bf16.mxu0 0
  %3270 = vmatpush1.bf16.msra.mxu0 0
  %3271 = vmatprep.subr.bf16.mxu0 0
  %3272 = vmatpush1.bf16.msra.mxu0 0
  %3273 = vmatprep.subr.bf16.mxu0 0
  %3274 = vmatpush1.bf16.msra.mxu0 0
  %3275 = vmatprep.subr.bf16.mxu0 0
  %3276 = vmatpush1.bf16.msra.mxu0 0
  %3277 = vmatprep.subr.bf16.mxu0 0
  %3278 = vmatpush1.bf16.msra.mxu0 0
  %3279 = vmatprep.subr.bf16.mxu0 0
  %3280 = vmatpush1.bf16.msra.mxu0 0
  %3281 = vmatprep.subr.bf16.mxu0 0
  %3282 = vmatpush1.bf16.msra.mxu0 0
  %3283 = vmatprep.subr.bf16.mxu0 0
  %3284 = vmatpush1.bf16.msra.mxu0 0
  %3285 = vmatprep.subr.bf16.mxu0 0
  %3286 = vmatpush1.bf16.msra.mxu0 0
  %3287 = vmatprep.subr.bf16.mxu0 0
  %3288 = vmatpush1.bf16.msra.mxu0 0
  %3289 = vmatprep.subr.bf16.mxu0 0
  %3290 = vmatpush1.bf16.msra.mxu0 0
  %3291 = vmatprep.subr.bf16.mxu0 0
  %3292 = vmatpush1.bf16.msra.mxu0 0
  %3293 = vmatprep.subr.bf16.mxu0 0
  %3294 = vmatpush1.bf16.msra.mxu0 0
  %3295 = vmatprep.subr.bf16.mxu0 0
  %3296 = vmatpush1.bf16.msra.mxu0 0
  %3297 = vmatprep.mubr.bf16.mxu0 0
  %3298 = vmatmul.mubr.bf16.gmra.mrb[0].mxu0 %v3263
  %v3299 = vpop.f32.mrb[0].mxu0
  %v3300 = vadd.f32 0.0, %v3299
  %v3301 = vpop.f32.mrb[0].mxu0
  %v3302 = vpop.f32.mrb[0].mxu0
  %v3303 = vpop.f32.mrb[0].mxu0
  %3304 = vdwg.mxu0
  %v3305 = vadd.f32 %v2633, %v3300
  %v3306 = vxor.u32 %v3305, 2147483648
  %v3307 = vmul.f32 %v3306, 1.442695
  %v3308 = vpow.pop %v3307
  %v3309 = vadd.f32 %v3308, 1.0
  %v3310 = vrcp.pop %v3309
  %v3311 = vmul.f32 1.0, %v3310
  %v3312 = vtanh.pop %v3305
  %v3313 = vmul.f32 %v3311, %v3251
  %3315 = vrot.lane.b32.xlu0 %v3312, 64
  %v3316 = vpop.permute.xlu0 %3315
  %v3318 = vmul.f32 %v3311, %v3316
  %3320 = vrot.lane.b32.xlu0 %v3318, 32
  %v3321 = vpop.permute.xlu0 %3320
  %v3323 = vadd.f32 %v3313, %v3321
  %v3324 = vtanh.pop %v3323
  %3326 = vrot.lane.b32.xlu0 %v3324, 64
  %v3327 = vpop.permute.xlu0 %3326
  %v3329 = vmul.f32 %v3311, %v3327
  %v3330 = vpack.c.bf16 %v3329, %v3329
  %3332 = vrot.lane.b32.xlu0 %v3330, 32
  %v3333 = vpop.permute.xlu0 %3332
  %v3335 = vsel %vm1235, %v3333, 0
  %3337 = vmatprep.subr.bf16.mxu0 0
  %3338 = vmatpush1.bf16.msra.mxu0 %v2754
  %3339 = vmatprep.subr.bf16.mxu0 0
  %3340 = vmatpush1.bf16.msra.mxu0 %v2755
  %3341 = vmatprep.subr.bf16.mxu0 0
  %3342 = vmatpush1.bf16.msra.mxu0 0
  %3343 = vmatprep.subr.bf16.mxu0 0
  %3344 = vmatpush1.bf16.msra.mxu0 0
  %3345 = vmatprep.subr.bf16.mxu0 0
  %3346 = vmatpush1.bf16.msra.mxu0 0
  %3347 = vmatprep.subr.bf16.mxu0 0
  %3348 = vmatpush1.bf16.msra.mxu0 0
  %3349 = vmatprep.subr.bf16.mxu0 0
  %3350 = vmatpush1.bf16.msra.mxu0 0
  %3351 = vmatprep.subr.bf16.mxu0 0
  %3352 = vmatpush1.bf16.msra.mxu0 0
  %3353 = vmatprep.subr.bf16.mxu0 0
  %3354 = vmatpush1.bf16.msra.mxu0 0
  %3355 = vmatprep.subr.bf16.mxu0 0
  %3356 = vmatpush1.bf16.msra.mxu0 0
  %3357 = vmatprep.subr.bf16.mxu0 0
  %3358 = vmatpush1.bf16.msra.mxu0 0
  %3359 = vmatprep.subr.bf16.mxu0 0
  %3360 = vmatpush1.bf16.msra.mxu0 0
  %3361 = vmatprep.subr.bf16.mxu0 0
  %3362 = vmatpush1.bf16.msra.mxu0 0
  %3363 = vmatprep.subr.bf16.mxu0 0
  %3364 = vmatpush1.bf16.msra.mxu0 0
  %3365 = vmatprep.subr.bf16.mxu0 0
  %3366 = vmatpush1.bf16.msra.mxu0 0
  %3367 = vmatprep.subr.bf16.mxu0 0
  %3368 = vmatpush1.bf16.msra.mxu0 0
  %3369 = vmatprep.mubr.bf16.mxu0 0
  %3370 = vmatmul.mubr.bf16.gmra.mrb[0].mxu0 %v3335
  %v3371 = vpop.f32.mrb[0].mxu0
  %v3372 = vadd.f32 0.0, %v3371
  %v3373 = vpop.f32.mrb[0].mxu0
  %v3374 = vpop.f32.mrb[0].mxu0
  %v3375 = vpop.f32.mrb[0].mxu0
  %3376 = vdwg.mxu0
  %v3377 = vadd.f32 %v2634, %v3372
  %v3378 = vxor.u32 %v3377, 2147483648
  %v3379 = vmul.f32 %v3378, 1.442695
  %v3380 = vpow.pop %v3379
  %v3381 = vadd.f32 %v3380, 1.0
  %v3382 = vrcp.pop %v3381
  %v3383 = vmul.f32 1.0, %v3382
  %v3384 = vtanh.pop %v3377
  %v3385 = vmul.f32 %v3383, %v3323
  %3387 = vrot.lane.b32.xlu0 %v3384, 64
  %v3388 = vpop.permute.xlu0 %3387
  %v3390 = vmul.f32 %v3383, %v3388
  %3392 = vrot.lane.b32.xlu0 %v3390, 32
  %v3393 = vpop.permute.xlu0 %3392
  %v3395 = vadd.f32 %v3385, %v3393
  %v3396 = vtanh.pop %v3395
  %3398 = vrot.lane.b32.xlu0 %v3396, 64
  %v3399 = vpop.permute.xlu0 %3398
  %v3401 = vmul.f32 %v3383, %v3399
  %v3402 = vld [vmem:[%s19] sm:$0xff]
  %v3403 = vld [vmem:[%s19 + $0x8] sm:$0xff]
  %v3404 = vld [vmem:[%s19 + $0x10] sm:$0xff]
  %v3405 = vld [vmem:[%s19 + $0x18] sm:$0xff]
  %3416 = vrot.lane.b32.xlu0 %v2741, 32
  %v3417 = vpop.permute.xlu0 %3416
  %3418 = vrot.lane.b32.xlu0 %v2825, 32
  %v3419 = vpop.permute.xlu0 %3418
  %3420 = vrot.lane.b32.xlu0 %v2897, 32
  %v3421 = vpop.permute.xlu0 %3420
  %3422 = vrot.lane.b32.xlu0 %v2969, 32
  %v3423 = vpop.permute.xlu0 %3422
  %3424 = vrot.lane.b32.xlu0 %v3041, 32
  %v3425 = vpop.permute.xlu0 %3424
  %3426 = vrot.lane.b32.xlu0 %v3113, 32
  %v3427 = vpop.permute.xlu0 %3426
  %3428 = vrot.lane.b32.xlu0 %v3185, 32
  %v3429 = vpop.permute.xlu0 %3428
  %3430 = vrot.lane.b32.xlu0 %v3257, 32
  %v3431 = vpop.permute.xlu0 %3430
  %3432 = vrot.lane.b32.xlu0 %v3329, 32
  %v3433 = vpop.permute.xlu0 %3432
  %3434 = vrot.lane.b32.xlu0 %v3401, 32
  %v3435 = vpop.permute.xlu0 %3434
  %v3436 = vsel %vm1235, %v3417, 0
  %v3438 = vsel %vm1235, %v3419, 0
  %v3440 = vsel %vm1235, %v3421, 0
  %v3442 = vsel %vm1235, %v3423, 0
  %v3444 = vsel %vm1235, %v3425, 0
  %v3446 = vsel %vm1235, %v3427, 0
  %v3448 = vsel %vm1235, %v3429, 0
  %v3450 = vsel %vm1235, %v3431, 0
  %v3452 = vsel %vm1235, %v3433, 0
  %v3454 = vsel %vm1235, %v3435, 0
  %3456 = vmatprep.subr.mxu0 0.0
  %3457 = vmatpush1.msra.mxu0 %v3402
  %3458 = vmatprep.subr.mxu0 0.0
  %3459 = vmatpush1.msra.mxu0 %v3403
  %3460 = vmatprep.subr.mxu0 0.0
  %3461 = vmatpush1.msra.mxu0 %v3404
  %3462 = vmatprep.subr.mxu0 0.0
  %3463 = vmatpush1.msra.mxu0 %v3405
  %3464 = vmatprep.subr.mxu0 0.0
  %3465 = vmatpush1.msra.mxu0 0.0
  %3466 = vmatprep.subr.mxu0 0.0
  %3467 = vmatpush1.msra.mxu0 0.0
  %3468 = vmatprep.subr.mxu0 0.0
  %3469 = vmatpush1.msra.mxu0 0.0
  %3470 = vmatprep.subr.mxu0 0.0
  %3471 = vmatpush1.msra.mxu0 0.0
  %3472 = vmatprep.subr.mxu0 0.0
  %3473 = vmatpush1.msra.mxu0 0.0
  %3474 = vmatprep.subr.mxu0 0.0
  %3475 = vmatpush1.msra.mxu0 0.0
  %3476 = vmatprep.subr.mxu0 0.0
  %3477 = vmatpush1.msra.mxu0 0.0
  %3478 = vmatprep.subr.mxu0 0.0
  %3479 = vmatpush1.msra.mxu0 0.0
  %3480 = vmatprep.subr.mxu0 0.0
  %3481 = vmatpush1.msra.mxu0 0.0
  %3482 = vmatprep.subr.mxu0 0.0
  %3483 = vmatpush1.msra.mxu0 0.0
  %3484 = vmatprep.subr.mxu0 0.0
  %3485 = vmatpush1.msra.mxu0 0.0
  %3486 = vmatprep.subr.mxu0 0.0
  %3487 = vmatpush1.msra.mxu0 0.0
  %3488 = vmatprep.subr.mxu0 0.0
  %3489 = vmatpush1.msra.mxu0 0.0
  %3490 = vmatprep.subr.mxu0 0.0
  %3491 = vmatpush1.msra.mxu0 0.0
  %3492 = vmatprep.subr.mxu0 0.0
  %3493 = vmatpush1.msra.mxu0 0.0
  %3494 = vmatprep.subr.mxu0 0.0
  %3495 = vmatpush1.msra.mxu0 0.0
  %3496 = vmatprep.subr.mxu0 0.0
  %3497 = vmatpush1.msra.mxu0 0.0
  %3498 = vmatprep.subr.mxu0 0.0
  %3499 = vmatpush1.msra.mxu0 0.0
  %3500 = vmatprep.subr.mxu0 0.0
  %3501 = vmatpush1.msra.mxu0 0.0
  %3502 = vmatprep.subr.mxu0 0.0
  %3503 = vmatpush1.msra.mxu0 0.0
  %3504 = vmatprep.subr.mxu0 0.0
  %3505 = vmatpush1.msra.mxu0 0.0
  %3506 = vmatprep.subr.mxu0 0.0
  %3507 = vmatpush1.msra.mxu0 0.0
  %3508 = vmatprep.subr.mxu0 0.0
  %3509 = vmatpush1.msra.mxu0 0.0
  %3510 = vmatprep.subr.mxu0 0.0
  %3511 = vmatpush1.msra.mxu0 0.0
  %3512 = vmatprep.subr.mxu0 0.0
  %3513 = vmatpush1.msra.mxu0 0.0
  %3514 = vmatprep.subr.mxu0 0.0
  %3515 = vmatpush1.msra.mxu0 0.0
  %3516 = vmatprep.subr.mxu0 0.0
  %3517 = vmatpush1.msra.mxu0 0.0
  %3518 = vmatprep.subr.mxu0 0.0
  %3519 = vmatpush1.msra.mxu0 0.0
  %3520 = vmatprep.mubr.f32.mxu0 0.0
  %3521 = vmatmul.mubr.f32.gmra.mrb[0].mxu0 %v3436
  %v3522 = vpop.f32.mrb[0].mxu0
  %v3523 = vadd.f32 0.0, %v3522
  %v3524 = vpop.f32.mrb[0].mxu0
  %3525 = vmatprep.mubr.f32.mxu0 0.0
  %3526 = vmatmul.mubr.f32.gmra.mrb[0].mxu0 %v3438
  %v3527 = vpop.f32.mrb[0].mxu0
  %v3528 = vadd.f32 0.0, %v3527
  %v3529 = vpop.f32.mrb[0].mxu0
  %3530 = vmatprep.mubr.f32.mxu0 0.0
  %3531 = vmatmul.mubr.f32.gmra.mrb[0].mxu0 %v3440
  %v3532 = vpop.f32.mrb[0].mxu0
  %v3533 = vadd.f32 0.0, %v3532
  %v3534 = vpop.f32.mrb[0].mxu0
  %3535 = vmatprep.mubr.f32.mxu0 0.0
  %3536 = vmatmul.mubr.f32.gmra.mrb[0].mxu0 %v3442
  %v3537 = vpop.f32.mrb[0].mxu0
  %v3538 = vadd.f32 0.0, %v3537
  %v3539 = vpop.f32.mrb[0].mxu0
  %3540 = vmatprep.mubr.f32.mxu0 0.0
  %3541 = vmatmul.mubr.f32.gmra.mrb[0].mxu0 %v3444
  %v3542 = vpop.f32.mrb[0].mxu0
  %v3543 = vadd.f32 0.0, %v3542
  %v3544 = vpop.f32.mrb[0].mxu0
  %3545 = vmatprep.mubr.f32.mxu0 0.0
  %3546 = vmatmul.mubr.f32.gmra.mrb[0].mxu0 %v3446
  %v3547 = vpop.f32.mrb[0].mxu0
  %v3548 = vadd.f32 0.0, %v3547
  %v3549 = vpop.f32.mrb[0].mxu0
  %3550 = vmatprep.mubr.f32.mxu0 0.0
  %3551 = vmatmul.mubr.f32.gmra.mrb[0].mxu0 %v3448
  %v3552 = vpop.f32.mrb[0].mxu0
  %v3553 = vadd.f32 0.0, %v3552
  %v3554 = vpop.f32.mrb[0].mxu0
  %3555 = vmatprep.mubr.f32.mxu0 0.0
  %3556 = vmatmul.mubr.f32.gmra.mrb[0].mxu0 %v3450
  %v3557 = vpop.f32.mrb[0].mxu0
  %v3558 = vadd.f32 0.0, %v3557
  %v3559 = vpop.f32.mrb[0].mxu0
  %3560 = vmatprep.mubr.f32.mxu0 0.0
  %3561 = vmatmul.mubr.f32.gmra.mrb[0].mxu0 %v3452
  %v3562 = vpop.f32.mrb[0].mxu0
  %v3563 = vadd.f32 0.0, %v3562
  %v3564 = vpop.f32.mrb[0].mxu0
  %3565 = vmatprep.mubr.f32.mxu0 0.0
  %3566 = vmatmul.mubr.f32.gmra.mrb[0].mxu0 %v3454
  %v3567 = vpop.f32.mrb[0].mxu0
  %v3568 = vadd.f32 0.0, %v3567
  %v3569 = vpop.f32.mrb[0].mxu0
  %3570 = vdwg.mxu0
  %v3571 = vsel %vm1329, %v3523, %v3568
  %v3572 = vsel %vm1329, %v3528, %v3563
  %v3573 = vsel %vm1329, %v3533, %v3558
  %v3574 = vsel %vm1329, %v3538, %v3553
  %v3575 = vsel %vm1329, %v3543, %v3548
  %v3576 = vsel %vm1329, %v3548, %v3543
  %v3577 = vsel %vm1329, %v3553, %v3538
  %v3578 = vsel %vm1329, %v3558, %v3533
  %v3579 = vsel %vm1329, %v3563, %v3528
  %v3580 = vsel %vm1329, %v3568, %v3523
  %s3581 = scalar_lea.vmem %s15, 16
  %v3582 = vld [vmem:[%s3581] sm:$0xff]
  %v3583 = vld [vmem:[%s3581 + $0x8] sm:$0xff]
  %s3584 = scalar_lea.vmem %s16, 1
  %v3585 = vld [vmem:[%s3584] sm:$0x1]
  %v3587 = vlaneseq
  %v3588 = vshrl.u32 %v3587, 7
  %v3589 = vsub.s32 0, %v3588
  %v3590 = vrot.slane %v3585, %v3589
  %v3593 = vsel %vm1486, %v3571, 0
  %v3596 = vsel %vm1486, %v3572, 0
  %v3599 = vsel %vm1486, %v3573, 0
  %v3602 = vsel %vm1486, %v3574, 0
  %v3605 = vsel %vm1486, %v3575, 0
  %v3608 = vsel %vm1486, %v3576, 0
  %v3611 = vsel %vm1486, %v3577, 0
  %v3614 = vsel %vm1486, %v3578, 0
  %v3617 = vsel %vm1486, %v3579, 0
  %v3620 = vsel %vm1486, %v3580, 0
  %3622 = vmatprep.subr.mxu0 0.0
  %3623 = vmatpush1.msra.mxu0 %v3582
  %3624 = vmatprep.subr.mxu0 0.0
  %3625 = vmatpush1.msra.mxu0 %v3583
  %3626 = vmatprep.subr.mxu0 0.0
  %3627 = vmatpush1.msra.mxu0 0.0
  %3628 = vmatprep.subr.mxu0 0.0
  %3629 = vmatpush1.msra.mxu0 0.0
  %3630 = vmatprep.subr.mxu0 0.0
  %3631 = vmatpush1.msra.mxu0 0.0
  %3632 = vmatprep.subr.mxu0 0.0
  %3633 = vmatpush1.msra.mxu0 0.0
  %3634 = vmatprep.subr.mxu0 0.0
  %3635 = vmatpush1.msra.mxu0 0.0
  %3636 = vmatprep.subr.mxu0 0.0
  %3637 = vmatpush1.msra.mxu0 0.0
  %3638 = vmatprep.subr.mxu0 0.0
  %3639 = vmatpush1.msra.mxu0 0.0
  %3640 = vmatprep.subr.mxu0 0.0
  %3641 = vmatpush1.msra.mxu0 0.0
  %3642 = vmatprep.subr.mxu0 0.0
  %3643 = vmatpush1.msra.mxu0 0.0
  %3644 = vmatprep.subr.mxu0 0.0
  %3645 = vmatpush1.msra.mxu0 0.0
  %3646 = vmatprep.subr.mxu0 0.0
  %3647 = vmatpush1.msra.mxu0 0.0
  %3648 = vmatprep.subr.mxu0 0.0
  %3649 = vmatpush1.msra.mxu0 0.0
  %3650 = vmatprep.subr.mxu0 0.0
  %3651 = vmatpush1.msra.mxu0 0.0
  %3652 = vmatprep.subr.mxu0 0.0
  %3653 = vmatpush1.msra.mxu0 0.0
  %3654 = vmatprep.subr.mxu0 0.0
  %3655 = vmatpush1.msra.mxu0 0.0
  %3656 = vmatprep.subr.mxu0 0.0
  %3657 = vmatpush1.msra.mxu0 0.0
  %3658 = vmatprep.subr.mxu0 0.0
  %3659 = vmatpush1.msra.mxu0 0.0
  %3660 = vmatprep.subr.mxu0 0.0
  %3661 = vmatpush1.msra.mxu0 0.0
  %3662 = vmatprep.subr.mxu0 0.0
  %3663 = vmatpush1.msra.mxu0 0.0
  %3664 = vmatprep.subr.mxu0 0.0
  %3665 = vmatpush1.msra.mxu0 0.0
  %3666 = vmatprep.subr.mxu0 0.0
  %3667 = vmatpush1.msra.mxu0 0.0
  %3668 = vmatprep.subr.mxu0 0.0
  %3669 = vmatpush1.msra.mxu0 0.0
  %3670 = vmatprep.subr.mxu0 0.0
  %3671 = vmatpush1.msra.mxu0 0.0
  %3672 = vmatprep.subr.mxu0 0.0
  %3673 = vmatpush1.msra.mxu0 0.0
  %3674 = vmatprep.subr.mxu0 0.0
  %3675 = vmatpush1.msra.mxu0 0.0
  %3676 = vmatprep.subr.mxu0 0.0
  %3677 = vmatpush1.msra.mxu0 0.0
  %3678 = vmatprep.subr.mxu0 0.0
  %3679 = vmatpush1.msra.mxu0 0.0
  %3680 = vmatprep.subr.mxu0 0.0
  %3681 = vmatpush1.msra.mxu0 0.0
  %3682 = vmatprep.subr.mxu0 0.0
  %3683 = vmatpush1.msra.mxu0 0.0
  %3684 = vmatprep.subr.mxu0 0.0
  %3685 = vmatpush1.msra.mxu0 0.0
  %3686 = vmatprep.mubr.f32.mxu0 0.0
  %3687 = vmatmul.mubr.f32.gmra.mrb[0].mxu0 %v3593
  %v3688 = vpop.f32.mrb[0].mxu0
  %v3689 = vadd.f32 %v3590, %v3688
  %v3690 = vpop.f32.mrb[0].mxu0
  %3691 = vmatprep.mubr.f32.mxu0 0.0
  %3692 = vmatmul.mubr.f32.gmra.mrb[0].mxu0 %v3596
  %v3693 = vpop.f32.mrb[0].mxu0
  %v3694 = vadd.f32 %v3590, %v3693
  %v3695 = vpop.f32.mrb[0].mxu0
  %3696 = vmatprep.mubr.f32.mxu0 0.0
  %3697 = vmatmul.mubr.f32.gmra.mrb[0].mxu0 %v3599
  %v3698 = vpop.f32.mrb[0].mxu0
  %v3699 = vadd.f32 %v3590, %v3698
  %v3700 = vpop.f32.mrb[0].mxu0
  %3701 = vmatprep.mubr.f32.mxu0 0.0
  %3702 = vmatmul.mubr.f32.gmra.mrb[0].mxu0 %v3602
  %v3703 = vpop.f32.mrb[0].mxu0
  %v3704 = vadd.f32 %v3590, %v3703
  %v3705 = vpop.f32.mrb[0].mxu0
  %3706 = vmatprep.mubr.f32.mxu0 0.0
  %3707 = vmatmul.mubr.f32.gmra.mrb[0].mxu0 %v3605
  %v3708 = vpop.f32.mrb[0].mxu0
  %v3709 = vadd.f32 %v3590, %v3708
  %v3710 = vpop.f32.mrb[0].mxu0
  %3711 = vmatprep.mubr.f32.mxu0 0.0
  %3712 = vmatmul.mubr.f32.gmra.mrb[0].mxu0 %v3608
  %v3713 = vpop.f32.mrb[0].mxu0
  %v3714 = vadd.f32 %v3590, %v3713
  %v3715 = vpop.f32.mrb[0].mxu0
  %3716 = vmatprep.mubr.f32.mxu0 0.0
  %3717 = vmatmul.mubr.f32.gmra.mrb[0].mxu0 %v3611
  %v3718 = vpop.f32.mrb[0].mxu0
  %v3719 = vadd.f32 %v3590, %v3718
  %v3720 = vpop.f32.mrb[0].mxu0
  %3721 = vmatprep.mubr.f32.mxu0 0.0
  %3722 = vmatmul.mubr.f32.gmra.mrb[0].mxu0 %v3614
  %v3723 = vpop.f32.mrb[0].mxu0
  %v3724 = vadd.f32 %v3590, %v3723
  %v3725 = vpop.f32.mrb[0].mxu0
  %3726 = vmatprep.mubr.f32.mxu0 0.0
  %3727 = vmatmul.mubr.f32.gmra.mrb[0].mxu0 %v3617
  %v3728 = vpop.f32.mrb[0].mxu0
  %v3729 = vadd.f32 %v3590, %v3728
  %v3730 = vpop.f32.mrb[0].mxu0
  %3731 = vmatprep.mubr.f32.mxu0 0.0
  %3732 = vmatmul.mubr.f32.gmra.mrb[0].mxu0 %v3620
  %v3733 = vpop.f32.mrb[0].mxu0
  %v3734 = vadd.f32 %v3590, %v3733
  %v3735 = vpop.f32.mrb[0].mxu0
  %3736 = vdwg.mxu0
  %v3737 = vsel %vm581, %v3734, %v3689
  %v3738 = vsel %vm581, %v3729, %v3694
  %v3739 = vsel %vm581, %v3724, %v3699
  %v3740 = vsel %vm581, %v3719, %v3704
  %v3741 = vsel %vm581, %v3714, %v3709
  %v3742 = vsel %vm581, %v3709, %v3714
  %v3743 = vsel %vm581, %v3704, %v3719
  %v3744 = vsel %vm581, %v3699, %v3724
  %v3745 = vsel %vm581, %v3694, %v3729
  %v3746 = vsel %vm581, %v3689, %v3734
  %s3747 = scalar_lea.vmem %s18, 16
  %v3748 = vld [vmem:[%s3747] sm:$0xff]
  %v3749 = vld [vmem:[%s3747 + $0x8] sm:$0xff]
  %s3750 = scalar_lea.vmem %s17, 16
  %v3751 = vld [vmem:[%s3750] sm:$0xf]
  %v3752 = vld [vmem:[%s3750 + $0x4] sm:$0xf]
  %v3753 = vld [vmem:[%s3750 + $0x8] sm:$0xf]
  %v3754 = vld [vmem:[%s3750 + $0xc] sm:$0xf]
  %v3756 = vsel %vm1486, %v2460, 0
  %3758 = vmatprep.subr.mxu0 0.0
  %3759 = vmatpush1.msra.mxu0 %v3748
  %3760 = vmatprep.subr.mxu0 0.0
  %3761 = vmatpush1.msra.mxu0 %v3749
  %3762 = vmatprep.subr.mxu0 0.0
  %3763 = vmatpush1.msra.mxu0 0.0
  %3764 = vmatprep.subr.mxu0 0.0
  %3765 = vmatpush1.msra.mxu0 0.0
  %3766 = vmatprep.subr.mxu0 0.0
  %3767 = vmatpush1.msra.mxu0 0.0
  %3768 = vmatprep.subr.mxu0 0.0
  %3769 = vmatpush1.msra.mxu0 0.0
  %3770 = vmatprep.subr.mxu0 0.0
  %3771 = vmatpush1.msra.mxu0 0.0
  %3772 = vmatprep.subr.mxu0 0.0
  %3773 = vmatpush1.msra.mxu0 0.0
  %3774 = vmatprep.subr.mxu0 0.0
  %3775 = vmatpush1.msra.mxu0 0.0
  %3776 = vmatprep.subr.mxu0 0.0
  %3777 = vmatpush1.msra.mxu0 0.0
  %3778 = vmatprep.subr.mxu0 0.0
  %3779 = vmatpush1.msra.mxu0 0.0
  %3780 = vmatprep.subr.mxu0 0.0
  %3781 = vmatpush1.msra.mxu0 0.0
  %3782 = vmatprep.subr.mxu0 0.0
  %3783 = vmatpush1.msra.mxu0 0.0
  %3784 = vmatprep.subr.mxu0 0.0
  %3785 = vmatpush1.msra.mxu0 0.0
  %3786 = vmatprep.subr.mxu0 0.0
  %3787 = vmatpush1.msra.mxu0 0.0
  %3788 = vmatprep.subr.mxu0 0.0
  %3789 = vmatpush1.msra.mxu0 0.0
  %3790 = vmatprep.subr.mxu0 0.0
  %3791 = vmatpush1.msra.mxu0 0.0
  %3792 = vmatprep.subr.mxu0 0.0
  %3793 = vmatpush1.msra.mxu0 0.0
  %3794 = vmatprep.subr.mxu0 0.0
  %3795 = vmatpush1.msra.mxu0 0.0
  %3796 = vmatprep.subr.mxu0 0.0
  %3797 = vmatpush1.msra.mxu0 0.0
  %3798 = vmatprep.subr.mxu0 0.0
  %3799 = vmatpush1.msra.mxu0 0.0
  %3800 = vmatprep.subr.mxu0 0.0
  %3801 = vmatpush1.msra.mxu0 0.0
  %3802 = vmatprep.subr.mxu0 0.0
  %3803 = vmatpush1.msra.mxu0 0.0
  %3804 = vmatprep.subr.mxu0 0.0
  %3805 = vmatpush1.msra.mxu0 0.0
  %3806 = vmatprep.subr.mxu0 0.0
  %3807 = vmatpush1.msra.mxu0 0.0
  %3808 = vmatprep.subr.mxu0 0.0
  %3809 = vmatpush1.msra.mxu0 0.0
  %3810 = vmatprep.subr.mxu0 0.0
  %3811 = vmatpush1.msra.mxu0 0.0
  %3812 = vmatprep.subr.mxu0 0.0
  %3813 = vmatpush1.msra.mxu0 0.0
  %3814 = vmatprep.subr.mxu0 0.0
  %3815 = vmatpush1.msra.mxu0 0.0
  %3816 = vmatprep.subr.mxu0 0.0
  %3817 = vmatpush1.msra.mxu0 0.0
  %3818 = vmatprep.subr.mxu0 0.0
  %3819 = vmatpush1.msra.mxu0 0.0
  %3820 = vmatprep.subr.mxu0 0.0
  %3821 = vmatpush1.msra.mxu0 0.0
  %3822 = vmatprep.mubr.f32.mxu0 0.0
  %3823 = vmatmul.mubr.f32.gmra.mrb[0].mxu0 %v3756
  %v3824 = vpop.f32.mrb[0].mxu0
  %v3825 = vadd.f32 %v3737, %v3824
  %v3826 = vpop.f32.mrb[0].mxu0
  %3827 = vdwg.mxu0
  %v3828 = vxor.u32 %v3825, 2147483648
  %v3829 = vmul.f32 %v3828, 1.442695
  %v3830 = vpow.pop %v3829
  %v3831 = vadd.f32 %v3830, 1.0
  %v3832 = vrcp.pop %v3831
  %v3833 = vmul.f32 1.0, %v3832
  %v3834 = vtanh.pop %v3825
  %3836 = vrot.lane.b32.xlu0 %v2470, 32
  %v3837 = vpop.permute.xlu0 %3836
  %v3839 = vmul.f32 %v3833, %v3837
  %3841 = vrot.lane.b32.xlu0 %v3834, 64
  %v3842 = vpop.permute.xlu0 %3841
  %v3844 = vmul.f32 %v3833, %v3842
  %3846 = vrot.lane.b32.xlu0 %v3844, 32
  %v3847 = vpop.permute.xlu0 %3846
  %v3849 = vadd.f32 %v3839, %v3847
  %v3850 = vtanh.pop %v3849
  %3852 = vrot.lane.b32.xlu0 %v3850, 64
  %v3853 = vpop.permute.xlu0 %3852
  %v3855 = vmul.f32 %v3833, %v3853
  %v3856 = vpack.c.bf16 %v3855, %v3855
  %3858 = vrot.lane.b32.xlu0 %v3856, 32
  %v3859 = vpop.permute.xlu0 %3858
  %v3864 = vunpack.c.l.b16 %v3751
  %v3865 = vunpack.c.l.b16 %v3752
  %v3866 = vunpack.c.l.b16 %v3753
  %v3867 = vunpack.c.l.b16 %v3754
  %v3868 = vpack.c.b16 %v3865, %v3864
  %v3869 = vpack.c.b16 %v3867, %v3866
  %v3873 = vsel %vm1235, %v3859, 0
  %3875 = vmatprep.subr.bf16.mxu0 0
  %3876 = vmatpush1.bf16.msra.mxu0 %v3868
  %3877 = vmatprep.subr.bf16.mxu0 0
  %3878 = vmatpush1.bf16.msra.mxu0 %v3869
  %3879 = vmatprep.subr.bf16.mxu0 0
  %3880 = vmatpush1.bf16.msra.mxu0 0
  %3881 = vmatprep.subr.bf16.mxu0 0
  %3882 = vmatpush1.bf16.msra.mxu0 0
  %3883 = vmatprep.subr.bf16.mxu0 0
  %3884 = vmatpush1.bf16.msra.mxu0 0
  %3885 = vmatprep.subr.bf16.mxu0 0
  %3886 = vmatpush1.bf16.msra.mxu0 0
  %3887 = vmatprep.subr.bf16.mxu0 0
  %3888 = vmatpush1.bf16.msra.mxu0 0
  %3889 = vmatprep.subr.bf16.mxu0 0
  %3890 = vmatpush1.bf16.msra.mxu0 0
  %3891 = vmatprep.subr.bf16.mxu0 0
  %3892 = vmatpush1.bf16.msra.mxu0 0
  %3893 = vmatprep.subr.bf16.mxu0 0
  %3894 = vmatpush1.bf16.msra.mxu0 0
  %3895 = vmatprep.subr.bf16.mxu0 0
  %3896 = vmatpush1.bf16.msra.mxu0 0
  %3897 = vmatprep.subr.bf16.mxu0 0
  %3898 = vmatpush1.bf16.msra.mxu0 0
  %3899 = vmatprep.subr.bf16.mxu0 0
  %3900 = vmatpush1.bf16.msra.mxu0 0
  %3901 = vmatprep.subr.bf16.mxu0 0
  %3902 = vmatpush1.bf16.msra.mxu0 0
  %3903 = vmatprep.subr.bf16.mxu0 0
  %3904 = vmatpush1.bf16.msra.mxu0 0
  %3905 = vmatprep.subr.bf16.mxu0 0
  %3906 = vmatpush1.bf16.msra.mxu0 0
  %3907 = vmatprep.mubr.bf16.mxu0 0
  %3908 = vmatmul.mubr.bf16.gmra.mrb[0].mxu0 %v3873
  %v3909 = vpop.f32.mrb[0].mxu0
  %v3910 = vadd.f32 0.0, %v3909
  %v3911 = vpop.f32.mrb[0].mxu0
  %v3912 = vpop.f32.mrb[0].mxu0
  %v3913 = vpop.f32.mrb[0].mxu0
  %3914 = vdwg.mxu0
  %v3915 = vadd.f32 %v3738, %v3910
  %v3916 = vxor.u32 %v3915, 2147483648
  %v3917 = vmul.f32 %v3916, 1.442695
  %v3918 = vpow.pop %v3917
  %v3919 = vadd.f32 %v3918, 1.0
  %v3920 = vrcp.pop %v3919
  %v3921 = vmul.f32 1.0, %v3920
  %v3922 = vtanh.pop %v3915
  %v3923 = vmul.f32 %v3921, %v3849
  %3925 = vrot.lane.b32.xlu0 %v3922, 64
  %v3926 = vpop.permute.xlu0 %3925
  %v3928 = vmul.f32 %v3921, %v3926
  %3930 = vrot.lane.b32.xlu0 %v3928, 32
  %v3931 = vpop.permute.xlu0 %3930
  %v3933 = vadd.f32 %v3923, %v3931
  %v3934 = vtanh.pop %v3933
  %3936 = vrot.lane.b32.xlu0 %v3934, 64
  %v3937 = vpop.permute.xlu0 %3936
  %v3939 = vmul.f32 %v3921, %v3937
  %v3940 = vpack.c.bf16 %v3939, %v3939
  %3942 = vrot.lane.b32.xlu0 %v3940, 32
  %v3943 = vpop.permute.xlu0 %3942
  %v3945 = vsel %vm1235, %v3943, 0
  %3947 = vmatprep.subr.bf16.mxu0 0
  %3948 = vmatpush1.bf16.msra.mxu0 %v3868
  %3949 = vmatprep.subr.bf16.mxu0 0
  %3950 = vmatpush1.bf16.msra.mxu0 %v3869
  %3951 = vmatprep.subr.bf16.mxu0 0
  %3952 = vmatpush1.bf16.msra.mxu0 0
  %3953 = vmatprep.subr.bf16.mxu0 0
  %3954 = vmatpush1.bf16.msra.mxu0 0
  %3955 = vmatprep.subr.bf16.mxu0 0
  %3956 = vmatpush1.bf16.msra.mxu0 0
  %3957 = vmatprep.subr.bf16.mxu0 0
  %3958 = vmatpush1.bf16.msra.mxu0 0
  %3959 = vmatprep.subr.bf16.mxu0 0
  %3960 = vmatpush1.bf16.msra.mxu0 0
  %3961 = vmatprep.subr.bf16.mxu0 0
  %3962 = vmatpush1.bf16.msra.mxu0 0
  %3963 = vmatprep.subr.bf16.mxu0 0
  %3964 = vmatpush1.bf16.msra.mxu0 0
  %3965 = vmatprep.subr.bf16.mxu0 0
  %3966 = vmatpush1.bf16.msra.mxu0 0
  %3967 = vmatprep.subr.bf16.mxu0 0
  %3968 = vmatpush1.bf16.msra.mxu0 0
  %3969 = vmatprep.subr.bf16.mxu0 0
  %3970 = vmatpush1.bf16.msra.mxu0 0
  %3971 = vmatprep.subr.bf16.mxu0 0
  %3972 = vmatpush1.bf16.msra.mxu0 0
  %3973 = vmatprep.subr.bf16.mxu0 0
  %3974 = vmatpush1.bf16.msra.mxu0 0
  %3975 = vmatprep.subr.bf16.mxu0 0
  %3976 = vmatpush1.bf16.msra.mxu0 0
  %3977 = vmatprep.subr.bf16.mxu0 0
  %3978 = vmatpush1.bf16.msra.mxu0 0
  %3979 = vmatprep.mubr.bf16.mxu0 0
  %3980 = vmatmul.mubr.bf16.gmra.mrb[0].mxu0 %v3945
  %v3981 = vpop.f32.mrb[0].mxu0
  %v3982 = vadd.f32 0.0, %v3981
  %v3983 = vpop.f32.mrb[0].mxu0
  %v3984 = vpop.f32.mrb[0].mxu0
  %v3985 = vpop.f32.mrb[0].mxu0
  %3986 = vdwg.mxu0
  %v3987 = vadd.f32 %v3739, %v3982
  %v3988 = vxor.u32 %v3987, 2147483648
  %v3989 = vmul.f32 %v3988, 1.442695
  %v3990 = vpow.pop %v3989
  %v3991 = vadd.f32 %v3990, 1.0
  %v3992 = vrcp.pop %v3991
  %v3993 = vmul.f32 1.0, %v3992
  %v3994 = vtanh.pop %v3987
  %v3995 = vmul.f32 %v3993, %v3933
  %3997 = vrot.lane.b32.xlu0 %v3994, 64
  %v3998 = vpop.permute.xlu0 %3997
  %v4000 = vmul.f32 %v3993, %v3998
  %4002 = vrot.lane.b32.xlu0 %v4000, 32
  %v4003 = vpop.permute.xlu0 %4002
  %v4005 = vadd.f32 %v3995, %v4003
  %v4006 = vtanh.pop %v4005
  %4008 = vrot.lane.b32.xlu0 %v4006, 64
  %v4009 = vpop.permute.xlu0 %4008
  %v4011 = vmul.f32 %v3993, %v4009
  %v4012 = vpack.c.bf16 %v4011, %v4011
  %4014 = vrot.lane.b32.xlu0 %v4012, 32
  %v4015 = vpop.permute.xlu0 %4014
  %v4017 = vsel %vm1235, %v4015, 0
  %4019 = vmatprep.subr.bf16.mxu0 0
  %4020 = vmatpush1.bf16.msra.mxu0 %v3868
  %4021 = vmatprep.subr.bf16.mxu0 0
  %4022 = vmatpush1.bf16.msra.mxu0 %v3869
  %4023 = vmatprep.subr.bf16.mxu0 0
  %4024 = vmatpush1.bf16.msra.mxu0 0
  %4025 = vmatprep.subr.bf16.mxu0 0
  %4026 = vmatpush1.bf16.msra.mxu0 0
  %4027 = vmatprep.subr.bf16.mxu0 0
  %4028 = vmatpush1.bf16.msra.mxu0 0
  %4029 = vmatprep.subr.bf16.mxu0 0
  %4030 = vmatpush1.bf16.msra.mxu0 0
  %4031 = vmatprep.subr.bf16.mxu0 0
  %4032 = vmatpush1.bf16.msra.mxu0 0
  %4033 = vmatprep.subr.bf16.mxu0 0
  %4034 = vmatpush1.bf16.msra.mxu0 0
  %4035 = vmatprep.subr.bf16.mxu0 0
  %4036 = vmatpush1.bf16.msra.mxu0 0
  %4037 = vmatprep.subr.bf16.mxu0 0
  %4038 = vmatpush1.bf16.msra.mxu0 0
  %4039 = vmatprep.subr.bf16.mxu0 0
  %4040 = vmatpush1.bf16.msra.mxu0 0
  %4041 = vmatprep.subr.bf16.mxu0 0
  %4042 = vmatpush1.bf16.msra.mxu0 0
  %4043 = vmatprep.subr.bf16.mxu0 0
  %4044 = vmatpush1.bf16.msra.mxu0 0
  %4045 = vmatprep.subr.bf16.mxu0 0
  %4046 = vmatpush1.bf16.msra.mxu0 0
  %4047 = vmatprep.subr.bf16.mxu0 0
  %4048 = vmatpush1.bf16.msra.mxu0 0
  %4049 = vmatprep.subr.bf16.mxu0 0
  %4050 = vmatpush1.bf16.msra.mxu0 0
  %4051 = vmatprep.mubr.bf16.mxu0 0
  %4052 = vmatmul.mubr.bf16.gmra.mrb[0].mxu0 %v4017
  %v4053 = vpop.f32.mrb[0].mxu0
  %v4054 = vadd.f32 0.0, %v4053
  %v4055 = vpop.f32.mrb[0].mxu0
  %v4056 = vpop.f32.mrb[0].mxu0
  %v4057 = vpop.f32.mrb[0].mxu0
  %4058 = vdwg.mxu0
  %v4059 = vadd.f32 %v3740, %v4054
  %v4060 = vxor.u32 %v4059, 2147483648
  %v4061 = vmul.f32 %v4060, 1.442695
  %v4062 = vpow.pop %v4061
  %v4063 = vadd.f32 %v4062, 1.0
  %v4064 = vrcp.pop %v4063
  %v4065 = vmul.f32 1.0, %v4064
  %v4066 = vtanh.pop %v4059
  %v4067 = vmul.f32 %v4065, %v4005
  %4069 = vrot.lane.b32.xlu0 %v4066, 64
  %v4070 = vpop.permute.xlu0 %4069
  %v4072 = vmul.f32 %v4065, %v4070
  %4074 = vrot.lane.b32.xlu0 %v4072, 32
  %v4075 = vpop.permute.xlu0 %4074
  %v4077 = vadd.f32 %v4067, %v4075
  %v4078 = vtanh.pop %v4077
  %4080 = vrot.lane.b32.xlu0 %v4078, 64
  %v4081 = vpop.permute.xlu0 %4080
  %v4083 = vmul.f32 %v4065, %v4081
  %v4084 = vpack.c.bf16 %v4083, %v4083
  %4086 = vrot.lane.b32.xlu0 %v4084, 32
  %v4087 = vpop.permute.xlu0 %4086
  %v4089 = vsel %vm1235, %v4087, 0
  %4091 = vmatprep.subr.bf16.mxu0 0
  %4092 = vmatpush1.bf16.msra.mxu0 %v3868
  %4093 = vmatprep.subr.bf16.mxu0 0
  %4094 = vmatpush1.bf16.msra.mxu0 %v3869
  %4095 = vmatprep.subr.bf16.mxu0 0
  %4096 = vmatpush1.bf16.msra.mxu0 0
  %4097 = vmatprep.subr.bf16.mxu0 0
  %4098 = vmatpush1.bf16.msra.mxu0 0
  %4099 = vmatprep.subr.bf16.mxu0 0
  %4100 = vmatpush1.bf16.msra.mxu0 0
  %4101 = vmatprep.subr.bf16.mxu0 0
  %4102 = vmatpush1.bf16.msra.mxu0 0
  %4103 = vmatprep.subr.bf16.mxu0 0
  %4104 = vmatpush1.bf16.msra.mxu0 0
  %4105 = vmatprep.subr.bf16.mxu0 0
  %4106 = vmatpush1.bf16.msra.mxu0 0
  %4107 = vmatprep.subr.bf16.mxu0 0
  %4108 = vmatpush1.bf16.msra.mxu0 0
  %4109 = vmatprep.subr.bf16.mxu0 0
  %4110 = vmatpush1.bf16.msra.mxu0 0
  %4111 = vmatprep.subr.bf16.mxu0 0
  %4112 = vmatpush1.bf16.msra.mxu0 0
  %4113 = vmatprep.subr.bf16.mxu0 0
  %4114 = vmatpush1.bf16.msra.mxu0 0
  %4115 = vmatprep.subr.bf16.mxu0 0
  %4116 = vmatpush1.bf16.msra.mxu0 0
  %4117 = vmatprep.subr.bf16.mxu0 0
  %4118 = vmatpush1.bf16.msra.mxu0 0
  %4119 = vmatprep.subr.bf16.mxu0 0
  %4120 = vmatpush1.bf16.msra.mxu0 0
  %4121 = vmatprep.subr.bf16.mxu0 0
  %4122 = vmatpush1.bf16.msra.mxu0 0
  %4123 = vmatprep.mubr.bf16.mxu0 0
  %4124 = vmatmul.mubr.bf16.gmra.mrb[0].mxu0 %v4089
  %v4125 = vpop.f32.mrb[0].mxu0
  %v4126 = vadd.f32 0.0, %v4125
  %v4127 = vpop.f32.mrb[0].mxu0
  %v4128 = vpop.f32.mrb[0].mxu0
  %v4129 = vpop.f32.mrb[0].mxu0
  %4130 = vdwg.mxu0
  %v4131 = vadd.f32 %v3741, %v4126
  %v4132 = vxor.u32 %v4131, 2147483648
  %v4133 = vmul.f32 %v4132, 1.442695
  %v4134 = vpow.pop %v4133
  %v4135 = vadd.f32 %v4134, 1.0
  %v4136 = vrcp.pop %v4135
  %v4137 = vmul.f32 1.0, %v4136
  %v4138 = vtanh.pop %v4131
  %v4139 = vmul.f32 %v4137, %v4077
  %4141 = vrot.lane.b32.xlu0 %v4138, 64
  %v4142 = vpop.permute.xlu0 %4141
  %v4144 = vmul.f32 %v4137, %v4142
  %4146 = vrot.lane.b32.xlu0 %v4144, 32
  %v4147 = vpop.permute.xlu0 %4146
  %v4149 = vadd.f32 %v4139, %v4147
  %v4150 = vtanh.pop %v4149
  %4152 = vrot.lane.b32.xlu0 %v4150, 64
  %v4153 = vpop.permute.xlu0 %4152
  %v4155 = vmul.f32 %v4137, %v4153
  %v4156 = vpack.c.bf16 %v4155, %v4155
  %4158 = vrot.lane.b32.xlu0 %v4156, 32
  %v4159 = vpop.permute.xlu0 %4158
  %v4161 = vsel %vm1235, %v4159, 0
  %4163 = vmatprep.subr.bf16.mxu0 0
  %4164 = vmatpush1.bf16.msra.mxu0 %v3868
  %4165 = vmatprep.subr.bf16.mxu0 0
  %4166 = vmatpush1.bf16.msra.mxu0 %v3869
  %4167 = vmatprep.subr.bf16.mxu0 0
  %4168 = vmatpush1.bf16.msra.mxu0 0
  %4169 = vmatprep.subr.bf16.mxu0 0
  %4170 = vmatpush1.bf16.msra.mxu0 0
  %4171 = vmatprep.subr.bf16.mxu0 0
  %4172 = vmatpush1.bf16.msra.mxu0 0
  %4173 = vmatprep.subr.bf16.mxu0 0
  %4174 = vmatpush1.bf16.msra.mxu0 0
  %4175 = vmatprep.subr.bf16.mxu0 0
  %4176 = vmatpush1.bf16.msra.mxu0 0
  %4177 = vmatprep.subr.bf16.mxu0 0
  %4178 = vmatpush1.bf16.msra.mxu0 0
  %4179 = vmatprep.subr.bf16.mxu0 0
  %4180 = vmatpush1.bf16.msra.mxu0 0
  %4181 = vmatprep.subr.bf16.mxu0 0
  %4182 = vmatpush1.bf16.msra.mxu0 0
  %4183 = vmatprep.subr.bf16.mxu0 0
  %4184 = vmatpush1.bf16.msra.mxu0 0
  %4185 = vmatprep.subr.bf16.mxu0 0
  %4186 = vmatpush1.bf16.msra.mxu0 0
  %4187 = vmatprep.subr.bf16.mxu0 0
  %4188 = vmatpush1.bf16.msra.mxu0 0
  %4189 = vmatprep.subr.bf16.mxu0 0
  %4190 = vmatpush1.bf16.msra.mxu0 0
  %4191 = vmatprep.subr.bf16.mxu0 0
  %4192 = vmatpush1.bf16.msra.mxu0 0
  %4193 = vmatprep.subr.bf16.mxu0 0
  %4194 = vmatpush1.bf16.msra.mxu0 0
  %4195 = vmatprep.mubr.bf16.mxu0 0
  %4196 = vmatmul.mubr.bf16.gmra.mrb[0].mxu0 %v4161
  %v4197 = vpop.f32.mrb[0].mxu0
  %v4198 = vadd.f32 0.0, %v4197
  %v4199 = vpop.f32.mrb[0].mxu0
  %v4200 = vpop.f32.mrb[0].mxu0
  %v4201 = vpop.f32.mrb[0].mxu0
  %4202 = vdwg.mxu0
  %v4203 = vadd.f32 %v3742, %v4198
  %v4204 = vxor.u32 %v4203, 2147483648
  %v4205 = vmul.f32 %v4204, 1.442695
  %v4206 = vpow.pop %v4205
  %v4207 = vadd.f32 %v4206, 1.0
  %v4208 = vrcp.pop %v4207
  %v4209 = vmul.f32 1.0, %v4208
  %v4210 = vtanh.pop %v4203
  %v4211 = vmul.f32 %v4209, %v4149
  %4213 = vrot.lane.b32.xlu0 %v4210, 64
  %v4214 = vpop.permute.xlu0 %4213
  %v4216 = vmul.f32 %v4209, %v4214
  %4218 = vrot.lane.b32.xlu0 %v4216, 32
  %v4219 = vpop.permute.xlu0 %4218
  %v4221 = vadd.f32 %v4211, %v4219
  %v4222 = vtanh.pop %v4221
  %4224 = vrot.lane.b32.xlu0 %v4222, 64
  %v4225 = vpop.permute.xlu0 %4224
  %v4227 = vmul.f32 %v4209, %v4225
  %v4228 = vpack.c.bf16 %v4227, %v4227
  %4230 = vrot.lane.b32.xlu0 %v4228, 32
  %v4231 = vpop.permute.xlu0 %4230
  %v4233 = vsel %vm1235, %v4231, 0
  %4235 = vmatprep.subr.bf16.mxu0 0
  %4236 = vmatpush1.bf16.msra.mxu0 %v3868
  %4237 = vmatprep.subr.bf16.mxu0 0
  %4238 = vmatpush1.bf16.msra.mxu0 %v3869
  %4239 = vmatprep.subr.bf16.mxu0 0
  %4240 = vmatpush1.bf16.msra.mxu0 0
  %4241 = vmatprep.subr.bf16.mxu0 0
  %4242 = vmatpush1.bf16.msra.mxu0 0
  %4243 = vmatprep.subr.bf16.mxu0 0
  %4244 = vmatpush1.bf16.msra.mxu0 0
  %4245 = vmatprep.subr.bf16.mxu0 0
  %4246 = vmatpush1.bf16.msra.mxu0 0
  %4247 = vmatprep.subr.bf16.mxu0 0
  %4248 = vmatpush1.bf16.msra.mxu0 0
  %4249 = vmatprep.subr.bf16.mxu0 0
  %4250 = vmatpush1.bf16.msra.mxu0 0
  %4251 = vmatprep.subr.bf16.mxu0 0
  %4252 = vmatpush1.bf16.msra.mxu0 0
  %4253 = vmatprep.subr.bf16.mxu0 0
  %4254 = vmatpush1.bf16.msra.mxu0 0
  %4255 = vmatprep.subr.bf16.mxu0 0
  %4256 = vmatpush1.bf16.msra.mxu0 0
  %4257 = vmatprep.subr.bf16.mxu0 0
  %4258 = vmatpush1.bf16.msra.mxu0 0
  %4259 = vmatprep.subr.bf16.mxu0 0
  %4260 = vmatpush1.bf16.msra.mxu0 0
  %4261 = vmatprep.subr.bf16.mxu0 0
  %4262 = vmatpush1.bf16.msra.mxu0 0
  %4263 = vmatprep.subr.bf16.mxu0 0
  %4264 = vmatpush1.bf16.msra.mxu0 0
  %4265 = vmatprep.subr.bf16.mxu0 0
  %4266 = vmatpush1.bf16.msra.mxu0 0
  %4267 = vmatprep.mubr.bf16.mxu0 0
  %4268 = vmatmul.mubr.bf16.gmra.mrb[0].mxu0 %v4233
  %v4269 = vpop.f32.mrb[0].mxu0
  %v4270 = vadd.f32 0.0, %v4269
  %v4271 = vpop.f32.mrb[0].mxu0
  %v4272 = vpop.f32.mrb[0].mxu0
  %v4273 = vpop.f32.mrb[0].mxu0
  %4274 = vdwg.mxu0
  %v4275 = vadd.f32 %v3743, %v4270
  %v4276 = vxor.u32 %v4275, 2147483648
  %v4277 = vmul.f32 %v4276, 1.442695
  %v4278 = vpow.pop %v4277
  %v4279 = vadd.f32 %v4278, 1.0
  %v4280 = vrcp.pop %v4279
  %v4281 = vmul.f32 1.0, %v4280
  %v4282 = vtanh.pop %v4275
  %v4283 = vmul.f32 %v4281, %v4221
  %4285 = vrot.lane.b32.xlu0 %v4282, 64
  %v4286 = vpop.permute.xlu0 %4285
  %v4288 = vmul.f32 %v4281, %v4286
  %4290 = vrot.lane.b32.xlu0 %v4288, 32
  %v4291 = vpop.permute.xlu0 %4290
  %v4293 = vadd.f32 %v4283, %v4291
  %v4294 = vtanh.pop %v4293
  %4296 = vrot.lane.b32.xlu0 %v4294, 64
  %v4297 = vpop.permute.xlu0 %4296
  %v4299 = vmul.f32 %v4281, %v4297
  %v4300 = vpack.c.bf16 %v4299, %v4299
  %4302 = vrot.lane.b32.xlu0 %v4300, 32
  %v4303 = vpop.permute.xlu0 %4302
  %v4305 = vsel %vm1235, %v4303, 0
  %4307 = vmatprep.subr.bf16.mxu0 0
  %4308 = vmatpush1.bf16.msra.mxu0 %v3868
  %4309 = vmatprep.subr.bf16.mxu0 0
  %4310 = vmatpush1.bf16.msra.mxu0 %v3869
  %4311 = vmatprep.subr.bf16.mxu0 0
  %4312 = vmatpush1.bf16.msra.mxu0 0
  %4313 = vmatprep.subr.bf16.mxu0 0
  %4314 = vmatpush1.bf16.msra.mxu0 0
  %4315 = vmatprep.subr.bf16.mxu0 0
  %4316 = vmatpush1.bf16.msra.mxu0 0
  %4317 = vmatprep.subr.bf16.mxu0 0
  %4318 = vmatpush1.bf16.msra.mxu0 0
  %4319 = vmatprep.subr.bf16.mxu0 0
  %4320 = vmatpush1.bf16.msra.mxu0 0
  %4321 = vmatprep.subr.bf16.mxu0 0
  %4322 = vmatpush1.bf16.msra.mxu0 0
  %4323 = vmatprep.subr.bf16.mxu0 0
  %4324 = vmatpush1.bf16.msra.mxu0 0
  %4325 = vmatprep.subr.bf16.mxu0 0
  %4326 = vmatpush1.bf16.msra.mxu0 0
  %4327 = vmatprep.subr.bf16.mxu0 0
  %4328 = vmatpush1.bf16.msra.mxu0 0
  %4329 = vmatprep.subr.bf16.mxu0 0
  %4330 = vmatpush1.bf16.msra.mxu0 0
  %4331 = vmatprep.subr.bf16.mxu0 0
  %4332 = vmatpush1.bf16.msra.mxu0 0
  %4333 = vmatprep.subr.bf16.mxu0 0
  %4334 = vmatpush1.bf16.msra.mxu0 0
  %4335 = vmatprep.subr.bf16.mxu0 0
  %4336 = vmatpush1.bf16.msra.mxu0 0
  %4337 = vmatprep.subr.bf16.mxu0 0
  %4338 = vmatpush1.bf16.msra.mxu0 0
  %4339 = vmatprep.mubr.bf16.mxu0 0
  %4340 = vmatmul.mubr.bf16.gmra.mrb[0].mxu0 %v4305
  %v4341 = vpop.f32.mrb[0].mxu0
  %v4342 = vadd.f32 0.0, %v4341
  %v4343 = vpop.f32.mrb[0].mxu0
  %v4344 = vpop.f32.mrb[0].mxu0
  %v4345 = vpop.f32.mrb[0].mxu0
  %4346 = vdwg.mxu0
  %v4347 = vadd.f32 %v3744, %v4342
  %v4348 = vxor.u32 %v4347, 2147483648
  %v4349 = vmul.f32 %v4348, 1.442695
  %v4350 = vpow.pop %v4349
  %v4351 = vadd.f32 %v4350, 1.0
  %v4352 = vrcp.pop %v4351
  %v4353 = vmul.f32 1.0, %v4352
  %v4354 = vtanh.pop %v4347
  %v4355 = vmul.f32 %v4353, %v4293
  %4357 = vrot.lane.b32.xlu0 %v4354, 64
  %v4358 = vpop.permute.xlu0 %4357
  %v4360 = vmul.f32 %v4353, %v4358
  %4362 = vrot.lane.b32.xlu0 %v4360, 32
  %v4363 = vpop.permute.xlu0 %4362
  %v4365 = vadd.f32 %v4355, %v4363
  %v4366 = vtanh.pop %v4365
  %4368 = vrot.lane.b32.xlu0 %v4366, 64
  %v4369 = vpop.permute.xlu0 %4368
  %v4371 = vmul.f32 %v4353, %v4369
  %v4372 = vpack.c.bf16 %v4371, %v4371
  %4374 = vrot.lane.b32.xlu0 %v4372, 32
  %v4375 = vpop.permute.xlu0 %4374
  %v4377 = vsel %vm1235, %v4375, 0
  %4379 = vmatprep.subr.bf16.mxu0 0
  %4380 = vmatpush1.bf16.msra.mxu0 %v3868
  %4381 = vmatprep.subr.bf16.mxu0 0
  %4382 = vmatpush1.bf16.msra.mxu0 %v3869
  %4383 = vmatprep.subr.bf16.mxu0 0
  %4384 = vmatpush1.bf16.msra.mxu0 0
  %4385 = vmatprep.subr.bf16.mxu0 0
  %4386 = vmatpush1.bf16.msra.mxu0 0
  %4387 = vmatprep.subr.bf16.mxu0 0
  %4388 = vmatpush1.bf16.msra.mxu0 0
  %4389 = vmatprep.subr.bf16.mxu0 0
  %4390 = vmatpush1.bf16.msra.mxu0 0
  %4391 = vmatprep.subr.bf16.mxu0 0
  %4392 = vmatpush1.bf16.msra.mxu0 0
  %4393 = vmatprep.subr.bf16.mxu0 0
  %4394 = vmatpush1.bf16.msra.mxu0 0
  %4395 = vmatprep.subr.bf16.mxu0 0
  %4396 = vmatpush1.bf16.msra.mxu0 0
  %4397 = vmatprep.subr.bf16.mxu0 0
  %4398 = vmatpush1.bf16.msra.mxu0 0
  %4399 = vmatprep.subr.bf16.mxu0 0
  %4400 = vmatpush1.bf16.msra.mxu0 0
  %4401 = vmatprep.subr.bf16.mxu0 0
  %4402 = vmatpush1.bf16.msra.mxu0 0
  %4403 = vmatprep.subr.bf16.mxu0 0
  %4404 = vmatpush1.bf16.msra.mxu0 0
  %4405 = vmatprep.subr.bf16.mxu0 0
  %4406 = vmatpush1.bf16.msra.mxu0 0
  %4407 = vmatprep.subr.bf16.mxu0 0
  %4408 = vmatpush1.bf16.msra.mxu0 0
  %4409 = vmatprep.subr.bf16.mxu0 0
  %4410 = vmatpush1.bf16.msra.mxu0 0
  %4411 = vmatprep.mubr.bf16.mxu0 0
  %4412 = vmatmul.mubr.bf16.gmra.mrb[0].mxu0 %v4377
  %v4413 = vpop.f32.mrb[0].mxu0
  %v4414 = vadd.f32 0.0, %v4413
  %v4415 = vpop.f32.mrb[0].mxu0
  %v4416 = vpop.f32.mrb[0].mxu0
  %v4417 = vpop.f32.mrb[0].mxu0
  %4418 = vdwg.mxu0
  %v4419 = vadd.f32 %v3745, %v4414
  %v4420 = vxor.u32 %v4419, 2147483648
  %v4421 = vmul.f32 %v4420, 1.442695
  %v4422 = vpow.pop %v4421
  %v4423 = vadd.f32 %v4422, 1.0
  %v4424 = vrcp.pop %v4423
  %v4425 = vmul.f32 1.0, %v4424
  %v4426 = vtanh.pop %v4419
  %v4427 = vmul.f32 %v4425, %v4365
  %4429 = vrot.lane.b32.xlu0 %v4426, 64
  %v4430 = vpop.permute.xlu0 %4429
  %v4432 = vmul.f32 %v4425, %v4430
  %4434 = vrot.lane.b32.xlu0 %v4432, 32
  %v4435 = vpop.permute.xlu0 %4434
  %v4437 = vadd.f32 %v4427, %v4435
  %v4438 = vtanh.pop %v4437
  %4440 = vrot.lane.b32.xlu0 %v4438, 64
  %v4441 = vpop.permute.xlu0 %4440
  %v4443 = vmul.f32 %v4425, %v4441
  %v4444 = vpack.c.bf16 %v4443, %v4443
  %4446 = vrot.lane.b32.xlu0 %v4444, 32
  %v4447 = vpop.permute.xlu0 %4446
  %v4449 = vsel %vm1235, %v4447, 0
  %4451 = vmatprep.subr.bf16.mxu0 0
  %4452 = vmatpush1.bf16.msra.mxu0 %v3868
  %4453 = vmatprep.subr.bf16.mxu0 0
  %4454 = vmatpush1.bf16.msra.mxu0 %v3869
  %4455 = vmatprep.subr.bf16.mxu0 0
  %4456 = vmatpush1.bf16.msra.mxu0 0
  %4457 = vmatprep.subr.bf16.mxu0 0
  %4458 = vmatpush1.bf16.msra.mxu0 0
  %4459 = vmatprep.subr.bf16.mxu0 0
  %4460 = vmatpush1.bf16.msra.mxu0 0
  %4461 = vmatprep.subr.bf16.mxu0 0
  %4462 = vmatpush1.bf16.msra.mxu0 0
  %4463 = vmatprep.subr.bf16.mxu0 0
  %4464 = vmatpush1.bf16.msra.mxu0 0
  %4465 = vmatprep.subr.bf16.mxu0 0
  %4466 = vmatpush1.bf16.msra.mxu0 0
  %4467 = vmatprep.subr.bf16.mxu0 0
  %4468 = vmatpush1.bf16.msra.mxu0 0
  %4469 = vmatprep.subr.bf16.mxu0 0
  %4470 = vmatpush1.bf16.msra.mxu0 0
  %4471 = vmatprep.subr.bf16.mxu0 0
  %4472 = vmatpush1.bf16.msra.mxu0 0
  %4473 = vmatprep.subr.bf16.mxu0 0
  %4474 = vmatpush1.bf16.msra.mxu0 0
  %4475 = vmatprep.subr.bf16.mxu0 0
  %4476 = vmatpush1.bf16.msra.mxu0 0
  %4477 = vmatprep.subr.bf16.mxu0 0
  %4478 = vmatpush1.bf16.msra.mxu0 0
  %4479 = vmatprep.subr.bf16.mxu0 0
  %4480 = vmatpush1.bf16.msra.mxu0 0
  %4481 = vmatprep.subr.bf16.mxu0 0
  %4482 = vmatpush1.bf16.msra.mxu0 0
  %4483 = vmatprep.mubr.bf16.mxu0 0
  %4484 = vmatmul.mubr.bf16.gmra.mrb[0].mxu0 %v4449
  %v4485 = vpop.f32.mrb[0].mxu0
  %v4486 = vadd.f32 0.0, %v4485
  %v4487 = vpop.f32.mrb[0].mxu0
  %v4488 = vpop.f32.mrb[0].mxu0
  %v4489 = vpop.f32.mrb[0].mxu0
  %4490 = vdwg.mxu0
  %v4491 = vadd.f32 %v3746, %v4486
  %v4492 = vxor.u32 %v4491, 2147483648
  %v4493 = vmul.f32 %v4492, 1.442695
  %v4494 = vpow.pop %v4493
  %v4495 = vadd.f32 %v4494, 1.0
  %v4496 = vrcp.pop %v4495
  %v4497 = vmul.f32 1.0, %v4496
  %v4498 = vtanh.pop %v4491
  %v4499 = vmul.f32 %v4497, %v4437
  %4501 = vrot.lane.b32.xlu0 %v4498, 64
  %v4502 = vpop.permute.xlu0 %4501
  %v4504 = vmul.f32 %v4497, %v4502
  %4506 = vrot.lane.b32.xlu0 %v4504, 32
  %v4507 = vpop.permute.xlu0 %4506
  %v4509 = vadd.f32 %v4499, %v4507
  %v4510 = vtanh.pop %v4509
  %4512 = vrot.lane.b32.xlu0 %v4510, 64
  %v4513 = vpop.permute.xlu0 %4512
  %v4515 = vmul.f32 %v4497, %v4513
  %v4516 = vadd.f32 %v3855, %v3939
  %v4517 = vadd.f32 %v4516, %v4011
  %v4518 = vadd.f32 %v4517, %v4083
  %v4519 = vadd.f32 %v4518, %v4155
  %v4520 = vadd.f32 %v4519, %v4227
  %v4521 = vadd.f32 %v4520, %v4299
  %v4522 = vadd.f32 %v4521, %v4371
  %v4523 = vadd.f32 %v4522, %v4443
  %v4524 = vadd.f32 %v4523, %v4515
  %s4525 = scalar_lea.vmem %s19, 32
  %v4526 = vld [vmem:[%s4525] sm:$0xff]
  %v4527 = vld [vmem:[%s4525 + $0x8] sm:$0xff]
  %v4528 = vld [vmem:[%s4525 + $0x10] sm:$0xff]
  %v4529 = vld [vmem:[%s4525 + $0x18] sm:$0xff]
  %4531 = vrot.lane.b32.xlu0 %v4524, 32
  %v4532 = vpop.permute.xlu0 %4531
  %v4533 = vsel %vm1235, %v4532, 0
  %4535 = vmatprep.subr.mxu0 0.0
  %4536 = vmatpush1.msra.mxu0 %v4526
  %4537 = vmatprep.subr.mxu0 0.0
  %4538 = vmatpush1.msra.mxu0 %v4527
  %4539 = vmatprep.subr.mxu0 0.0
  %4540 = vmatpush1.msra.mxu0 %v4528
  %4541 = vmatprep.subr.mxu0 0.0
  %4542 = vmatpush1.msra.mxu0 %v4529
  %4543 = vmatprep.subr.mxu0 0.0
  %4544 = vmatpush1.msra.mxu0 0.0
  %4545 = vmatprep.subr.mxu0 0.0
  %4546 = vmatpush1.msra.mxu0 0.0
  %4547 = vmatprep.subr.mxu0 0.0
  %4548 = vmatpush1.msra.mxu0 0.0
  %4549 = vmatprep.subr.mxu0 0.0
  %4550 = vmatpush1.msra.mxu0 0.0
  %4551 = vmatprep.subr.mxu0 0.0
  %4552 = vmatpush1.msra.mxu0 0.0
  %4553 = vmatprep.subr.mxu0 0.0
  %4554 = vmatpush1.msra.mxu0 0.0
  %4555 = vmatprep.subr.mxu0 0.0
  %4556 = vmatpush1.msra.mxu0 0.0
  %4557 = vmatprep.subr.mxu0 0.0
  %4558 = vmatpush1.msra.mxu0 0.0
  %4559 = vmatprep.subr.mxu0 0.0
  %4560 = vmatpush1.msra.mxu0 0.0
  %4561 = vmatprep.subr.mxu0 0.0
  %4562 = vmatpush1.msra.mxu0 0.0
  %4563 = vmatprep.subr.mxu0 0.0
  %4564 = vmatpush1.msra.mxu0 0.0
  %4565 = vmatprep.subr.mxu0 0.0
  %4566 = vmatpush1.msra.mxu0 0.0
  %4567 = vmatprep.subr.mxu0 0.0
  %4568 = vmatpush1.msra.mxu0 0.0
  %4569 = vmatprep.subr.mxu0 0.0
  %4570 = vmatpush1.msra.mxu0 0.0
  %4571 = vmatprep.subr.mxu0 0.0
  %4572 = vmatpush1.msra.mxu0 0.0
  %4573 = vmatprep.subr.mxu0 0.0
  %4574 = vmatpush1.msra.mxu0 0.0
  %4575 = vmatprep.subr.mxu0 0.0
  %4576 = vmatpush1.msra.mxu0 0.0
  %4577 = vmatprep.subr.mxu0 0.0
  %4578 = vmatpush1.msra.mxu0 0.0
  %4579 = vmatprep.subr.mxu0 0.0
  %4580 = vmatpush1.msra.mxu0 0.0
  %4581 = vmatprep.subr.mxu0 0.0
  %4582 = vmatpush1.msra.mxu0 0.0
  %4583 = vmatprep.subr.mxu0 0.0
  %4584 = vmatpush1.msra.mxu0 0.0
  %4585 = vmatprep.subr.mxu0 0.0
  %4586 = vmatpush1.msra.mxu0 0.0
  %4587 = vmatprep.subr.mxu0 0.0
  %4588 = vmatpush1.msra.mxu0 0.0
  %4589 = vmatprep.subr.mxu0 0.0
  %4590 = vmatpush1.msra.mxu0 0.0
  %4591 = vmatprep.subr.mxu0 0.0
  %4592 = vmatpush1.msra.mxu0 0.0
  %4593 = vmatprep.subr.mxu0 0.0
  %4594 = vmatpush1.msra.mxu0 0.0
  %4595 = vmatprep.subr.mxu0 0.0
  %4596 = vmatpush1.msra.mxu0 0.0
  %4597 = vmatprep.subr.mxu0 0.0
  %4598 = vmatpush1.msra.mxu0 0.0
  %4599 = vmatprep.mubr.f32.mxu0 0.0
  %4600 = vmatmul.mubr.f32.gmra.mrb[0].mxu0 %v4533
  %v4601 = vpop.f32.mrb[0].mxu0
  %v4602 = vadd.f32 0.0, %v4601
  %v4603 = vpop.f32.mrb[0].mxu0
  %4604 = vdwg.mxu0
  %v4605 = vmul.f32 %v4602, 0.1
  %v4606 = vld [vmem:[%s20] sm:$0xff]
  %v4607 = vld [vmem:[%s20 + $0x8] sm:$0xff]
  %v4608 = vld [vmem:[%s20 + $0x10] sm:$0xff]
  %v4609 = vld [vmem:[%s20 + $0x18] sm:$0xff]
  %v4610 = vld [vmem:[%s21] sm:$0x3]
  %v4612 = vlaneseq
  %v4613 = vshrl.u32 %v4612, 7
  %v4614 = vsub.s32 0, %v4613
  %v4615 = vrot.slane %v4610, %v4614
  %v4616 = vlaneseq
  %v4617 = vshrl.u32 %v4616, 7
  %v4618 = vsub.s32 1, %v4617
  %v4619 = vrot.slane %v4610, %v4618
  %v4623 = vsel %vm1486, %v4605, 0
  %4625 = vmatprep.subr.mxu0 %v4607
  %4626 = vmatpush1.msra.mxu0 %v4606
  %4627 = vmatprep.subr.mxu0 %v4609
  %4628 = vmatpush1.msra.mxu0 %v4608
  %4629 = vmatprep.subr.mxu0 0.0
  %4630 = vmatpush1.msra.mxu0 0.0
  %4631 = vmatprep.subr.mxu0 0.0
  %4632 = vmatpush1.msra.mxu0 0.0
  %4633 = vmatprep.subr.mxu0 0.0
  %4634 = vmatpush1.msra.mxu0 0.0
  %4635 = vmatprep.subr.mxu0 0.0
  %4636 = vmatpush1.msra.mxu0 0.0
  %4637 = vmatprep.subr.mxu0 0.0
  %4638 = vmatpush1.msra.mxu0 0.0
  %4639 = vmatprep.subr.mxu0 0.0
  %4640 = vmatpush1.msra.mxu0 0.0
  %4641 = vmatprep.subr.mxu0 0.0
  %4642 = vmatpush1.msra.mxu0 0.0
  %4643 = vmatprep.subr.mxu0 0.0
  %4644 = vmatpush1.msra.mxu0 0.0
  %4645 = vmatprep.subr.mxu0 0.0
  %4646 = vmatpush1.msra.mxu0 0.0
  %4647 = vmatprep.subr.mxu0 0.0
  %4648 = vmatpush1.msra.mxu0 0.0
  %4649 = vmatprep.subr.mxu0 0.0
  %4650 = vmatpush1.msra.mxu0 0.0
  %4651 = vmatprep.subr.mxu0 0.0
  %4652 = vmatpush1.msra.mxu0 0.0
  %4653 = vmatprep.subr.mxu0 0.0
  %4654 = vmatpush1.msra.mxu0 0.0
  %4655 = vmatprep.subr.mxu0 0.0
  %4656 = vmatpush1.msra.mxu0 0.0
  %4657 = vmatprep.subr.mxu0 0.0
  %4658 = vmatpush1.msra.mxu0 0.0
  %4659 = vmatprep.subr.mxu0 0.0
  %4660 = vmatpush1.msra.mxu0 0.0
  %4661 = vmatprep.subr.mxu0 0.0
  %4662 = vmatpush1.msra.mxu0 0.0
  %4663 = vmatprep.subr.mxu0 0.0
  %4664 = vmatpush1.msra.mxu0 0.0
  %4665 = vmatprep.subr.mxu0 0.0
  %4666 = vmatpush1.msra.mxu0 0.0
  %4667 = vmatprep.subr.mxu0 0.0
  %4668 = vmatpush1.msra.mxu0 0.0
  %4669 = vmatprep.subr.mxu0 0.0
  %4670 = vmatpush1.msra.mxu0 0.0
  %4671 = vmatprep.subr.mxu0 0.0
  %4672 = vmatpush1.msra.mxu0 0.0
  %4673 = vmatprep.subr.mxu0 0.0
  %4674 = vmatpush1.msra.mxu0 0.0
  %4675 = vmatprep.subr.mxu0 0.0
  %4676 = vmatpush1.msra.mxu0 0.0
  %4677 = vmatprep.subr.mxu0 0.0
  %4678 = vmatpush1.msra.mxu0 0.0
  %4679 = vmatprep.subr.mxu0 0.0
  %4680 = vmatpush1.msra.mxu0 0.0
  %4681 = vmatprep.subr.mxu0 0.0
  %4682 = vmatpush1.msra.mxu0 0.0
  %4683 = vmatprep.subr.mxu0 0.0
  %4684 = vmatpush1.msra.mxu0 0.0
  %4685 = vmatprep.subr.mxu0 0.0
  %4686 = vmatpush1.msra.mxu0 0.0
  %4687 = vmatprep.subr.mxu0 0.0
  %4688 = vmatpush1.msra.mxu0 0.0
  %4689 = vmatprep.mubr.f32.mxu0 0.0
  %4690 = vmatmul.mubr.f32.gmra.mrb[0].mxu0 %v4623
  %v4691 = vpop.f32.mrb[0].mxu0
  %v4692 = vadd.f32 %v4615, %v4691
  %v4693 = vpop.f32.mrb[0].mxu0
  %v4694 = vadd.f32 %v4619, %v4693
  %4695 = vdwg.mxu0
  %v4696 = vmax.f32 %v4692, 0.0
  %v4697 = vmax.f32 %v4694, 0.0
  %v4698 = vld [vmem:[%s22] sm:$0xff]
  %v4699 = vld [vmem:[%s22 + $0x8] sm:$0xff]
  %v4700 = vld [vmem:[%s22 + $0x10] sm:$0xff]
  %v4701 = vld [vmem:[%s22 + $0x18] sm:$0xff]
  %v4702 = vld [vmem:[%s22 + $0x20] sm:$0xff]
  %v4703 = vld [vmem:[%s22 + $0x28] sm:$0xff]
  %v4704 = vld [vmem:[%s22 + $0x30] sm:$0xff]
  %v4705 = vld [vmem:[%s22 + $0x38] sm:$0xff]
  %v4706 = vld [vmem:[%s22 + $0x40] sm:$0xff]
  %v4707 = vld [vmem:[%s22 + $0x48] sm:$0xff]
  %v4708 = vld [vmem:[%s22 + $0x50] sm:$0xff]
  %v4709 = vld [vmem:[%s22 + $0x58] sm:$0xff]
  %v4710 = vld [vmem:[%s22 + $0x60] sm:$0xff]
  %v4711 = vld [vmem:[%s22 + $0x68] sm:$0xff]
  %v4712 = vld [vmem:[%s22 + $0x70] sm:$0xff]
  %v4713 = vld [vmem:[%s22 + $0x78] sm:$0xff]
  %v4714 = vld [vmem:[%s22 + $0x80] sm:$0xff]
  %v4715 = vld [vmem:[%s22 + $0x88] sm:$0xff]
  %v4716 = vld [vmem:[%s22 + $0x90] sm:$0xff]
  %v4717 = vld [vmem:[%s22 + $0x98] sm:$0xff]
  %v4718 = vld [vmem:[%s22 + $0xa0] sm:$0xff]
  %v4719 = vld [vmem:[%s22 + $0xa8] sm:$0xff]
  %v4720 = vld [vmem:[%s22 + $0xb0] sm:$0xff]
  %v4721 = vld [vmem:[%s22 + $0xb8] sm:$0xff]
  %v4722 = vld [vmem:[%s22 + $0xc0] sm:$0xff]
  %v4723 = vld [vmem:[%s22 + $0xc8] sm:$0xff]
  %v4724 = vld [vmem:[%s22 + $0xd0] sm:$0xff]
  %v4725 = vld [vmem:[%s22 + $0xd8] sm:$0xff]
  %v4726 = vld [vmem:[%s22 + $0xe0] sm:$0xff]
  %v4727 = vld [vmem:[%s22 + $0xe8] sm:$0xff]
  %v4728 = vld [vmem:[%s22 + $0xf0] sm:$0xff]
  %v4729 = vld [vmem:[%s22 + $0xf8] sm:$0xff]
  %v4730 = vld [vmem:[#allocation2] sm:$0x1]
  %v4732 = vlaneseq
  %v4733 = vshrl.u32 %v4732, 7
  %v4734 = vsub.s32 0, %v4733
  %v4735 = vrot.slane %v4730, %v4734
  %4737 = vmatprep.subr.mxu0 0.0
  %4738 = vmatpush1.msra.mxu0 %v4698
  %4739 = vmatprep.subr.mxu0 0.0
  %4740 = vmatpush1.msra.mxu0 %v4699
  %4741 = vmatprep.subr.mxu0 0.0
  %4742 = vmatpush1.msra.mxu0 %v4700
  %4743 = vmatprep.subr.mxu0 0.0
  %4744 = vmatpush1.msra.mxu0 %v4701
  %4745 = vmatprep.subr.mxu0 0.0
  %4746 = vmatpush1.msra.mxu0 %v4702
  %4747 = vmatprep.subr.mxu0 0.0
  %4748 = vmatpush1.msra.mxu0 %v4703
  %4749 = vmatprep.subr.mxu0 0.0
  %4750 = vmatpush1.msra.mxu0 %v4704
  %4751 = vmatprep.subr.mxu0 0.0
  %4752 = vmatpush1.msra.mxu0 %v4705
  %4753 = vmatprep.subr.mxu0 0.0
  %4754 = vmatpush1.msra.mxu0 %v4706
  %4755 = vmatprep.subr.mxu0 0.0
  %4756 = vmatpush1.msra.mxu0 %v4707
  %4757 = vmatprep.subr.mxu0 0.0
  %4758 = vmatpush1.msra.mxu0 %v4708
  %4759 = vmatprep.subr.mxu0 0.0
  %4760 = vmatpush1.msra.mxu0 %v4709
  %4761 = vmatprep.subr.mxu0 0.0
  %4762 = vmatpush1.msra.mxu0 %v4710
  %4763 = vmatprep.subr.mxu0 0.0
  %4764 = vmatpush1.msra.mxu0 %v4711
  %4765 = vmatprep.subr.mxu0 0.0
  %4766 = vmatpush1.msra.mxu0 %v4712
  %4767 = vmatprep.subr.mxu0 0.0
  %4768 = vmatpush1.msra.mxu0 %v4713
  %4769 = vmatprep.subr.mxu0 0.0
  %4770 = vmatpush1.msra.mxu0 %v4714
  %4771 = vmatprep.subr.mxu0 0.0
  %4772 = vmatpush1.msra.mxu0 %v4715
  %4773 = vmatprep.subr.mxu0 0.0
  %4774 = vmatpush1.msra.mxu0 %v4716
  %4775 = vmatprep.subr.mxu0 0.0
  %4776 = vmatpush1.msra.mxu0 %v4717
  %4777 = vmatprep.subr.mxu0 0.0
  %4778 = vmatpush1.msra.mxu0 %v4718
  %4779 = vmatprep.subr.mxu0 0.0
  %4780 = vmatpush1.msra.mxu0 %v4719
  %4781 = vmatprep.subr.mxu0 0.0
  %4782 = vmatpush1.msra.mxu0 %v4720
  %4783 = vmatprep.subr.mxu0 0.0
  %4784 = vmatpush1.msra.mxu0 %v4721
  %4785 = vmatprep.subr.mxu0 0.0
  %4786 = vmatpush1.msra.mxu0 %v4722
  %4787 = vmatprep.subr.mxu0 0.0
  %4788 = vmatpush1.msra.mxu0 %v4723
  %4789 = vmatprep.subr.mxu0 0.0
  %4790 = vmatpush1.msra.mxu0 %v4724
  %4791 = vmatprep.subr.mxu0 0.0
  %4792 = vmatpush1.msra.mxu0 %v4725
  %4793 = vmatprep.subr.mxu0 0.0
  %4794 = vmatpush1.msra.mxu0 %v4726
  %4795 = vmatprep.subr.mxu0 0.0
  %4796 = vmatpush1.msra.mxu0 %v4727
  %4797 = vmatprep.subr.mxu0 0.0
  %4798 = vmatpush1.msra.mxu0 %v4728
  %4799 = vmatprep.subr.mxu0 0.0
  %4800 = vmatpush1.msra.mxu0 %v4729
  %4801 = vmatprep.mubr.f32.mxu0 %v4697
  %4802 = vmatmul.mubr.f32.gmra.mrb[0].mxu0 %v4696
  %v4803 = vpop.f32.mrb[0].mxu0
  %v4804 = vadd.f32 %v4735, %v4803
  %v4805 = vpop.f32.mrb[0].mxu0
  %4806 = vdwg.mxu0
  %vm4807 = vcmask 7168
  %4808 = vst.msk [vmem:[%s24] sm:$0xff] %vm4807, %v4804
  // Predicated region
  $region98: #{forward.1} parent=0 // pred_check
    _
  $region99: #{forward.1} parent=0 // pred_check_branch
    %4810 = sbr.rel (0) target = $region101
  $region100: #{forward.1} parent=0 // pred_region
    _
  $region101: #{forward.1} parent=0 // pred_fallthru
    _
  // Predicated region
  $region102: #{forward.1} parent=0 // pred_check
    _
  $region103: #{forward.1} parent=0 // pred_check_branch
    %4812 = sbr.rel (0) target = $region105
  $region104: #{forward.1} parent=0 // pred_region
    _
  $region105: #{forward.1} parent=0 // pred_fallthru
    _

</llo_original>
